<compile_context>
chip_gen: v6e
topology: v6e:2x2x1
jax: 0.10.0
libtpu: 0.0.40
codegen_flags: <defaults>
</compile_context>

<pallas_src>
import jax
import jax.numpy as jnp
from jax.experimental import pallas as pl
from jax.experimental.pallas import tpu as pltpu

# bf16 MXU operands, f32 accumulation.  Set to jnp.float32 for ~1e-5 parity
# with the PyTorch module.
MATMUL_DTYPE = jnp.bfloat16
LANE = 128  # TPU lane width; output channels are padded up to a multiple of it.


def _erf(z):
    # Abramowitz & Stegun 7.1.26, |error| <= 1.5e-7.  Short VPU polynomial plus
    # one EUP exp; the divide is an approx reciprocal on the (otherwise idle)
    # EUP slot instead of a VALU divide chain (perf review).
    a1, a2, a3, a4, a5 = (0.254829592, -0.284496736, 1.421413741,
                          -1.453152027, 1.061405429)
    p = 0.3275911
    s = jnp.where(z >= 0.0, 1.0, -1.0)
    az = jnp.abs(z)
    t = pl.reciprocal(1.0 + p * az, approx=True)
    poly = ((((a5 * t + a4) * t + a3) * t + a2) * t + a1) * t
    return s * (1.0 - poly * jnp.exp(-az * az))


def _gelu_exact(x):
    # PyTorch nn.GELU default = exact (erf-based) GELU.
    return 0.5 * x * (1.0 + _erf(x * 0.7071067811865476))


def _downblock_kernel(xt_ref, xflat_ref, w1_ref, b1_ref, w2_ref, b2s_ref,
                      ws_ref, o_ref, xrot_ref):
    HW = xt_ref.shape[1]
    Cp = o_ref.shape[-1]                     # padded out-channels (mult of 128)
    W = (xrot_ref.shape[1] - HW) // 2        # scratch rows = HW + 2*W
    H = HW // W

    # ---- conv1(gelu(x)): a single K = 9*Cin matmul --------------------------
    a1 = _gelu_exact(xt_ref[0])                                # (HW, 9*Cin) f32
    h1 = jnp.dot(a1.astype(MATMUL_DTYPE), w1_ref[...],
                 preferred_element_type=jnp.float32)           # (HW, Cp) f32

    # ---- a2 = gelu(h1 + b1); conv1 bias added exactly once ------------------
    a2 = _gelu_exact(h1 + b1_ref[...])                         # (HW, Cp) f32
    a2_3d = a2.reshape(H, W, Cp)

    # ---- build the 3 x-rotations once, row-padded for free y-shifts ---------
    # xrot_ref[dx, W + r, :] = rot_dx[r]; rows [0, W) and [W+HW, W+2W) hold the
    # circular wrap, so tap (dy, dx) below is the contiguous, 8-row-aligned
    # window xrot_ref[dx, dy*W : dy*W + HW, :] (the y-shift becomes an offset).
    for dx in range(3):
        kx = (dx - 1) % W
        if kx:
            rot = jnp.concatenate([a2_3d[:, kx:, :], a2_3d[:, :kx, :]], axis=1)
        else:
            rot = a2_3d
        flat = rot.reshape(HW, Cp).astype(MATMUL_DTYPE)        # cast once per dx
        xrot_ref[dx, W:W + HW, :] = flat
        xrot_ref[dx, 0:W, :] = flat[HW - W:, :]
        xrot_ref[dx, W + HW:W + HW + W, :] = flat[:W, :]

    # ---- output accumulator = shortcut(x) + (b2 + bs) (fused residual) ------
    o_ref[0] = jnp.dot(xflat_ref[0].astype(MATMUL_DTYPE), ws_ref[...],
                       preferred_element_type=jnp.float32) + b2s_ref[...]

    # ---- conv2(gelu(h1 + b1)): 9 K=Cp matmuls, accumulate in the out block --
    for dy in range(3):
        for dx in range(3):
            tap = xrot_ref[dx, dy * W:dy * W + HW, :]          # aligned load
            o_ref[0] += jnp.dot(tap, w2_ref[3 * dy + dx],
                                preferred_element_type=jnp.float32)


def downblock_pallas(x_nhwc, params):
    """x_nhwc: (B, H, W, Cin) float32. Returns (B, H, W, Cout) float32."""
    x_nhwc = x_nhwc.astype(jnp.float32)
    B, H, W, Cin = x_nhwc.shape
    Cout = params["b1"].shape[-1]
    Cp = LANE * pl.cdiv(Cout, LANE)      # pad out-channels to full lane width
    HW = H * W
    assert H % 8 == 0 and W % 8 == 0, "aligned row-block trick needs H, W % 8 == 0"
    # TODO(synk): for large H*W (e.g. 128x128) add an HW-tiled grid axis; the
    # single-block intermediates would otherwise collide with v7x's 64 MiB VMEM.

    def pad_last(a, n):
        return jnp.pad(a, [(0, 0)] * (a.ndim - 1) + [(0, n - a.shape[-1])])

    # Stacked conv1 weight: rows [k*Cin:(k+1)*Cin] = w1[dy, dx], k = 3*dy + dx.
    w1s = pad_last(params["w1"], Cp).reshape(9 * Cin, Cp).astype(MATMUL_DTYPE)
    w2 = jnp.pad(params["w2"],
                 ((0, 0), (0, 0), (0, Cp - Cout), (0, Cp - Cout))
                 ).reshape(9, Cp, Cp).astype(MATMUL_DTYPE)
    ws = pad_last(params["ws"], Cp).astype(MATMUL_DTYPE)
    b1 = pad_last(params["b1"], Cp).reshape(1, Cp).astype(jnp.float32)
    b2s = pad_last(params["b2"] + params["bs"], Cp).reshape(1, Cp).astype(jnp.float32)

    # Wrapper-side circular 9-tap gather of the raw input (layout plumbing of a
    # tiny tensor); gelu, both convs and the shortcut stay in-kernel.  gelu
    # commutes with the gather, so gelu(x_taps) == taps of gelu(x).
    taps = [jnp.roll(x_nhwc, (1 - dy, 1 - dx), axis=(1, 2))
            for dy in range(3) for dx in range(3)]
    x_taps = jnp.concatenate(taps, axis=-1).reshape(B, HW, 9 * Cin)
    x_flat = x_nhwc.reshape(B, HW, Cin)

    grid_spec = pltpu.PrefetchScalarGridSpec(
        num_scalar_prefetch=0,
        grid=(B,),   # one image per step; B >= 2 keeps both v7x TCs busy
        in_specs=[
            pl.BlockSpec((1, HW, 9 * Cin), lambda b: (b, 0, 0)),
            pl.BlockSpec((1, HW, Cin), lambda b: (b, 0, 0)),
            pl.BlockSpec((9 * Cin, Cp), lambda b: (0, 0)),
            pl.BlockSpec((1, Cp), lambda b: (0, 0)),
            pl.BlockSpec((9, Cp, Cp), lambda b: (0, 0, 0)),
            pl.BlockSpec((1, Cp), lambda b: (0, 0)),
            pl.BlockSpec((Cin, Cp), lambda b: (0, 0)),
        ],
        out_specs=pl.BlockSpec((1, HW, Cp), lambda b: (b, 0, 0)),
        scratch_shapes=[pltpu.VMEM((3, HW + 2 * W, Cp), MATMUL_DTYPE)],
    )

    out = pl.pallas_call(
        _downblock_kernel,
        out_shape=jax.ShapeDtypeStruct((B, HW, Cp), jnp.float32),
        grid_spec=grid_spec,
        compiler_params=pltpu.CompilerParams(
            dimension_semantics=("parallel",),
            vmem_limit_bytes=32 * 1024 * 1024),
    )(x_taps, x_flat, w1s, b1, w2, b2s, ws)

    # Lane-dense (.., Cp) result -> user layout; drop the channel padding.
    return out.reshape(B, H, W, Cp)[..., :Cout]


def downblock_reference(x_nhwc, params):
    # Pure-JAX f32 reference (module semantics) for validation.
    prec = jax.lax.Precision.HIGHEST

    def conv3x3(v, w_hwio, b):
        vp = jnp.pad(v, ((0, 0), (1, 1), (1, 1), (0, 0)), mode="wrap")
        out = jax.lax.conv_general_dilated(
            vp, w_hwio, window_strides=(1, 1), padding="VALID",
            dimension_numbers=("NHWC", "HWIO", "NHWC"), precision=prec)
        return out + b

    a1 = jax.nn.gelu(x_nhwc, approximate=False)
    h1 = conv3x3(a1, params["w1"], params["b1"])
    a2 = jax.nn.gelu(h1, approximate=False)
    h2 = conv3x3(a2, params["w2"], params["b2"])
    sc = jnp.einsum("nhwc,cd->nhwd", x_nhwc, params["ws"],
                    precision=prec) + params["bs"]
    return h2 + sc


def init_params(key, cin, cout):
    k1, k2, k3, k4, k5, k6 = jax.random.split(key, 6)
    scale1 = 1.0 / (3 * 3 * cin) ** 0.5
    scale2 = 1.0 / (3 * 3 * cout) ** 0.5
    scale_s = 1.0 / cin ** 0.5
    return {
        "w1": jax.random.normal(k1, (3, 3, cin, cout), jnp.float32) * scale1,
        "b1": jax.random.normal(k2, (cout,), jnp.float32) * scale1,
        "w2": jax.random.normal(k3, (3, 3, cout, cout), jnp.float32) * scale2,
        "b2": jax.random.normal(k4, (cout,), jnp.float32) * scale2,
        "ws": jax.random.normal(k5, (cin, cout), jnp.float32) * scale_s,
        "bs": jax.random.normal(k6, (cout,), jnp.float32) * scale_s,
    }


if __name__ == "__main__":
    key = jax.random.PRNGKey(0)
    kx, kp = jax.random.split(key)

    B, Cin, H, W = 2, 4, 16, 16     # NCHW, as the PyTorch module would receive
    Cout = 8                        # in_channels != out_channels -> 1x1 shortcut

    x_nchw = jax.random.normal(kx, (B, Cin, H, W), jnp.float32)
    params = init_params(kp, Cin, Cout)

    # The kernel operates in NHWC.
    x_nhwc = jnp.transpose(x_nchw, (0, 2, 3, 1))

    out = jax.block_until_ready(jax.jit(downblock_pallas)(x_nhwc, params))
    ref = jax.block_until_ready(downblock_reference(x_nhwc, params))

    assert out.shape == (B, H, W, Cout)
    max_err = float(jnp.max(jnp.abs(out - ref)))
    # Tolerance sized for bf16 MXU operands vs the f32 reference
    # (set MATMUL_DTYPE = jnp.float32 for ~1e-5-level parity).
    assert jnp.allclose(out, ref, atol=2e-2, rtol=2e-2), (
        f"mismatch vs reference, max_abs_err={max_err}")

    _ = jnp.transpose(out, (0, 3, 1, 2))  # back to NCHW for PyTorch callers
    print("KERNEL_OK")
</pallas_src>

<mosaic_0001>
module attributes {stable_mosaic.version = 11 : i64} {
  func.func @_downblock_kernel(%arg0: i32, %arg1: memref<1x256x36xf32, #tpu.memory_space<vmem>>, %arg2: memref<1x256x4xf32, #tpu.memory_space<vmem>>, %arg3: memref<36x128xbf16, #tpu.memory_space<vmem>>, %arg4: memref<1x128xf32, #tpu.memory_space<vmem>>, %arg5: memref<9x128x128xbf16, #tpu.memory_space<vmem>>, %arg6: memref<1x128xf32, #tpu.memory_space<vmem>>, %arg7: memref<4x128xbf16, #tpu.memory_space<vmem>>, %arg8: memref<1x256x128xf32, #tpu.memory_space<vmem>>, %arg9: memref<3x288x128xbf16, #tpu.memory_space<vmem>>) attributes {dimension_semantics = [#tpu.dimension_semantics<parallel>], iteration_bounds = array<i64: 2>, scalar_prefetch = 0 : i64, scratch_operands = 1 : i64, tpu.core_type = #tpu.core_type<tc>, window_params = [{transform_indices = @transform_0, window_bounds = array<i64: 1, 256, 36>}, {transform_indices = @transform_1, window_bounds = array<i64: 1, 256, 4>}, {pipeline_mode = #tpu.pipeline_mode<synchronous>, transform_indices = @transform_2, window_bounds = array<i64: 36, 128>}, {pipeline_mode = #tpu.pipeline_mode<synchronous>, transform_indices = @transform_3, window_bounds = array<i64: 1, 128>}, {pipeline_mode = #tpu.pipeline_mode<synchronous>, transform_indices = @transform_4, window_bounds = array<i64: 9, 128, 128>}, {pipeline_mode = #tpu.pipeline_mode<synchronous>, transform_indices = @transform_5, window_bounds = array<i64: 1, 128>}, {pipeline_mode = #tpu.pipeline_mode<synchronous>, transform_indices = @transform_6, window_bounds = array<i64: 4, 128>}, {transform_indices = @transform_7, window_bounds = array<i64: 1, 256, 128>}]} {
    %c0 = arith.constant 0 : index
    %c0_0 = arith.constant 0 : index
    %c0_1 = arith.constant 0 : index
    %0 = vector.load %arg1[%c0, %c0_0, %c0_1] : memref<1x256x36xf32, #tpu.memory_space<vmem>>, vector<1x256x36xf32>
    %1 = vector.shape_cast %0 : vector<1x256x36xf32> to vector<256x36xf32>
    %cst = arith.constant 5.000000e-01 : f32
    %2 = vector.broadcast %cst : f32 to vector<256x36xf32>
    %3 = arith.mulf %2, %1 : vector<256x36xf32>
    %cst_2 = arith.constant 0.707106769 : f32
    %4 = vector.broadcast %cst_2 : f32 to vector<256x36xf32>
    %5 = arith.mulf %1, %4 : vector<256x36xf32>
    %cst_3 = arith.constant 0.000000e+00 : f32
    %6 = vector.broadcast %cst_3 : f32 to vector<256x36xf32>
    %7 = arith.cmpf oge, %5, %6 : vector<256x36xf32>
    %cst_4 = arith.constant 1.000000e+00 : f32
    %cst_5 = arith.constant -1.000000e+00 : f32
    %8 = vector.broadcast %cst_4 : f32 to vector<256x36xf32>
    %9 = vector.broadcast %cst_5 : f32 to vector<256x36xf32>
    %10 = arith.select %7, %8, %9 : vector<256x36xi1>, vector<256x36xf32>
    %11 = math.absf %5 : vector<256x36xf32>
    %cst_6 = arith.constant 0.327591091 : f32
    %12 = vector.broadcast %cst_6 : f32 to vector<256x36xf32>
    %13 = arith.mulf %12, %11 : vector<256x36xf32>
    %cst_7 = arith.constant 1.000000e+00 : f32
    %14 = vector.broadcast %cst_7 : f32 to vector<256x36xf32>
    %15 = arith.addf %14, %13 : vector<256x36xf32>
    %16 = tpu.reciprocal %15 {approx = true} : vector<256x36xf32> -> vector<256x36xf32>
    %cst_8 = arith.constant 1.06140542 : f32
    %17 = vector.broadcast %cst_8 : f32 to vector<256x36xf32>
    %18 = arith.mulf %17, %16 : vector<256x36xf32>
    %cst_9 = arith.constant -1.45315206 : f32
    %19 = vector.broadcast %cst_9 : f32 to vector<256x36xf32>
    %20 = arith.addf %18, %19 : vector<256x36xf32>
    %21 = arith.mulf %20, %16 : vector<256x36xf32>
    %cst_10 = arith.constant 1.42141378 : f32
    %22 = vector.broadcast %cst_10 : f32 to vector<256x36xf32>
    %23 = arith.addf %21, %22 : vector<256x36xf32>
    %24 = arith.mulf %23, %16 : vector<256x36xf32>
    %cst_11 = arith.constant -0.284496725 : f32
    %25 = vector.broadcast %cst_11 : f32 to vector<256x36xf32>
    %26 = arith.addf %24, %25 : vector<256x36xf32>
    %27 = arith.mulf %26, %16 : vector<256x36xf32>
    %cst_12 = arith.constant 0.254829586 : f32
    %28 = vector.broadcast %cst_12 : f32 to vector<256x36xf32>
    %29 = arith.addf %27, %28 : vector<256x36xf32>
    %30 = arith.mulf %29, %16 : vector<256x36xf32>
    %cst_13 = arith.constant 0.000000e+00 : f32
    %31 = vector.broadcast %cst_13 : f32 to vector<256x36xf32>
    %32 = arith.subf %31, %11 : vector<256x36xf32>
    %33 = arith.mulf %32, %11 : vector<256x36xf32>
    %34 = math.exp %33 : vector<256x36xf32>
    %35 = arith.mulf %30, %34 : vector<256x36xf32>
    %cst_14 = arith.constant 1.000000e+00 : f32
    %36 = vector.broadcast %cst_14 : f32 to vector<256x36xf32>
    %37 = arith.subf %36, %35 : vector<256x36xf32>
    %38 = arith.mulf %10, %37 : vector<256x36xf32>
    %cst_15 = arith.constant 1.000000e+00 : f32
    %39 = vector.broadcast %cst_15 : f32 to vector<256x36xf32>
    %40 = arith.addf %39, %38 : vector<256x36xf32>
    %41 = arith.mulf %3, %40 : vector<256x36xf32>
    %42 = arith.truncf %41 : vector<256x36xf32> to vector<256x36xbf16>
    %c0_16 = arith.constant 0 : index
    %c0_17 = arith.constant 0 : index
    %43 = vector.load %arg3[%c0_16, %c0_17] : memref<36x128xbf16, #tpu.memory_space<vmem>>, vector<36x128xbf16>
    %cst_18 = arith.constant dense<0.000000e+00> : vector<256x128xf32>
    %44 = tpu.matmul %42, %43, %cst_18 {dimension_numbers = #tpu.dot_dimension_numbers<[1], [0], [0], [1], [0, 0, 1, 1], [], []>} : vector<256x36xbf16>, vector<36x128xbf16>, vector<256x128xf32> -> vector<256x128xf32>
    %c0_19 = arith.constant 0 : index
    %c0_20 = arith.constant 0 : index
    %45 = vector.load %arg4[%c0_19, %c0_20] : memref<1x128xf32, #tpu.memory_space<vmem>>, vector<1x128xf32>
    %46 = vector.broadcast %45 : vector<1x128xf32> to vector<256x128xf32>
    %47 = arith.addf %44, %46 : vector<256x128xf32>
    %cst_21 = arith.constant 5.000000e-01 : f32
    %48 = vector.broadcast %cst_21 : f32 to vector<256x128xf32>
    %49 = arith.mulf %48, %47 : vector<256x128xf32>
    %cst_22 = arith.constant 0.707106769 : f32
    %50 = vector.broadcast %cst_22 : f32 to vector<256x128xf32>
    %51 = arith.mulf %47, %50 : vector<256x128xf32>
    %cst_23 = arith.constant 0.000000e+00 : f32
    %52 = vector.broadcast %cst_23 : f32 to vector<256x128xf32>
    %53 = arith.cmpf oge, %51, %52 : vector<256x128xf32>
    %cst_24 = arith.constant 1.000000e+00 : f32
    %cst_25 = arith.constant -1.000000e+00 : f32
    %54 = vector.broadcast %cst_24 : f32 to vector<256x128xf32>
    %55 = vector.broadcast %cst_25 : f32 to vector<256x128xf32>
    %56 = arith.select %53, %54, %55 : vector<256x128xi1>, vector<256x128xf32>
    %57 = math.absf %51 : vector<256x128xf32>
    %cst_26 = arith.constant 0.327591091 : f32
    %58 = vector.broadcast %cst_26 : f32 to vector<256x128xf32>
    %59 = arith.mulf %58, %57 : vector<256x128xf32>
    %cst_27 = arith.constant 1.000000e+00 : f32
    %60 = vector.broadcast %cst_27 : f32 to vector<256x128xf32>
    %61 = arith.addf %60, %59 : vector<256x128xf32>
    %62 = tpu.reciprocal %61 {approx = true} : vector<256x128xf32> -> vector<256x128xf32>
    %cst_28 = arith.constant 1.06140542 : f32
    %63 = vector.broadcast %cst_28 : f32 to vector<256x128xf32>
    %64 = arith.mulf %63, %62 : vector<256x128xf32>
    %cst_29 = arith.constant -1.45315206 : f32
    %65 = vector.broadcast %cst_29 : f32 to vector<256x128xf32>
    %66 = arith.addf %64, %65 : vector<256x128xf32>
    %67 = arith.mulf %66, %62 : vector<256x128xf32>
    %cst_30 = arith.constant 1.42141378 : f32
    %68 = vector.broadcast %cst_30 : f32 to vector<256x128xf32>
    %69 = arith.addf %67, %68 : vector<256x128xf32>
    %70 = arith.mulf %69, %62 : vector<256x128xf32>
    %cst_31 = arith.constant -0.284496725 : f32
    %71 = vector.broadcast %cst_31 : f32 to vector<256x128xf32>
    %72 = arith.addf %70, %71 : vector<256x128xf32>
    %73 = arith.mulf %72, %62 : vector<256x128xf32>
    %cst_32 = arith.constant 0.254829586 : f32
    %74 = vector.broadcast %cst_32 : f32 to vector<256x128xf32>
    %75 = arith.addf %73, %74 : vector<256x128xf32>
    %76 = arith.mulf %75, %62 : vector<256x128xf32>
    %cst_33 = arith.constant 0.000000e+00 : f32
    %77 = vector.broadcast %cst_33 : f32 to vector<256x128xf32>
    %78 = arith.subf %77, %57 : vector<256x128xf32>
    %79 = arith.mulf %78, %57 : vector<256x128xf32>
    %80 = math.exp %79 : vector<256x128xf32>
    %81 = arith.mulf %76, %80 : vector<256x128xf32>
    %cst_34 = arith.constant 1.000000e+00 : f32
    %82 = vector.broadcast %cst_34 : f32 to vector<256x128xf32>
    %83 = arith.subf %82, %81 : vector<256x128xf32>
    %84 = arith.mulf %56, %83 : vector<256x128xf32>
    %cst_35 = arith.constant 1.000000e+00 : f32
    %85 = vector.broadcast %cst_35 : f32 to vector<256x128xf32>
    %86 = arith.addf %85, %84 : vector<256x128xf32>
    %87 = arith.mulf %49, %86 : vector<256x128xf32>
    %88 = vector.shape_cast %87 : vector<256x128xf32> to vector<16x16x128xf32>
    %89 = vector.extract_strided_slice %88 {offsets = [0, 15, 0], sizes = [16, 1, 128], strides = [1, 1, 1]} : vector<16x16x128xf32> to vector<16x1x128xf32>
    %90 = vector.extract_strided_slice %88 {offsets = [0, 0, 0], sizes = [16, 15, 128], strides = [1, 1, 1]} : vector<16x16x128xf32> to vector<16x15x128xf32>
    %91 = tpu.concatenate %89, %90 in 1 : vector<16x1x128xf32>, vector<16x15x128xf32> -> vector<16x16x128xf32>
    %92 = vector.shape_cast %91 : vector<16x16x128xf32> to vector<256x128xf32>
    %93 = arith.truncf %92 : vector<256x128xf32> to vector<256x128xbf16>
    %c0_36 = arith.constant 0 : index
    %c16 = arith.constant 16 : index
    %c0_37 = arith.constant 0 : index
    %94 = vector.load %arg9[%c0_36, %c16, %c0_37] : memref<3x288x128xbf16, #tpu.memory_space<vmem>>, vector<1x256x128xbf16>
    %95 = vector.shape_cast %94 : vector<1x256x128xbf16> to vector<256x128xbf16>
    %96 = vector.shape_cast %93 : vector<256x128xbf16> to vector<1x256x128xbf16>
    tpu.vector_store %arg9[%c0_36, %c16, %c0_37], %96 {strides = array<i32>} : memref<3x288x128xbf16, #tpu.memory_space<vmem>>, vector<1x256x128xbf16>,
    %97 = vector.extract_strided_slice %93 {offsets = [240, 0], sizes = [16, 128], strides = [1, 1]} : vector<256x128xbf16> to vector<16x128xbf16>
    %c0_38 = arith.constant 0 : index
    %c0_39 = arith.constant 0 : index
    %c0_40 = arith.constant 0 : index
    %98 = vector.load %arg9[%c0_38, %c0_39, %c0_40] : memref<3x288x128xbf16, #tpu.memory_space<vmem>>, vector<1x16x128xbf16>
    %99 = vector.shape_cast %98 : vector<1x16x128xbf16> to vector<16x128xbf16>
    %100 = vector.shape_cast %97 : vector<16x128xbf16> to vector<1x16x128xbf16>
    tpu.vector_store %arg9[%c0_38, %c0_39, %c0_40], %100 {strides = array<i32>} : memref<3x288x128xbf16, #tpu.memory_space<vmem>>, vector<1x16x128xbf16>,
    %101 = vector.extract_strided_slice %93 {offsets = [0, 0], sizes = [16, 128], strides = [1, 1]} : vector<256x128xbf16> to vector<16x128xbf16>
    %c0_41 = arith.constant 0 : index
    %c272 = arith.constant 272 : index
    %c0_42 = arith.constant 0 : index
    %102 = vector.load %arg9[%c0_41, %c272, %c0_42] : memref<3x288x128xbf16, #tpu.memory_space<vmem>>, vector<1x16x128xbf16>
    %103 = vector.shape_cast %102 : vector<1x16x128xbf16> to vector<16x128xbf16>
    %104 = vector.shape_cast %101 : vector<16x128xbf16> to vector<1x16x128xbf16>
    tpu.vector_store %arg9[%c0_41, %c272, %c0_42], %104 {strides = array<i32>} : memref<3x288x128xbf16, #tpu.memory_space<vmem>>, vector<1x16x128xbf16>,
    %105 = vector.shape_cast %88 : vector<16x16x128xf32> to vector<256x128xf32>
    %106 = arith.truncf %105 : vector<256x128xf32> to vector<256x128xbf16>
    %c1 = arith.constant 1 : index
    %c16_43 = arith.constant 16 : index
    %c0_44 = arith.constant 0 : index
    %107 = vector.load %arg9[%c1, %c16_43, %c0_44] : memref<3x288x128xbf16, #tpu.memory_space<vmem>>, vector<1x256x128xbf16>
    %108 = vector.shape_cast %107 : vector<1x256x128xbf16> to vector<256x128xbf16>
    %109 = vector.shape_cast %106 : vector<256x128xbf16> to vector<1x256x128xbf16>
    tpu.vector_store %arg9[%c1, %c16_43, %c0_44], %109 {strides = array<i32>} : memref<3x288x128xbf16, #tpu.memory_space<vmem>>, vector<1x256x128xbf16>,
    %110 = vector.extract_strided_slice %106 {offsets = [240, 0], sizes = [16, 128], strides = [1, 1]} : vector<256x128xbf16> to vector<16x128xbf16>
    %c1_45 = arith.constant 1 : index
    %c0_46 = arith.constant 0 : index
    %c0_47 = arith.constant 0 : index
    %111 = vector.load %arg9[%c1_45, %c0_46, %c0_47] : memref<3x288x128xbf16, #tpu.memory_space<vmem>>, vector<1x16x128xbf16>
    %112 = vector.shape_cast %111 : vector<1x16x128xbf16> to vector<16x128xbf16>
    %113 = vector.shape_cast %110 : vector<16x128xbf16> to vector<1x16x128xbf16>
    tpu.vector_store %arg9[%c1_45, %c0_46, %c0_47], %113 {strides = array<i32>} : memref<3x288x128xbf16, #tpu.memory_space<vmem>>, vector<1x16x128xbf16>,
    %114 = vector.extract_strided_slice %106 {offsets = [0, 0], sizes = [16, 128], strides = [1, 1]} : vector<256x128xbf16> to vector<16x128xbf16>
    %c1_48 = arith.constant 1 : index
    %c272_49 = arith.constant 272 : index
    %c0_50 = arith.constant 0 : index
    %115 = vector.load %arg9[%c1_48, %c272_49, %c0_50] : memref<3x288x128xbf16, #tpu.memory_space<vmem>>, vector<1x16x128xbf16>
    %116 = vector.shape_cast %115 : vector<1x16x128xbf16> to vector<16x128xbf16>
    %117 = vector.shape_cast %114 : vector<16x128xbf16> to vector<1x16x128xbf16>
    tpu.vector_store %arg9[%c1_48, %c272_49, %c0_50], %117 {strides = array<i32>} : memref<3x288x128xbf16, #tpu.memory_space<vmem>>, vector<1x16x128xbf16>,
    %118 = vector.extract_strided_slice %88 {offsets = [0, 1, 0], sizes = [16, 15, 128], strides = [1, 1, 1]} : vector<16x16x128xf32> to vector<16x15x128xf32>
    %119 = vector.extract_strided_slice %88 {offsets = [0, 0, 0], sizes = [16, 1, 128], strides = [1, 1, 1]} : vector<16x16x128xf32> to vector<16x1x128xf32>
    %120 = tpu.concatenate %118, %119 in 1 : vector<16x15x128xf32>, vector<16x1x128xf32> -> vector<16x16x128xf32>
    %121 = vector.shape_cast %120 : vector<16x16x128xf32> to vector<256x128xf32>
    %122 = arith.truncf %121 : vector<256x128xf32> to vector<256x128xbf16>
    %c2 = arith.constant 2 : index
    %c16_51 = arith.constant 16 : index
    %c0_52 = arith.constant 0 : index
    %123 = vector.load %arg9[%c2, %c16_51, %c0_52] : memref<3x288x128xbf16, #tpu.memory_space<vmem>>, vector<1x256x128xbf16>
    %124 = vector.shape_cast %123 : vector<1x256x128xbf16> to vector<256x128xbf16>
    %125 = vector.shape_cast %122 : vector<256x128xbf16> to vector<1x256x128xbf16>
    tpu.vector_store %arg9[%c2, %c16_51, %c0_52], %125 {strides = array<i32>} : memref<3x288x128xbf16, #tpu.memory_space<vmem>>, vector<1x256x128xbf16>,
    %126 = vector.extract_strided_slice %122 {offsets = [240, 0], sizes = [16, 128], strides = [1, 1]} : vector<256x128xbf16> to vector<16x128xbf16>
    %c2_53 = arith.constant 2 : index
    %c0_54 = arith.constant 0 : index
    %c0_55 = arith.constant 0 : index
    %127 = vector.load %arg9[%c2_53, %c0_54, %c0_55] : memref<3x288x128xbf16, #tpu.memory_space<vmem>>, vector<1x16x128xbf16>
    %128 = vector.shape_cast %127 : vector<1x16x128xbf16> to vector<16x128xbf16>
    %129 = vector.shape_cast %126 : vector<16x128xbf16> to vector<1x16x128xbf16>
    tpu.vector_store %arg9[%c2_53, %c0_54, %c0_55], %129 {strides = array<i32>} : memref<3x288x128xbf16, #tpu.memory_space<vmem>>, vector<1x16x128xbf16>,
    %130 = vector.extract_strided_slice %122 {offsets = [0, 0], sizes = [16, 128], strides = [1, 1]} : vector<256x128xbf16> to vector<16x128xbf16>
    %c2_56 = arith.constant 2 : index
    %c272_57 = arith.constant 272 : index
    %c0_58 = arith.constant 0 : index
    %131 = vector.load %arg9[%c2_56, %c272_57, %c0_58] : memref<3x288x128xbf16, #tpu.memory_space<vmem>>, vector<1x16x128xbf16>
    %132 = vector.shape_cast %131 : vector<1x16x128xbf16> to vector<16x128xbf16>
    %133 = vector.shape_cast %130 : vector<16x128xbf16> to vector<1x16x128xbf16>
    tpu.vector_store %arg9[%c2_56, %c272_57, %c0_58], %133 {strides = array<i32>} : memref<3x288x128xbf16, #tpu.memory_space<vmem>>, vector<1x16x128xbf16>,
    %c0_59 = arith.constant 0 : index
    %c0_60 = arith.constant 0 : index
    %c0_61 = arith.constant 0 : index
    %134 = vector.load %arg2[%c0_59, %c0_60, %c0_61] : memref<1x256x4xf32, #tpu.memory_space<vmem>>, vector<1x256x4xf32>
    %135 = vector.shape_cast %134 : vector<1x256x4xf32> to vector<256x4xf32>
    %136 = arith.truncf %135 : vector<256x4xf32> to vector<256x4xbf16>
    %c0_62 = arith.constant 0 : index
    %c0_63 = arith.constant 0 : index
    %137 = vector.load %arg7[%c0_62, %c0_63] : memref<4x128xbf16, #tpu.memory_space<vmem>>, vector<4x128xbf16>
    %cst_64 = arith.constant dense<0.000000e+00> : vector<256x128xf32>
    %138 = tpu.matmul %136, %137, %cst_64 {dimension_numbers = #tpu.dot_dimension_numbers<[1], [0], [0], [1], [0, 0, 1, 1], [], []>} : vector<256x4xbf16>, vector<4x128xbf16>, vector<256x128xf32> -> vector<256x128xf32>
    %c0_65 = arith.constant 0 : index
    %c0_66 = arith.constant 0 : index
    %139 = vector.load %arg6[%c0_65, %c0_66] : memref<1x128xf32, #tpu.memory_space<vmem>>, vector<1x128xf32>
    %140 = vector.broadcast %139 : vector<1x128xf32> to vector<256x128xf32>
    %141 = arith.addf %138, %140 : vector<256x128xf32>
    %c0_67 = arith.constant 0 : index
    %c0_68 = arith.constant 0 : index
    %c0_69 = arith.constant 0 : index
    %142 = vector.load %arg8[%c0_67, %c0_68, %c0_69] : memref<1x256x128xf32, #tpu.memory_space<vmem>>, vector<1x256x128xf32>
    %143 = vector.shape_cast %142 : vector<1x256x128xf32> to vector<256x128xf32>
    %144 = vector.shape_cast %141 : vector<256x128xf32> to vector<1x256x128xf32>
    tpu.vector_store %arg8[%c0_67, %c0_68, %c0_69], %144 {strides = array<i32>} : memref<1x256x128xf32, #tpu.memory_space<vmem>>, vector<1x256x128xf32>,
    %c0_70 = arith.constant 0 : index
    %c0_71 = arith.constant 0 : index
    %c0_72 = arith.constant 0 : index
    %145 = vector.load %arg9[%c0_70, %c0_71, %c0_72] : memref<3x288x128xbf16, #tpu.memory_space<vmem>>, vector<1x256x128xbf16>
    %146 = vector.shape_cast %145 : vector<1x256x128xbf16> to vector<256x128xbf16>
    %c0_73 = arith.constant 0 : index
    %c0_74 = arith.constant 0 : index
    %c0_75 = arith.constant 0 : index
    %147 = vector.load %arg8[%c0_73, %c0_74, %c0_75] : memref<1x256x128xf32, #tpu.memory_space<vmem>>, vector<1x256x128xf32>
    %148 = vector.shape_cast %147 : vector<1x256x128xf32> to vector<256x128xf32>
    %c0_76 = arith.constant 0 : index
    %c0_77 = arith.constant 0 : index
    %c0_78 = arith.constant 0 : index
    %149 = vector.load %arg5[%c0_76, %c0_77, %c0_78] : memref<9x128x128xbf16, #tpu.memory_space<vmem>>, vector<1x128x128xbf16>
    %150 = vector.shape_cast %149 : vector<1x128x128xbf16> to vector<128x128xbf16>
    %cst_79 = arith.constant dense<0.000000e+00> : vector<256x128xf32>
    %151 = tpu.matmul %146, %150, %cst_79 {dimension_numbers = #tpu.dot_dimension_numbers<[1], [0], [0], [1], [0, 0, 1, 1], [], []>} : vector<256x128xbf16>, vector<128x128xbf16>, vector<256x128xf32> -> vector<256x128xf32>
    %152 = arith.addf %148, %151 : vector<256x128xf32>
    %c0_80 = arith.constant 0 : index
    %c0_81 = arith.constant 0 : index
    %c0_82 = arith.constant 0 : index
    %153 = vector.load %arg8[%c0_80, %c0_81, %c0_82] : memref<1x256x128xf32, #tpu.memory_space<vmem>>, vector<1x256x128xf32>
    %154 = vector.shape_cast %153 : vector<1x256x128xf32> to vector<256x128xf32>
    %155 = vector.shape_cast %152 : vector<256x128xf32> to vector<1x256x128xf32>
    tpu.vector_store %arg8[%c0_80, %c0_81, %c0_82], %155 {strides = array<i32>} : memref<1x256x128xf32, #tpu.memory_space<vmem>>, vector<1x256x128xf32>,
    %c1_83 = arith.constant 1 : index
    %c0_84 = arith.constant 0 : index
    %c0_85 = arith.constant 0 : index
    %156 = vector.load %arg9[%c1_83, %c0_84, %c0_85] : memref<3x288x128xbf16, #tpu.memory_space<vmem>>, vector<1x256x128xbf16>
    %157 = vector.shape_cast %156 : vector<1x256x128xbf16> to vector<256x128xbf16>
    %c0_86 = arith.constant 0 : index
    %c0_87 = arith.constant 0 : index
    %c0_88 = arith.constant 0 : index
    %158 = vector.load %arg8[%c0_86, %c0_87, %c0_88] : memref<1x256x128xf32, #tpu.memory_space<vmem>>, vector<1x256x128xf32>
    %159 = vector.shape_cast %158 : vector<1x256x128xf32> to vector<256x128xf32>
    %c1_89 = arith.constant 1 : index
    %c0_90 = arith.constant 0 : index
    %c0_91 = arith.constant 0 : index
    %160 = vector.load %arg5[%c1_89, %c0_90, %c0_91] : memref<9x128x128xbf16, #tpu.memory_space<vmem>>, vector<1x128x128xbf16>
    %161 = vector.shape_cast %160 : vector<1x128x128xbf16> to vector<128x128xbf16>
    %cst_92 = arith.constant dense<0.000000e+00> : vector<256x128xf32>
    %162 = tpu.matmul %157, %161, %cst_92 {dimension_numbers = #tpu.dot_dimension_numbers<[1], [0], [0], [1], [0, 0, 1, 1], [], []>} : vector<256x128xbf16>, vector<128x128xbf16>, vector<256x128xf32> -> vector<256x128xf32>
    %163 = arith.addf %159, %162 : vector<256x128xf32>
    %c0_93 = arith.constant 0 : index
    %c0_94 = arith.constant 0 : index
    %c0_95 = arith.constant 0 : index
    %164 = vector.load %arg8[%c0_93, %c0_94, %c0_95] : memref<1x256x128xf32, #tpu.memory_space<vmem>>, vector<1x256x128xf32>
    %165 = vector.shape_cast %164 : vector<1x256x128xf32> to vector<256x128xf32>
    %166 = vector.shape_cast %163 : vector<256x128xf32> to vector<1x256x128xf32>
    tpu.vector_store %arg8[%c0_93, %c0_94, %c0_95], %166 {strides = array<i32>} : memref<1x256x128xf32, #tpu.memory_space<vmem>>, vector<1x256x128xf32>,
    %c2_96 = arith.constant 2 : index
    %c0_97 = arith.constant 0 : index
    %c0_98 = arith.constant 0 : index
    %167 = vector.load %arg9[%c2_96, %c0_97, %c0_98] : memref<3x288x128xbf16, #tpu.memory_space<vmem>>, vector<1x256x128xbf16>
    %168 = vector.shape_cast %167 : vector<1x256x128xbf16> to vector<256x128xbf16>
    %c0_99 = arith.constant 0 : index
    %c0_100 = arith.constant 0 : index
    %c0_101 = arith.constant 0 : index
    %169 = vector.load %arg8[%c0_99, %c0_100, %c0_101] : memref<1x256x128xf32, #tpu.memory_space<vmem>>, vector<1x256x128xf32>
    %170 = vector.shape_cast %169 : vector<1x256x128xf32> to vector<256x128xf32>
    %c2_102 = arith.constant 2 : index
    %c0_103 = arith.constant 0 : index
    %c0_104 = arith.constant 0 : index
    %171 = vector.load %arg5[%c2_102, %c0_103, %c0_104] : memref<9x128x128xbf16, #tpu.memory_space<vmem>>, vector<1x128x128xbf16>
    %172 = vector.shape_cast %171 : vector<1x128x128xbf16> to vector<128x128xbf16>
    %cst_105 = arith.constant dense<0.000000e+00> : vector<256x128xf32>
    %173 = tpu.matmul %168, %172, %cst_105 {dimension_numbers = #tpu.dot_dimension_numbers<[1], [0], [0], [1], [0, 0, 1, 1], [], []>} : vector<256x128xbf16>, vector<128x128xbf16>, vector<256x128xf32> -> vector<256x128xf32>
    %174 = arith.addf %170, %173 : vector<256x128xf32>
    %c0_106 = arith.constant 0 : index
    %c0_107 = arith.constant 0 : index
    %c0_108 = arith.constant 0 : index
    %175 = vector.load %arg8[%c0_106, %c0_107, %c0_108] : memref<1x256x128xf32, #tpu.memory_space<vmem>>, vector<1x256x128xf32>
    %176 = vector.shape_cast %175 : vector<1x256x128xf32> to vector<256x128xf32>
    %177 = vector.shape_cast %174 : vector<256x128xf32> to vector<1x256x128xf32>
    tpu.vector_store %arg8[%c0_106, %c0_107, %c0_108], %177 {strides = array<i32>} : memref<1x256x128xf32, #tpu.memory_space<vmem>>, vector<1x256x128xf32>,
    %c0_109 = arith.constant 0 : index
    %c16_110 = arith.constant 16 : index
    %c0_111 = arith.constant 0 : index
    %178 = vector.load %arg9[%c0_109, %c16_110, %c0_111] : memref<3x288x128xbf16, #tpu.memory_space<vmem>>, vector<1x256x128xbf16>
    %179 = vector.shape_cast %178 : vector<1x256x128xbf16> to vector<256x128xbf16>
    %c0_112 = arith.constant 0 : index
    %c0_113 = arith.constant 0 : index
    %c0_114 = arith.constant 0 : index
    %180 = vector.load %arg8[%c0_112, %c0_113, %c0_114] : memref<1x256x128xf32, #tpu.memory_space<vmem>>, vector<1x256x128xf32>
    %181 = vector.shape_cast %180 : vector<1x256x128xf32> to vector<256x128xf32>
    %c3 = arith.constant 3 : index
    %c0_115 = arith.constant 0 : index
    %c0_116 = arith.constant 0 : index
    %182 = vector.load %arg5[%c3, %c0_115, %c0_116] : memref<9x128x128xbf16, #tpu.memory_space<vmem>>, vector<1x128x128xbf16>
    %183 = vector.shape_cast %182 : vector<1x128x128xbf16> to vector<128x128xbf16>
    %cst_117 = arith.constant dense<0.000000e+00> : vector<256x128xf32>
    %184 = tpu.matmul %179, %183, %cst_117 {dimension_numbers = #tpu.dot_dimension_numbers<[1], [0], [0], [1], [0, 0, 1, 1], [], []>} : vector<256x128xbf16>, vector<128x128xbf16>, vector<256x128xf32> -> vector<256x128xf32>
    %185 = arith.addf %181, %184 : vector<256x128xf32>
    %c0_118 = arith.constant 0 : index
    %c0_119 = arith.constant 0 : index
    %c0_120 = arith.constant 0 : index
    %186 = vector.load %arg8[%c0_118, %c0_119, %c0_120] : memref<1x256x128xf32, #tpu.memory_space<vmem>>, vector<1x256x128xf32>
    %187 = vector.shape_cast %186 : vector<1x256x128xf32> to vector<256x128xf32>
    %188 = vector.shape_cast %185 : vector<256x128xf32> to vector<1x256x128xf32>
    tpu.vector_store %arg8[%c0_118, %c0_119, %c0_120], %188 {strides = array<i32>} : memref<1x256x128xf32, #tpu.memory_space<vmem>>, vector<1x256x128xf32>,
    %c1_121 = arith.constant 1 : index
    %c16_122 = arith.constant 16 : index
    %c0_123 = arith.constant 0 : index
    %189 = vector.load %arg9[%c1_121, %c16_122, %c0_123] : memref<3x288x128xbf16, #tpu.memory_space<vmem>>, vector<1x256x128xbf16>
    %190 = vector.shape_cast %189 : vector<1x256x128xbf16> to vector<256x128xbf16>
    %c0_124 = arith.constant 0 : index
    %c0_125 = arith.constant 0 : index
    %c0_126 = arith.constant 0 : index
    %191 = vector.load %arg8[%c0_124, %c0_125, %c0_126] : memref<1x256x128xf32, #tpu.memory_space<vmem>>, vector<1x256x128xf32>
    %192 = vector.shape_cast %191 : vector<1x256x128xf32> to vector<256x128xf32>
    %c4 = arith.constant 4 : index
    %c0_127 = arith.constant 0 : index
    %c0_128 = arith.constant 0 : index
    %193 = vector.load %arg5[%c4, %c0_127, %c0_128] : memref<9x128x128xbf16, #tpu.memory_space<vmem>>, vector<1x128x128xbf16>
    %194 = vector.shape_cast %193 : vector<1x128x128xbf16> to vector<128x128xbf16>
    %cst_129 = arith.constant dense<0.000000e+00> : vector<256x128xf32>
    %195 = tpu.matmul %190, %194, %cst_129 {dimension_numbers = #tpu.dot_dimension_numbers<[1], [0], [0], [1], [0, 0, 1, 1], [], []>} : vector<256x128xbf16>, vector<128x128xbf16>, vector<256x128xf32> -> vector<256x128xf32>
    %196 = arith.addf %192, %195 : vector<256x128xf32>
    %c0_130 = arith.constant 0 : index
    %c0_131 = arith.constant 0 : index
    %c0_132 = arith.constant 0 : index
    %197 = vector.load %arg8[%c0_130, %c0_131, %c0_132] : memref<1x256x128xf32, #tpu.memory_space<vmem>>, vector<1x256x128xf32>
    %198 = vector.shape_cast %197 : vector<1x256x128xf32> to vector<256x128xf32>
    %199 = vector.shape_cast %196 : vector<256x128xf32> to vector<1x256x128xf32>
    tpu.vector_store %arg8[%c0_130, %c0_131, %c0_132], %199 {strides = array<i32>} : memref<1x256x128xf32, #tpu.memory_space<vmem>>, vector<1x256x128xf32>,
    %c2_133 = arith.constant 2 : index
    %c16_134 = arith.constant 16 : index
    %c0_135 = arith.constant 0 : index
    %200 = vector.load %arg9[%c2_133, %c16_134, %c0_135] : memref<3x288x128xbf16, #tpu.memory_space<vmem>>, vector<1x256x128xbf16>
    %201 = vector.shape_cast %200 : vector<1x256x128xbf16> to vector<256x128xbf16>
    %c0_136 = arith.constant 0 : index
    %c0_137 = arith.constant 0 : index
    %c0_138 = arith.constant 0 : index
    %202 = vector.load %arg8[%c0_136, %c0_137, %c0_138] : memref<1x256x128xf32, #tpu.memory_space<vmem>>, vector<1x256x128xf32>
    %203 = vector.shape_cast %202 : vector<1x256x128xf32> to vector<256x128xf32>
    %c5 = arith.constant 5 : index
    %c0_139 = arith.constant 0 : index
    %c0_140 = arith.constant 0 : index
    %204 = vector.load %arg5[%c5, %c0_139, %c0_140] : memref<9x128x128xbf16, #tpu.memory_space<vmem>>, vector<1x128x128xbf16>
    %205 = vector.shape_cast %204 : vector<1x128x128xbf16> to vector<128x128xbf16>
    %cst_141 = arith.constant dense<0.000000e+00> : vector<256x128xf32>
    %206 = tpu.matmul %201, %205, %cst_141 {dimension_numbers = #tpu.dot_dimension_numbers<[1], [0], [0], [1], [0, 0, 1, 1], [], []>} : vector<256x128xbf16>, vector<128x128xbf16>, vector<256x128xf32> -> vector<256x128xf32>
    %207 = arith.addf %203, %206 : vector<256x128xf32>
    %c0_142 = arith.constant 0 : index
    %c0_143 = arith.constant 0 : index
    %c0_144 = arith.constant 0 : index
    %208 = vector.load %arg8[%c0_142, %c0_143, %c0_144] : memref<1x256x128xf32, #tpu.memory_space<vmem>>, vector<1x256x128xf32>
    %209 = vector.shape_cast %208 : vector<1x256x128xf32> to vector<256x128xf32>
    %210 = vector.shape_cast %207 : vector<256x128xf32> to vector<1x256x128xf32>
    tpu.vector_store %arg8[%c0_142, %c0_143, %c0_144], %210 {strides = array<i32>} : memref<1x256x128xf32, #tpu.memory_space<vmem>>, vector<1x256x128xf32>,
    %c0_145 = arith.constant 0 : index
    %c32 = arith.constant 32 : index
    %c0_146 = arith.constant 0 : index
    %211 = vector.load %arg9[%c0_145, %c32, %c0_146] : memref<3x288x128xbf16, #tpu.memory_space<vmem>>, vector<1x256x128xbf16>
    %212 = vector.shape_cast %211 : vector<1x256x128xbf16> to vector<256x128xbf16>
    %c0_147 = arith.constant 0 : index
    %c0_148 = arith.constant 0 : index
    %c0_149 = arith.constant 0 : index
    %213 = vector.load %arg8[%c0_147, %c0_148, %c0_149] : memref<1x256x128xf32, #tpu.memory_space<vmem>>, vector<1x256x128xf32>
    %214 = vector.shape_cast %213 : vector<1x256x128xf32> to vector<256x128xf32>
    %c6 = arith.constant 6 : index
    %c0_150 = arith.constant 0 : index
    %c0_151 = arith.constant 0 : index
    %215 = vector.load %arg5[%c6, %c0_150, %c0_151] : memref<9x128x128xbf16, #tpu.memory_space<vmem>>, vector<1x128x128xbf16>
    %216 = vector.shape_cast %215 : vector<1x128x128xbf16> to vector<128x128xbf16>
    %cst_152 = arith.constant dense<0.000000e+00> : vector<256x128xf32>
    %217 = tpu.matmul %212, %216, %cst_152 {dimension_numbers = #tpu.dot_dimension_numbers<[1], [0], [0], [1], [0, 0, 1, 1], [], []>} : vector<256x128xbf16>, vector<128x128xbf16>, vector<256x128xf32> -> vector<256x128xf32>
    %218 = arith.addf %214, %217 : vector<256x128xf32>
    %c0_153 = arith.constant 0 : index
    %c0_154 = arith.constant 0 : index
    %c0_155 = arith.constant 0 : index
    %219 = vector.load %arg8[%c0_153, %c0_154, %c0_155] : memref<1x256x128xf32, #tpu.memory_space<vmem>>, vector<1x256x128xf32>
    %220 = vector.shape_cast %219 : vector<1x256x128xf32> to vector<256x128xf32>
    %221 = vector.shape_cast %218 : vector<256x128xf32> to vector<1x256x128xf32>
    tpu.vector_store %arg8[%c0_153, %c0_154, %c0_155], %221 {strides = array<i32>} : memref<1x256x128xf32, #tpu.memory_space<vmem>>, vector<1x256x128xf32>,
    %c1_156 = arith.constant 1 : index
    %c32_157 = arith.constant 32 : index
    %c0_158 = arith.constant 0 : index
    %222 = vector.load %arg9[%c1_156, %c32_157, %c0_158] : memref<3x288x128xbf16, #tpu.memory_space<vmem>>, vector<1x256x128xbf16>
    %223 = vector.shape_cast %222 : vector<1x256x128xbf16> to vector<256x128xbf16>
    %c0_159 = arith.constant 0 : index
    %c0_160 = arith.constant 0 : index
    %c0_161 = arith.constant 0 : index
    %224 = vector.load %arg8[%c0_159, %c0_160, %c0_161] : memref<1x256x128xf32, #tpu.memory_space<vmem>>, vector<1x256x128xf32>
    %225 = vector.shape_cast %224 : vector<1x256x128xf32> to vector<256x128xf32>
    %c7 = arith.constant 7 : index
    %c0_162 = arith.constant 0 : index
    %c0_163 = arith.constant 0 : index
    %226 = vector.load %arg5[%c7, %c0_162, %c0_163] : memref<9x128x128xbf16, #tpu.memory_space<vmem>>, vector<1x128x128xbf16>
    %227 = vector.shape_cast %226 : vector<1x128x128xbf16> to vector<128x128xbf16>
    %cst_164 = arith.constant dense<0.000000e+00> : vector<256x128xf32>
    %228 = tpu.matmul %223, %227, %cst_164 {dimension_numbers = #tpu.dot_dimension_numbers<[1], [0], [0], [1], [0, 0, 1, 1], [], []>} : vector<256x128xbf16>, vector<128x128xbf16>, vector<256x128xf32> -> vector<256x128xf32>
    %229 = arith.addf %225, %228 : vector<256x128xf32>
    %c0_165 = arith.constant 0 : index
    %c0_166 = arith.constant 0 : index
    %c0_167 = arith.constant 0 : index
    %230 = vector.load %arg8[%c0_165, %c0_166, %c0_167] : memref<1x256x128xf32, #tpu.memory_space<vmem>>, vector<1x256x128xf32>
    %231 = vector.shape_cast %230 : vector<1x256x128xf32> to vector<256x128xf32>
    %232 = vector.shape_cast %229 : vector<256x128xf32> to vector<1x256x128xf32>
    tpu.vector_store %arg8[%c0_165, %c0_166, %c0_167], %232 {strides = array<i32>} : memref<1x256x128xf32, #tpu.memory_space<vmem>>, vector<1x256x128xf32>,
    %c2_168 = arith.constant 2 : index
    %c32_169 = arith.constant 32 : index
    %c0_170 = arith.constant 0 : index
    %233 = vector.load %arg9[%c2_168, %c32_169, %c0_170] : memref<3x288x128xbf16, #tpu.memory_space<vmem>>, vector<1x256x128xbf16>
    %234 = vector.shape_cast %233 : vector<1x256x128xbf16> to vector<256x128xbf16>
    %c0_171 = arith.constant 0 : index
    %c0_172 = arith.constant 0 : index
    %c0_173 = arith.constant 0 : index
    %235 = vector.load %arg8[%c0_171, %c0_172, %c0_173] : memref<1x256x128xf32, #tpu.memory_space<vmem>>, vector<1x256x128xf32>
    %236 = vector.shape_cast %235 : vector<1x256x128xf32> to vector<256x128xf32>
    %c8 = arith.constant 8 : index
    %c0_174 = arith.constant 0 : index
    %c0_175 = arith.constant 0 : index
    %237 = vector.load %arg5[%c8, %c0_174, %c0_175] : memref<9x128x128xbf16, #tpu.memory_space<vmem>>, vector<1x128x128xbf16>
    %238 = vector.shape_cast %237 : vector<1x128x128xbf16> to vector<128x128xbf16>
    %cst_176 = arith.constant dense<0.000000e+00> : vector<256x128xf32>
    %239 = tpu.matmul %234, %238, %cst_176 {dimension_numbers = #tpu.dot_dimension_numbers<[1], [0], [0], [1], [0, 0, 1, 1], [], []>} : vector<256x128xbf16>, vector<128x128xbf16>, vector<256x128xf32> -> vector<256x128xf32>
    %240 = arith.addf %236, %239 : vector<256x128xf32>
    %c0_177 = arith.constant 0 : index
    %c0_178 = arith.constant 0 : index
    %c0_179 = arith.constant 0 : index
    %241 = vector.load %arg8[%c0_177, %c0_178, %c0_179] : memref<1x256x128xf32, #tpu.memory_space<vmem>>, vector<1x256x128xf32>
    %242 = vector.shape_cast %241 : vector<1x256x128xf32> to vector<256x128xf32>
    %243 = vector.shape_cast %240 : vector<256x128xf32> to vector<1x256x128xf32>
    tpu.vector_store %arg8[%c0_177, %c0_178, %c0_179], %243 {strides = array<i32>} : memref<1x256x128xf32, #tpu.memory_space<vmem>>, vector<1x256x128xf32>,
    return
  }
  func.func @transform_0(%arg0: i32) -> (i32, i32, i32) {
    %c0_i32 = arith.constant 0 : i32
    %c0_i32_0 = arith.constant 0 : i32
    %c0_i32_1 = arith.constant 0 : i32
    return %arg0, %c0_i32, %c0_i32_0 : i32, i32, i32
  }
  func.func @transform_1(%arg0: i32) -> (i32, i32, i32) {
    %c0_i32 = arith.constant 0 : i32
    %c0_i32_0 = arith.constant 0 : i32
    %c0_i32_1 = arith.constant 0 : i32
    return %arg0, %c0_i32, %c0_i32_0 : i32, i32, i32
  }
  func.func @transform_2(%arg0: i32) -> (i32, i32) {
    %c0_i32 = arith.constant 0 : i32
    %c0_i32_0 = arith.constant 0 : i32
    %c0_i32_1 = arith.constant 0 : i32
    return %c0_i32, %c0_i32_0 : i32, i32
  }
  func.func @transform_3(%arg0: i32) -> (i32, i32) {
    %c0_i32 = arith.constant 0 : i32
    %c0_i32_0 = arith.constant 0 : i32
    %c0_i32_1 = arith.constant 0 : i32
    return %c0_i32, %c0_i32_0 : i32, i32
  }
  func.func @transform_4(%arg0: i32) -> (i32, i32, i32) {
    %c0_i32 = arith.constant 0 : i32
    %c0_i32_0 = arith.constant 0 : i32
    %c0_i32_1 = arith.constant 0 : i32
    %c0_i32_2 = arith.constant 0 : i32
    return %c0_i32, %c0_i32_0, %c0_i32_1 : i32, i32, i32
  }
  func.func @transform_5(%arg0: i32) -> (i32, i32) {
    %c0_i32 = arith.constant 0 : i32
    %c0_i32_0 = arith.constant 0 : i32
    %c0_i32_1 = arith.constant 0 : i32
    return %c0_i32, %c0_i32_0 : i32, i32
  }
  func.func @transform_6(%arg0: i32) -> (i32, i32) {
    %c0_i32 = arith.constant 0 : i32
    %c0_i32_0 = arith.constant 0 : i32
    %c0_i32_1 = arith.constant 0 : i32
    return %c0_i32, %c0_i32_0 : i32, i32
  }
  func.func @transform_7(%arg0: i32) -> (i32, i32, i32) {
    %c0_i32 = arith.constant 0 : i32
    %c0_i32_0 = arith.constant 0 : i32
    %c0_i32_1 = arith.constant 0 : i32
    return %arg0, %c0_i32, %c0_i32_0 : i32, i32, i32
  }
}

</mosaic_0001>

<llo_original>
// kernel: downblock_pallas.1
$region0: #{downblock_pallas.1}
  #allocation0 [shape = 'u32[]', space=smem, size = 0x4, offset = 0x4, fixed_abs, tag = 'smem constant byte address 0x4 - core index']
  #allocation1 [shape = 'u32[144,128]{1,0:T(1,128)}', space=vmem, size = 0x12000, scoped, tag = 'internal scratch']
  #allocation2 [shape = 'bf16[3,288,128]{2,1,0:T(8,128)(2,1)}', space=vmem, size = 0x36000, scoped, tag = 'scratch operand']
  %s0 = inlined_call_operand.vmem [shape: f32[2,256,36], index: 0, kind: input, shape index: {}]
  %s1 = inlined_call_operand.vmem [shape: f32[2,256,4], index: 1, kind: input, shape index: {}]
  %s2 = inlined_call_operand.vmem [shape: bf16[36,128], index: 2, kind: input, shape index: {}]
  %s3 = inlined_call_operand.vmem [shape: f32[1,128], index: 3, kind: input, shape index: {}]
  %s4 = inlined_call_operand.vmem [shape: bf16[9,128,128], index: 4, kind: input, shape index: {}]
  %s5 = inlined_call_operand.vmem [shape: f32[1,128], index: 5, kind: input, shape index: {}]
  %s6 = inlined_call_operand.vmem [shape: bf16[4,128], index: 6, kind: input, shape index: {}]
  %s7 = inlined_call_operand.vmem [shape: f32[2,256,128], index: 7, kind: output, shape index: {}]
  %s8 = sld [smem:[#allocation0]]
  $region61: #{downblock_pallas.1} parent=0
    _
  %s10 = ssub.s32 1, %s8
  %s11 = scalar_select 0, %s10, %s8
  loop: start=0, step=1, limit=4
  $region2: #{downblock_pallas.1} parent=0 // loop_pre_header
    _
  $region3: #{downblock_pallas.1} parent=0 // loop_header
    %s13 = sphi 0, %s17
    %p14 = scmp.ge.s32.totalorder %s13, 4
    %s23 = sphi 0, %s25
    %s26 = sphi 0, %s23
    %s27 = sphi 0, %s26
    %s43 = sphi 0, %s27
    %s49 = sphi 0, %s51
    %s52 = sphi 0, %s49
    %s53 = sphi 0, %s52
    %s69 = sphi 0, %s53
    %s73 = sphi 0, %s73
    %s75 = sphi 0, %s73
    %s76 = sphi 0, %s75
    %s90 = sphi 0, %s76
    %s94 = sphi 0, %s94
    %s96 = sphi 0, %s94
    %s97 = sphi 0, %s96
    %s111 = sphi 0, %s97
    %s115 = sphi 0, %s115
    %s117 = sphi 0, %s115
    %s118 = sphi 0, %s117
    %s132 = sphi 0, %s118
    %s136 = sphi 0, %s136
    %s138 = sphi 0, %s136
    %s139 = sphi 0, %s138
    %s153 = sphi 0, %s139
    %s157 = sphi 0, %s157
    %s159 = sphi 0, %s157
    %s160 = sphi 0, %s159
    %s174 = sphi 0, %s160
    %s180 = sphi 0, %s182
    %s183 = sphi 0, %s180
    %s184 = sphi 0, %s183
    %s200 = sphi 0, %s184
  $region4: #{downblock_pallas.1} parent=0 // loop_header_branch
    %16 = sbr.rel (%p14) target = $region8
  $region5: #{downblock_pallas.1} parent=0 // loop_body
    %s18 = ssub.s32 %s13, 1
    %s19 = ssub.s32 %s13, 2
    %s20 = sadd.s32 %s13, 1
    %s21 = ssub.s32 %s13, %s20
    %p22 = scmp.eq.s32.totalorder %s21, 0
    %s24 = sadd.s32 %s23, 1
    %s25 = scalar_select %p22, %s23, %s24
    %p28 = pneg %p22
    %p29 = scmp.eq.s32.totalorder %s13, 1
    %p30 = por %p28, %p29
    %p31 = scmp.ne.s32.totalorder %s23, %s26
    %p32 = scmp.eq.s32.totalorder %s13, 0
    %p33 = por %p31, %p32
    %p34 = scmp.ne.s32.totalorder %s23, %s26
    %p35 = scmp.eq.s32.totalorder %s18, 1
    %p36 = por %p34, %p35
    %p37 = scmp.ne.s32.totalorder %s26, %s27
    %p38 = scmp.eq.s32.totalorder %s18, 0
    %p39 = por %p37, %p38
    %p40 = scmp.ne.s32.totalorder %s26, %s27
    %p41 = scmp.eq.s32.totalorder %s19, 1
    %p42 = por %p40, %p41
    %p44 = scmp.ne.s32.totalorder %s27, %s43
    %p45 = scmp.eq.s32.totalorder %s19, 0
    %p46 = por %p44, %p45
    %s47 = ssub.s32 %s13, %s20
    %p48 = scmp.eq.s32.totalorder %s47, 0
    %s50 = sadd.s32 %s49, 1
    %s51 = scalar_select %p48, %s49, %s50
    %p54 = pneg %p48
    %p55 = scmp.eq.s32.totalorder %s13, 1
    %p56 = por %p54, %p55
    %p57 = scmp.ne.s32.totalorder %s49, %s52
    %p58 = scmp.eq.s32.totalorder %s13, 0
    %p59 = por %p57, %p58
    %p60 = scmp.ne.s32.totalorder %s49, %s52
    %p61 = scmp.eq.s32.totalorder %s18, 1
    %p62 = por %p60, %p61
    %p63 = scmp.ne.s32.totalorder %s52, %s53
    %p64 = scmp.eq.s32.totalorder %s18, 0
    %p65 = por %p63, %p64
    %p66 = scmp.ne.s32.totalorder %s52, %s53
    %p67 = scmp.eq.s32.totalorder %s19, 1
    %p68 = por %p66, %p67
    %p70 = scmp.ne.s32.totalorder %s53, %s69
    %p71 = scmp.eq.s32.totalorder %s19, 0
    %p72 = por %p70, %p71
    %s74 = sadd.s32 %s73, 1
    %p77 = scmp.eq.s32.totalorder %s13, 1
    %p78 = scmp.ne.s32.totalorder %s73, %s75
    %p79 = scmp.eq.s32.totalorder %s13, 0
    %p80 = por %p78, %p79
    %p81 = scmp.ne.s32.totalorder %s73, %s75
    %p82 = scmp.eq.s32.totalorder %s18, 1
    %p83 = por %p81, %p82
    %p84 = scmp.ne.s32.totalorder %s75, %s76
    %p85 = scmp.eq.s32.totalorder %s18, 0
    %p86 = por %p84, %p85
    %p87 = scmp.ne.s32.totalorder %s75, %s76
    %p88 = scmp.eq.s32.totalorder %s19, 1
    %p89 = por %p87, %p88
    %p91 = scmp.ne.s32.totalorder %s76, %s90
    %p92 = scmp.eq.s32.totalorder %s19, 0
    %p93 = por %p91, %p92
    %s95 = sadd.s32 %s94, 1
    %p98 = scmp.eq.s32.totalorder %s13, 1
    %p99 = scmp.ne.s32.totalorder %s94, %s96
    %p100 = scmp.eq.s32.totalorder %s13, 0
    %p101 = por %p99, %p100
    %p102 = scmp.ne.s32.totalorder %s94, %s96
    %p103 = scmp.eq.s32.totalorder %s18, 1
    %p104 = por %p102, %p103
    %p105 = scmp.ne.s32.totalorder %s96, %s97
    %p106 = scmp.eq.s32.totalorder %s18, 0
    %p107 = por %p105, %p106
    %p108 = scmp.ne.s32.totalorder %s96, %s97
    %p109 = scmp.eq.s32.totalorder %s19, 1
    %p110 = por %p108, %p109
    %p112 = scmp.ne.s32.totalorder %s97, %s111
    %p113 = scmp.eq.s32.totalorder %s19, 0
    %p114 = por %p112, %p113
    %s116 = sadd.s32 %s115, 1
    %p119 = scmp.eq.s32.totalorder %s13, 1
    %p120 = scmp.ne.s32.totalorder %s115, %s117
    %p121 = scmp.eq.s32.totalorder %s13, 0
    %p122 = por %p120, %p121
    %p123 = scmp.ne.s32.totalorder %s115, %s117
    %p124 = scmp.eq.s32.totalorder %s18, 1
    %p125 = por %p123, %p124
    %p126 = scmp.ne.s32.totalorder %s117, %s118
    %p127 = scmp.eq.s32.totalorder %s18, 0
    %p128 = por %p126, %p127
    %p129 = scmp.ne.s32.totalorder %s117, %s118
    %p130 = scmp.eq.s32.totalorder %s19, 1
    %p131 = por %p129, %p130
    %p133 = scmp.ne.s32.totalorder %s118, %s132
    %p134 = scmp.eq.s32.totalorder %s19, 0
    %p135 = por %p133, %p134
    %s137 = sadd.s32 %s136, 1
    %p140 = scmp.eq.s32.totalorder %s13, 1
    %p141 = scmp.ne.s32.totalorder %s136, %s138
    %p142 = scmp.eq.s32.totalorder %s13, 0
    %p143 = por %p141, %p142
    %p144 = scmp.ne.s32.totalorder %s136, %s138
    %p145 = scmp.eq.s32.totalorder %s18, 1
    %p146 = por %p144, %p145
    %p147 = scmp.ne.s32.totalorder %s138, %s139
    %p148 = scmp.eq.s32.totalorder %s18, 0
    %p149 = por %p147, %p148
    %p150 = scmp.ne.s32.totalorder %s138, %s139
    %p151 = scmp.eq.s32.totalorder %s19, 1
    %p152 = por %p150, %p151
    %p154 = scmp.ne.s32.totalorder %s139, %s153
    %p155 = scmp.eq.s32.totalorder %s19, 0
    %p156 = por %p154, %p155
    %s158 = sadd.s32 %s157, 1
    %p161 = scmp.eq.s32.totalorder %s13, 1
    %p162 = scmp.ne.s32.totalorder %s157, %s159
    %p163 = scmp.eq.s32.totalorder %s13, 0
    %p164 = por %p162, %p163
    %p165 = scmp.ne.s32.totalorder %s157, %s159
    %p166 = scmp.eq.s32.totalorder %s18, 1
    %p167 = por %p165, %p166
    %p168 = scmp.ne.s32.totalorder %s159, %s160
    %p169 = scmp.eq.s32.totalorder %s18, 0
    %p170 = por %p168, %p169
    %p171 = scmp.ne.s32.totalorder %s159, %s160
    %p172 = scmp.eq.s32.totalorder %s19, 1
    %p173 = por %p171, %p172
    %p175 = scmp.ne.s32.totalorder %s160, %s174
    %p176 = scmp.eq.s32.totalorder %s19, 0
    %p177 = por %p175, %p176
    %s178 = ssub.s32 %s13, %s20
    %p179 = scmp.eq.s32.totalorder %s178, 0
    %s181 = sadd.s32 %s180, 1
    %s182 = scalar_select %p179, %s180, %s181
    %p185 = pneg %p179
    %p186 = scmp.eq.s32.totalorder %s13, 1
    %p187 = por %p185, %p186
    %p188 = scmp.ne.s32.totalorder %s180, %s183
    %p189 = scmp.eq.s32.totalorder %s13, 0
    %p190 = por %p188, %p189
    %p191 = scmp.ne.s32.totalorder %s180, %s183
    %p192 = scmp.eq.s32.totalorder %s18, 1
    %p193 = por %p191, %p192
    %p194 = scmp.ne.s32.totalorder %s183, %s184
    %p195 = scmp.eq.s32.totalorder %s18, 0
    %p196 = por %p194, %p195
    %p197 = scmp.ne.s32.totalorder %s183, %s184
    %p198 = scmp.eq.s32.totalorder %s19, 1
    %p199 = por %p197, %p198
    %p201 = scmp.ne.s32.totalorder %s184, %s200
    %p202 = scmp.eq.s32.totalorder %s19, 0
    %p203 = por %p201, %p202
    %p204 = scmp.le.s32.totalorder 1, %s13
    %p205 = scmp.lt.s32.totalorder %s13, 3
    %p206 = pnand %p204, %p205
    %p207 = pneg %p206
    // Predicated region
    $region9: #{downblock_pallas.1} parent=5 // pred_check
      _
    $region10: #{downblock_pallas.1} parent=5 // pred_check_branch
      %209 = sbr.rel (%p206) target = $region12
    $region11: #{downblock_pallas.1} parent=5 // pred_region
      %s210 = ssub.s32 %s13, 1
      // Predicated region
      $region13: #{downblock_pallas.1} parent=11 // pred_check
        %p211 = pneg %p86
      $region14: #{downblock_pallas.1} parent=11 // pred_check_branch
        %213 = sbr.rel (%p211) target = $region16
      $region15: #{downblock_pallas.1} parent=11 // pred_region
        _
      $region16: #{downblock_pallas.1} parent=11 // pred_fallthru
        _
      // Predicated region
      $region17: #{downblock_pallas.1} parent=11 // pred_check
        %p214 = pneg %p107
      $region18: #{downblock_pallas.1} parent=11 // pred_check_branch
        %216 = sbr.rel (%p214) target = $region20
      $region19: #{downblock_pallas.1} parent=11 // pred_region
        _
      $region20: #{downblock_pallas.1} parent=11 // pred_fallthru
        _
      // Predicated region
      $region21: #{downblock_pallas.1} parent=11 // pred_check
        %p217 = pneg %p128
      $region22: #{downblock_pallas.1} parent=11 // pred_check_branch
        %219 = sbr.rel (%p217) target = $region24
      $region23: #{downblock_pallas.1} parent=11 // pred_region
        _
      $region24: #{downblock_pallas.1} parent=11 // pred_fallthru
        _
      // Predicated region
      $region25: #{downblock_pallas.1} parent=11 // pred_check
        %p220 = pneg %p149
      $region26: #{downblock_pallas.1} parent=11 // pred_check_branch
        %222 = sbr.rel (%p220) target = $region28
      $region27: #{downblock_pallas.1} parent=11 // pred_region
        _
      $region28: #{downblock_pallas.1} parent=11 // pred_fallthru
        _
      // Predicated region
      $region29: #{downblock_pallas.1} parent=11 // pred_check
        %p223 = pneg %p170
      $region30: #{downblock_pallas.1} parent=11 // pred_check_branch
        %225 = sbr.rel (%p223) target = $region32
      $region31: #{downblock_pallas.1} parent=11 // pred_region
        _
      $region32: #{downblock_pallas.1} parent=11 // pred_fallthru
        _
    $region12: #{downblock_pallas.1} parent=5 // pred_fallthru
      _
    %p226 = scmp.lt.s32.totalorder %s13, 2
    // Predicated region
    $region33: #{downblock_pallas.1} parent=5 // pred_check
      %p227 = pneg %p226
    $region34: #{downblock_pallas.1} parent=5 // pred_check_branch
      %229 = sbr.rel (%p227) target = $region36
    $region35: #{downblock_pallas.1} parent=5 // pred_region
      // Predicated region
      $region37: #{downblock_pallas.1} parent=35 // pred_check
        %p230 = pneg %p33
      $region38: #{downblock_pallas.1} parent=35 // pred_check_branch
        %232 = sbr.rel (%p230) target = $region40
      $region39: #{downblock_pallas.1} parent=35 // pred_region
        %p233 = scmp.lt.s32.totalorder %s13, 1
        %s234 = scalar_select %p233, %s13, 1
        %s235 = smul.addr %s234, 32
        %s236 = smul.addr %s235, 8
        %s237 = scalar_lea.vmem %s0, %s236
      $region40: #{downblock_pallas.1} parent=35 // pred_fallthru
        _
      // Predicated region
      $region41: #{downblock_pallas.1} parent=35 // pred_check
        %p238 = pneg %p59
      $region42: #{downblock_pallas.1} parent=35 // pred_check_branch
        %240 = sbr.rel (%p238) target = $region44
      $region43: #{downblock_pallas.1} parent=35 // pred_region
        %p241 = scmp.lt.s32.totalorder %s13, 1
        %s242 = scalar_select %p241, %s13, 1
        %s243 = smul.addr %s242, 32
        %s244 = smul.addr %s243, 8
        %s245 = scalar_lea.vmem %s1, %s244
      $region44: #{downblock_pallas.1} parent=35 // pred_fallthru
        _
    $region36: #{downblock_pallas.1} parent=5 // pred_fallthru
      _
    %p246 = scmp.le.s32.totalorder 1, %s13
    %p247 = scmp.lt.s32.totalorder %s13, 3
    %p248 = pnand %p246, %p247
    %p249 = pneg %p248
    // Predicated region
    $region45: #{downblock_pallas.1} parent=5 // pred_check
      _
    $region46: #{downblock_pallas.1} parent=5 // pred_check_branch
      %251 = sbr.rel (%p248) target = $region48
    $region47: #{downblock_pallas.1} parent=5 // pred_region
      %s252 = ssub.s32 %s13, 1
      %p253 = scmp.lt.s32.totalorder %s18, 1
      %s254 = scalar_select %p253, %s18, 1
      %s255 = smul.addr %s254, 32
      %s256 = smul.addr %s255, 8
      %s257 = scalar_lea.vmem %s0, %s256
      %p258 = pneg %p39
      %p259 = pneg %p36
      %p260 = scmp.lt.s32.totalorder %s18, 1
      %s261 = scalar_select %p260, %s18, 1
      %s262 = smul.addr %s261, 32
      %s263 = smul.addr %s262, 8
      %s264 = scalar_lea.vmem %s1, %s263
      %p265 = pneg %p65
      %p266 = pneg %p62
      %p267 = pneg %p86
      %p268 = pneg %p83
      %p269 = pneg %p107
      %p270 = pneg %p104
      %p271 = pneg %p128
      %p272 = pneg %p125
      %p273 = pneg %p149
      %p274 = pneg %p146
      %p275 = pneg %p170
      %p276 = pneg %p167
      %p277 = pneg %p196
      %p278 = pneg %p193
      %p279 = scmp.lt.s32.totalorder %s18, 1
      %s280 = scalar_select %p279, %s18, 1
      %s281 = smul.addr %s280, 32
      %s282 = smul.addr %s281, 8
      %s283 = scalar_lea.vmem %s7, %s282
      %p284 = scmp.lt.s32.totalorder %s18, 1
      %s285 = scalar_select %p284, %s18, 1
      %s286 = smul.addr %s285, 32
      %s287 = smul.addr %s286, 8
      %s288 = scalar_lea.vmem %s0, %s287
      %p289 = scmp.lt.s32.totalorder %s18, 1
      %s290 = scalar_select %p289, %s18, 1
      %s291 = smul.addr %s290, 32
      %s292 = smul.addr %s291, 8
      %s293 = scalar_lea.vmem %s1, %s292
      %p294 = scmp.lt.s32.totalorder %s18, 1
      %s295 = scalar_select %p294, %s18, 1
      %s296 = smul.addr %s295, 32
      %s297 = smul.addr %s296, 8
      %s298 = scalar_lea.vmem %s7, %s297
      %v300 = vld [vmem:[%s288] sm:$0xff]
      %v301 = vld [vmem:[%s288 + $0x8] sm:$0xff]
      %v302 = vld [vmem:[%s288 + $0x10] sm:$0xff]
      %v303 = vld [vmem:[%s288 + $0x18] sm:$0xff]
      %v304 = vld [vmem:[%s288 + $0x20] sm:$0xff]
      %v305 = vld [vmem:[%s288 + $0x28] sm:$0xff]
      %v306 = vld [vmem:[%s288 + $0x30] sm:$0xff]
      %v307 = vld [vmem:[%s288 + $0x38] sm:$0xff]
      %v308 = vld [vmem:[%s288 + $0x40] sm:$0xff]
      %v309 = vld [vmem:[%s288 + $0x48] sm:$0xff]
      %v310 = vld [vmem:[%s288 + $0x50] sm:$0xff]
      %v311 = vld [vmem:[%s288 + $0x58] sm:$0xff]
      %v312 = vld [vmem:[%s288 + $0x60] sm:$0xff]
      %v313 = vld [vmem:[%s288 + $0x68] sm:$0xff]
      %v314 = vld [vmem:[%s288 + $0x70] sm:$0xff]
      %v315 = vld [vmem:[%s288 + $0x78] sm:$0xff]
      %v316 = vld [vmem:[%s288 + $0x80] sm:$0xff]
      %v317 = vld [vmem:[%s288 + $0x88] sm:$0xff]
      %v318 = vld [vmem:[%s288 + $0x90] sm:$0xff]
      %v319 = vld [vmem:[%s288 + $0x98] sm:$0xff]
      %v320 = vld [vmem:[%s288 + $0xa0] sm:$0xff]
      %v321 = vld [vmem:[%s288 + $0xa8] sm:$0xff]
      %v322 = vld [vmem:[%s288 + $0xb0] sm:$0xff]
      %v323 = vld [vmem:[%s288 + $0xb8] sm:$0xff]
      %v324 = vld [vmem:[%s288 + $0xc0] sm:$0xff]
      %v325 = vld [vmem:[%s288 + $0xc8] sm:$0xff]
      %v326 = vld [vmem:[%s288 + $0xd0] sm:$0xff]
      %v327 = vld [vmem:[%s288 + $0xd8] sm:$0xff]
      %v328 = vld [vmem:[%s288 + $0xe0] sm:$0xff]
      %v329 = vld [vmem:[%s288 + $0xe8] sm:$0xff]
      %v330 = vld [vmem:[%s288 + $0xf0] sm:$0xff]
      %v331 = vld [vmem:[%s288 + $0xf8] sm:$0xff]
      %v332 = vmul.f32 %v300, 0.5
      %v333 = vmul.f32 %v301, 0.5
      %v334 = vmul.f32 %v302, 0.5
      %v335 = vmul.f32 %v303, 0.5
      %v336 = vmul.f32 %v304, 0.5
      %v337 = vmul.f32 %v305, 0.5
      %v338 = vmul.f32 %v306, 0.5
      %v339 = vmul.f32 %v307, 0.5
      %v340 = vmul.f32 %v308, 0.5
      %v341 = vmul.f32 %v309, 0.5
      %v342 = vmul.f32 %v310, 0.5
      %v343 = vmul.f32 %v311, 0.5
      %v344 = vmul.f32 %v312, 0.5
      %v345 = vmul.f32 %v313, 0.5
      %v346 = vmul.f32 %v314, 0.5
      %v347 = vmul.f32 %v315, 0.5
      %v348 = vmul.f32 %v316, 0.5
      %v349 = vmul.f32 %v317, 0.5
      %v350 = vmul.f32 %v318, 0.5
      %v351 = vmul.f32 %v319, 0.5
      %v352 = vmul.f32 %v320, 0.5
      %v353 = vmul.f32 %v321, 0.5
      %v354 = vmul.f32 %v322, 0.5
      %v355 = vmul.f32 %v323, 0.5
      %v356 = vmul.f32 %v324, 0.5
      %v357 = vmul.f32 %v325, 0.5
      %v358 = vmul.f32 %v326, 0.5
      %v359 = vmul.f32 %v327, 0.5
      %v360 = vmul.f32 %v328, 0.5
      %v361 = vmul.f32 %v329, 0.5
      %v362 = vmul.f32 %v330, 0.5
      %v363 = vmul.f32 %v331, 0.5
      %v364 = vmul.f32 %v300, 0.70710677
      %v365 = vmul.f32 %v301, 0.70710677
      %v366 = vmul.f32 %v302, 0.70710677
      %v367 = vmul.f32 %v303, 0.70710677
      %v368 = vmul.f32 %v304, 0.70710677
      %v369 = vmul.f32 %v305, 0.70710677
      %v370 = vmul.f32 %v306, 0.70710677
      %v371 = vmul.f32 %v307, 0.70710677
      %v372 = vmul.f32 %v308, 0.70710677
      %v373 = vmul.f32 %v309, 0.70710677
      %v374 = vmul.f32 %v310, 0.70710677
      %v375 = vmul.f32 %v311, 0.70710677
      %v376 = vmul.f32 %v312, 0.70710677
      %v377 = vmul.f32 %v313, 0.70710677
      %v378 = vmul.f32 %v314, 0.70710677
      %v379 = vmul.f32 %v315, 0.70710677
      %v380 = vmul.f32 %v316, 0.70710677
      %v381 = vmul.f32 %v317, 0.70710677
      %v382 = vmul.f32 %v318, 0.70710677
      %v383 = vmul.f32 %v319, 0.70710677
      %v384 = vmul.f32 %v320, 0.70710677
      %v385 = vmul.f32 %v321, 0.70710677
      %v386 = vmul.f32 %v322, 0.70710677
      %v387 = vmul.f32 %v323, 0.70710677
      %v388 = vmul.f32 %v324, 0.70710677
      %v389 = vmul.f32 %v325, 0.70710677
      %v390 = vmul.f32 %v326, 0.70710677
      %v391 = vmul.f32 %v327, 0.70710677
      %v392 = vmul.f32 %v328, 0.70710677
      %v393 = vmul.f32 %v329, 0.70710677
      %v394 = vmul.f32 %v330, 0.70710677
      %v395 = vmul.f32 %v331, 0.70710677
      %vm396 = vcmp.ge.f32.partialorder %v364, 0.0
      %vm397 = vcmp.ge.f32.partialorder %v365, 0.0
      %vm398 = vcmp.ge.f32.partialorder %v366, 0.0
      %vm399 = vcmp.ge.f32.partialorder %v367, 0.0
      %vm400 = vcmp.ge.f32.partialorder %v368, 0.0
      %vm401 = vcmp.ge.f32.partialorder %v369, 0.0
      %vm402 = vcmp.ge.f32.partialorder %v370, 0.0
      %vm403 = vcmp.ge.f32.partialorder %v371, 0.0
      %vm404 = vcmp.ge.f32.partialorder %v372, 0.0
      %vm405 = vcmp.ge.f32.partialorder %v373, 0.0
      %vm406 = vcmp.ge.f32.partialorder %v374, 0.0
      %vm407 = vcmp.ge.f32.partialorder %v375, 0.0
      %vm408 = vcmp.ge.f32.partialorder %v376, 0.0
      %vm409 = vcmp.ge.f32.partialorder %v377, 0.0
      %vm410 = vcmp.ge.f32.partialorder %v378, 0.0
      %vm411 = vcmp.ge.f32.partialorder %v379, 0.0
      %vm412 = vcmp.ge.f32.partialorder %v380, 0.0
      %vm413 = vcmp.ge.f32.partialorder %v381, 0.0
      %vm414 = vcmp.ge.f32.partialorder %v382, 0.0
      %vm415 = vcmp.ge.f32.partialorder %v383, 0.0
      %vm416 = vcmp.ge.f32.partialorder %v384, 0.0
      %vm417 = vcmp.ge.f32.partialorder %v385, 0.0
      %vm418 = vcmp.ge.f32.partialorder %v386, 0.0
      %vm419 = vcmp.ge.f32.partialorder %v387, 0.0
      %vm420 = vcmp.ge.f32.partialorder %v388, 0.0
      %vm421 = vcmp.ge.f32.partialorder %v389, 0.0
      %vm422 = vcmp.ge.f32.partialorder %v390, 0.0
      %vm423 = vcmp.ge.f32.partialorder %v391, 0.0
      %vm424 = vcmp.ge.f32.partialorder %v392, 0.0
      %vm425 = vcmp.ge.f32.partialorder %v393, 0.0
      %vm426 = vcmp.ge.f32.partialorder %v394, 0.0
      %vm427 = vcmp.ge.f32.partialorder %v395, 0.0
      %v428 = vsel %vm396, 1.0, -1.0
      %v429 = vsel %vm397, 1.0, -1.0
      %v430 = vsel %vm398, 1.0, -1.0
      %v431 = vsel %vm399, 1.0, -1.0
      %v432 = vsel %vm400, 1.0, -1.0
      %v433 = vsel %vm401, 1.0, -1.0
      %v434 = vsel %vm402, 1.0, -1.0
      %v435 = vsel %vm403, 1.0, -1.0
      %v436 = vsel %vm404, 1.0, -1.0
      %v437 = vsel %vm405, 1.0, -1.0
      %v438 = vsel %vm406, 1.0, -1.0
      %v439 = vsel %vm407, 1.0, -1.0
      %v440 = vsel %vm408, 1.0, -1.0
      %v441 = vsel %vm409, 1.0, -1.0
      %v442 = vsel %vm410, 1.0, -1.0
      %v443 = vsel %vm411, 1.0, -1.0
      %v444 = vsel %vm412, 1.0, -1.0
      %v445 = vsel %vm413, 1.0, -1.0
      %v446 = vsel %vm414, 1.0, -1.0
      %v447 = vsel %vm415, 1.0, -1.0
      %v448 = vsel %vm416, 1.0, -1.0
      %v449 = vsel %vm417, 1.0, -1.0
      %v450 = vsel %vm418, 1.0, -1.0
      %v451 = vsel %vm419, 1.0, -1.0
      %v452 = vsel %vm420, 1.0, -1.0
      %v453 = vsel %vm421, 1.0, -1.0
      %v454 = vsel %vm422, 1.0, -1.0
      %v455 = vsel %vm423, 1.0, -1.0
      %v456 = vsel %vm424, 1.0, -1.0
      %v457 = vsel %vm425, 1.0, -1.0
      %v458 = vsel %vm426, 1.0, -1.0
      %v459 = vsel %vm427, 1.0, -1.0
      %v460 = vand.u32 2147483647, %v364
      %v461 = vand.u32 2147483647, %v365
      %v462 = vand.u32 2147483647, %v366
      %v463 = vand.u32 2147483647, %v367
      %v464 = vand.u32 2147483647, %v368
      %v465 = vand.u32 2147483647, %v369
      %v466 = vand.u32 2147483647, %v370
      %v467 = vand.u32 2147483647, %v371
      %v468 = vand.u32 2147483647, %v372
      %v469 = vand.u32 2147483647, %v373
      %v470 = vand.u32 2147483647, %v374
      %v471 = vand.u32 2147483647, %v375
      %v472 = vand.u32 2147483647, %v376
      %v473 = vand.u32 2147483647, %v377
      %v474 = vand.u32 2147483647, %v378
      %v475 = vand.u32 2147483647, %v379
      %v476 = vand.u32 2147483647, %v380
      %v477 = vand.u32 2147483647, %v381
      %v478 = vand.u32 2147483647, %v382
      %v479 = vand.u32 2147483647, %v383
      %v480 = vand.u32 2147483647, %v384
      %v481 = vand.u32 2147483647, %v385
      %v482 = vand.u32 2147483647, %v386
      %v483 = vand.u32 2147483647, %v387
      %v484 = vand.u32 2147483647, %v388
      %v485 = vand.u32 2147483647, %v389
      %v486 = vand.u32 2147483647, %v390
      %v487 = vand.u32 2147483647, %v391
      %v488 = vand.u32 2147483647, %v392
      %v489 = vand.u32 2147483647, %v393
      %v490 = vand.u32 2147483647, %v394
      %v491 = vand.u32 2147483647, %v395
      %v492 = vmul.f32 %v460, 0.3275911
      %v493 = vmul.f32 %v461, 0.3275911
      %v494 = vmul.f32 %v462, 0.3275911
      %v495 = vmul.f32 %v463, 0.3275911
      %v496 = vmul.f32 %v464, 0.3275911
      %v497 = vmul.f32 %v465, 0.3275911
      %v498 = vmul.f32 %v466, 0.3275911
      %v499 = vmul.f32 %v467, 0.3275911
      %v500 = vmul.f32 %v468, 0.3275911
      %v501 = vmul.f32 %v469, 0.3275911
      %v502 = vmul.f32 %v470, 0.3275911
      %v503 = vmul.f32 %v471, 0.3275911
      %v504 = vmul.f32 %v472, 0.3275911
      %v505 = vmul.f32 %v473, 0.3275911
      %v506 = vmul.f32 %v474, 0.3275911
      %v507 = vmul.f32 %v475, 0.3275911
      %v508 = vmul.f32 %v476, 0.3275911
      %v509 = vmul.f32 %v477, 0.3275911
      %v510 = vmul.f32 %v478, 0.3275911
      %v511 = vmul.f32 %v479, 0.3275911
      %v512 = vmul.f32 %v480, 0.3275911
      %v513 = vmul.f32 %v481, 0.3275911
      %v514 = vmul.f32 %v482, 0.3275911
      %v515 = vmul.f32 %v483, 0.3275911
      %v516 = vmul.f32 %v484, 0.3275911
      %v517 = vmul.f32 %v485, 0.3275911
      %v518 = vmul.f32 %v486, 0.3275911
      %v519 = vmul.f32 %v487, 0.3275911
      %v520 = vmul.f32 %v488, 0.3275911
      %v521 = vmul.f32 %v489, 0.3275911
      %v522 = vmul.f32 %v490, 0.3275911
      %v523 = vmul.f32 %v491, 0.3275911
      %v524 = vadd.f32 %v492, 1.0
      %v525 = vadd.f32 %v493, 1.0
      %v526 = vadd.f32 %v494, 1.0
      %v527 = vadd.f32 %v495, 1.0
      %v528 = vadd.f32 %v496, 1.0
      %v529 = vadd.f32 %v497, 1.0
      %v530 = vadd.f32 %v498, 1.0
      %v531 = vadd.f32 %v499, 1.0
      %v532 = vadd.f32 %v500, 1.0
      %v533 = vadd.f32 %v501, 1.0
      %v534 = vadd.f32 %v502, 1.0
      %v535 = vadd.f32 %v503, 1.0
      %v536 = vadd.f32 %v504, 1.0
      %v537 = vadd.f32 %v505, 1.0
      %v538 = vadd.f32 %v506, 1.0
      %v539 = vadd.f32 %v507, 1.0
      %v540 = vadd.f32 %v508, 1.0
      %v541 = vadd.f32 %v509, 1.0
      %v542 = vadd.f32 %v510, 1.0
      %v543 = vadd.f32 %v511, 1.0
      %v544 = vadd.f32 %v512, 1.0
      %v545 = vadd.f32 %v513, 1.0
      %v546 = vadd.f32 %v514, 1.0
      %v547 = vadd.f32 %v515, 1.0
      %v548 = vadd.f32 %v516, 1.0
      %v549 = vadd.f32 %v517, 1.0
      %v550 = vadd.f32 %v518, 1.0
      %v551 = vadd.f32 %v519, 1.0
      %v552 = vadd.f32 %v520, 1.0
      %v553 = vadd.f32 %v521, 1.0
      %v554 = vadd.f32 %v522, 1.0
      %v555 = vadd.f32 %v523, 1.0
      %v556 = vrcp.pop %v524
      %v557 = vrcp.pop %v525
      %v558 = vrcp.pop %v526
      %v559 = vrcp.pop %v527
      %v560 = vrcp.pop %v528
      %v561 = vrcp.pop %v529
      %v562 = vrcp.pop %v530
      %v563 = vrcp.pop %v531
      %v564 = vrcp.pop %v532
      %v565 = vrcp.pop %v533
      %v566 = vrcp.pop %v534
      %v567 = vrcp.pop %v535
      %v568 = vrcp.pop %v536
      %v569 = vrcp.pop %v537
      %v570 = vrcp.pop %v538
      %v571 = vrcp.pop %v539
      %v572 = vrcp.pop %v540
      %v573 = vrcp.pop %v541
      %v574 = vrcp.pop %v542
      %v575 = vrcp.pop %v543
      %v576 = vrcp.pop %v544
      %v577 = vrcp.pop %v545
      %v578 = vrcp.pop %v546
      %v579 = vrcp.pop %v547
      %v580 = vrcp.pop %v548
      %v581 = vrcp.pop %v549
      %v582 = vrcp.pop %v550
      %v583 = vrcp.pop %v551
      %v584 = vrcp.pop %v552
      %v585 = vrcp.pop %v553
      %v586 = vrcp.pop %v554
      %v587 = vrcp.pop %v555
      %v588 = vmul.f32 %v556, 1.0614054
      %v589 = vmul.f32 %v557, 1.0614054
      %v590 = vmul.f32 %v558, 1.0614054
      %v591 = vmul.f32 %v559, 1.0614054
      %v592 = vmul.f32 %v560, 1.0614054
      %v593 = vmul.f32 %v561, 1.0614054
      %v594 = vmul.f32 %v562, 1.0614054
      %v595 = vmul.f32 %v563, 1.0614054
      %v596 = vmul.f32 %v564, 1.0614054
      %v597 = vmul.f32 %v565, 1.0614054
      %v598 = vmul.f32 %v566, 1.0614054
      %v599 = vmul.f32 %v567, 1.0614054
      %v600 = vmul.f32 %v568, 1.0614054
      %v601 = vmul.f32 %v569, 1.0614054
      %v602 = vmul.f32 %v570, 1.0614054
      %v603 = vmul.f32 %v571, 1.0614054
      %v604 = vmul.f32 %v572, 1.0614054
      %v605 = vmul.f32 %v573, 1.0614054
      %v606 = vmul.f32 %v574, 1.0614054
      %v607 = vmul.f32 %v575, 1.0614054
      %v608 = vmul.f32 %v576, 1.0614054
      %v609 = vmul.f32 %v577, 1.0614054
      %v610 = vmul.f32 %v578, 1.0614054
      %v611 = vmul.f32 %v579, 1.0614054
      %v612 = vmul.f32 %v580, 1.0614054
      %v613 = vmul.f32 %v581, 1.0614054
      %v614 = vmul.f32 %v582, 1.0614054
      %v615 = vmul.f32 %v583, 1.0614054
      %v616 = vmul.f32 %v584, 1.0614054
      %v617 = vmul.f32 %v585, 1.0614054
      %v618 = vmul.f32 %v586, 1.0614054
      %v619 = vmul.f32 %v587, 1.0614054
      %v620 = vadd.f32 %v588, -1.4531521
      %v621 = vadd.f32 %v589, -1.4531521
      %v622 = vadd.f32 %v590, -1.4531521
      %v623 = vadd.f32 %v591, -1.4531521
      %v624 = vadd.f32 %v592, -1.4531521
      %v625 = vadd.f32 %v593, -1.4531521
      %v626 = vadd.f32 %v594, -1.4531521
      %v627 = vadd.f32 %v595, -1.4531521
      %v628 = vadd.f32 %v596, -1.4531521
      %v629 = vadd.f32 %v597, -1.4531521
      %v630 = vadd.f32 %v598, -1.4531521
      %v631 = vadd.f32 %v599, -1.4531521
      %v632 = vadd.f32 %v600, -1.4531521
      %v633 = vadd.f32 %v601, -1.4531521
      %v634 = vadd.f32 %v602, -1.4531521
      %v635 = vadd.f32 %v603, -1.4531521
      %v636 = vadd.f32 %v604, -1.4531521
      %v637 = vadd.f32 %v605, -1.4531521
      %v638 = vadd.f32 %v606, -1.4531521
      %v639 = vadd.f32 %v607, -1.4531521
      %v640 = vadd.f32 %v608, -1.4531521
      %v641 = vadd.f32 %v609, -1.4531521
      %v642 = vadd.f32 %v610, -1.4531521
      %v643 = vadd.f32 %v611, -1.4531521
      %v644 = vadd.f32 %v612, -1.4531521
      %v645 = vadd.f32 %v613, -1.4531521
      %v646 = vadd.f32 %v614, -1.4531521
      %v647 = vadd.f32 %v615, -1.4531521
      %v648 = vadd.f32 %v616, -1.4531521
      %v649 = vadd.f32 %v617, -1.4531521
      %v650 = vadd.f32 %v618, -1.4531521
      %v651 = vadd.f32 %v619, -1.4531521
      %v652 = vmul.f32 %v620, %v556
      %v653 = vmul.f32 %v621, %v557
      %v654 = vmul.f32 %v622, %v558
      %v655 = vmul.f32 %v623, %v559
      %v656 = vmul.f32 %v624, %v560
      %v657 = vmul.f32 %v625, %v561
      %v658 = vmul.f32 %v626, %v562
      %v659 = vmul.f32 %v627, %v563
      %v660 = vmul.f32 %v628, %v564
      %v661 = vmul.f32 %v629, %v565
      %v662 = vmul.f32 %v630, %v566
      %v663 = vmul.f32 %v631, %v567
      %v664 = vmul.f32 %v632, %v568
      %v665 = vmul.f32 %v633, %v569
      %v666 = vmul.f32 %v634, %v570
      %v667 = vmul.f32 %v635, %v571
      %v668 = vmul.f32 %v636, %v572
      %v669 = vmul.f32 %v637, %v573
      %v670 = vmul.f32 %v638, %v574
      %v671 = vmul.f32 %v639, %v575
      %v672 = vmul.f32 %v640, %v576
      %v673 = vmul.f32 %v641, %v577
      %v674 = vmul.f32 %v642, %v578
      %v675 = vmul.f32 %v643, %v579
      %v676 = vmul.f32 %v644, %v580
      %v677 = vmul.f32 %v645, %v581
      %v678 = vmul.f32 %v646, %v582
      %v679 = vmul.f32 %v647, %v583
      %v680 = vmul.f32 %v648, %v584
      %v681 = vmul.f32 %v649, %v585
      %v682 = vmul.f32 %v650, %v586
      %v683 = vmul.f32 %v651, %v587
      %v684 = vadd.f32 %v652, 1.4214138
      %v685 = vadd.f32 %v653, 1.4214138
      %v686 = vadd.f32 %v654, 1.4214138
      %v687 = vadd.f32 %v655, 1.4214138
      %v688 = vadd.f32 %v656, 1.4214138
      %v689 = vadd.f32 %v657, 1.4214138
      %v690 = vadd.f32 %v658, 1.4214138
      %v691 = vadd.f32 %v659, 1.4214138
      %v692 = vadd.f32 %v660, 1.4214138
      %v693 = vadd.f32 %v661, 1.4214138
      %v694 = vadd.f32 %v662, 1.4214138
      %v695 = vadd.f32 %v663, 1.4214138
      %v696 = vadd.f32 %v664, 1.4214138
      %v697 = vadd.f32 %v665, 1.4214138
      %v698 = vadd.f32 %v666, 1.4214138
      %v699 = vadd.f32 %v667, 1.4214138
      %v700 = vadd.f32 %v668, 1.4214138
      %v701 = vadd.f32 %v669, 1.4214138
      %v702 = vadd.f32 %v670, 1.4214138
      %v703 = vadd.f32 %v671, 1.4214138
      %v704 = vadd.f32 %v672, 1.4214138
      %v705 = vadd.f32 %v673, 1.4214138
      %v706 = vadd.f32 %v674, 1.4214138
      %v707 = vadd.f32 %v675, 1.4214138
      %v708 = vadd.f32 %v676, 1.4214138
      %v709 = vadd.f32 %v677, 1.4214138
      %v710 = vadd.f32 %v678, 1.4214138
      %v711 = vadd.f32 %v679, 1.4214138
      %v712 = vadd.f32 %v680, 1.4214138
      %v713 = vadd.f32 %v681, 1.4214138
      %v714 = vadd.f32 %v682, 1.4214138
      %v715 = vadd.f32 %v683, 1.4214138
      %v716 = vmul.f32 %v684, %v556
      %v717 = vmul.f32 %v685, %v557
      %v718 = vmul.f32 %v686, %v558
      %v719 = vmul.f32 %v687, %v559
      %v720 = vmul.f32 %v688, %v560
      %v721 = vmul.f32 %v689, %v561
      %v722 = vmul.f32 %v690, %v562
      %v723 = vmul.f32 %v691, %v563
      %v724 = vmul.f32 %v692, %v564
      %v725 = vmul.f32 %v693, %v565
      %v726 = vmul.f32 %v694, %v566
      %v727 = vmul.f32 %v695, %v567
      %v728 = vmul.f32 %v696, %v568
      %v729 = vmul.f32 %v697, %v569
      %v730 = vmul.f32 %v698, %v570
      %v731 = vmul.f32 %v699, %v571
      %v732 = vmul.f32 %v700, %v572
      %v733 = vmul.f32 %v701, %v573
      %v734 = vmul.f32 %v702, %v574
      %v735 = vmul.f32 %v703, %v575
      %v736 = vmul.f32 %v704, %v576
      %v737 = vmul.f32 %v705, %v577
      %v738 = vmul.f32 %v706, %v578
      %v739 = vmul.f32 %v707, %v579
      %v740 = vmul.f32 %v708, %v580
      %v741 = vmul.f32 %v709, %v581
      %v742 = vmul.f32 %v710, %v582
      %v743 = vmul.f32 %v711, %v583
      %v744 = vmul.f32 %v712, %v584
      %v745 = vmul.f32 %v713, %v585
      %v746 = vmul.f32 %v714, %v586
      %v747 = vmul.f32 %v715, %v587
      %v748 = vadd.f32 %v716, -0.28449672
      %v749 = vadd.f32 %v717, -0.28449672
      %v750 = vadd.f32 %v718, -0.28449672
      %v751 = vadd.f32 %v719, -0.28449672
      %v752 = vadd.f32 %v720, -0.28449672
      %v753 = vadd.f32 %v721, -0.28449672
      %v754 = vadd.f32 %v722, -0.28449672
      %v755 = vadd.f32 %v723, -0.28449672
      %v756 = vadd.f32 %v724, -0.28449672
      %v757 = vadd.f32 %v725, -0.28449672
      %v758 = vadd.f32 %v726, -0.28449672
      %v759 = vadd.f32 %v727, -0.28449672
      %v760 = vadd.f32 %v728, -0.28449672
      %v761 = vadd.f32 %v729, -0.28449672
      %v762 = vadd.f32 %v730, -0.28449672
      %v763 = vadd.f32 %v731, -0.28449672
      %v764 = vadd.f32 %v732, -0.28449672
      %v765 = vadd.f32 %v733, -0.28449672
      %v766 = vadd.f32 %v734, -0.28449672
      %v767 = vadd.f32 %v735, -0.28449672
      %v768 = vadd.f32 %v736, -0.28449672
      %v769 = vadd.f32 %v737, -0.28449672
      %v770 = vadd.f32 %v738, -0.28449672
      %v771 = vadd.f32 %v739, -0.28449672
      %v772 = vadd.f32 %v740, -0.28449672
      %v773 = vadd.f32 %v741, -0.28449672
      %v774 = vadd.f32 %v742, -0.28449672
      %v775 = vadd.f32 %v743, -0.28449672
      %v776 = vadd.f32 %v744, -0.28449672
      %v777 = vadd.f32 %v745, -0.28449672
      %v778 = vadd.f32 %v746, -0.28449672
      %v779 = vadd.f32 %v747, -0.28449672
      %v780 = vmul.f32 %v748, %v556
      %v781 = vmul.f32 %v749, %v557
      %v782 = vmul.f32 %v750, %v558
      %v783 = vmul.f32 %v751, %v559
      %v784 = vmul.f32 %v752, %v560
      %v785 = vmul.f32 %v753, %v561
      %v786 = vmul.f32 %v754, %v562
      %v787 = vmul.f32 %v755, %v563
      %v788 = vmul.f32 %v756, %v564
      %v789 = vmul.f32 %v757, %v565
      %v790 = vmul.f32 %v758, %v566
      %v791 = vmul.f32 %v759, %v567
      %v792 = vmul.f32 %v760, %v568
      %v793 = vmul.f32 %v761, %v569
      %v794 = vmul.f32 %v762, %v570
      %v795 = vmul.f32 %v763, %v571
      %v796 = vmul.f32 %v764, %v572
      %v797 = vmul.f32 %v765, %v573
      %v798 = vmul.f32 %v766, %v574
      %v799 = vmul.f32 %v767, %v575
      %v800 = vmul.f32 %v768, %v576
      %v801 = vmul.f32 %v769, %v577
      %v802 = vmul.f32 %v770, %v578
      %v803 = vmul.f32 %v771, %v579
      %v804 = vmul.f32 %v772, %v580
      %v805 = vmul.f32 %v773, %v581
      %v806 = vmul.f32 %v774, %v582
      %v807 = vmul.f32 %v775, %v583
      %v808 = vmul.f32 %v776, %v584
      %v809 = vmul.f32 %v777, %v585
      %v810 = vmul.f32 %v778, %v586
      %v811 = vmul.f32 %v779, %v587
      %v812 = vadd.f32 %v780, 0.2548296
      %v813 = vadd.f32 %v781, 0.2548296
      %v814 = vadd.f32 %v782, 0.2548296
      %v815 = vadd.f32 %v783, 0.2548296
      %v816 = vadd.f32 %v784, 0.2548296
      %v817 = vadd.f32 %v785, 0.2548296
      %v818 = vadd.f32 %v786, 0.2548296
      %v819 = vadd.f32 %v787, 0.2548296
      %v820 = vadd.f32 %v788, 0.2548296
      %v821 = vadd.f32 %v789, 0.2548296
      %v822 = vadd.f32 %v790, 0.2548296
      %v823 = vadd.f32 %v791, 0.2548296
      %v824 = vadd.f32 %v792, 0.2548296
      %v825 = vadd.f32 %v793, 0.2548296
      %v826 = vadd.f32 %v794, 0.2548296
      %v827 = vadd.f32 %v795, 0.2548296
      %v828 = vadd.f32 %v796, 0.2548296
      %v829 = vadd.f32 %v797, 0.2548296
      %v830 = vadd.f32 %v798, 0.2548296
      %v831 = vadd.f32 %v799, 0.2548296
      %v832 = vadd.f32 %v800, 0.2548296
      %v833 = vadd.f32 %v801, 0.2548296
      %v834 = vadd.f32 %v802, 0.2548296
      %v835 = vadd.f32 %v803, 0.2548296
      %v836 = vadd.f32 %v804, 0.2548296
      %v837 = vadd.f32 %v805, 0.2548296
      %v838 = vadd.f32 %v806, 0.2548296
      %v839 = vadd.f32 %v807, 0.2548296
      %v840 = vadd.f32 %v808, 0.2548296
      %v841 = vadd.f32 %v809, 0.2548296
      %v842 = vadd.f32 %v810, 0.2548296
      %v843 = vadd.f32 %v811, 0.2548296
      %v844 = vmul.f32 %v812, %v556
      %v845 = vmul.f32 %v813, %v557
      %v846 = vmul.f32 %v814, %v558
      %v847 = vmul.f32 %v815, %v559
      %v848 = vmul.f32 %v816, %v560
      %v849 = vmul.f32 %v817, %v561
      %v850 = vmul.f32 %v818, %v562
      %v851 = vmul.f32 %v819, %v563
      %v852 = vmul.f32 %v820, %v564
      %v853 = vmul.f32 %v821, %v565
      %v854 = vmul.f32 %v822, %v566
      %v855 = vmul.f32 %v823, %v567
      %v856 = vmul.f32 %v824, %v568
      %v857 = vmul.f32 %v825, %v569
      %v858 = vmul.f32 %v826, %v570
      %v859 = vmul.f32 %v827, %v571
      %v860 = vmul.f32 %v828, %v572
      %v861 = vmul.f32 %v829, %v573
      %v862 = vmul.f32 %v830, %v574
      %v863 = vmul.f32 %v831, %v575
      %v864 = vmul.f32 %v832, %v576
      %v865 = vmul.f32 %v833, %v577
      %v866 = vmul.f32 %v834, %v578
      %v867 = vmul.f32 %v835, %v579
      %v868 = vmul.f32 %v836, %v580
      %v869 = vmul.f32 %v837, %v581
      %v870 = vmul.f32 %v838, %v582
      %v871 = vmul.f32 %v839, %v583
      %v872 = vmul.f32 %v840, %v584
      %v873 = vmul.f32 %v841, %v585
      %v874 = vmul.f32 %v842, %v586
      %v875 = vmul.f32 %v843, %v587
      %v876 = vsub.f32 0.0, %v460
      %v877 = vsub.f32 0.0, %v461
      %v878 = vsub.f32 0.0, %v462
      %v879 = vsub.f32 0.0, %v463
      %v880 = vsub.f32 0.0, %v464
      %v881 = vsub.f32 0.0, %v465
      %v882 = vsub.f32 0.0, %v466
      %v883 = vsub.f32 0.0, %v467
      %v884 = vsub.f32 0.0, %v468
      %v885 = vsub.f32 0.0, %v469
      %v886 = vsub.f32 0.0, %v470
      %v887 = vsub.f32 0.0, %v471
      %v888 = vsub.f32 0.0, %v472
      %v889 = vsub.f32 0.0, %v473
      %v890 = vsub.f32 0.0, %v474
      %v891 = vsub.f32 0.0, %v475
      %v892 = vsub.f32 0.0, %v476
      %v893 = vsub.f32 0.0, %v477
      %v894 = vsub.f32 0.0, %v478
      %v895 = vsub.f32 0.0, %v479
      %v896 = vsub.f32 0.0, %v480
      %v897 = vsub.f32 0.0, %v481
      %v898 = vsub.f32 0.0, %v482
      %v899 = vsub.f32 0.0, %v483
      %v900 = vsub.f32 0.0, %v484
      %v901 = vsub.f32 0.0, %v485
      %v902 = vsub.f32 0.0, %v486
      %v903 = vsub.f32 0.0, %v487
      %v904 = vsub.f32 0.0, %v488
      %v905 = vsub.f32 0.0, %v489
      %v906 = vsub.f32 0.0, %v490
      %v907 = vsub.f32 0.0, %v491
      %v908 = vmul.f32 %v876, %v460
      %v909 = vmul.f32 %v877, %v461
      %v910 = vmul.f32 %v878, %v462
      %v911 = vmul.f32 %v879, %v463
      %v912 = vmul.f32 %v880, %v464
      %v913 = vmul.f32 %v881, %v465
      %v914 = vmul.f32 %v882, %v466
      %v915 = vmul.f32 %v883, %v467
      %v916 = vmul.f32 %v884, %v468
      %v917 = vmul.f32 %v885, %v469
      %v918 = vmul.f32 %v886, %v470
      %v919 = vmul.f32 %v887, %v471
      %v920 = vmul.f32 %v888, %v472
      %v921 = vmul.f32 %v889, %v473
      %v922 = vmul.f32 %v890, %v474
      %v923 = vmul.f32 %v891, %v475
      %v924 = vmul.f32 %v892, %v476
      %v925 = vmul.f32 %v893, %v477
      %v926 = vmul.f32 %v894, %v478
      %v927 = vmul.f32 %v895, %v479
      %v928 = vmul.f32 %v896, %v480
      %v929 = vmul.f32 %v897, %v481
      %v930 = vmul.f32 %v898, %v482
      %v931 = vmul.f32 %v899, %v483
      %v932 = vmul.f32 %v900, %v484
      %v933 = vmul.f32 %v901, %v485
      %v934 = vmul.f32 %v902, %v486
      %v935 = vmul.f32 %v903, %v487
      %v936 = vmul.f32 %v904, %v488
      %v937 = vmul.f32 %v905, %v489
      %v938 = vmul.f32 %v906, %v490
      %v939 = vmul.f32 %v907, %v491
      %v940 = vmul.f32 %v908, 1.442695
      %v941 = vpow.pop %v940
      %v942 = vmul.f32 %v909, 1.442695
      %v943 = vpow.pop %v942
      %v944 = vmul.f32 %v910, 1.442695
      %v945 = vpow.pop %v944
      %v946 = vmul.f32 %v911, 1.442695
      %v947 = vpow.pop %v946
      %v948 = vmul.f32 %v912, 1.442695
      %v949 = vpow.pop %v948
      %v950 = vmul.f32 %v913, 1.442695
      %v951 = vpow.pop %v950
      %v952 = vmul.f32 %v914, 1.442695
      %v953 = vpow.pop %v952
      %v954 = vmul.f32 %v915, 1.442695
      %v955 = vpow.pop %v954
      %v956 = vmul.f32 %v916, 1.442695
      %v957 = vpow.pop %v956
      %v958 = vmul.f32 %v917, 1.442695
      %v959 = vpow.pop %v958
      %v960 = vmul.f32 %v918, 1.442695
      %v961 = vpow.pop %v960
      %v962 = vmul.f32 %v919, 1.442695
      %v963 = vpow.pop %v962
      %v964 = vmul.f32 %v920, 1.442695
      %v965 = vpow.pop %v964
      %v966 = vmul.f32 %v921, 1.442695
      %v967 = vpow.pop %v966
      %v968 = vmul.f32 %v922, 1.442695
      %v969 = vpow.pop %v968
      %v970 = vmul.f32 %v923, 1.442695
      %v971 = vpow.pop %v970
      %v972 = vmul.f32 %v924, 1.442695
      %v973 = vpow.pop %v972
      %v974 = vmul.f32 %v925, 1.442695
      %v975 = vpow.pop %v974
      %v976 = vmul.f32 %v926, 1.442695
      %v977 = vpow.pop %v976
      %v978 = vmul.f32 %v927, 1.442695
      %v979 = vpow.pop %v978
      %v980 = vmul.f32 %v928, 1.442695
      %v981 = vpow.pop %v980
      %v982 = vmul.f32 %v929, 1.442695
      %v983 = vpow.pop %v982
      %v984 = vmul.f32 %v930, 1.442695
      %v985 = vpow.pop %v984
      %v986 = vmul.f32 %v931, 1.442695
      %v987 = vpow.pop %v986
      %v988 = vmul.f32 %v932, 1.442695
      %v989 = vpow.pop %v988
      %v990 = vmul.f32 %v933, 1.442695
      %v991 = vpow.pop %v990
      %v992 = vmul.f32 %v934, 1.442695
      %v993 = vpow.pop %v992
      %v994 = vmul.f32 %v935, 1.442695
      %v995 = vpow.pop %v994
      %v996 = vmul.f32 %v936, 1.442695
      %v997 = vpow.pop %v996
      %v998 = vmul.f32 %v937, 1.442695
      %v999 = vpow.pop %v998
      %v1000 = vmul.f32 %v938, 1.442695
      %v1001 = vpow.pop %v1000
      %v1002 = vmul.f32 %v939, 1.442695
      %v1003 = vpow.pop %v1002
      %v1004 = vmul.f32 %v844, %v941
      %v1005 = vmul.f32 %v845, %v943
      %v1006 = vmul.f32 %v846, %v945
      %v1007 = vmul.f32 %v847, %v947
      %v1008 = vmul.f32 %v848, %v949
      %v1009 = vmul.f32 %v849, %v951
      %v1010 = vmul.f32 %v850, %v953
      %v1011 = vmul.f32 %v851, %v955
      %v1012 = vmul.f32 %v852, %v957
      %v1013 = vmul.f32 %v853, %v959
      %v1014 = vmul.f32 %v854, %v961
      %v1015 = vmul.f32 %v855, %v963
      %v1016 = vmul.f32 %v856, %v965
      %v1017 = vmul.f32 %v857, %v967
      %v1018 = vmul.f32 %v858, %v969
      %v1019 = vmul.f32 %v859, %v971
      %v1020 = vmul.f32 %v860, %v973
      %v1021 = vmul.f32 %v861, %v975
      %v1022 = vmul.f32 %v862, %v977
      %v1023 = vmul.f32 %v863, %v979
      %v1024 = vmul.f32 %v864, %v981
      %v1025 = vmul.f32 %v865, %v983
      %v1026 = vmul.f32 %v866, %v985
      %v1027 = vmul.f32 %v867, %v987
      %v1028 = vmul.f32 %v868, %v989
      %v1029 = vmul.f32 %v869, %v991
      %v1030 = vmul.f32 %v870, %v993
      %v1031 = vmul.f32 %v871, %v995
      %v1032 = vmul.f32 %v872, %v997
      %v1033 = vmul.f32 %v873, %v999
      %v1034 = vmul.f32 %v874, %v1001
      %v1035 = vmul.f32 %v875, %v1003
      %v1036 = vsub.f32 1.0, %v1004
      %v1037 = vsub.f32 1.0, %v1005
      %v1038 = vsub.f32 1.0, %v1006
      %v1039 = vsub.f32 1.0, %v1007
      %v1040 = vsub.f32 1.0, %v1008
      %v1041 = vsub.f32 1.0, %v1009
      %v1042 = vsub.f32 1.0, %v1010
      %v1043 = vsub.f32 1.0, %v1011
      %v1044 = vsub.f32 1.0, %v1012
      %v1045 = vsub.f32 1.0, %v1013
      %v1046 = vsub.f32 1.0, %v1014
      %v1047 = vsub.f32 1.0, %v1015
      %v1048 = vsub.f32 1.0, %v1016
      %v1049 = vsub.f32 1.0, %v1017
      %v1050 = vsub.f32 1.0, %v1018
      %v1051 = vsub.f32 1.0, %v1019
      %v1052 = vsub.f32 1.0, %v1020
      %v1053 = vsub.f32 1.0, %v1021
      %v1054 = vsub.f32 1.0, %v1022
      %v1055 = vsub.f32 1.0, %v1023
      %v1056 = vsub.f32 1.0, %v1024
      %v1057 = vsub.f32 1.0, %v1025
      %v1058 = vsub.f32 1.0, %v1026
      %v1059 = vsub.f32 1.0, %v1027
      %v1060 = vsub.f32 1.0, %v1028
      %v1061 = vsub.f32 1.0, %v1029
      %v1062 = vsub.f32 1.0, %v1030
      %v1063 = vsub.f32 1.0, %v1031
      %v1064 = vsub.f32 1.0, %v1032
      %v1065 = vsub.f32 1.0, %v1033
      %v1066 = vsub.f32 1.0, %v1034
      %v1067 = vsub.f32 1.0, %v1035
      %v1068 = vmul.f32 %v428, %v1036
      %v1069 = vmul.f32 %v429, %v1037
      %v1070 = vmul.f32 %v430, %v1038
      %v1071 = vmul.f32 %v431, %v1039
      %v1072 = vmul.f32 %v432, %v1040
      %v1073 = vmul.f32 %v433, %v1041
      %v1074 = vmul.f32 %v434, %v1042
      %v1075 = vmul.f32 %v435, %v1043
      %v1076 = vmul.f32 %v436, %v1044
      %v1077 = vmul.f32 %v437, %v1045
      %v1078 = vmul.f32 %v438, %v1046
      %v1079 = vmul.f32 %v439, %v1047
      %v1080 = vmul.f32 %v440, %v1048
      %v1081 = vmul.f32 %v441, %v1049
      %v1082 = vmul.f32 %v442, %v1050
      %v1083 = vmul.f32 %v443, %v1051
      %v1084 = vmul.f32 %v444, %v1052
      %v1085 = vmul.f32 %v445, %v1053
      %v1086 = vmul.f32 %v446, %v1054
      %v1087 = vmul.f32 %v447, %v1055
      %v1088 = vmul.f32 %v448, %v1056
      %v1089 = vmul.f32 %v449, %v1057
      %v1090 = vmul.f32 %v450, %v1058
      %v1091 = vmul.f32 %v451, %v1059
      %v1092 = vmul.f32 %v452, %v1060
      %v1093 = vmul.f32 %v453, %v1061
      %v1094 = vmul.f32 %v454, %v1062
      %v1095 = vmul.f32 %v455, %v1063
      %v1096 = vmul.f32 %v456, %v1064
      %v1097 = vmul.f32 %v457, %v1065
      %v1098 = vmul.f32 %v458, %v1066
      %v1099 = vmul.f32 %v459, %v1067
      %v1100 = vadd.f32 %v1068, 1.0
      %v1101 = vadd.f32 %v1069, 1.0
      %v1102 = vadd.f32 %v1070, 1.0
      %v1103 = vadd.f32 %v1071, 1.0
      %v1104 = vadd.f32 %v1072, 1.0
      %v1105 = vadd.f32 %v1073, 1.0
      %v1106 = vadd.f32 %v1074, 1.0
      %v1107 = vadd.f32 %v1075, 1.0
      %v1108 = vadd.f32 %v1076, 1.0
      %v1109 = vadd.f32 %v1077, 1.0
      %v1110 = vadd.f32 %v1078, 1.0
      %v1111 = vadd.f32 %v1079, 1.0
      %v1112 = vadd.f32 %v1080, 1.0
      %v1113 = vadd.f32 %v1081, 1.0
      %v1114 = vadd.f32 %v1082, 1.0
      %v1115 = vadd.f32 %v1083, 1.0
      %v1116 = vadd.f32 %v1084, 1.0
      %v1117 = vadd.f32 %v1085, 1.0
      %v1118 = vadd.f32 %v1086, 1.0
      %v1119 = vadd.f32 %v1087, 1.0
      %v1120 = vadd.f32 %v1088, 1.0
      %v1121 = vadd.f32 %v1089, 1.0
      %v1122 = vadd.f32 %v1090, 1.0
      %v1123 = vadd.f32 %v1091, 1.0
      %v1124 = vadd.f32 %v1092, 1.0
      %v1125 = vadd.f32 %v1093, 1.0
      %v1126 = vadd.f32 %v1094, 1.0
      %v1127 = vadd.f32 %v1095, 1.0
      %v1128 = vadd.f32 %v1096, 1.0
      %v1129 = vadd.f32 %v1097, 1.0
      %v1130 = vadd.f32 %v1098, 1.0
      %v1131 = vadd.f32 %v1099, 1.0
      %v1132 = vmul.f32 %v332, %v1100
      %v1133 = vmul.f32 %v333, %v1101
      %v1134 = vmul.f32 %v334, %v1102
      %v1135 = vmul.f32 %v335, %v1103
      %v1136 = vmul.f32 %v336, %v1104
      %v1137 = vmul.f32 %v337, %v1105
      %v1138 = vmul.f32 %v338, %v1106
      %v1139 = vmul.f32 %v339, %v1107
      %v1140 = vmul.f32 %v340, %v1108
      %v1141 = vmul.f32 %v341, %v1109
      %v1142 = vmul.f32 %v342, %v1110
      %v1143 = vmul.f32 %v343, %v1111
      %v1144 = vmul.f32 %v344, %v1112
      %v1145 = vmul.f32 %v345, %v1113
      %v1146 = vmul.f32 %v346, %v1114
      %v1147 = vmul.f32 %v347, %v1115
      %v1148 = vmul.f32 %v348, %v1116
      %v1149 = vmul.f32 %v349, %v1117
      %v1150 = vmul.f32 %v350, %v1118
      %v1151 = vmul.f32 %v351, %v1119
      %v1152 = vmul.f32 %v352, %v1120
      %v1153 = vmul.f32 %v353, %v1121
      %v1154 = vmul.f32 %v354, %v1122
      %v1155 = vmul.f32 %v355, %v1123
      %v1156 = vmul.f32 %v356, %v1124
      %v1157 = vmul.f32 %v357, %v1125
      %v1158 = vmul.f32 %v358, %v1126
      %v1159 = vmul.f32 %v359, %v1127
      %v1160 = vmul.f32 %v360, %v1128
      %v1161 = vmul.f32 %v361, %v1129
      %v1162 = vmul.f32 %v362, %v1130
      %v1163 = vmul.f32 %v363, %v1131
      %v1164 = vpack.c.bf16 %v1133, %v1132
      %v1165 = vpack.c.bf16 %v1135, %v1134
      %v1166 = vpack.c.bf16 %v1137, %v1136
      %v1167 = vpack.c.bf16 %v1139, %v1138
      %v1168 = vpack.c.bf16 %v1141, %v1140
      %v1169 = vpack.c.bf16 %v1143, %v1142
      %v1170 = vpack.c.bf16 %v1145, %v1144
      %v1171 = vpack.c.bf16 %v1147, %v1146
      %v1172 = vpack.c.bf16 %v1149, %v1148
      %v1173 = vpack.c.bf16 %v1151, %v1150
      %v1174 = vpack.c.bf16 %v1153, %v1152
      %v1175 = vpack.c.bf16 %v1155, %v1154
      %v1176 = vpack.c.bf16 %v1157, %v1156
      %v1177 = vpack.c.bf16 %v1159, %v1158
      %v1178 = vpack.c.bf16 %v1161, %v1160
      %v1179 = vpack.c.bf16 %v1163, %v1162
      %v1180 = vld [vmem:[%s2] sm:$0xf]
      %v1181 = vld [vmem:[%s2 + $0x4] sm:$0xf]
      %v1182 = vld [vmem:[%s2 + $0x8] sm:$0xf]
      %v1183 = vld [vmem:[%s2 + $0xc] sm:$0xf]
      %v1184 = vld [vmem:[%s2 + $0x10] sm:$0x3]
      %v1185 = vld [vmem:[%s3] sm:$0x1]
      %v1187 = vlaneseq
      %v1188 = vshrl.u32 %v1187, 7
      %v1189 = vsub.s32 0, %v1188
      %v1190 = vrot.slane %v1185, %v1189
      %v1197 = vunpack.c.l.b16 %v1180
      %v1198 = vunpack.c.l.b16 %v1181
      %v1199 = vunpack.c.l.b16 %v1182
      %v1200 = vunpack.c.l.b16 %v1183
      %v1201 = vunpack.c.l.b16 %v1184
      %v1202 = vpack.c.b16 %v1198, %v1197
      %v1203 = vpack.c.b16 %v1200, %v1199
      %v1204 = vpack.c.b16 %v1201, %v1201
      %vm1207 = vcmask 293888
      %v1209 = vsel %vm1207, %v1164, 0
      %v1212 = vsel %vm1207, %v1165, 0
      %v1215 = vsel %vm1207, %v1166, 0
      %v1218 = vsel %vm1207, %v1167, 0
      %v1221 = vsel %vm1207, %v1168, 0
      %v1224 = vsel %vm1207, %v1169, 0
      %v1227 = vsel %vm1207, %v1170, 0
      %v1230 = vsel %vm1207, %v1171, 0
      %v1233 = vsel %vm1207, %v1172, 0
      %v1236 = vsel %vm1207, %v1173, 0
      %v1239 = vsel %vm1207, %v1174, 0
      %v1242 = vsel %vm1207, %v1175, 0
      %v1245 = vsel %vm1207, %v1176, 0
      %v1248 = vsel %vm1207, %v1177, 0
      %v1251 = vsel %vm1207, %v1178, 0
      %v1254 = vsel %vm1207, %v1179, 0
      %vm1256 = vcmask 1041408
      %v1258 = vsel %vm1256, %v1204, 0
      %1260 = vmatprep.subr.bf16.mxu0 0
      %1261 = vmatpush1.bf16.msra.mxu0 0
      %1262 = vmatprep.subr.bf16.mxu0 0
      %1263 = vmatpush1.bf16.msra.mxu0 0
      %1264 = vmatprep.subr.bf16.mxu0 0
      %1265 = vmatpush1.bf16.msra.mxu0 0
      %1266 = vmatprep.subr.bf16.mxu0 0
      %1267 = vmatpush1.bf16.msra.mxu0 0
      %1268 = vmatprep.subr.bf16.mxu0 0
      %1269 = vmatpush1.bf16.msra.mxu0 0
      %1270 = vmatprep.subr.bf16.mxu0 0
      %1271 = vmatpush1.bf16.msra.mxu0 %v1258
      %1272 = vmatprep.subr.bf16.mxu0 0
      %1273 = vmatpush1.bf16.msra.mxu0 %v1203
      %1274 = vmatprep.subr.bf16.mxu0 0
      %1275 = vmatpush1.bf16.msra.mxu0 %v1202
      %1276 = vmatprep.subr.bf16.mxu0 0
      %1277 = vmatpush2.bf16.msra.mxu0 0
      %1278 = vmatprep.subr.bf16.mxu0 0
      %1279 = vmatpush2.bf16.msra.mxu0 0
      %1280 = vmatprep.subr.bf16.mxu0 0
      %1281 = vmatpush2.bf16.msra.mxu0 0
      %1282 = vmatprep.subr.bf16.mxu0 0
      %1283 = vmatpush2.bf16.msra.mxu0 0
      %1284 = vmatprep.subr.bf16.mxu0 0
      %1285 = vmatpush2.bf16.msra.mxu0 0
      %1286 = vmatprep.subr.bf16.mxu0 0
      %1287 = vmatpush2.bf16.msra.mxu0 0
      %1288 = vmatprep.subr.bf16.mxu0 0
      %1289 = vmatpush2.bf16.msra.mxu0 0
      %1290 = vmatprep.subr.bf16.mxu0 0
      %1291 = vmatpush2.bf16.msra.mxu0 0
      %1292 = vmatprep.mubr.bf16.mxu0 0
      %1293 = vmatmul.mubr.bf16.gmra.mxu0 %v1209
      %v1294 = vpop.f32.mrf.mxu0
      %v1295 = vadd.f32 %v1190, %v1294
      %v1296 = vpop.f32.mrf.mxu0
      %v1297 = vpop.f32.mrf.mxu0
      %v1298 = vadd.f32 %v1190, %v1297
      %v1299 = vpop.f32.mrf.mxu0
      %1300 = vmatprep.mubr.bf16.mxu0 0
      %1301 = vmatmul.mubr.bf16.gmra.mxu0 %v1212
      %v1302 = vpop.f32.mrf.mxu0
      %v1303 = vadd.f32 %v1190, %v1302
      %v1304 = vpop.f32.mrf.mxu0
      %v1305 = vpop.f32.mrf.mxu0
      %v1306 = vadd.f32 %v1190, %v1305
      %v1307 = vpop.f32.mrf.mxu0
      %1308 = vmatprep.mubr.bf16.mxu0 0
      %1309 = vmatmul.mubr.bf16.gmra.mxu0 %v1215
      %v1310 = vpop.f32.mrf.mxu0
      %v1311 = vadd.f32 %v1190, %v1310
      %v1312 = vpop.f32.mrf.mxu0
      %v1313 = vpop.f32.mrf.mxu0
      %v1314 = vadd.f32 %v1190, %v1313
      %v1315 = vpop.f32.mrf.mxu0
      %1316 = vmatprep.mubr.bf16.mxu0 0
      %1317 = vmatmul.mubr.bf16.gmra.mxu0 %v1218
      %v1318 = vpop.f32.mrf.mxu0
      %v1319 = vadd.f32 %v1190, %v1318
      %v1320 = vpop.f32.mrf.mxu0
      %v1321 = vpop.f32.mrf.mxu0
      %v1322 = vadd.f32 %v1190, %v1321
      %v1323 = vpop.f32.mrf.mxu0
      %1324 = vmatprep.mubr.bf16.mxu0 0
      %1325 = vmatmul.mubr.bf16.gmra.mxu0 %v1221
      %v1326 = vpop.f32.mrf.mxu0
      %v1327 = vadd.f32 %v1190, %v1326
      %v1328 = vpop.f32.mrf.mxu0
      %v1329 = vpop.f32.mrf.mxu0
      %v1330 = vadd.f32 %v1190, %v1329
      %v1331 = vpop.f32.mrf.mxu0
      %1332 = vmatprep.mubr.bf16.mxu0 0
      %1333 = vmatmul.mubr.bf16.gmra.mxu0 %v1224
      %v1334 = vpop.f32.mrf.mxu0
      %v1335 = vadd.f32 %v1190, %v1334
      %v1336 = vpop.f32.mrf.mxu0
      %v1337 = vpop.f32.mrf.mxu0
      %v1338 = vadd.f32 %v1190, %v1337
      %v1339 = vpop.f32.mrf.mxu0
      %1340 = vmatprep.mubr.bf16.mxu0 0
      %1341 = vmatmul.mubr.bf16.gmra.mxu0 %v1227
      %v1342 = vpop.f32.mrf.mxu0
      %v1343 = vadd.f32 %v1190, %v1342
      %v1344 = vpop.f32.mrf.mxu0
      %v1345 = vpop.f32.mrf.mxu0
      %v1346 = vadd.f32 %v1190, %v1345
      %v1347 = vpop.f32.mrf.mxu0
      %1348 = vmatprep.mubr.bf16.mxu0 0
      %1349 = vmatmul.mubr.bf16.gmra.mxu0 %v1230
      %v1350 = vpop.f32.mrf.mxu0
      %v1351 = vadd.f32 %v1190, %v1350
      %v1352 = vpop.f32.mrf.mxu0
      %v1353 = vpop.f32.mrf.mxu0
      %v1354 = vadd.f32 %v1190, %v1353
      %v1355 = vpop.f32.mrf.mxu0
      %1356 = vmatprep.mubr.bf16.mxu0 0
      %1357 = vmatmul.mubr.bf16.gmra.mxu0 %v1233
      %v1358 = vpop.f32.mrf.mxu0
      %v1359 = vadd.f32 %v1190, %v1358
      %v1360 = vpop.f32.mrf.mxu0
      %v1361 = vpop.f32.mrf.mxu0
      %v1362 = vadd.f32 %v1190, %v1361
      %v1363 = vpop.f32.mrf.mxu0
      %1364 = vmatprep.mubr.bf16.mxu0 0
      %1365 = vmatmul.mubr.bf16.gmra.mxu0 %v1236
      %v1366 = vpop.f32.mrf.mxu0
      %v1367 = vadd.f32 %v1190, %v1366
      %v1368 = vpop.f32.mrf.mxu0
      %v1369 = vpop.f32.mrf.mxu0
      %v1370 = vadd.f32 %v1190, %v1369
      %v1371 = vpop.f32.mrf.mxu0
      %1372 = vmatprep.mubr.bf16.mxu0 0
      %1373 = vmatmul.mubr.bf16.gmra.mxu0 %v1239
      %v1374 = vpop.f32.mrf.mxu0
      %v1375 = vadd.f32 %v1190, %v1374
      %v1376 = vpop.f32.mrf.mxu0
      %v1377 = vpop.f32.mrf.mxu0
      %v1378 = vadd.f32 %v1190, %v1377
      %v1379 = vpop.f32.mrf.mxu0
      %1380 = vmatprep.mubr.bf16.mxu0 0
      %1381 = vmatmul.mubr.bf16.gmra.mxu0 %v1242
      %v1382 = vpop.f32.mrf.mxu0
      %v1383 = vadd.f32 %v1190, %v1382
      %v1384 = vpop.f32.mrf.mxu0
      %v1385 = vpop.f32.mrf.mxu0
      %v1386 = vadd.f32 %v1190, %v1385
      %v1387 = vpop.f32.mrf.mxu0
      %1388 = vmatprep.mubr.bf16.mxu0 0
      %1389 = vmatmul.mubr.bf16.gmra.mxu0 %v1245
      %v1390 = vpop.f32.mrf.mxu0
      %v1391 = vadd.f32 %v1190, %v1390
      %v1392 = vpop.f32.mrf.mxu0
      %v1393 = vpop.f32.mrf.mxu0
      %v1394 = vadd.f32 %v1190, %v1393
      %v1395 = vpop.f32.mrf.mxu0
      %1396 = vmatprep.mubr.bf16.mxu0 0
      %1397 = vmatmul.mubr.bf16.gmra.mxu0 %v1248
      %v1398 = vpop.f32.mrf.mxu0
      %v1399 = vadd.f32 %v1190, %v1398
      %v1400 = vpop.f32.mrf.mxu0
      %v1401 = vpop.f32.mrf.mxu0
      %v1402 = vadd.f32 %v1190, %v1401
      %v1403 = vpop.f32.mrf.mxu0
      %1404 = vmatprep.mubr.bf16.mxu0 0
      %1405 = vmatmul.mubr.bf16.gmra.mxu0 %v1251
      %v1406 = vpop.f32.mrf.mxu0
      %v1407 = vadd.f32 %v1190, %v1406
      %v1408 = vpop.f32.mrf.mxu0
      %v1409 = vpop.f32.mrf.mxu0
      %v1410 = vadd.f32 %v1190, %v1409
      %v1411 = vpop.f32.mrf.mxu0
      %1412 = vmatprep.mubr.bf16.mxu0 0
      %1413 = vmatmul.mubr.bf16.gmra.mxu0 %v1254
      %v1414 = vpop.f32.mrf.mxu0
      %v1415 = vadd.f32 %v1190, %v1414
      %v1416 = vpop.f32.mrf.mxu0
      %v1417 = vpop.f32.mrf.mxu0
      %v1418 = vadd.f32 %v1190, %v1417
      %v1419 = vpop.f32.mrf.mxu0
      %1420 = vdwg.mxu0
      %v1421 = vmul.f32 %v1295, 0.5
      %v1422 = vmul.f32 %v1298, 0.5
      %v1423 = vmul.f32 %v1303, 0.5
      %v1424 = vmul.f32 %v1306, 0.5
      %v1425 = vmul.f32 %v1311, 0.5
      %v1426 = vmul.f32 %v1314, 0.5
      %v1427 = vmul.f32 %v1319, 0.5
      %v1428 = vmul.f32 %v1322, 0.5
      %v1429 = vmul.f32 %v1327, 0.5
      %v1430 = vmul.f32 %v1330, 0.5
      %v1431 = vmul.f32 %v1335, 0.5
      %v1432 = vmul.f32 %v1338, 0.5
      %v1433 = vmul.f32 %v1343, 0.5
      %v1434 = vmul.f32 %v1346, 0.5
      %v1435 = vmul.f32 %v1351, 0.5
      %v1436 = vmul.f32 %v1354, 0.5
      %v1437 = vmul.f32 %v1359, 0.5
      %v1438 = vmul.f32 %v1362, 0.5
      %v1439 = vmul.f32 %v1367, 0.5
      %v1440 = vmul.f32 %v1370, 0.5
      %v1441 = vmul.f32 %v1375, 0.5
      %v1442 = vmul.f32 %v1378, 0.5
      %v1443 = vmul.f32 %v1383, 0.5
      %v1444 = vmul.f32 %v1386, 0.5
      %v1445 = vmul.f32 %v1391, 0.5
      %v1446 = vmul.f32 %v1394, 0.5
      %v1447 = vmul.f32 %v1399, 0.5
      %v1448 = vmul.f32 %v1402, 0.5
      %v1449 = vmul.f32 %v1407, 0.5
      %v1450 = vmul.f32 %v1410, 0.5
      %v1451 = vmul.f32 %v1415, 0.5
      %v1452 = vmul.f32 %v1418, 0.5
      %v1453 = vmul.f32 %v1295, 0.70710677
      %v1454 = vmul.f32 %v1298, 0.70710677
      %v1455 = vmul.f32 %v1303, 0.70710677
      %v1456 = vmul.f32 %v1306, 0.70710677
      %v1457 = vmul.f32 %v1311, 0.70710677
      %v1458 = vmul.f32 %v1314, 0.70710677
      %v1459 = vmul.f32 %v1319, 0.70710677
      %v1460 = vmul.f32 %v1322, 0.70710677
      %v1461 = vmul.f32 %v1327, 0.70710677
      %v1462 = vmul.f32 %v1330, 0.70710677
      %v1463 = vmul.f32 %v1335, 0.70710677
      %v1464 = vmul.f32 %v1338, 0.70710677
      %v1465 = vmul.f32 %v1343, 0.70710677
      %v1466 = vmul.f32 %v1346, 0.70710677
      %v1467 = vmul.f32 %v1351, 0.70710677
      %v1468 = vmul.f32 %v1354, 0.70710677
      %v1469 = vmul.f32 %v1359, 0.70710677
      %v1470 = vmul.f32 %v1362, 0.70710677
      %v1471 = vmul.f32 %v1367, 0.70710677
      %v1472 = vmul.f32 %v1370, 0.70710677
      %v1473 = vmul.f32 %v1375, 0.70710677
      %v1474 = vmul.f32 %v1378, 0.70710677
      %v1475 = vmul.f32 %v1383, 0.70710677
      %v1476 = vmul.f32 %v1386, 0.70710677
      %v1477 = vmul.f32 %v1391, 0.70710677
      %v1478 = vmul.f32 %v1394, 0.70710677
      %v1479 = vmul.f32 %v1399, 0.70710677
      %v1480 = vmul.f32 %v1402, 0.70710677
      %v1481 = vmul.f32 %v1407, 0.70710677
      %v1482 = vmul.f32 %v1410, 0.70710677
      %v1483 = vmul.f32 %v1415, 0.70710677
      %v1484 = vmul.f32 %v1418, 0.70710677
      %vm1485 = vcmp.ge.f32.partialorder %v1453, 0.0
      %vm1486 = vcmp.ge.f32.partialorder %v1454, 0.0
      %vm1487 = vcmp.ge.f32.partialorder %v1455, 0.0
      %vm1488 = vcmp.ge.f32.partialorder %v1456, 0.0
      %vm1489 = vcmp.ge.f32.partialorder %v1457, 0.0
      %vm1490 = vcmp.ge.f32.partialorder %v1458, 0.0
      %vm1491 = vcmp.ge.f32.partialorder %v1459, 0.0
      %vm1492 = vcmp.ge.f32.partialorder %v1460, 0.0
      %vm1493 = vcmp.ge.f32.partialorder %v1461, 0.0
      %vm1494 = vcmp.ge.f32.partialorder %v1462, 0.0
      %vm1495 = vcmp.ge.f32.partialorder %v1463, 0.0
      %vm1496 = vcmp.ge.f32.partialorder %v1464, 0.0
      %vm1497 = vcmp.ge.f32.partialorder %v1465, 0.0
      %vm1498 = vcmp.ge.f32.partialorder %v1466, 0.0
      %vm1499 = vcmp.ge.f32.partialorder %v1467, 0.0
      %vm1500 = vcmp.ge.f32.partialorder %v1468, 0.0
      %vm1501 = vcmp.ge.f32.partialorder %v1469, 0.0
      %vm1502 = vcmp.ge.f32.partialorder %v1470, 0.0
      %vm1503 = vcmp.ge.f32.partialorder %v1471, 0.0
      %vm1504 = vcmp.ge.f32.partialorder %v1472, 0.0
      %vm1505 = vcmp.ge.f32.partialorder %v1473, 0.0
      %vm1506 = vcmp.ge.f32.partialorder %v1474, 0.0
      %vm1507 = vcmp.ge.f32.partialorder %v1475, 0.0
      %vm1508 = vcmp.ge.f32.partialorder %v1476, 0.0
      %vm1509 = vcmp.ge.f32.partialorder %v1477, 0.0
      %vm1510 = vcmp.ge.f32.partialorder %v1478, 0.0
      %vm1511 = vcmp.ge.f32.partialorder %v1479, 0.0
      %vm1512 = vcmp.ge.f32.partialorder %v1480, 0.0
      %vm1513 = vcmp.ge.f32.partialorder %v1481, 0.0
      %vm1514 = vcmp.ge.f32.partialorder %v1482, 0.0
      %vm1515 = vcmp.ge.f32.partialorder %v1483, 0.0
      %vm1516 = vcmp.ge.f32.partialorder %v1484, 0.0
      %v1517 = vsel %vm1485, 1.0, -1.0
      %v1518 = vsel %vm1486, 1.0, -1.0
      %v1519 = vsel %vm1487, 1.0, -1.0
      %v1520 = vsel %vm1488, 1.0, -1.0
      %v1521 = vsel %vm1489, 1.0, -1.0
      %v1522 = vsel %vm1490, 1.0, -1.0
      %v1523 = vsel %vm1491, 1.0, -1.0
      %v1524 = vsel %vm1492, 1.0, -1.0
      %v1525 = vsel %vm1493, 1.0, -1.0
      %v1526 = vsel %vm1494, 1.0, -1.0
      %v1527 = vsel %vm1495, 1.0, -1.0
      %v1528 = vsel %vm1496, 1.0, -1.0
      %v1529 = vsel %vm1497, 1.0, -1.0
      %v1530 = vsel %vm1498, 1.0, -1.0
      %v1531 = vsel %vm1499, 1.0, -1.0
      %v1532 = vsel %vm1500, 1.0, -1.0
      %v1533 = vsel %vm1501, 1.0, -1.0
      %v1534 = vsel %vm1502, 1.0, -1.0
      %v1535 = vsel %vm1503, 1.0, -1.0
      %v1536 = vsel %vm1504, 1.0, -1.0
      %v1537 = vsel %vm1505, 1.0, -1.0
      %v1538 = vsel %vm1506, 1.0, -1.0
      %v1539 = vsel %vm1507, 1.0, -1.0
      %v1540 = vsel %vm1508, 1.0, -1.0
      %v1541 = vsel %vm1509, 1.0, -1.0
      %v1542 = vsel %vm1510, 1.0, -1.0
      %v1543 = vsel %vm1511, 1.0, -1.0
      %v1544 = vsel %vm1512, 1.0, -1.0
      %v1545 = vsel %vm1513, 1.0, -1.0
      %v1546 = vsel %vm1514, 1.0, -1.0
      %v1547 = vsel %vm1515, 1.0, -1.0
      %v1548 = vsel %vm1516, 1.0, -1.0
      %v1549 = vand.u32 2147483647, %v1453
      %v1550 = vand.u32 2147483647, %v1454
      %v1551 = vand.u32 2147483647, %v1455
      %v1552 = vand.u32 2147483647, %v1456
      %v1553 = vand.u32 2147483647, %v1457
      %v1554 = vand.u32 2147483647, %v1458
      %v1555 = vand.u32 2147483647, %v1459
      %v1556 = vand.u32 2147483647, %v1460
      %v1557 = vand.u32 2147483647, %v1461
      %v1558 = vand.u32 2147483647, %v1462
      %v1559 = vand.u32 2147483647, %v1463
      %v1560 = vand.u32 2147483647, %v1464
      %v1561 = vand.u32 2147483647, %v1465
      %v1562 = vand.u32 2147483647, %v1466
      %v1563 = vand.u32 2147483647, %v1467
      %v1564 = vand.u32 2147483647, %v1468
      %v1565 = vand.u32 2147483647, %v1469
      %v1566 = vand.u32 2147483647, %v1470
      %v1567 = vand.u32 2147483647, %v1471
      %v1568 = vand.u32 2147483647, %v1472
      %v1569 = vand.u32 2147483647, %v1473
      %v1570 = vand.u32 2147483647, %v1474
      %v1571 = vand.u32 2147483647, %v1475
      %v1572 = vand.u32 2147483647, %v1476
      %v1573 = vand.u32 2147483647, %v1477
      %v1574 = vand.u32 2147483647, %v1478
      %v1575 = vand.u32 2147483647, %v1479
      %v1576 = vand.u32 2147483647, %v1480
      %v1577 = vand.u32 2147483647, %v1481
      %v1578 = vand.u32 2147483647, %v1482
      %v1579 = vand.u32 2147483647, %v1483
      %v1580 = vand.u32 2147483647, %v1484
      %v1581 = vmul.f32 %v1549, 0.3275911
      %v1582 = vmul.f32 %v1550, 0.3275911
      %v1583 = vmul.f32 %v1551, 0.3275911
      %v1584 = vmul.f32 %v1552, 0.3275911
      %v1585 = vmul.f32 %v1553, 0.3275911
      %v1586 = vmul.f32 %v1554, 0.3275911
      %v1587 = vmul.f32 %v1555, 0.3275911
      %v1588 = vmul.f32 %v1556, 0.3275911
      %v1589 = vmul.f32 %v1557, 0.3275911
      %v1590 = vmul.f32 %v1558, 0.3275911
      %v1591 = vmul.f32 %v1559, 0.3275911
      %v1592 = vmul.f32 %v1560, 0.3275911
      %v1593 = vmul.f32 %v1561, 0.3275911
      %v1594 = vmul.f32 %v1562, 0.3275911
      %v1595 = vmul.f32 %v1563, 0.3275911
      %v1596 = vmul.f32 %v1564, 0.3275911
      %v1597 = vmul.f32 %v1565, 0.3275911
      %v1598 = vmul.f32 %v1566, 0.3275911
      %v1599 = vmul.f32 %v1567, 0.3275911
      %v1600 = vmul.f32 %v1568, 0.3275911
      %v1601 = vmul.f32 %v1569, 0.3275911
      %v1602 = vmul.f32 %v1570, 0.3275911
      %v1603 = vmul.f32 %v1571, 0.3275911
      %v1604 = vmul.f32 %v1572, 0.3275911
      %v1605 = vmul.f32 %v1573, 0.3275911
      %v1606 = vmul.f32 %v1574, 0.3275911
      %v1607 = vmul.f32 %v1575, 0.3275911
      %v1608 = vmul.f32 %v1576, 0.3275911
      %v1609 = vmul.f32 %v1577, 0.3275911
      %v1610 = vmul.f32 %v1578, 0.3275911
      %v1611 = vmul.f32 %v1579, 0.3275911
      %v1612 = vmul.f32 %v1580, 0.3275911
      %v1613 = vadd.f32 %v1581, 1.0
      %v1614 = vadd.f32 %v1582, 1.0
      %v1615 = vadd.f32 %v1583, 1.0
      %v1616 = vadd.f32 %v1584, 1.0
      %v1617 = vadd.f32 %v1585, 1.0
      %v1618 = vadd.f32 %v1586, 1.0
      %v1619 = vadd.f32 %v1587, 1.0
      %v1620 = vadd.f32 %v1588, 1.0
      %v1621 = vadd.f32 %v1589, 1.0
      %v1622 = vadd.f32 %v1590, 1.0
      %v1623 = vadd.f32 %v1591, 1.0
      %v1624 = vadd.f32 %v1592, 1.0
      %v1625 = vadd.f32 %v1593, 1.0
      %v1626 = vadd.f32 %v1594, 1.0
      %v1627 = vadd.f32 %v1595, 1.0
      %v1628 = vadd.f32 %v1596, 1.0
      %v1629 = vadd.f32 %v1597, 1.0
      %v1630 = vadd.f32 %v1598, 1.0
      %v1631 = vadd.f32 %v1599, 1.0
      %v1632 = vadd.f32 %v1600, 1.0
      %v1633 = vadd.f32 %v1601, 1.0
      %v1634 = vadd.f32 %v1602, 1.0
      %v1635 = vadd.f32 %v1603, 1.0
      %v1636 = vadd.f32 %v1604, 1.0
      %v1637 = vadd.f32 %v1605, 1.0
      %v1638 = vadd.f32 %v1606, 1.0
      %v1639 = vadd.f32 %v1607, 1.0
      %v1640 = vadd.f32 %v1608, 1.0
      %v1641 = vadd.f32 %v1609, 1.0
      %v1642 = vadd.f32 %v1610, 1.0
      %v1643 = vadd.f32 %v1611, 1.0
      %v1644 = vadd.f32 %v1612, 1.0
      %v1645 = vrcp.pop %v1613
      %v1646 = vrcp.pop %v1614
      %v1647 = vrcp.pop %v1615
      %v1648 = vrcp.pop %v1616
      %v1649 = vrcp.pop %v1617
      %v1650 = vrcp.pop %v1618
      %v1651 = vrcp.pop %v1619
      %v1652 = vrcp.pop %v1620
      %v1653 = vrcp.pop %v1621
      %v1654 = vrcp.pop %v1622
      %v1655 = vrcp.pop %v1623
      %v1656 = vrcp.pop %v1624
      %v1657 = vrcp.pop %v1625
      %v1658 = vrcp.pop %v1626
      %v1659 = vrcp.pop %v1627
      %v1660 = vrcp.pop %v1628
      %v1661 = vrcp.pop %v1629
      %v1662 = vrcp.pop %v1630
      %v1663 = vrcp.pop %v1631
      %v1664 = vrcp.pop %v1632
      %v1665 = vrcp.pop %v1633
      %v1666 = vrcp.pop %v1634
      %v1667 = vrcp.pop %v1635
      %v1668 = vrcp.pop %v1636
      %v1669 = vrcp.pop %v1637
      %v1670 = vrcp.pop %v1638
      %v1671 = vrcp.pop %v1639
      %v1672 = vrcp.pop %v1640
      %v1673 = vrcp.pop %v1641
      %v1674 = vrcp.pop %v1642
      %v1675 = vrcp.pop %v1643
      %v1676 = vrcp.pop %v1644
      %v1677 = vmul.f32 %v1645, 1.0614054
      %v1678 = vmul.f32 %v1646, 1.0614054
      %v1679 = vmul.f32 %v1647, 1.0614054
      %v1680 = vmul.f32 %v1648, 1.0614054
      %v1681 = vmul.f32 %v1649, 1.0614054
      %v1682 = vmul.f32 %v1650, 1.0614054
      %v1683 = vmul.f32 %v1651, 1.0614054
      %v1684 = vmul.f32 %v1652, 1.0614054
      %v1685 = vmul.f32 %v1653, 1.0614054
      %v1686 = vmul.f32 %v1654, 1.0614054
      %v1687 = vmul.f32 %v1655, 1.0614054
      %v1688 = vmul.f32 %v1656, 1.0614054
      %v1689 = vmul.f32 %v1657, 1.0614054
      %v1690 = vmul.f32 %v1658, 1.0614054
      %v1691 = vmul.f32 %v1659, 1.0614054
      %v1692 = vmul.f32 %v1660, 1.0614054
      %v1693 = vmul.f32 %v1661, 1.0614054
      %v1694 = vmul.f32 %v1662, 1.0614054
      %v1695 = vmul.f32 %v1663, 1.0614054
      %v1696 = vmul.f32 %v1664, 1.0614054
      %v1697 = vmul.f32 %v1665, 1.0614054
      %v1698 = vmul.f32 %v1666, 1.0614054
      %v1699 = vmul.f32 %v1667, 1.0614054
      %v1700 = vmul.f32 %v1668, 1.0614054
      %v1701 = vmul.f32 %v1669, 1.0614054
      %v1702 = vmul.f32 %v1670, 1.0614054
      %v1703 = vmul.f32 %v1671, 1.0614054
      %v1704 = vmul.f32 %v1672, 1.0614054
      %v1705 = vmul.f32 %v1673, 1.0614054
      %v1706 = vmul.f32 %v1674, 1.0614054
      %v1707 = vmul.f32 %v1675, 1.0614054
      %v1708 = vmul.f32 %v1676, 1.0614054
      %v1709 = vadd.f32 %v1677, -1.4531521
      %v1710 = vadd.f32 %v1678, -1.4531521
      %v1711 = vadd.f32 %v1679, -1.4531521
      %v1712 = vadd.f32 %v1680, -1.4531521
      %v1713 = vadd.f32 %v1681, -1.4531521
      %v1714 = vadd.f32 %v1682, -1.4531521
      %v1715 = vadd.f32 %v1683, -1.4531521
      %v1716 = vadd.f32 %v1684, -1.4531521
      %v1717 = vadd.f32 %v1685, -1.4531521
      %v1718 = vadd.f32 %v1686, -1.4531521
      %v1719 = vadd.f32 %v1687, -1.4531521
      %v1720 = vadd.f32 %v1688, -1.4531521
      %v1721 = vadd.f32 %v1689, -1.4531521
      %v1722 = vadd.f32 %v1690, -1.4531521
      %v1723 = vadd.f32 %v1691, -1.4531521
      %v1724 = vadd.f32 %v1692, -1.4531521
      %v1725 = vadd.f32 %v1693, -1.4531521
      %v1726 = vadd.f32 %v1694, -1.4531521
      %v1727 = vadd.f32 %v1695, -1.4531521
      %v1728 = vadd.f32 %v1696, -1.4531521
      %v1729 = vadd.f32 %v1697, -1.4531521
      %v1730 = vadd.f32 %v1698, -1.4531521
      %v1731 = vadd.f32 %v1699, -1.4531521
      %v1732 = vadd.f32 %v1700, -1.4531521
      %v1733 = vadd.f32 %v1701, -1.4531521
      %v1734 = vadd.f32 %v1702, -1.4531521
      %v1735 = vadd.f32 %v1703, -1.4531521
      %v1736 = vadd.f32 %v1704, -1.4531521
      %v1737 = vadd.f32 %v1705, -1.4531521
      %v1738 = vadd.f32 %v1706, -1.4531521
      %v1739 = vadd.f32 %v1707, -1.4531521
      %v1740 = vadd.f32 %v1708, -1.4531521
      %v1741 = vmul.f32 %v1709, %v1645
      %v1742 = vmul.f32 %v1710, %v1646
      %v1743 = vmul.f32 %v1711, %v1647
      %v1744 = vmul.f32 %v1712, %v1648
      %v1745 = vmul.f32 %v1713, %v1649
      %v1746 = vmul.f32 %v1714, %v1650
      %v1747 = vmul.f32 %v1715, %v1651
      %v1748 = vmul.f32 %v1716, %v1652
      %v1749 = vmul.f32 %v1717, %v1653
      %v1750 = vmul.f32 %v1718, %v1654
      %v1751 = vmul.f32 %v1719, %v1655
      %v1752 = vmul.f32 %v1720, %v1656
      %v1753 = vmul.f32 %v1721, %v1657
      %v1754 = vmul.f32 %v1722, %v1658
      %v1755 = vmul.f32 %v1723, %v1659
      %v1756 = vmul.f32 %v1724, %v1660
      %v1757 = vmul.f32 %v1725, %v1661
      %v1758 = vmul.f32 %v1726, %v1662
      %v1759 = vmul.f32 %v1727, %v1663
      %v1760 = vmul.f32 %v1728, %v1664
      %v1761 = vmul.f32 %v1729, %v1665
      %v1762 = vmul.f32 %v1730, %v1666
      %v1763 = vmul.f32 %v1731, %v1667
      %v1764 = vmul.f32 %v1732, %v1668
      %v1765 = vmul.f32 %v1733, %v1669
      %v1766 = vmul.f32 %v1734, %v1670
      %v1767 = vmul.f32 %v1735, %v1671
      %v1768 = vmul.f32 %v1736, %v1672
      %v1769 = vmul.f32 %v1737, %v1673
      %v1770 = vmul.f32 %v1738, %v1674
      %v1771 = vmul.f32 %v1739, %v1675
      %v1772 = vmul.f32 %v1740, %v1676
      %v1773 = vadd.f32 %v1741, 1.4214138
      %v1774 = vadd.f32 %v1742, 1.4214138
      %v1775 = vadd.f32 %v1743, 1.4214138
      %v1776 = vadd.f32 %v1744, 1.4214138
      %v1777 = vadd.f32 %v1745, 1.4214138
      %v1778 = vadd.f32 %v1746, 1.4214138
      %v1779 = vadd.f32 %v1747, 1.4214138
      %v1780 = vadd.f32 %v1748, 1.4214138
      %v1781 = vadd.f32 %v1749, 1.4214138
      %v1782 = vadd.f32 %v1750, 1.4214138
      %v1783 = vadd.f32 %v1751, 1.4214138
      %v1784 = vadd.f32 %v1752, 1.4214138
      %v1785 = vadd.f32 %v1753, 1.4214138
      %v1786 = vadd.f32 %v1754, 1.4214138
      %v1787 = vadd.f32 %v1755, 1.4214138
      %v1788 = vadd.f32 %v1756, 1.4214138
      %v1789 = vadd.f32 %v1757, 1.4214138
      %v1790 = vadd.f32 %v1758, 1.4214138
      %v1791 = vadd.f32 %v1759, 1.4214138
      %v1792 = vadd.f32 %v1760, 1.4214138
      %v1793 = vadd.f32 %v1761, 1.4214138
      %v1794 = vadd.f32 %v1762, 1.4214138
      %v1795 = vadd.f32 %v1763, 1.4214138
      %v1796 = vadd.f32 %v1764, 1.4214138
      %v1797 = vadd.f32 %v1765, 1.4214138
      %v1798 = vadd.f32 %v1766, 1.4214138
      %v1799 = vadd.f32 %v1767, 1.4214138
      %v1800 = vadd.f32 %v1768, 1.4214138
      %v1801 = vadd.f32 %v1769, 1.4214138
      %v1802 = vadd.f32 %v1770, 1.4214138
      %v1803 = vadd.f32 %v1771, 1.4214138
      %v1804 = vadd.f32 %v1772, 1.4214138
      %v1805 = vmul.f32 %v1773, %v1645
      %v1806 = vmul.f32 %v1774, %v1646
      %v1807 = vmul.f32 %v1775, %v1647
      %v1808 = vmul.f32 %v1776, %v1648
      %v1809 = vmul.f32 %v1777, %v1649
      %v1810 = vmul.f32 %v1778, %v1650
      %v1811 = vmul.f32 %v1779, %v1651
      %v1812 = vmul.f32 %v1780, %v1652
      %v1813 = vmul.f32 %v1781, %v1653
      %v1814 = vmul.f32 %v1782, %v1654
      %v1815 = vmul.f32 %v1783, %v1655
      %v1816 = vmul.f32 %v1784, %v1656
      %v1817 = vmul.f32 %v1785, %v1657
      %v1818 = vmul.f32 %v1786, %v1658
      %v1819 = vmul.f32 %v1787, %v1659
      %v1820 = vmul.f32 %v1788, %v1660
      %v1821 = vmul.f32 %v1789, %v1661
      %v1822 = vmul.f32 %v1790, %v1662
      %v1823 = vmul.f32 %v1791, %v1663
      %v1824 = vmul.f32 %v1792, %v1664
      %v1825 = vmul.f32 %v1793, %v1665
      %v1826 = vmul.f32 %v1794, %v1666
      %v1827 = vmul.f32 %v1795, %v1667
      %v1828 = vmul.f32 %v1796, %v1668
      %v1829 = vmul.f32 %v1797, %v1669
      %v1830 = vmul.f32 %v1798, %v1670
      %v1831 = vmul.f32 %v1799, %v1671
      %v1832 = vmul.f32 %v1800, %v1672
      %v1833 = vmul.f32 %v1801, %v1673
      %v1834 = vmul.f32 %v1802, %v1674
      %v1835 = vmul.f32 %v1803, %v1675
      %v1836 = vmul.f32 %v1804, %v1676
      %v1837 = vadd.f32 %v1805, -0.28449672
      %v1838 = vadd.f32 %v1806, -0.28449672
      %v1839 = vadd.f32 %v1807, -0.28449672
      %v1840 = vadd.f32 %v1808, -0.28449672
      %v1841 = vadd.f32 %v1809, -0.28449672
      %v1842 = vadd.f32 %v1810, -0.28449672
      %v1843 = vadd.f32 %v1811, -0.28449672
      %v1844 = vadd.f32 %v1812, -0.28449672
      %v1845 = vadd.f32 %v1813, -0.28449672
      %v1846 = vadd.f32 %v1814, -0.28449672
      %v1847 = vadd.f32 %v1815, -0.28449672
      %v1848 = vadd.f32 %v1816, -0.28449672
      %v1849 = vadd.f32 %v1817, -0.28449672
      %v1850 = vadd.f32 %v1818, -0.28449672
      %v1851 = vadd.f32 %v1819, -0.28449672
      %v1852 = vadd.f32 %v1820, -0.28449672
      %v1853 = vadd.f32 %v1821, -0.28449672
      %v1854 = vadd.f32 %v1822, -0.28449672
      %v1855 = vadd.f32 %v1823, -0.28449672
      %v1856 = vadd.f32 %v1824, -0.28449672
      %v1857 = vadd.f32 %v1825, -0.28449672
      %v1858 = vadd.f32 %v1826, -0.28449672
      %v1859 = vadd.f32 %v1827, -0.28449672
      %v1860 = vadd.f32 %v1828, -0.28449672
      %v1861 = vadd.f32 %v1829, -0.28449672
      %v1862 = vadd.f32 %v1830, -0.28449672
      %v1863 = vadd.f32 %v1831, -0.28449672
      %v1864 = vadd.f32 %v1832, -0.28449672
      %v1865 = vadd.f32 %v1833, -0.28449672
      %v1866 = vadd.f32 %v1834, -0.28449672
      %v1867 = vadd.f32 %v1835, -0.28449672
      %v1868 = vadd.f32 %v1836, -0.28449672
      %v1869 = vmul.f32 %v1837, %v1645
      %v1870 = vmul.f32 %v1838, %v1646
      %v1871 = vmul.f32 %v1839, %v1647
      %v1872 = vmul.f32 %v1840, %v1648
      %v1873 = vmul.f32 %v1841, %v1649
      %v1874 = vmul.f32 %v1842, %v1650
      %v1875 = vmul.f32 %v1843, %v1651
      %v1876 = vmul.f32 %v1844, %v1652
      %v1877 = vmul.f32 %v1845, %v1653
      %v1878 = vmul.f32 %v1846, %v1654
      %v1879 = vmul.f32 %v1847, %v1655
      %v1880 = vmul.f32 %v1848, %v1656
      %v1881 = vmul.f32 %v1849, %v1657
      %v1882 = vmul.f32 %v1850, %v1658
      %v1883 = vmul.f32 %v1851, %v1659
      %v1884 = vmul.f32 %v1852, %v1660
      %v1885 = vmul.f32 %v1853, %v1661
      %v1886 = vmul.f32 %v1854, %v1662
      %v1887 = vmul.f32 %v1855, %v1663
      %v1888 = vmul.f32 %v1856, %v1664
      %v1889 = vmul.f32 %v1857, %v1665
      %v1890 = vmul.f32 %v1858, %v1666
      %v1891 = vmul.f32 %v1859, %v1667
      %v1892 = vmul.f32 %v1860, %v1668
      %v1893 = vmul.f32 %v1861, %v1669
      %v1894 = vmul.f32 %v1862, %v1670
      %v1895 = vmul.f32 %v1863, %v1671
      %v1896 = vmul.f32 %v1864, %v1672
      %v1897 = vmul.f32 %v1865, %v1673
      %v1898 = vmul.f32 %v1866, %v1674
      %v1899 = vmul.f32 %v1867, %v1675
      %v1900 = vmul.f32 %v1868, %v1676
      %v1901 = vadd.f32 %v1869, 0.2548296
      %v1902 = vadd.f32 %v1870, 0.2548296
      %v1903 = vadd.f32 %v1871, 0.2548296
      %v1904 = vadd.f32 %v1872, 0.2548296
      %v1905 = vadd.f32 %v1873, 0.2548296
      %v1906 = vadd.f32 %v1874, 0.2548296
      %v1907 = vadd.f32 %v1875, 0.2548296
      %v1908 = vadd.f32 %v1876, 0.2548296
      %v1909 = vadd.f32 %v1877, 0.2548296
      %v1910 = vadd.f32 %v1878, 0.2548296
      %v1911 = vadd.f32 %v1879, 0.2548296
      %v1912 = vadd.f32 %v1880, 0.2548296
      %v1913 = vadd.f32 %v1881, 0.2548296
      %v1914 = vadd.f32 %v1882, 0.2548296
      %v1915 = vadd.f32 %v1883, 0.2548296
      %v1916 = vadd.f32 %v1884, 0.2548296
      %v1917 = vadd.f32 %v1885, 0.2548296
      %v1918 = vadd.f32 %v1886, 0.2548296
      %v1919 = vadd.f32 %v1887, 0.2548296
      %v1920 = vadd.f32 %v1888, 0.2548296
      %v1921 = vadd.f32 %v1889, 0.2548296
      %v1922 = vadd.f32 %v1890, 0.2548296
      %v1923 = vadd.f32 %v1891, 0.2548296
      %v1924 = vadd.f32 %v1892, 0.2548296
      %v1925 = vadd.f32 %v1893, 0.2548296
      %v1926 = vadd.f32 %v1894, 0.2548296
      %v1927 = vadd.f32 %v1895, 0.2548296
      %v1928 = vadd.f32 %v1896, 0.2548296
      %v1929 = vadd.f32 %v1897, 0.2548296
      %v1930 = vadd.f32 %v1898, 0.2548296
      %v1931 = vadd.f32 %v1899, 0.2548296
      %v1932 = vadd.f32 %v1900, 0.2548296
      %v1933 = vmul.f32 %v1901, %v1645
      %v1934 = vmul.f32 %v1902, %v1646
      %v1935 = vmul.f32 %v1903, %v1647
      %v1936 = vmul.f32 %v1904, %v1648
      %v1937 = vmul.f32 %v1905, %v1649
      %v1938 = vmul.f32 %v1906, %v1650
      %v1939 = vmul.f32 %v1907, %v1651
      %v1940 = vmul.f32 %v1908, %v1652
      %v1941 = vmul.f32 %v1909, %v1653
      %v1942 = vmul.f32 %v1910, %v1654
      %v1943 = vmul.f32 %v1911, %v1655
      %v1944 = vmul.f32 %v1912, %v1656
      %v1945 = vmul.f32 %v1913, %v1657
      %v1946 = vmul.f32 %v1914, %v1658
      %v1947 = vmul.f32 %v1915, %v1659
      %v1948 = vmul.f32 %v1916, %v1660
      %v1949 = vmul.f32 %v1917, %v1661
      %v1950 = vmul.f32 %v1918, %v1662
      %v1951 = vmul.f32 %v1919, %v1663
      %v1952 = vmul.f32 %v1920, %v1664
      %v1953 = vmul.f32 %v1921, %v1665
      %v1954 = vmul.f32 %v1922, %v1666
      %v1955 = vmul.f32 %v1923, %v1667
      %v1956 = vmul.f32 %v1924, %v1668
      %v1957 = vmul.f32 %v1925, %v1669
      %v1958 = vmul.f32 %v1926, %v1670
      %v1959 = vmul.f32 %v1927, %v1671
      %v1960 = vmul.f32 %v1928, %v1672
      %v1961 = vmul.f32 %v1929, %v1673
      %v1962 = vmul.f32 %v1930, %v1674
      %v1963 = vmul.f32 %v1931, %v1675
      %v1964 = vmul.f32 %v1932, %v1676
      %v1965 = vsub.f32 0.0, %v1549
      %v1966 = vsub.f32 0.0, %v1550
      %v1967 = vsub.f32 0.0, %v1551
      %v1968 = vsub.f32 0.0, %v1552
      %v1969 = vsub.f32 0.0, %v1553
      %v1970 = vsub.f32 0.0, %v1554
      %v1971 = vsub.f32 0.0, %v1555
      %v1972 = vsub.f32 0.0, %v1556
      %v1973 = vsub.f32 0.0, %v1557
      %v1974 = vsub.f32 0.0, %v1558
      %v1975 = vsub.f32 0.0, %v1559
      %v1976 = vsub.f32 0.0, %v1560
      %v1977 = vsub.f32 0.0, %v1561
      %v1978 = vsub.f32 0.0, %v1562
      %v1979 = vsub.f32 0.0, %v1563
      %v1980 = vsub.f32 0.0, %v1564
      %v1981 = vsub.f32 0.0, %v1565
      %v1982 = vsub.f32 0.0, %v1566
      %v1983 = vsub.f32 0.0, %v1567
      %v1984 = vsub.f32 0.0, %v1568
      %v1985 = vsub.f32 0.0, %v1569
      %v1986 = vsub.f32 0.0, %v1570
      %v1987 = vsub.f32 0.0, %v1571
      %v1988 = vsub.f32 0.0, %v1572
      %v1989 = vsub.f32 0.0, %v1573
      %v1990 = vsub.f32 0.0, %v1574
      %v1991 = vsub.f32 0.0, %v1575
      %v1992 = vsub.f32 0.0, %v1576
      %v1993 = vsub.f32 0.0, %v1577
      %v1994 = vsub.f32 0.0, %v1578
      %v1995 = vsub.f32 0.0, %v1579
      %v1996 = vsub.f32 0.0, %v1580
      %v1997 = vmul.f32 %v1965, %v1549
      %v1998 = vmul.f32 %v1966, %v1550
      %v1999 = vmul.f32 %v1967, %v1551
      %v2000 = vmul.f32 %v1968, %v1552
      %v2001 = vmul.f32 %v1969, %v1553
      %v2002 = vmul.f32 %v1970, %v1554
      %v2003 = vmul.f32 %v1971, %v1555
      %v2004 = vmul.f32 %v1972, %v1556
      %v2005 = vmul.f32 %v1973, %v1557
      %v2006 = vmul.f32 %v1974, %v1558
      %v2007 = vmul.f32 %v1975, %v1559
      %v2008 = vmul.f32 %v1976, %v1560
      %v2009 = vmul.f32 %v1977, %v1561
      %v2010 = vmul.f32 %v1978, %v1562
      %v2011 = vmul.f32 %v1979, %v1563
      %v2012 = vmul.f32 %v1980, %v1564
      %v2013 = vmul.f32 %v1981, %v1565
      %v2014 = vmul.f32 %v1982, %v1566
      %v2015 = vmul.f32 %v1983, %v1567
      %v2016 = vmul.f32 %v1984, %v1568
      %v2017 = vmul.f32 %v1985, %v1569
      %v2018 = vmul.f32 %v1986, %v1570
      %v2019 = vmul.f32 %v1987, %v1571
      %v2020 = vmul.f32 %v1988, %v1572
      %v2021 = vmul.f32 %v1989, %v1573
      %v2022 = vmul.f32 %v1990, %v1574
      %v2023 = vmul.f32 %v1991, %v1575
      %v2024 = vmul.f32 %v1992, %v1576
      %v2025 = vmul.f32 %v1993, %v1577
      %v2026 = vmul.f32 %v1994, %v1578
      %v2027 = vmul.f32 %v1995, %v1579
      %v2028 = vmul.f32 %v1996, %v1580
      %v2029 = vmul.f32 %v1997, 1.442695
      %v2030 = vpow.pop %v2029
      %v2031 = vmul.f32 %v1998, 1.442695
      %v2032 = vpow.pop %v2031
      %v2033 = vmul.f32 %v1999, 1.442695
      %v2034 = vpow.pop %v2033
      %v2035 = vmul.f32 %v2000, 1.442695
      %v2036 = vpow.pop %v2035
      %v2037 = vmul.f32 %v2001, 1.442695
      %v2038 = vpow.pop %v2037
      %v2039 = vmul.f32 %v2002, 1.442695
      %v2040 = vpow.pop %v2039
      %v2041 = vmul.f32 %v2003, 1.442695
      %v2042 = vpow.pop %v2041
      %v2043 = vmul.f32 %v2004, 1.442695
      %v2044 = vpow.pop %v2043
      %v2045 = vmul.f32 %v2005, 1.442695
      %v2046 = vpow.pop %v2045
      %v2047 = vmul.f32 %v2006, 1.442695
      %v2048 = vpow.pop %v2047
      %v2049 = vmul.f32 %v2007, 1.442695
      %v2050 = vpow.pop %v2049
      %v2051 = vmul.f32 %v2008, 1.442695
      %v2052 = vpow.pop %v2051
      %v2053 = vmul.f32 %v2009, 1.442695
      %v2054 = vpow.pop %v2053
      %v2055 = vmul.f32 %v2010, 1.442695
      %v2056 = vpow.pop %v2055
      %v2057 = vmul.f32 %v2011, 1.442695
      %v2058 = vpow.pop %v2057
      %v2059 = vmul.f32 %v2012, 1.442695
      %v2060 = vpow.pop %v2059
      %v2061 = vmul.f32 %v2013, 1.442695
      %v2062 = vpow.pop %v2061
      %v2063 = vmul.f32 %v2014, 1.442695
      %v2064 = vpow.pop %v2063
      %v2065 = vmul.f32 %v2015, 1.442695
      %v2066 = vpow.pop %v2065
      %v2067 = vmul.f32 %v2016, 1.442695
      %v2068 = vpow.pop %v2067
      %v2069 = vmul.f32 %v2017, 1.442695
      %v2070 = vpow.pop %v2069
      %v2071 = vmul.f32 %v2018, 1.442695
      %v2072 = vpow.pop %v2071
      %v2073 = vmul.f32 %v2019, 1.442695
      %v2074 = vpow.pop %v2073
      %v2075 = vmul.f32 %v2020, 1.442695
      %v2076 = vpow.pop %v2075
      %v2077 = vmul.f32 %v2021, 1.442695
      %v2078 = vpow.pop %v2077
      %v2079 = vmul.f32 %v2022, 1.442695
      %v2080 = vpow.pop %v2079
      %v2081 = vmul.f32 %v2023, 1.442695
      %v2082 = vpow.pop %v2081
      %v2083 = vmul.f32 %v2024, 1.442695
      %v2084 = vpow.pop %v2083
      %v2085 = vmul.f32 %v2025, 1.442695
      %v2086 = vpow.pop %v2085
      %v2087 = vmul.f32 %v2026, 1.442695
      %v2088 = vpow.pop %v2087
      %v2089 = vmul.f32 %v2027, 1.442695
      %v2090 = vpow.pop %v2089
      %v2091 = vmul.f32 %v2028, 1.442695
      %v2092 = vpow.pop %v2091
      %v2093 = vmul.f32 %v1933, %v2030
      %v2094 = vmul.f32 %v1934, %v2032
      %v2095 = vmul.f32 %v1935, %v2034
      %v2096 = vmul.f32 %v1936, %v2036
      %v2097 = vmul.f32 %v1937, %v2038
      %v2098 = vmul.f32 %v1938, %v2040
      %v2099 = vmul.f32 %v1939, %v2042
      %v2100 = vmul.f32 %v1940, %v2044
      %v2101 = vmul.f32 %v1941, %v2046
      %v2102 = vmul.f32 %v1942, %v2048
      %v2103 = vmul.f32 %v1943, %v2050
      %v2104 = vmul.f32 %v1944, %v2052
      %v2105 = vmul.f32 %v1945, %v2054
      %v2106 = vmul.f32 %v1946, %v2056
      %v2107 = vmul.f32 %v1947, %v2058
      %v2108 = vmul.f32 %v1948, %v2060
      %v2109 = vmul.f32 %v1949, %v2062
      %v2110 = vmul.f32 %v1950, %v2064
      %v2111 = vmul.f32 %v1951, %v2066
      %v2112 = vmul.f32 %v1952, %v2068
      %v2113 = vmul.f32 %v1953, %v2070
      %v2114 = vmul.f32 %v1954, %v2072
      %v2115 = vmul.f32 %v1955, %v2074
      %v2116 = vmul.f32 %v1956, %v2076
      %v2117 = vmul.f32 %v1957, %v2078
      %v2118 = vmul.f32 %v1958, %v2080
      %v2119 = vmul.f32 %v1959, %v2082
      %v2120 = vmul.f32 %v1960, %v2084
      %v2121 = vmul.f32 %v1961, %v2086
      %v2122 = vmul.f32 %v1962, %v2088
      %v2123 = vmul.f32 %v1963, %v2090
      %v2124 = vmul.f32 %v1964, %v2092
      %v2125 = vsub.f32 1.0, %v2093
      %v2126 = vsub.f32 1.0, %v2094
      %v2127 = vsub.f32 1.0, %v2095
      %v2128 = vsub.f32 1.0, %v2096
      %v2129 = vsub.f32 1.0, %v2097
      %v2130 = vsub.f32 1.0, %v2098
      %v2131 = vsub.f32 1.0, %v2099
      %v2132 = vsub.f32 1.0, %v2100
      %v2133 = vsub.f32 1.0, %v2101
      %v2134 = vsub.f32 1.0, %v2102
      %v2135 = vsub.f32 1.0, %v2103
      %v2136 = vsub.f32 1.0, %v2104
      %v2137 = vsub.f32 1.0, %v2105
      %v2138 = vsub.f32 1.0, %v2106
      %v2139 = vsub.f32 1.0, %v2107
      %v2140 = vsub.f32 1.0, %v2108
      %v2141 = vsub.f32 1.0, %v2109
      %v2142 = vsub.f32 1.0, %v2110
      %v2143 = vsub.f32 1.0, %v2111
      %v2144 = vsub.f32 1.0, %v2112
      %v2145 = vsub.f32 1.0, %v2113
      %v2146 = vsub.f32 1.0, %v2114
      %v2147 = vsub.f32 1.0, %v2115
      %v2148 = vsub.f32 1.0, %v2116
      %v2149 = vsub.f32 1.0, %v2117
      %v2150 = vsub.f32 1.0, %v2118
      %v2151 = vsub.f32 1.0, %v2119
      %v2152 = vsub.f32 1.0, %v2120
      %v2153 = vsub.f32 1.0, %v2121
      %v2154 = vsub.f32 1.0, %v2122
      %v2155 = vsub.f32 1.0, %v2123
      %v2156 = vsub.f32 1.0, %v2124
      %v2157 = vmul.f32 %v1517, %v2125
      %v2158 = vmul.f32 %v1518, %v2126
      %v2159 = vmul.f32 %v1519, %v2127
      %v2160 = vmul.f32 %v1520, %v2128
      %v2161 = vmul.f32 %v1521, %v2129
      %v2162 = vmul.f32 %v1522, %v2130
      %v2163 = vmul.f32 %v1523, %v2131
      %v2164 = vmul.f32 %v1524, %v2132
      %v2165 = vmul.f32 %v1525, %v2133
      %v2166 = vmul.f32 %v1526, %v2134
      %v2167 = vmul.f32 %v1527, %v2135
      %v2168 = vmul.f32 %v1528, %v2136
      %v2169 = vmul.f32 %v1529, %v2137
      %v2170 = vmul.f32 %v1530, %v2138
      %v2171 = vmul.f32 %v1531, %v2139
      %v2172 = vmul.f32 %v1532, %v2140
      %v2173 = vmul.f32 %v1533, %v2141
      %v2174 = vmul.f32 %v1534, %v2142
      %v2175 = vmul.f32 %v1535, %v2143
      %v2176 = vmul.f32 %v1536, %v2144
      %v2177 = vmul.f32 %v1537, %v2145
      %v2178 = vmul.f32 %v1538, %v2146
      %v2179 = vmul.f32 %v1539, %v2147
      %v2180 = vmul.f32 %v1540, %v2148
      %v2181 = vmul.f32 %v1541, %v2149
      %v2182 = vmul.f32 %v1542, %v2150
      %v2183 = vmul.f32 %v1543, %v2151
      %v2184 = vmul.f32 %v1544, %v2152
      %v2185 = vmul.f32 %v1545, %v2153
      %v2186 = vmul.f32 %v1546, %v2154
      %v2187 = vmul.f32 %v1547, %v2155
      %v2188 = vmul.f32 %v1548, %v2156
      %v2189 = vadd.f32 %v2157, 1.0
      %v2190 = vadd.f32 %v2158, 1.0
      %v2191 = vadd.f32 %v2159, 1.0
      %v2192 = vadd.f32 %v2160, 1.0
      %v2193 = vadd.f32 %v2161, 1.0
      %v2194 = vadd.f32 %v2162, 1.0
      %v2195 = vadd.f32 %v2163, 1.0
      %v2196 = vadd.f32 %v2164, 1.0
      %v2197 = vadd.f32 %v2165, 1.0
      %v2198 = vadd.f32 %v2166, 1.0
      %v2199 = vadd.f32 %v2167, 1.0
      %v2200 = vadd.f32 %v2168, 1.0
      %v2201 = vadd.f32 %v2169, 1.0
      %v2202 = vadd.f32 %v2170, 1.0
      %v2203 = vadd.f32 %v2171, 1.0
      %v2204 = vadd.f32 %v2172, 1.0
      %v2205 = vadd.f32 %v2173, 1.0
      %v2206 = vadd.f32 %v2174, 1.0
      %v2207 = vadd.f32 %v2175, 1.0
      %v2208 = vadd.f32 %v2176, 1.0
      %v2209 = vadd.f32 %v2177, 1.0
      %v2210 = vadd.f32 %v2178, 1.0
      %v2211 = vadd.f32 %v2179, 1.0
      %v2212 = vadd.f32 %v2180, 1.0
      %v2213 = vadd.f32 %v2181, 1.0
      %v2214 = vadd.f32 %v2182, 1.0
      %v2215 = vadd.f32 %v2183, 1.0
      %v2216 = vadd.f32 %v2184, 1.0
      %v2217 = vadd.f32 %v2185, 1.0
      %v2218 = vadd.f32 %v2186, 1.0
      %v2219 = vadd.f32 %v2187, 1.0
      %v2220 = vadd.f32 %v2188, 1.0
      %v2221 = vmul.f32 %v1421, %v2189
      %v2222 = vmul.f32 %v1422, %v2190
      %v2223 = vmul.f32 %v1423, %v2191
      %v2224 = vmul.f32 %v1424, %v2192
      %v2225 = vmul.f32 %v1425, %v2193
      %v2226 = vmul.f32 %v1426, %v2194
      %v2227 = vmul.f32 %v1427, %v2195
      %v2228 = vmul.f32 %v1428, %v2196
      %v2229 = vmul.f32 %v1429, %v2197
      %v2230 = vmul.f32 %v1430, %v2198
      %v2231 = vmul.f32 %v1431, %v2199
      %v2232 = vmul.f32 %v1432, %v2200
      %v2233 = vmul.f32 %v1433, %v2201
      %v2234 = vmul.f32 %v1434, %v2202
      %v2235 = vmul.f32 %v1435, %v2203
      %v2236 = vmul.f32 %v1436, %v2204
      %v2237 = vmul.f32 %v1437, %v2205
      %v2238 = vmul.f32 %v1438, %v2206
      %v2239 = vmul.f32 %v1439, %v2207
      %v2240 = vmul.f32 %v1440, %v2208
      %v2241 = vmul.f32 %v1441, %v2209
      %v2242 = vmul.f32 %v1442, %v2210
      %v2243 = vmul.f32 %v1443, %v2211
      %v2244 = vmul.f32 %v1444, %v2212
      %v2245 = vmul.f32 %v1445, %v2213
      %v2246 = vmul.f32 %v1446, %v2214
      %v2247 = vmul.f32 %v1447, %v2215
      %v2248 = vmul.f32 %v1448, %v2216
      %v2249 = vmul.f32 %v1449, %v2217
      %v2250 = vmul.f32 %v1450, %v2218
      %v2251 = vmul.f32 %v1451, %v2219
      %v2252 = vmul.f32 %v1452, %v2220
      %v2269 = vrot.slane %v2222, 7
      %v2270 = vrot.slane %v2224, 7
      %v2271 = vrot.slane %v2226, 7
      %v2272 = vrot.slane %v2228, 7
      %v2273 = vrot.slane %v2230, 7
      %v2274 = vrot.slane %v2232, 7
      %v2275 = vrot.slane %v2234, 7
      %v2276 = vrot.slane %v2236, 7
      %v2277 = vrot.slane %v2238, 7
      %v2278 = vrot.slane %v2240, 7
      %v2279 = vrot.slane %v2242, 7
      %v2280 = vrot.slane %v2244, 7
      %v2281 = vrot.slane %v2246, 7
      %v2282 = vrot.slane %v2248, 7
      %v2283 = vrot.slane %v2250, 7
      %v2284 = vrot.slane %v2252, 7
      %vm2317 = vcmask 1040384
      %v2318 = vrot.slane %v2221, 7
      %v2319 = vsel %vm2317, %v2318, %v2269
      %v2320 = vrot.slane %v2223, 7
      %v2321 = vsel %vm2317, %v2320, %v2270
      %v2322 = vrot.slane %v2225, 7
      %v2323 = vsel %vm2317, %v2322, %v2271
      %v2324 = vrot.slane %v2227, 7
      %v2325 = vsel %vm2317, %v2324, %v2272
      %v2326 = vrot.slane %v2229, 7
      %v2327 = vsel %vm2317, %v2326, %v2273
      %v2328 = vrot.slane %v2231, 7
      %v2329 = vsel %vm2317, %v2328, %v2274
      %v2330 = vrot.slane %v2233, 7
      %v2331 = vsel %vm2317, %v2330, %v2275
      %v2332 = vrot.slane %v2235, 7
      %v2333 = vsel %vm2317, %v2332, %v2276
      %v2334 = vrot.slane %v2237, 7
      %v2335 = vsel %vm2317, %v2334, %v2277
      %v2336 = vrot.slane %v2239, 7
      %v2337 = vsel %vm2317, %v2336, %v2278
      %v2338 = vrot.slane %v2241, 7
      %v2339 = vsel %vm2317, %v2338, %v2279
      %v2340 = vrot.slane %v2243, 7
      %v2341 = vsel %vm2317, %v2340, %v2280
      %v2342 = vrot.slane %v2245, 7
      %v2343 = vsel %vm2317, %v2342, %v2281
      %v2344 = vrot.slane %v2247, 7
      %v2345 = vsel %vm2317, %v2344, %v2282
      %v2346 = vrot.slane %v2249, 7
      %v2347 = vsel %vm2317, %v2346, %v2283
      %v2348 = vrot.slane %v2251, 7
      %v2349 = vsel %vm2317, %v2348, %v2284
      %v2382 = vsel %vm2317, %v2269, %v2318
      %v2383 = vsel %vm2317, %v2270, %v2320
      %v2384 = vsel %vm2317, %v2271, %v2322
      %v2385 = vsel %vm2317, %v2272, %v2324
      %v2386 = vsel %vm2317, %v2273, %v2326
      %v2387 = vsel %vm2317, %v2274, %v2328
      %v2388 = vsel %vm2317, %v2275, %v2330
      %v2389 = vsel %vm2317, %v2276, %v2332
      %v2390 = vsel %vm2317, %v2277, %v2334
      %v2391 = vsel %vm2317, %v2278, %v2336
      %v2392 = vsel %vm2317, %v2279, %v2338
      %v2393 = vsel %vm2317, %v2280, %v2340
      %v2394 = vsel %vm2317, %v2281, %v2342
      %v2395 = vsel %vm2317, %v2282, %v2344
      %v2396 = vsel %vm2317, %v2283, %v2346
      %v2397 = vsel %vm2317, %v2284, %v2348
      %v2398 = vpack.c.bf16 %v2319, %v2382
      %v2399 = vpack.c.bf16 %v2321, %v2383
      %v2400 = vpack.c.bf16 %v2323, %v2384
      %v2401 = vpack.c.bf16 %v2325, %v2385
      %v2402 = vpack.c.bf16 %v2327, %v2386
      %v2403 = vpack.c.bf16 %v2329, %v2387
      %v2404 = vpack.c.bf16 %v2331, %v2388
      %v2405 = vpack.c.bf16 %v2333, %v2389
      %v2406 = vpack.c.bf16 %v2335, %v2390
      %v2407 = vpack.c.bf16 %v2337, %v2391
      %v2408 = vpack.c.bf16 %v2339, %v2392
      %v2409 = vpack.c.bf16 %v2341, %v2393
      %v2410 = vpack.c.bf16 %v2343, %v2394
      %v2411 = vpack.c.bf16 %v2345, %v2395
      %v2412 = vpack.c.bf16 %v2347, %v2396
      %v2413 = vpack.c.bf16 %v2349, %v2397
      %v2430 = vunpack.c.l.b16 %v2398
      %v2431 = vunpack.c.h.b16 %v2398
      %v2432 = vunpack.c.l.b16 %v2399
      %v2433 = vunpack.c.h.b16 %v2399
      %v2434 = vunpack.c.l.b16 %v2400
      %v2435 = vunpack.c.h.b16 %v2400
      %v2436 = vunpack.c.l.b16 %v2401
      %v2437 = vunpack.c.h.b16 %v2401
      %v2438 = vunpack.c.l.b16 %v2402
      %v2439 = vunpack.c.h.b16 %v2402
      %v2440 = vunpack.c.l.b16 %v2403
      %v2441 = vunpack.c.h.b16 %v2403
      %v2442 = vunpack.c.l.b16 %v2404
      %v2443 = vunpack.c.h.b16 %v2404
      %v2444 = vunpack.c.l.b16 %v2405
      %v2445 = vunpack.c.h.b16 %v2405
      %v2446 = vunpack.c.l.b16 %v2406
      %v2447 = vunpack.c.h.b16 %v2406
      %v2448 = vunpack.c.l.b16 %v2407
      %v2449 = vunpack.c.h.b16 %v2407
      %v2450 = vunpack.c.l.b16 %v2408
      %v2451 = vunpack.c.h.b16 %v2408
      %v2452 = vunpack.c.l.b16 %v2409
      %v2453 = vunpack.c.h.b16 %v2409
      %v2454 = vunpack.c.l.b16 %v2410
      %v2455 = vunpack.c.h.b16 %v2410
      %v2456 = vunpack.c.l.b16 %v2411
      %v2457 = vunpack.c.h.b16 %v2411
      %v2458 = vunpack.c.l.b16 %v2412
      %v2459 = vunpack.c.h.b16 %v2412
      %v2460 = vunpack.c.l.b16 %v2413
      %v2461 = vunpack.c.h.b16 %v2413
      %v2462 = vpack.c.b16 %v2430, %v2430
      %v2463 = vpack.c.b16 %v2431, %v2431
      %v2464 = vpack.c.b16 %v2432, %v2432
      %v2465 = vpack.c.b16 %v2433, %v2433
      %v2466 = vpack.c.b16 %v2434, %v2434
      %v2467 = vpack.c.b16 %v2435, %v2435
      %v2468 = vpack.c.b16 %v2436, %v2436
      %v2469 = vpack.c.b16 %v2437, %v2437
      %v2470 = vpack.c.b16 %v2438, %v2438
      %v2471 = vpack.c.b16 %v2439, %v2439
      %v2472 = vpack.c.b16 %v2440, %v2440
      %v2473 = vpack.c.b16 %v2441, %v2441
      %v2474 = vpack.c.b16 %v2442, %v2442
      %v2475 = vpack.c.b16 %v2443, %v2443
      %v2476 = vpack.c.b16 %v2444, %v2444
      %v2477 = vpack.c.b16 %v2445, %v2445
      %v2478 = vpack.c.b16 %v2446, %v2446
      %v2479 = vpack.c.b16 %v2447, %v2447
      %v2480 = vpack.c.b16 %v2448, %v2448
      %v2481 = vpack.c.b16 %v2449, %v2449
      %v2482 = vpack.c.b16 %v2450, %v2450
      %v2483 = vpack.c.b16 %v2451, %v2451
      %v2484 = vpack.c.b16 %v2452, %v2452
      %v2485 = vpack.c.b16 %v2453, %v2453
      %v2486 = vpack.c.b16 %v2454, %v2454
      %v2487 = vpack.c.b16 %v2455, %v2455
      %v2488 = vpack.c.b16 %v2456, %v2456
      %v2489 = vpack.c.b16 %v2457, %v2457
      %v2490 = vpack.c.b16 %v2458, %v2458
      %v2491 = vpack.c.b16 %v2459, %v2459
      %v2492 = vpack.c.b16 %v2460, %v2460
      %v2493 = vpack.c.b16 %v2461, %v2461
      %2526 = vst [vmem:[#allocation2 + $0x8] sm:$0xf] %v2462
      %2527 = vst [vmem:[#allocation2 + $0xc] sm:$0xf] %v2463
      %2528 = vst [vmem:[#allocation2 + $0x10] sm:$0xf] %v2464
      %2529 = vst [vmem:[#allocation2 + $0x14] sm:$0xf] %v2465
      %2530 = vst [vmem:[#allocation2 + $0x18] sm:$0xf] %v2466
      %2531 = vst [vmem:[#allocation2 + $0x1c] sm:$0xf] %v2467
      %2532 = vst [vmem:[#allocation2 + $0x20] sm:$0xf] %v2468
      %2533 = vst [vmem:[#allocation2 + $0x24] sm:$0xf] %v2469
      %2534 = vst [vmem:[#allocation2 + $0x28] sm:$0xf] %v2470
      %2535 = vst [vmem:[#allocation2 + $0x2c] sm:$0xf] %v2471
      %2536 = vst [vmem:[#allocation2 + $0x30] sm:$0xf] %v2472
      %2537 = vst [vmem:[#allocation2 + $0x34] sm:$0xf] %v2473
      %2538 = vst [vmem:[#allocation2 + $0x38] sm:$0xf] %v2474
      %2539 = vst [vmem:[#allocation2 + $0x3c] sm:$0xf] %v2475
      %2540 = vst [vmem:[#allocation2 + $0x40] sm:$0xf] %v2476
      %2541 = vst [vmem:[#allocation2 + $0x44] sm:$0xf] %v2477
      %2542 = vst [vmem:[#allocation2 + $0x48] sm:$0xf] %v2478
      %2543 = vst [vmem:[#allocation2 + $0x4c] sm:$0xf] %v2479
      %2544 = vst [vmem:[#allocation2 + $0x50] sm:$0xf] %v2480
      %2545 = vst [vmem:[#allocation2 + $0x54] sm:$0xf] %v2481
      %2546 = vst [vmem:[#allocation2 + $0x58] sm:$0xf] %v2482
      %2547 = vst [vmem:[#allocation2 + $0x5c] sm:$0xf] %v2483
      %2548 = vst [vmem:[#allocation2 + $0x60] sm:$0xf] %v2484
      %2549 = vst [vmem:[#allocation2 + $0x64] sm:$0xf] %v2485
      %2550 = vst [vmem:[#allocation2 + $0x68] sm:$0xf] %v2486
      %2551 = vst [vmem:[#allocation2 + $0x6c] sm:$0xf] %v2487
      %2552 = vst [vmem:[#allocation2 + $0x70] sm:$0xf] %v2488
      %2553 = vst [vmem:[#allocation2 + $0x74] sm:$0xf] %v2489
      %2554 = vst [vmem:[#allocation2 + $0x78] sm:$0xf] %v2490
      %2555 = vst [vmem:[#allocation2 + $0x7c] sm:$0xf] %v2491
      %2556 = vst [vmem:[#allocation2 + $0x80] sm:$0xf] %v2492
      %2557 = vst [vmem:[#allocation2 + $0x84] sm:$0xf] %v2493
      %2558 = vst [vmem:[#allocation2] sm:$0xf] %v2492
      %2559 = vst [vmem:[#allocation2 + $0x4] sm:$0xf] %v2493
      %2560 = vst [vmem:[#allocation2 + $0x88] sm:$0xf] %v2462
      %2561 = vst [vmem:[#allocation2 + $0x8c] sm:$0xf] %v2463
      %v2562 = vpack.c.bf16 %v2222, %v2221
      %v2563 = vpack.c.bf16 %v2224, %v2223
      %v2564 = vpack.c.bf16 %v2226, %v2225
      %v2565 = vpack.c.bf16 %v2228, %v2227
      %v2566 = vpack.c.bf16 %v2230, %v2229
      %v2567 = vpack.c.bf16 %v2232, %v2231
      %v2568 = vpack.c.bf16 %v2234, %v2233
      %v2569 = vpack.c.bf16 %v2236, %v2235
      %v2570 = vpack.c.bf16 %v2238, %v2237
      %v2571 = vpack.c.bf16 %v2240, %v2239
      %v2572 = vpack.c.bf16 %v2242, %v2241
      %v2573 = vpack.c.bf16 %v2244, %v2243
      %v2574 = vpack.c.bf16 %v2246, %v2245
      %v2575 = vpack.c.bf16 %v2248, %v2247
      %v2576 = vpack.c.bf16 %v2250, %v2249
      %v2577 = vpack.c.bf16 %v2252, %v2251
      %v2594 = vunpack.c.l.b16 %v2562
      %v2595 = vunpack.c.h.b16 %v2562
      %v2596 = vunpack.c.l.b16 %v2563
      %v2597 = vunpack.c.h.b16 %v2563
      %v2598 = vunpack.c.l.b16 %v2564
      %v2599 = vunpack.c.h.b16 %v2564
      %v2600 = vunpack.c.l.b16 %v2565
      %v2601 = vunpack.c.h.b16 %v2565
      %v2602 = vunpack.c.l.b16 %v2566
      %v2603 = vunpack.c.h.b16 %v2566
      %v2604 = vunpack.c.l.b16 %v2567
      %v2605 = vunpack.c.h.b16 %v2567
      %v2606 = vunpack.c.l.b16 %v2568
      %v2607 = vunpack.c.h.b16 %v2568
      %v2608 = vunpack.c.l.b16 %v2569
      %v2609 = vunpack.c.h.b16 %v2569
      %v2610 = vunpack.c.l.b16 %v2570
      %v2611 = vunpack.c.h.b16 %v2570
      %v2612 = vunpack.c.l.b16 %v2571
      %v2613 = vunpack.c.h.b16 %v2571
      %v2614 = vunpack.c.l.b16 %v2572
      %v2615 = vunpack.c.h.b16 %v2572
      %v2616 = vunpack.c.l.b16 %v2573
      %v2617 = vunpack.c.h.b16 %v2573
      %v2618 = vunpack.c.l.b16 %v2574
      %v2619 = vunpack.c.h.b16 %v2574
      %v2620 = vunpack.c.l.b16 %v2575
      %v2621 = vunpack.c.h.b16 %v2575
      %v2622 = vunpack.c.l.b16 %v2576
      %v2623 = vunpack.c.h.b16 %v2576
      %v2624 = vunpack.c.l.b16 %v2577
      %v2625 = vunpack.c.h.b16 %v2577
      %v2626 = vpack.c.b16 %v2594, %v2594
      %v2627 = vpack.c.b16 %v2595, %v2595
      %v2628 = vpack.c.b16 %v2596, %v2596
      %v2629 = vpack.c.b16 %v2597, %v2597
      %v2630 = vpack.c.b16 %v2598, %v2598
      %v2631 = vpack.c.b16 %v2599, %v2599
      %v2632 = vpack.c.b16 %v2600, %v2600
      %v2633 = vpack.c.b16 %v2601, %v2601
      %v2634 = vpack.c.b16 %v2602, %v2602
      %v2635 = vpack.c.b16 %v2603, %v2603
      %v2636 = vpack.c.b16 %v2604, %v2604
      %v2637 = vpack.c.b16 %v2605, %v2605
      %v2638 = vpack.c.b16 %v2606, %v2606
      %v2639 = vpack.c.b16 %v2607, %v2607
      %v2640 = vpack.c.b16 %v2608, %v2608
      %v2641 = vpack.c.b16 %v2609, %v2609
      %v2642 = vpack.c.b16 %v2610, %v2610
      %v2643 = vpack.c.b16 %v2611, %v2611
      %v2644 = vpack.c.b16 %v2612, %v2612
      %v2645 = vpack.c.b16 %v2613, %v2613
      %v2646 = vpack.c.b16 %v2614, %v2614
      %v2647 = vpack.c.b16 %v2615, %v2615
      %v2648 = vpack.c.b16 %v2616, %v2616
      %v2649 = vpack.c.b16 %v2617, %v2617
      %v2650 = vpack.c.b16 %v2618, %v2618
      %v2651 = vpack.c.b16 %v2619, %v2619
      %v2652 = vpack.c.b16 %v2620, %v2620
      %v2653 = vpack.c.b16 %v2621, %v2621
      %v2654 = vpack.c.b16 %v2622, %v2622
      %v2655 = vpack.c.b16 %v2623, %v2623
      %v2656 = vpack.c.b16 %v2624, %v2624
      %v2657 = vpack.c.b16 %v2625, %v2625
      %s2690 = scalar_lea.vmem [#allocation2], 144
      %2691 = vst [vmem:[%s2690 + $0x8] sm:$0xf] %v2626
      %2692 = vst [vmem:[%s2690 + $0xc] sm:$0xf] %v2627
      %2693 = vst [vmem:[%s2690 + $0x10] sm:$0xf] %v2628
      %2694 = vst [vmem:[%s2690 + $0x14] sm:$0xf] %v2629
      %2695 = vst [vmem:[%s2690 + $0x18] sm:$0xf] %v2630
      %2696 = vst [vmem:[%s2690 + $0x1c] sm:$0xf] %v2631
      %2697 = vst [vmem:[%s2690 + $0x20] sm:$0xf] %v2632
      %2698 = vst [vmem:[%s2690 + $0x24] sm:$0xf] %v2633
      %2699 = vst [vmem:[%s2690 + $0x28] sm:$0xf] %v2634
      %2700 = vst [vmem:[%s2690 + $0x2c] sm:$0xf] %v2635
      %2701 = vst [vmem:[%s2690 + $0x30] sm:$0xf] %v2636
      %2702 = vst [vmem:[%s2690 + $0x34] sm:$0xf] %v2637
      %2703 = vst [vmem:[%s2690 + $0x38] sm:$0xf] %v2638
      %2704 = vst [vmem:[%s2690 + $0x3c] sm:$0xf] %v2639
      %2705 = vst [vmem:[%s2690 + $0x40] sm:$0xf] %v2640
      %2706 = vst [vmem:[%s2690 + $0x44] sm:$0xf] %v2641
      %2707 = vst [vmem:[%s2690 + $0x48] sm:$0xf] %v2642
      %2708 = vst [vmem:[%s2690 + $0x4c] sm:$0xf] %v2643
      %2709 = vst [vmem:[%s2690 + $0x50] sm:$0xf] %v2644
      %2710 = vst [vmem:[%s2690 + $0x54] sm:$0xf] %v2645
      %2711 = vst [vmem:[%s2690 + $0x58] sm:$0xf] %v2646
      %2712 = vst [vmem:[%s2690 + $0x5c] sm:$0xf] %v2647
      %2713 = vst [vmem:[%s2690 + $0x60] sm:$0xf] %v2648
      %2714 = vst [vmem:[%s2690 + $0x64] sm:$0xf] %v2649
      %2715 = vst [vmem:[%s2690 + $0x68] sm:$0xf] %v2650
      %2716 = vst [vmem:[%s2690 + $0x6c] sm:$0xf] %v2651
      %2717 = vst [vmem:[%s2690 + $0x70] sm:$0xf] %v2652
      %2718 = vst [vmem:[%s2690 + $0x74] sm:$0xf] %v2653
      %2719 = vst [vmem:[%s2690 + $0x78] sm:$0xf] %v2654
      %2720 = vst [vmem:[%s2690 + $0x7c] sm:$0xf] %v2655
      %2721 = vst [vmem:[%s2690 + $0x80] sm:$0xf] %v2656
      %2722 = vst [vmem:[%s2690 + $0x84] sm:$0xf] %v2657
      %2723 = vst [vmem:[%s2690] sm:$0xf] %v2656
      %2724 = vst [vmem:[%s2690 + $0x4] sm:$0xf] %v2657
      %2725 = vst [vmem:[%s2690 + $0x88] sm:$0xf] %v2626
      %2726 = vst [vmem:[%s2690 + $0x8c] sm:$0xf] %v2627
      %vm2727 = vcmask 1046528
      %v2728 = vrot.slane %v2221, 1
      %v2729 = vrot.slane %v2222, 1
      %v2730 = vsel %vm2727, %v2728, %v2729
      %v2731 = vrot.slane %v2223, 1
      %v2732 = vrot.slane %v2224, 1
      %v2733 = vsel %vm2727, %v2731, %v2732
      %v2734 = vrot.slane %v2225, 1
      %v2735 = vrot.slane %v2226, 1
      %v2736 = vsel %vm2727, %v2734, %v2735
      %v2737 = vrot.slane %v2227, 1
      %v2738 = vrot.slane %v2228, 1
      %v2739 = vsel %vm2727, %v2737, %v2738
      %v2740 = vrot.slane %v2229, 1
      %v2741 = vrot.slane %v2230, 1
      %v2742 = vsel %vm2727, %v2740, %v2741
      %v2743 = vrot.slane %v2231, 1
      %v2744 = vrot.slane %v2232, 1
      %v2745 = vsel %vm2727, %v2743, %v2744
      %v2746 = vrot.slane %v2233, 1
      %v2747 = vrot.slane %v2234, 1
      %v2748 = vsel %vm2727, %v2746, %v2747
      %v2749 = vrot.slane %v2235, 1
      %v2750 = vrot.slane %v2236, 1
      %v2751 = vsel %vm2727, %v2749, %v2750
      %v2752 = vrot.slane %v2237, 1
      %v2753 = vrot.slane %v2238, 1
      %v2754 = vsel %vm2727, %v2752, %v2753
      %v2755 = vrot.slane %v2239, 1
      %v2756 = vrot.slane %v2240, 1
      %v2757 = vsel %vm2727, %v2755, %v2756
      %v2758 = vrot.slane %v2241, 1
      %v2759 = vrot.slane %v2242, 1
      %v2760 = vsel %vm2727, %v2758, %v2759
      %v2761 = vrot.slane %v2243, 1
      %v2762 = vrot.slane %v2244, 1
      %v2763 = vsel %vm2727, %v2761, %v2762
      %v2764 = vrot.slane %v2245, 1
      %v2765 = vrot.slane %v2246, 1
      %v2766 = vsel %vm2727, %v2764, %v2765
      %v2767 = vrot.slane %v2247, 1
      %v2768 = vrot.slane %v2248, 1
      %v2769 = vsel %vm2727, %v2767, %v2768
      %v2770 = vrot.slane %v2249, 1
      %v2771 = vrot.slane %v2250, 1
      %v2772 = vsel %vm2727, %v2770, %v2771
      %v2773 = vrot.slane %v2251, 1
      %v2774 = vrot.slane %v2252, 1
      %v2775 = vsel %vm2727, %v2773, %v2774
      %v2824 = vsel %vm2727, %v2729, %v2728
      %v2825 = vsel %vm2727, %v2732, %v2731
      %v2826 = vsel %vm2727, %v2735, %v2734
      %v2827 = vsel %vm2727, %v2738, %v2737
      %v2828 = vsel %vm2727, %v2741, %v2740
      %v2829 = vsel %vm2727, %v2744, %v2743
      %v2830 = vsel %vm2727, %v2747, %v2746
      %v2831 = vsel %vm2727, %v2750, %v2749
      %v2832 = vsel %vm2727, %v2753, %v2752
      %v2833 = vsel %vm2727, %v2756, %v2755
      %v2834 = vsel %vm2727, %v2759, %v2758
      %v2835 = vsel %vm2727, %v2762, %v2761
      %v2836 = vsel %vm2727, %v2765, %v2764
      %v2837 = vsel %vm2727, %v2768, %v2767
      %v2838 = vsel %vm2727, %v2771, %v2770
      %v2839 = vsel %vm2727, %v2774, %v2773
      %v2840 = vpack.c.bf16 %v2824, %v2730
      %v2841 = vpack.c.bf16 %v2825, %v2733
      %v2842 = vpack.c.bf16 %v2826, %v2736
      %v2843 = vpack.c.bf16 %v2827, %v2739
      %v2844 = vpack.c.bf16 %v2828, %v2742
      %v2845 = vpack.c.bf16 %v2829, %v2745
      %v2846 = vpack.c.bf16 %v2830, %v2748
      %v2847 = vpack.c.bf16 %v2831, %v2751
      %v2848 = vpack.c.bf16 %v2832, %v2754
      %v2849 = vpack.c.bf16 %v2833, %v2757
      %v2850 = vpack.c.bf16 %v2834, %v2760
      %v2851 = vpack.c.bf16 %v2835, %v2763
      %v2852 = vpack.c.bf16 %v2836, %v2766
      %v2853 = vpack.c.bf16 %v2837, %v2769
      %v2854 = vpack.c.bf16 %v2838, %v2772
      %v2855 = vpack.c.bf16 %v2839, %v2775
      %v2872 = vunpack.c.l.b16 %v2840
      %v2873 = vunpack.c.h.b16 %v2840
      %v2874 = vunpack.c.l.b16 %v2841
      %v2875 = vunpack.c.h.b16 %v2841
      %v2876 = vunpack.c.l.b16 %v2842
      %v2877 = vunpack.c.h.b16 %v2842
      %v2878 = vunpack.c.l.b16 %v2843
      %v2879 = vunpack.c.h.b16 %v2843
      %v2880 = vunpack.c.l.b16 %v2844
      %v2881 = vunpack.c.h.b16 %v2844
      %v2882 = vunpack.c.l.b16 %v2845
      %v2883 = vunpack.c.h.b16 %v2845
      %v2884 = vunpack.c.l.b16 %v2846
      %v2885 = vunpack.c.h.b16 %v2846
      %v2886 = vunpack.c.l.b16 %v2847
      %v2887 = vunpack.c.h.b16 %v2847
      %v2888 = vunpack.c.l.b16 %v2848
      %v2889 = vunpack.c.h.b16 %v2848
      %v2890 = vunpack.c.l.b16 %v2849
      %v2891 = vunpack.c.h.b16 %v2849
      %v2892 = vunpack.c.l.b16 %v2850
      %v2893 = vunpack.c.h.b16 %v2850
      %v2894 = vunpack.c.l.b16 %v2851
      %v2895 = vunpack.c.h.b16 %v2851
      %v2896 = vunpack.c.l.b16 %v2852
      %v2897 = vunpack.c.h.b16 %v2852
      %v2898 = vunpack.c.l.b16 %v2853
      %v2899 = vunpack.c.h.b16 %v2853
      %v2900 = vunpack.c.l.b16 %v2854
      %v2901 = vunpack.c.h.b16 %v2854
      %v2902 = vunpack.c.l.b16 %v2855
      %v2903 = vunpack.c.h.b16 %v2855
      %v2904 = vpack.c.b16 %v2872, %v2872
      %v2905 = vpack.c.b16 %v2873, %v2873
      %v2906 = vpack.c.b16 %v2874, %v2874
      %v2907 = vpack.c.b16 %v2875, %v2875
      %v2908 = vpack.c.b16 %v2876, %v2876
      %v2909 = vpack.c.b16 %v2877, %v2877
      %v2910 = vpack.c.b16 %v2878, %v2878
      %v2911 = vpack.c.b16 %v2879, %v2879
      %v2912 = vpack.c.b16 %v2880, %v2880
      %v2913 = vpack.c.b16 %v2881, %v2881
      %v2914 = vpack.c.b16 %v2882, %v2882
      %v2915 = vpack.c.b16 %v2883, %v2883
      %v2916 = vpack.c.b16 %v2884, %v2884
      %v2917 = vpack.c.b16 %v2885, %v2885
      %v2918 = vpack.c.b16 %v2886, %v2886
      %v2919 = vpack.c.b16 %v2887, %v2887
      %v2920 = vpack.c.b16 %v2888, %v2888
      %v2921 = vpack.c.b16 %v2889, %v2889
      %v2922 = vpack.c.b16 %v2890, %v2890
      %v2923 = vpack.c.b16 %v2891, %v2891
      %v2924 = vpack.c.b16 %v2892, %v2892
      %v2925 = vpack.c.b16 %v2893, %v2893
      %v2926 = vpack.c.b16 %v2894, %v2894
      %v2927 = vpack.c.b16 %v2895, %v2895
      %v2928 = vpack.c.b16 %v2896, %v2896
      %v2929 = vpack.c.b16 %v2897, %v2897
      %v2930 = vpack.c.b16 %v2898, %v2898
      %v2931 = vpack.c.b16 %v2899, %v2899
      %v2932 = vpack.c.b16 %v2900, %v2900
      %v2933 = vpack.c.b16 %v2901, %v2901
      %v2934 = vpack.c.b16 %v2902, %v2902
      %v2935 = vpack.c.b16 %v2903, %v2903
      %s2968 = scalar_lea.vmem [#allocation2], 288
      %2969 = vst [vmem:[%s2968 + $0x8] sm:$0xf] %v2904
      %2970 = vst [vmem:[%s2968 + $0xc] sm:$0xf] %v2905
      %2971 = vst [vmem:[%s2968 + $0x10] sm:$0xf] %v2906
      %2972 = vst [vmem:[%s2968 + $0x14] sm:$0xf] %v2907
      %2973 = vst [vmem:[%s2968 + $0x18] sm:$0xf] %v2908
      %2974 = vst [vmem:[%s2968 + $0x1c] sm:$0xf] %v2909
      %2975 = vst [vmem:[%s2968 + $0x20] sm:$0xf] %v2910
      %2976 = vst [vmem:[%s2968 + $0x24] sm:$0xf] %v2911
      %2977 = vst [vmem:[%s2968 + $0x28] sm:$0xf] %v2912
      %2978 = vst [vmem:[%s2968 + $0x2c] sm:$0xf] %v2913
      %2979 = vst [vmem:[%s2968 + $0x30] sm:$0xf] %v2914
      %2980 = vst [vmem:[%s2968 + $0x34] sm:$0xf] %v2915
      %2981 = vst [vmem:[%s2968 + $0x38] sm:$0xf] %v2916
      %2982 = vst [vmem:[%s2968 + $0x3c] sm:$0xf] %v2917
      %2983 = vst [vmem:[%s2968 + $0x40] sm:$0xf] %v2918
      %2984 = vst [vmem:[%s2968 + $0x44] sm:$0xf] %v2919
      %2985 = vst [vmem:[%s2968 + $0x48] sm:$0xf] %v2920
      %2986 = vst [vmem:[%s2968 + $0x4c] sm:$0xf] %v2921
      %2987 = vst [vmem:[%s2968 + $0x50] sm:$0xf] %v2922
      %2988 = vst [vmem:[%s2968 + $0x54] sm:$0xf] %v2923
      %2989 = vst [vmem:[%s2968 + $0x58] sm:$0xf] %v2924
      %2990 = vst [vmem:[%s2968 + $0x5c] sm:$0xf] %v2925
      %2991 = vst [vmem:[%s2968 + $0x60] sm:$0xf] %v2926
      %2992 = vst [vmem:[%s2968 + $0x64] sm:$0xf] %v2927
      %2993 = vst [vmem:[%s2968 + $0x68] sm:$0xf] %v2928
      %2994 = vst [vmem:[%s2968 + $0x6c] sm:$0xf] %v2929
      %2995 = vst [vmem:[%s2968 + $0x70] sm:$0xf] %v2930
      %2996 = vst [vmem:[%s2968 + $0x74] sm:$0xf] %v2931
      %2997 = vst [vmem:[%s2968 + $0x78] sm:$0xf] %v2932
      %2998 = vst [vmem:[%s2968 + $0x7c] sm:$0xf] %v2933
      %2999 = vst [vmem:[%s2968 + $0x80] sm:$0xf] %v2934
      %3000 = vst [vmem:[%s2968 + $0x84] sm:$0xf] %v2935
      %3001 = vst [vmem:[%s2968] sm:$0xf] %v2934
      %3002 = vst [vmem:[%s2968 + $0x4] sm:$0xf] %v2935
      %3003 = vst [vmem:[%s2968 + $0x88] sm:$0xf] %v2904
      %3004 = vst [vmem:[%s2968 + $0x8c] sm:$0xf] %v2905
      %v3005 = vld [vmem:[%s293] sm:$0xff]
      %v3006 = vld [vmem:[%s293 + $0x8] sm:$0xff]
      %v3007 = vld [vmem:[%s293 + $0x10] sm:$0xff]
      %v3008 = vld [vmem:[%s293 + $0x18] sm:$0xff]
      %v3009 = vld [vmem:[%s293 + $0x20] sm:$0xff]
      %v3010 = vld [vmem:[%s293 + $0x28] sm:$0xff]
      %v3011 = vld [vmem:[%s293 + $0x30] sm:$0xff]
      %v3012 = vld [vmem:[%s293 + $0x38] sm:$0xff]
      %v3013 = vld [vmem:[%s293 + $0x40] sm:$0xff]
      %v3014 = vld [vmem:[%s293 + $0x48] sm:$0xff]
      %v3015 = vld [vmem:[%s293 + $0x50] sm:$0xff]
      %v3016 = vld [vmem:[%s293 + $0x58] sm:$0xff]
      %v3017 = vld [vmem:[%s293 + $0x60] sm:$0xff]
      %v3018 = vld [vmem:[%s293 + $0x68] sm:$0xff]
      %v3019 = vld [vmem:[%s293 + $0x70] sm:$0xff]
      %v3020 = vld [vmem:[%s293 + $0x78] sm:$0xff]
      %v3021 = vld [vmem:[%s293 + $0x80] sm:$0xff]
      %v3022 = vld [vmem:[%s293 + $0x88] sm:$0xff]
      %v3023 = vld [vmem:[%s293 + $0x90] sm:$0xff]
      %v3024 = vld [vmem:[%s293 + $0x98] sm:$0xff]
      %v3025 = vld [vmem:[%s293 + $0xa0] sm:$0xff]
      %v3026 = vld [vmem:[%s293 + $0xa8] sm:$0xff]
      %v3027 = vld [vmem:[%s293 + $0xb0] sm:$0xff]
      %v3028 = vld [vmem:[%s293 + $0xb8] sm:$0xff]
      %v3029 = vld [vmem:[%s293 + $0xc0] sm:$0xff]
      %v3030 = vld [vmem:[%s293 + $0xc8] sm:$0xff]
      %v3031 = vld [vmem:[%s293 + $0xd0] sm:$0xff]
      %v3032 = vld [vmem:[%s293 + $0xd8] sm:$0xff]
      %v3033 = vld [vmem:[%s293 + $0xe0] sm:$0xff]
      %v3034 = vld [vmem:[%s293 + $0xe8] sm:$0xff]
      %v3035 = vld [vmem:[%s293 + $0xf0] sm:$0xff]
      %v3036 = vld [vmem:[%s293 + $0xf8] sm:$0xff]
      %v3037 = vpack.c.bf16 %v3006, %v3005
      %v3038 = vpack.c.bf16 %v3008, %v3007
      %v3039 = vpack.c.bf16 %v3010, %v3009
      %v3040 = vpack.c.bf16 %v3012, %v3011
      %v3041 = vpack.c.bf16 %v3014, %v3013
      %v3042 = vpack.c.bf16 %v3016, %v3015
      %v3043 = vpack.c.bf16 %v3018, %v3017
      %v3044 = vpack.c.bf16 %v3020, %v3019
      %v3045 = vpack.c.bf16 %v3022, %v3021
      %v3046 = vpack.c.bf16 %v3024, %v3023
      %v3047 = vpack.c.bf16 %v3026, %v3025
      %v3048 = vpack.c.bf16 %v3028, %v3027
      %v3049 = vpack.c.bf16 %v3030, %v3029
      %v3050 = vpack.c.bf16 %v3032, %v3031
      %v3051 = vpack.c.bf16 %v3034, %v3033
      %v3052 = vpack.c.bf16 %v3036, %v3035
      %v3053 = vld [vmem:[%s6] sm:$0x3]
      %v3054 = vld [vmem:[%s5] sm:$0x1]
      %v3056 = vlaneseq
      %v3057 = vshrl.u32 %v3056, 7
      %v3058 = vsub.s32 0, %v3057
      %v3059 = vrot.slane %v3054, %v3058
      %vm3061 = vcmask 31744
      %v3063 = vsel %vm3061, %v3037, 0
      %v3066 = vsel %vm3061, %v3038, 0
      %v3069 = vsel %vm3061, %v3039, 0
      %v3072 = vsel %vm3061, %v3040, 0
      %v3075 = vsel %vm3061, %v3041, 0
      %v3078 = vsel %vm3061, %v3042, 0
      %v3081 = vsel %vm3061, %v3043, 0
      %v3084 = vsel %vm3061, %v3044, 0
      %v3087 = vsel %vm3061, %v3045, 0
      %v3090 = vsel %vm3061, %v3046, 0
      %v3093 = vsel %vm3061, %v3047, 0
      %v3096 = vsel %vm3061, %v3048, 0
      %v3099 = vsel %vm3061, %v3049, 0
      %v3102 = vsel %vm3061, %v3050, 0
      %v3105 = vsel %vm3061, %v3051, 0
      %v3108 = vsel %vm3061, %v3052, 0
      %v3111 = vsel %vm1256, %v3053, 0
      %3113 = vmatprep.subr.bf16.mxu0 0
      %3114 = vmatpush1.bf16.msra.mxu0 0
      %3115 = vmatprep.subr.bf16.mxu0 0
      %3116 = vmatpush1.bf16.msra.mxu0 0
      %3117 = vmatprep.subr.bf16.mxu0 0
      %3118 = vmatpush1.bf16.msra.mxu0 0
      %3119 = vmatprep.subr.bf16.mxu0 0
      %3120 = vmatpush1.bf16.msra.mxu0 0
      %3121 = vmatprep.subr.bf16.mxu0 0
      %3122 = vmatpush1.bf16.msra.mxu0 0
      %3123 = vmatprep.subr.bf16.mxu0 0
      %3124 = vmatpush1.bf16.msra.mxu0 0
      %3125 = vmatprep.subr.bf16.mxu0 0
      %3126 = vmatpush1.bf16.msra.mxu0 0
      %3127 = vmatprep.subr.bf16.mxu0 0
      %3128 = vmatpush1.bf16.msra.mxu0 %v3111
      %3129 = vmatprep.subr.bf16.mxu0 0
      %3130 = vmatpush2.bf16.msra.mxu0 0
      %3131 = vmatprep.subr.bf16.mxu0 0
      %3132 = vmatpush2.bf16.msra.mxu0 0
      %3133 = vmatprep.subr.bf16.mxu0 0
      %3134 = vmatpush2.bf16.msra.mxu0 0
      %3135 = vmatprep.subr.bf16.mxu0 0
      %3136 = vmatpush2.bf16.msra.mxu0 0
      %3137 = vmatprep.subr.bf16.mxu0 0
      %3138 = vmatpush2.bf16.msra.mxu0 0
      %3139 = vmatprep.subr.bf16.mxu0 0
      %3140 = vmatpush2.bf16.msra.mxu0 0
      %3141 = vmatprep.subr.bf16.mxu0 0
      %3142 = vmatpush2.bf16.msra.mxu0 0
      %3143 = vmatprep.subr.bf16.mxu0 0
      %3144 = vmatpush2.bf16.msra.mxu0 0
      %3145 = vmatprep.mubr.bf16.mxu0 0
      %3146 = vmatmul.mubr.bf16.gmra.mxu0 %v3063
      %v3147 = vpop.f32.mrf.mxu0
      %v3148 = vadd.f32 %v3059, %v3147
      %v3149 = vpop.f32.mrf.mxu0
      %v3150 = vpop.f32.mrf.mxu0
      %v3151 = vadd.f32 %v3059, %v3150
      %v3152 = vpop.f32.mrf.mxu0
      %3153 = vmatprep.mubr.bf16.mxu0 0
      %3154 = vmatmul.mubr.bf16.gmra.mxu0 %v3066
      %v3155 = vpop.f32.mrf.mxu0
      %v3156 = vadd.f32 %v3059, %v3155
      %v3157 = vpop.f32.mrf.mxu0
      %v3158 = vpop.f32.mrf.mxu0
      %v3159 = vadd.f32 %v3059, %v3158
      %v3160 = vpop.f32.mrf.mxu0
      %3161 = vmatprep.mubr.bf16.mxu0 0
      %3162 = vmatmul.mubr.bf16.gmra.mxu0 %v3069
      %v3163 = vpop.f32.mrf.mxu0
      %v3164 = vadd.f32 %v3059, %v3163
      %v3165 = vpop.f32.mrf.mxu0
      %v3166 = vpop.f32.mrf.mxu0
      %v3167 = vadd.f32 %v3059, %v3166
      %v3168 = vpop.f32.mrf.mxu0
      %3169 = vmatprep.mubr.bf16.mxu0 0
      %3170 = vmatmul.mubr.bf16.gmra.mxu0 %v3072
      %v3171 = vpop.f32.mrf.mxu0
      %v3172 = vadd.f32 %v3059, %v3171
      %v3173 = vpop.f32.mrf.mxu0
      %v3174 = vpop.f32.mrf.mxu0
      %v3175 = vadd.f32 %v3059, %v3174
      %v3176 = vpop.f32.mrf.mxu0
      %3177 = vmatprep.mubr.bf16.mxu0 0
      %3178 = vmatmul.mubr.bf16.gmra.mxu0 %v3075
      %v3179 = vpop.f32.mrf.mxu0
      %v3180 = vadd.f32 %v3059, %v3179
      %v3181 = vpop.f32.mrf.mxu0
      %v3182 = vpop.f32.mrf.mxu0
      %v3183 = vadd.f32 %v3059, %v3182
      %v3184 = vpop.f32.mrf.mxu0
      %3185 = vmatprep.mubr.bf16.mxu0 0
      %3186 = vmatmul.mubr.bf16.gmra.mxu0 %v3078
      %v3187 = vpop.f32.mrf.mxu0
      %v3188 = vadd.f32 %v3059, %v3187
      %v3189 = vpop.f32.mrf.mxu0
      %v3190 = vpop.f32.mrf.mxu0
      %v3191 = vadd.f32 %v3059, %v3190
      %v3192 = vpop.f32.mrf.mxu0
      %3193 = vmatprep.mubr.bf16.mxu0 0
      %3194 = vmatmul.mubr.bf16.gmra.mxu0 %v3081
      %v3195 = vpop.f32.mrf.mxu0
      %v3196 = vadd.f32 %v3059, %v3195
      %v3197 = vpop.f32.mrf.mxu0
      %v3198 = vpop.f32.mrf.mxu0
      %v3199 = vadd.f32 %v3059, %v3198
      %v3200 = vpop.f32.mrf.mxu0
      %3201 = vmatprep.mubr.bf16.mxu0 0
      %3202 = vmatmul.mubr.bf16.gmra.mxu0 %v3084
      %v3203 = vpop.f32.mrf.mxu0
      %v3204 = vadd.f32 %v3059, %v3203
      %v3205 = vpop.f32.mrf.mxu0
      %v3206 = vpop.f32.mrf.mxu0
      %v3207 = vadd.f32 %v3059, %v3206
      %v3208 = vpop.f32.mrf.mxu0
      %3209 = vmatprep.mubr.bf16.mxu0 0
      %3210 = vmatmul.mubr.bf16.gmra.mxu0 %v3087
      %v3211 = vpop.f32.mrf.mxu0
      %v3212 = vadd.f32 %v3059, %v3211
      %v3213 = vpop.f32.mrf.mxu0
      %v3214 = vpop.f32.mrf.mxu0
      %v3215 = vadd.f32 %v3059, %v3214
      %v3216 = vpop.f32.mrf.mxu0
      %3217 = vmatprep.mubr.bf16.mxu0 0
      %3218 = vmatmul.mubr.bf16.gmra.mxu0 %v3090
      %v3219 = vpop.f32.mrf.mxu0
      %v3220 = vadd.f32 %v3059, %v3219
      %v3221 = vpop.f32.mrf.mxu0
      %v3222 = vpop.f32.mrf.mxu0
      %v3223 = vadd.f32 %v3059, %v3222
      %v3224 = vpop.f32.mrf.mxu0
      %3225 = vmatprep.mubr.bf16.mxu0 0
      %3226 = vmatmul.mubr.bf16.gmra.mxu0 %v3093
      %v3227 = vpop.f32.mrf.mxu0
      %v3228 = vadd.f32 %v3059, %v3227
      %v3229 = vpop.f32.mrf.mxu0
      %v3230 = vpop.f32.mrf.mxu0
      %v3231 = vadd.f32 %v3059, %v3230
      %v3232 = vpop.f32.mrf.mxu0
      %3233 = vmatprep.mubr.bf16.mxu0 0
      %3234 = vmatmul.mubr.bf16.gmra.mxu0 %v3096
      %v3235 = vpop.f32.mrf.mxu0
      %v3236 = vadd.f32 %v3059, %v3235
      %v3237 = vpop.f32.mrf.mxu0
      %v3238 = vpop.f32.mrf.mxu0
      %v3239 = vadd.f32 %v3059, %v3238
      %v3240 = vpop.f32.mrf.mxu0
      %3241 = vmatprep.mubr.bf16.mxu0 0
      %3242 = vmatmul.mubr.bf16.gmra.mxu0 %v3099
      %v3243 = vpop.f32.mrf.mxu0
      %v3244 = vadd.f32 %v3059, %v3243
      %v3245 = vpop.f32.mrf.mxu0
      %v3246 = vpop.f32.mrf.mxu0
      %v3247 = vadd.f32 %v3059, %v3246
      %v3248 = vpop.f32.mrf.mxu0
      %3249 = vmatprep.mubr.bf16.mxu0 0
      %3250 = vmatmul.mubr.bf16.gmra.mxu0 %v3102
      %v3251 = vpop.f32.mrf.mxu0
      %v3252 = vadd.f32 %v3059, %v3251
      %v3253 = vpop.f32.mrf.mxu0
      %v3254 = vpop.f32.mrf.mxu0
      %v3255 = vadd.f32 %v3059, %v3254
      %v3256 = vpop.f32.mrf.mxu0
      %3257 = vmatprep.mubr.bf16.mxu0 0
      %3258 = vmatmul.mubr.bf16.gmra.mxu0 %v3105
      %v3259 = vpop.f32.mrf.mxu0
      %v3260 = vadd.f32 %v3059, %v3259
      %v3261 = vpop.f32.mrf.mxu0
      %v3262 = vpop.f32.mrf.mxu0
      %v3263 = vadd.f32 %v3059, %v3262
      %v3264 = vpop.f32.mrf.mxu0
      %3265 = vmatprep.mubr.bf16.mxu0 0
      %3266 = vmatmul.mubr.bf16.gmra.mxu0 %v3108
      %v3267 = vpop.f32.mrf.mxu0
      %v3268 = vadd.f32 %v3059, %v3267
      %v3269 = vpop.f32.mrf.mxu0
      %v3270 = vpop.f32.mrf.mxu0
      %v3271 = vadd.f32 %v3059, %v3270
      %v3272 = vpop.f32.mrf.mxu0
      %3273 = vdwg.mxu0
      %3274 = vst [vmem:[%s298] sm:$0xff] %v3148
      %3275 = vst [vmem:[%s298 + $0x8] sm:$0xff] %v3151
      %3276 = vst [vmem:[%s298 + $0x10] sm:$0xff] %v3156
      %3277 = vst [vmem:[%s298 + $0x18] sm:$0xff] %v3159
      %3278 = vst [vmem:[%s298 + $0x20] sm:$0xff] %v3164
      %3279 = vst [vmem:[%s298 + $0x28] sm:$0xff] %v3167
      %3280 = vst [vmem:[%s298 + $0x30] sm:$0xff] %v3172
      %3281 = vst [vmem:[%s298 + $0x38] sm:$0xff] %v3175
      %3282 = vst [vmem:[%s298 + $0x40] sm:$0xff] %v3180
      %3283 = vst [vmem:[%s298 + $0x48] sm:$0xff] %v3183
      %3284 = vst [vmem:[%s298 + $0x50] sm:$0xff] %v3188
      %3285 = vst [vmem:[%s298 + $0x58] sm:$0xff] %v3191
      %3286 = vst [vmem:[%s298 + $0x60] sm:$0xff] %v3196
      %3287 = vst [vmem:[%s298 + $0x68] sm:$0xff] %v3199
      %3288 = vst [vmem:[%s298 + $0x70] sm:$0xff] %v3204
      %3289 = vst [vmem:[%s298 + $0x78] sm:$0xff] %v3207
      %3290 = vst [vmem:[%s298 + $0x80] sm:$0xff] %v3212
      %3291 = vst [vmem:[%s298 + $0x88] sm:$0xff] %v3215
      %3292 = vst [vmem:[%s298 + $0x90] sm:$0xff] %v3220
      %3293 = vst [vmem:[%s298 + $0x98] sm:$0xff] %v3223
      %3294 = vst [vmem:[%s298 + $0xa0] sm:$0xff] %v3228
      %3295 = vst [vmem:[%s298 + $0xa8] sm:$0xff] %v3231
      %3296 = vst [vmem:[%s298 + $0xb0] sm:$0xff] %v3236
      %3297 = vst [vmem:[%s298 + $0xb8] sm:$0xff] %v3239
      %3298 = vst [vmem:[%s298 + $0xc0] sm:$0xff] %v3244
      %3299 = vst [vmem:[%s298 + $0xc8] sm:$0xff] %v3247
      %3300 = vst [vmem:[%s298 + $0xd0] sm:$0xff] %v3252
      %3301 = vst [vmem:[%s298 + $0xd8] sm:$0xff] %v3255
      %3302 = vst [vmem:[%s298 + $0xe0] sm:$0xff] %v3260
      %3303 = vst [vmem:[%s298 + $0xe8] sm:$0xff] %v3263
      %3304 = vst [vmem:[%s298 + $0xf0] sm:$0xff] %v3268
      %3305 = vst [vmem:[%s298 + $0xf8] sm:$0xff] %v3271
      %v3306 = vld [vmem:[#allocation2] sm:$0xf]
      %v3307 = vld [vmem:[#allocation2 + $0x4] sm:$0xf]
      %v3308 = vld [vmem:[#allocation2 + $0x8] sm:$0xf]
      %v3309 = vld [vmem:[#allocation2 + $0xc] sm:$0xf]
      %v3310 = vld [vmem:[#allocation2 + $0x10] sm:$0xf]
      %v3311 = vld [vmem:[#allocation2 + $0x14] sm:$0xf]
      %v3312 = vld [vmem:[#allocation2 + $0x18] sm:$0xf]
      %v3313 = vld [vmem:[#allocation2 + $0x1c] sm:$0xf]
      %v3314 = vld [vmem:[#allocation2 + $0x20] sm:$0xf]
      %v3315 = vld [vmem:[#allocation2 + $0x24] sm:$0xf]
      %v3316 = vld [vmem:[#allocation2 + $0x28] sm:$0xf]
      %v3317 = vld [vmem:[#allocation2 + $0x2c] sm:$0xf]
      %v3318 = vld [vmem:[#allocation2 + $0x30] sm:$0xf]
      %v3319 = vld [vmem:[#allocation2 + $0x34] sm:$0xf]
      %v3320 = vld [vmem:[#allocation2 + $0x38] sm:$0xf]
      %v3321 = vld [vmem:[#allocation2 + $0x3c] sm:$0xf]
      %v3322 = vld [vmem:[#allocation2 + $0x40] sm:$0xf]
      %v3323 = vld [vmem:[#allocation2 + $0x44] sm:$0xf]
      %v3324 = vld [vmem:[#allocation2 + $0x48] sm:$0xf]
      %v3325 = vld [vmem:[#allocation2 + $0x4c] sm:$0xf]
      %v3326 = vld [vmem:[#allocation2 + $0x50] sm:$0xf]
      %v3327 = vld [vmem:[#allocation2 + $0x54] sm:$0xf]
      %v3328 = vld [vmem:[#allocation2 + $0x58] sm:$0xf]
      %v3329 = vld [vmem:[#allocation2 + $0x5c] sm:$0xf]
      %v3330 = vld [vmem:[#allocation2 + $0x60] sm:$0xf]
      %v3331 = vld [vmem:[#allocation2 + $0x64] sm:$0xf]
      %v3332 = vld [vmem:[#allocation2 + $0x68] sm:$0xf]
      %v3333 = vld [vmem:[#allocation2 + $0x6c] sm:$0xf]
      %v3334 = vld [vmem:[#allocation2 + $0x70] sm:$0xf]
      %v3335 = vld [vmem:[#allocation2 + $0x74] sm:$0xf]
      %v3336 = vld [vmem:[#allocation2 + $0x78] sm:$0xf]
      %v3337 = vld [vmem:[#allocation2 + $0x7c] sm:$0xf]
      %v3338 = vld [vmem:[%s298] sm:$0xff]
      %v3339 = vld [vmem:[%s298 + $0x8] sm:$0xff]
      %v3340 = vld [vmem:[%s298 + $0x10] sm:$0xff]
      %v3341 = vld [vmem:[%s298 + $0x18] sm:$0xff]
      %v3342 = vld [vmem:[%s298 + $0x20] sm:$0xff]
      %v3343 = vld [vmem:[%s298 + $0x28] sm:$0xff]
      %v3344 = vld [vmem:[%s298 + $0x30] sm:$0xff]
      %v3345 = vld [vmem:[%s298 + $0x38] sm:$0xff]
      %v3346 = vld [vmem:[%s298 + $0x40] sm:$0xff]
      %v3347 = vld [vmem:[%s298 + $0x48] sm:$0xff]
      %v3348 = vld [vmem:[%s298 + $0x50] sm:$0xff]
      %v3349 = vld [vmem:[%s298 + $0x58] sm:$0xff]
      %v3350 = vld [vmem:[%s298 + $0x60] sm:$0xff]
      %v3351 = vld [vmem:[%s298 + $0x68] sm:$0xff]
      %v3352 = vld [vmem:[%s298 + $0x70] sm:$0xff]
      %v3353 = vld [vmem:[%s298 + $0x78] sm:$0xff]
      %v3354 = vld [vmem:[%s298 + $0x80] sm:$0xff]
      %v3355 = vld [vmem:[%s298 + $0x88] sm:$0xff]
      %v3356 = vld [vmem:[%s298 + $0x90] sm:$0xff]
      %v3357 = vld [vmem:[%s298 + $0x98] sm:$0xff]
      %v3358 = vld [vmem:[%s298 + $0xa0] sm:$0xff]
      %v3359 = vld [vmem:[%s298 + $0xa8] sm:$0xff]
      %v3360 = vld [vmem:[%s298 + $0xb0] sm:$0xff]
      %v3361 = vld [vmem:[%s298 + $0xb8] sm:$0xff]
      %v3362 = vld [vmem:[%s298 + $0xc0] sm:$0xff]
      %v3363 = vld [vmem:[%s298 + $0xc8] sm:$0xff]
      %v3364 = vld [vmem:[%s298 + $0xd0] sm:$0xff]
      %v3365 = vld [vmem:[%s298 + $0xd8] sm:$0xff]
      %v3366 = vld [vmem:[%s298 + $0xe0] sm:$0xff]
      %v3367 = vld [vmem:[%s298 + $0xe8] sm:$0xff]
      %v3368 = vld [vmem:[%s298 + $0xf0] sm:$0xff]
      %v3369 = vld [vmem:[%s298 + $0xf8] sm:$0xff]
      %v3370 = vld [vmem:[%s4] sm:$0xf]
      %v3371 = vld [vmem:[%s4 + $0x4] sm:$0xf]
      %v3372 = vld [vmem:[%s4 + $0x8] sm:$0xf]
      %v3373 = vld [vmem:[%s4 + $0xc] sm:$0xf]
      %v3374 = vld [vmem:[%s4 + $0x10] sm:$0xf]
      %v3375 = vld [vmem:[%s4 + $0x14] sm:$0xf]
      %v3376 = vld [vmem:[%s4 + $0x18] sm:$0xf]
      %v3377 = vld [vmem:[%s4 + $0x1c] sm:$0xf]
      %v3378 = vld [vmem:[%s4 + $0x20] sm:$0xf]
      %v3379 = vld [vmem:[%s4 + $0x24] sm:$0xf]
      %v3380 = vld [vmem:[%s4 + $0x28] sm:$0xf]
      %v3381 = vld [vmem:[%s4 + $0x2c] sm:$0xf]
      %v3382 = vld [vmem:[%s4 + $0x30] sm:$0xf]
      %v3383 = vld [vmem:[%s4 + $0x34] sm:$0xf]
      %v3384 = vld [vmem:[%s4 + $0x38] sm:$0xf]
      %v3385 = vld [vmem:[%s4 + $0x3c] sm:$0xf]
      %v3418 = vunpack.c.l.b16 %v3306
      %v3419 = vunpack.c.l.b16 %v3307
      %v3420 = vunpack.c.l.b16 %v3308
      %v3421 = vunpack.c.l.b16 %v3309
      %v3422 = vunpack.c.l.b16 %v3310
      %v3423 = vunpack.c.l.b16 %v3311
      %v3424 = vunpack.c.l.b16 %v3312
      %v3425 = vunpack.c.l.b16 %v3313
      %v3426 = vunpack.c.l.b16 %v3314
      %v3427 = vunpack.c.l.b16 %v3315
      %v3428 = vunpack.c.l.b16 %v3316
      %v3429 = vunpack.c.l.b16 %v3317
      %v3430 = vunpack.c.l.b16 %v3318
      %v3431 = vunpack.c.l.b16 %v3319
      %v3432 = vunpack.c.l.b16 %v3320
      %v3433 = vunpack.c.l.b16 %v3321
      %v3434 = vunpack.c.l.b16 %v3322
      %v3435 = vunpack.c.l.b16 %v3323
      %v3436 = vunpack.c.l.b16 %v3324
      %v3437 = vunpack.c.l.b16 %v3325
      %v3438 = vunpack.c.l.b16 %v3326
      %v3439 = vunpack.c.l.b16 %v3327
      %v3440 = vunpack.c.l.b16 %v3328
      %v3441 = vunpack.c.l.b16 %v3329
      %v3442 = vunpack.c.l.b16 %v3330
      %v3443 = vunpack.c.l.b16 %v3331
      %v3444 = vunpack.c.l.b16 %v3332
      %v3445 = vunpack.c.l.b16 %v3333
      %v3446 = vunpack.c.l.b16 %v3334
      %v3447 = vunpack.c.l.b16 %v3335
      %v3448 = vunpack.c.l.b16 %v3336
      %v3449 = vunpack.c.l.b16 %v3337
      %v3450 = vpack.c.b16 %v3419, %v3418
      %v3451 = vpack.c.b16 %v3421, %v3420
      %v3452 = vpack.c.b16 %v3423, %v3422
      %v3453 = vpack.c.b16 %v3425, %v3424
      %v3454 = vpack.c.b16 %v3427, %v3426
      %v3455 = vpack.c.b16 %v3429, %v3428
      %v3456 = vpack.c.b16 %v3431, %v3430
      %v3457 = vpack.c.b16 %v3433, %v3432
      %v3458 = vpack.c.b16 %v3435, %v3434
      %v3459 = vpack.c.b16 %v3437, %v3436
      %v3460 = vpack.c.b16 %v3439, %v3438
      %v3461 = vpack.c.b16 %v3441, %v3440
      %v3462 = vpack.c.b16 %v3443, %v3442
      %v3463 = vpack.c.b16 %v3445, %v3444
      %v3464 = vpack.c.b16 %v3447, %v3446
      %v3465 = vpack.c.b16 %v3449, %v3448
      %v3498 = vunpack.c.l.b16 %v3370
      %v3499 = vunpack.c.l.b16 %v3371
      %v3500 = vunpack.c.l.b16 %v3372
      %v3501 = vunpack.c.l.b16 %v3373
      %v3502 = vunpack.c.l.b16 %v3374
      %v3503 = vunpack.c.l.b16 %v3375
      %v3504 = vunpack.c.l.b16 %v3376
      %v3505 = vunpack.c.l.b16 %v3377
      %v3506 = vunpack.c.l.b16 %v3378
      %v3507 = vunpack.c.l.b16 %v3379
      %v3508 = vunpack.c.l.b16 %v3380
      %v3509 = vunpack.c.l.b16 %v3381
      %v3510 = vunpack.c.l.b16 %v3382
      %v3511 = vunpack.c.l.b16 %v3383
      %v3512 = vunpack.c.l.b16 %v3384
      %v3513 = vunpack.c.l.b16 %v3385
      %v3514 = vpack.c.b16 %v3499, %v3498
      %v3515 = vpack.c.b16 %v3501, %v3500
      %v3516 = vpack.c.b16 %v3503, %v3502
      %v3517 = vpack.c.b16 %v3505, %v3504
      %v3518 = vpack.c.b16 %v3507, %v3506
      %v3519 = vpack.c.b16 %v3509, %v3508
      %v3520 = vpack.c.b16 %v3511, %v3510
      %v3521 = vpack.c.b16 %v3513, %v3512
      %3530 = vmatprep.subr.bf16.mxu0 0
      %3531 = vmatpush1.bf16.msra.mxu0 %v3521
      %3532 = vmatprep.subr.bf16.mxu0 0
      %3533 = vmatpush1.bf16.msra.mxu0 %v3520
      %3534 = vmatprep.subr.bf16.mxu0 0
      %3535 = vmatpush1.bf16.msra.mxu0 %v3519
      %3536 = vmatprep.subr.bf16.mxu0 0
      %3537 = vmatpush1.bf16.msra.mxu0 %v3518
      %3538 = vmatprep.subr.bf16.mxu0 0
      %3539 = vmatpush1.bf16.msra.mxu0 %v3517
      %3540 = vmatprep.subr.bf16.mxu0 0
      %3541 = vmatpush1.bf16.msra.mxu0 %v3516
      %3542 = vmatprep.subr.bf16.mxu0 0
      %3543 = vmatpush1.bf16.msra.mxu0 %v3515
      %3544 = vmatprep.subr.bf16.mxu0 0
      %3545 = vmatpush1.bf16.msra.mxu0 %v3514
      %3546 = vmatprep.subr.bf16.mxu0 0
      %3547 = vmatpush2.bf16.msra.mxu0 0
      %3548 = vmatprep.subr.bf16.mxu0 0
      %3549 = vmatpush2.bf16.msra.mxu0 0
      %3550 = vmatprep.subr.bf16.mxu0 0
      %3551 = vmatpush2.bf16.msra.mxu0 0
      %3552 = vmatprep.subr.bf16.mxu0 0
      %3553 = vmatpush2.bf16.msra.mxu0 0
      %3554 = vmatprep.subr.bf16.mxu0 0
      %3555 = vmatpush2.bf16.msra.mxu0 0
      %3556 = vmatprep.subr.bf16.mxu0 0
      %3557 = vmatpush2.bf16.msra.mxu0 0
      %3558 = vmatprep.subr.bf16.mxu0 0
      %3559 = vmatpush2.bf16.msra.mxu0 0
      %3560 = vmatprep.subr.bf16.mxu0 0
      %3561 = vmatpush2.bf16.msra.mxu0 0
      %3562 = vmatprep.mubr.bf16.mxu0 0
      %3563 = vmatmul.mubr.bf16.gmra.mxu0 %v3450
      %v3564 = vpop.f32.mrf.mxu0
      %v3565 = vadd.f32 0.0, %v3564
      %v3566 = vpop.f32.mrf.mxu0
      %v3567 = vpop.f32.mrf.mxu0
      %v3568 = vadd.f32 0.0, %v3567
      %v3569 = vpop.f32.mrf.mxu0
      %3570 = vmatprep.mubr.bf16.mxu0 0
      %3571 = vmatmul.mubr.bf16.gmra.mxu0 %v3451
      %v3572 = vpop.f32.mrf.mxu0
      %v3573 = vadd.f32 0.0, %v3572
      %v3574 = vpop.f32.mrf.mxu0
      %v3575 = vpop.f32.mrf.mxu0
      %v3576 = vadd.f32 0.0, %v3575
      %v3577 = vpop.f32.mrf.mxu0
      %3578 = vmatprep.mubr.bf16.mxu0 0
      %3579 = vmatmul.mubr.bf16.gmra.mxu0 %v3452
      %v3580 = vpop.f32.mrf.mxu0
      %v3581 = vadd.f32 0.0, %v3580
      %v3582 = vpop.f32.mrf.mxu0
      %v3583 = vpop.f32.mrf.mxu0
      %v3584 = vadd.f32 0.0, %v3583
      %v3585 = vpop.f32.mrf.mxu0
      %3586 = vmatprep.mubr.bf16.mxu0 0
      %3587 = vmatmul.mubr.bf16.gmra.mxu0 %v3453
      %v3588 = vpop.f32.mrf.mxu0
      %v3589 = vadd.f32 0.0, %v3588
      %v3590 = vpop.f32.mrf.mxu0
      %v3591 = vpop.f32.mrf.mxu0
      %v3592 = vadd.f32 0.0, %v3591
      %v3593 = vpop.f32.mrf.mxu0
      %3594 = vmatprep.mubr.bf16.mxu0 0
      %3595 = vmatmul.mubr.bf16.gmra.mxu0 %v3454
      %v3596 = vpop.f32.mrf.mxu0
      %v3597 = vadd.f32 0.0, %v3596
      %v3598 = vpop.f32.mrf.mxu0
      %v3599 = vpop.f32.mrf.mxu0
      %v3600 = vadd.f32 0.0, %v3599
      %v3601 = vpop.f32.mrf.mxu0
      %3602 = vmatprep.mubr.bf16.mxu0 0
      %3603 = vmatmul.mubr.bf16.gmra.mxu0 %v3455
      %v3604 = vpop.f32.mrf.mxu0
      %v3605 = vadd.f32 0.0, %v3604
      %v3606 = vpop.f32.mrf.mxu0
      %v3607 = vpop.f32.mrf.mxu0
      %v3608 = vadd.f32 0.0, %v3607
      %v3609 = vpop.f32.mrf.mxu0
      %3610 = vmatprep.mubr.bf16.mxu0 0
      %3611 = vmatmul.mubr.bf16.gmra.mxu0 %v3456
      %v3612 = vpop.f32.mrf.mxu0
      %v3613 = vadd.f32 0.0, %v3612
      %v3614 = vpop.f32.mrf.mxu0
      %v3615 = vpop.f32.mrf.mxu0
      %v3616 = vadd.f32 0.0, %v3615
      %v3617 = vpop.f32.mrf.mxu0
      %3618 = vmatprep.mubr.bf16.mxu0 0
      %3619 = vmatmul.mubr.bf16.gmra.mxu0 %v3457
      %v3620 = vpop.f32.mrf.mxu0
      %v3621 = vadd.f32 0.0, %v3620
      %v3622 = vpop.f32.mrf.mxu0
      %v3623 = vpop.f32.mrf.mxu0
      %v3624 = vadd.f32 0.0, %v3623
      %v3625 = vpop.f32.mrf.mxu0
      %3626 = vmatprep.mubr.bf16.mxu0 0
      %3627 = vmatmul.mubr.bf16.gmra.mxu0 %v3458
      %v3628 = vpop.f32.mrf.mxu0
      %v3629 = vadd.f32 0.0, %v3628
      %v3630 = vpop.f32.mrf.mxu0
      %v3631 = vpop.f32.mrf.mxu0
      %v3632 = vadd.f32 0.0, %v3631
      %v3633 = vpop.f32.mrf.mxu0
      %3634 = vmatprep.mubr.bf16.mxu0 0
      %3635 = vmatmul.mubr.bf16.gmra.mxu0 %v3459
      %v3636 = vpop.f32.mrf.mxu0
      %v3637 = vadd.f32 0.0, %v3636
      %v3638 = vpop.f32.mrf.mxu0
      %v3639 = vpop.f32.mrf.mxu0
      %v3640 = vadd.f32 0.0, %v3639
      %v3641 = vpop.f32.mrf.mxu0
      %3642 = vmatprep.mubr.bf16.mxu0 0
      %3643 = vmatmul.mubr.bf16.gmra.mxu0 %v3460
      %v3644 = vpop.f32.mrf.mxu0
      %v3645 = vadd.f32 0.0, %v3644
      %v3646 = vpop.f32.mrf.mxu0
      %v3647 = vpop.f32.mrf.mxu0
      %v3648 = vadd.f32 0.0, %v3647
      %v3649 = vpop.f32.mrf.mxu0
      %3650 = vmatprep.mubr.bf16.mxu0 0
      %3651 = vmatmul.mubr.bf16.gmra.mxu0 %v3461
      %v3652 = vpop.f32.mrf.mxu0
      %v3653 = vadd.f32 0.0, %v3652
      %v3654 = vpop.f32.mrf.mxu0
      %v3655 = vpop.f32.mrf.mxu0
      %v3656 = vadd.f32 0.0, %v3655
      %v3657 = vpop.f32.mrf.mxu0
      %3658 = vmatprep.mubr.bf16.mxu0 0
      %3659 = vmatmul.mubr.bf16.gmra.mxu0 %v3462
      %v3660 = vpop.f32.mrf.mxu0
      %v3661 = vadd.f32 0.0, %v3660
      %v3662 = vpop.f32.mrf.mxu0
      %v3663 = vpop.f32.mrf.mxu0
      %v3664 = vadd.f32 0.0, %v3663
      %v3665 = vpop.f32.mrf.mxu0
      %3666 = vmatprep.mubr.bf16.mxu0 0
      %3667 = vmatmul.mubr.bf16.gmra.mxu0 %v3463
      %v3668 = vpop.f32.mrf.mxu0
      %v3669 = vadd.f32 0.0, %v3668
      %v3670 = vpop.f32.mrf.mxu0
      %v3671 = vpop.f32.mrf.mxu0
      %v3672 = vadd.f32 0.0, %v3671
      %v3673 = vpop.f32.mrf.mxu0
      %3674 = vmatprep.mubr.bf16.mxu0 0
      %3675 = vmatmul.mubr.bf16.gmra.mxu0 %v3464
      %v3676 = vpop.f32.mrf.mxu0
      %v3677 = vadd.f32 0.0, %v3676
      %v3678 = vpop.f32.mrf.mxu0
      %v3679 = vpop.f32.mrf.mxu0
      %v3680 = vadd.f32 0.0, %v3679
      %v3681 = vpop.f32.mrf.mxu0
      %3682 = vmatprep.mubr.bf16.mxu0 0
      %3683 = vmatmul.mubr.bf16.gmra.mxu0 %v3465
      %v3684 = vpop.f32.mrf.mxu0
      %v3685 = vadd.f32 0.0, %v3684
      %v3686 = vpop.f32.mrf.mxu0
      %v3687 = vpop.f32.mrf.mxu0
      %v3688 = vadd.f32 0.0, %v3687
      %v3689 = vpop.f32.mrf.mxu0
      %3690 = vdwg.mxu0
      %v3691 = vadd.f32 %v3338, %v3565
      %v3692 = vadd.f32 %v3339, %v3568
      %v3693 = vadd.f32 %v3340, %v3573
      %v3694 = vadd.f32 %v3341, %v3576
      %v3695 = vadd.f32 %v3342, %v3581
      %v3696 = vadd.f32 %v3343, %v3584
      %v3697 = vadd.f32 %v3344, %v3589
      %v3698 = vadd.f32 %v3345, %v3592
      %v3699 = vadd.f32 %v3346, %v3597
      %v3700 = vadd.f32 %v3347, %v3600
      %v3701 = vadd.f32 %v3348, %v3605
      %v3702 = vadd.f32 %v3349, %v3608
      %v3703 = vadd.f32 %v3350, %v3613
      %v3704 = vadd.f32 %v3351, %v3616
      %v3705 = vadd.f32 %v3352, %v3621
      %v3706 = vadd.f32 %v3353, %v3624
      %v3707 = vadd.f32 %v3354, %v3629
      %v3708 = vadd.f32 %v3355, %v3632
      %v3709 = vadd.f32 %v3356, %v3637
      %v3710 = vadd.f32 %v3357, %v3640
      %v3711 = vadd.f32 %v3358, %v3645
      %v3712 = vadd.f32 %v3359, %v3648
      %v3713 = vadd.f32 %v3360, %v3653
      %v3714 = vadd.f32 %v3361, %v3656
      %v3715 = vadd.f32 %v3362, %v3661
      %v3716 = vadd.f32 %v3363, %v3664
      %v3717 = vadd.f32 %v3364, %v3669
      %v3718 = vadd.f32 %v3365, %v3672
      %v3719 = vadd.f32 %v3366, %v3677
      %v3720 = vadd.f32 %v3367, %v3680
      %v3721 = vadd.f32 %v3368, %v3685
      %v3722 = vadd.f32 %v3369, %v3688
      %3723 = vst [vmem:[%s298] sm:$0xff] %v3691
      %3724 = vst [vmem:[%s298 + $0x8] sm:$0xff] %v3692
      %3725 = vst [vmem:[%s298 + $0x10] sm:$0xff] %v3693
      %3726 = vst [vmem:[%s298 + $0x18] sm:$0xff] %v3694
      %3727 = vst [vmem:[%s298 + $0x20] sm:$0xff] %v3695
      %3728 = vst [vmem:[%s298 + $0x28] sm:$0xff] %v3696
      %3729 = vst [vmem:[%s298 + $0x30] sm:$0xff] %v3697
      %3730 = vst [vmem:[%s298 + $0x38] sm:$0xff] %v3698
      %3731 = vst [vmem:[%s298 + $0x40] sm:$0xff] %v3699
      %3732 = vst [vmem:[%s298 + $0x48] sm:$0xff] %v3700
      %3733 = vst [vmem:[%s298 + $0x50] sm:$0xff] %v3701
      %3734 = vst [vmem:[%s298 + $0x58] sm:$0xff] %v3702
      %3735 = vst [vmem:[%s298 + $0x60] sm:$0xff] %v3703
      %3736 = vst [vmem:[%s298 + $0x68] sm:$0xff] %v3704
      %3737 = vst [vmem:[%s298 + $0x70] sm:$0xff] %v3705
      %3738 = vst [vmem:[%s298 + $0x78] sm:$0xff] %v3706
      %3739 = vst [vmem:[%s298 + $0x80] sm:$0xff] %v3707
      %3740 = vst [vmem:[%s298 + $0x88] sm:$0xff] %v3708
      %3741 = vst [vmem:[%s298 + $0x90] sm:$0xff] %v3709
      %3742 = vst [vmem:[%s298 + $0x98] sm:$0xff] %v3710
      %3743 = vst [vmem:[%s298 + $0xa0] sm:$0xff] %v3711
      %3744 = vst [vmem:[%s298 + $0xa8] sm:$0xff] %v3712
      %3745 = vst [vmem:[%s298 + $0xb0] sm:$0xff] %v3713
      %3746 = vst [vmem:[%s298 + $0xb8] sm:$0xff] %v3714
      %3747 = vst [vmem:[%s298 + $0xc0] sm:$0xff] %v3715
      %3748 = vst [vmem:[%s298 + $0xc8] sm:$0xff] %v3716
      %3749 = vst [vmem:[%s298 + $0xd0] sm:$0xff] %v3717
      %3750 = vst [vmem:[%s298 + $0xd8] sm:$0xff] %v3718
      %3751 = vst [vmem:[%s298 + $0xe0] sm:$0xff] %v3719
      %3752 = vst [vmem:[%s298 + $0xe8] sm:$0xff] %v3720
      %3753 = vst [vmem:[%s298 + $0xf0] sm:$0xff] %v3721
      %3754 = vst [vmem:[%s298 + $0xf8] sm:$0xff] %v3722
      %v3755 = vld [vmem:[%s2690] sm:$0xf]
      %v3756 = vld [vmem:[%s2690 + $0x4] sm:$0xf]
      %v3757 = vld [vmem:[%s2690 + $0x8] sm:$0xf]
      %v3758 = vld [vmem:[%s2690 + $0xc] sm:$0xf]
      %v3759 = vld [vmem:[%s2690 + $0x10] sm:$0xf]
      %v3760 = vld [vmem:[%s2690 + $0x14] sm:$0xf]
      %v3761 = vld [vmem:[%s2690 + $0x18] sm:$0xf]
      %v3762 = vld [vmem:[%s2690 + $0x1c] sm:$0xf]
      %v3763 = vld [vmem:[%s2690 + $0x20] sm:$0xf]
      %v3764 = vld [vmem:[%s2690 + $0x24] sm:$0xf]
      %v3765 = vld [vmem:[%s2690 + $0x28] sm:$0xf]
      %v3766 = vld [vmem:[%s2690 + $0x2c] sm:$0xf]
      %v3767 = vld [vmem:[%s2690 + $0x30] sm:$0xf]
      %v3768 = vld [vmem:[%s2690 + $0x34] sm:$0xf]
      %v3769 = vld [vmem:[%s2690 + $0x38] sm:$0xf]
      %v3770 = vld [vmem:[%s2690 + $0x3c] sm:$0xf]
      %v3771 = vld [vmem:[%s2690 + $0x40] sm:$0xf]
      %v3772 = vld [vmem:[%s2690 + $0x44] sm:$0xf]
      %v3773 = vld [vmem:[%s2690 + $0x48] sm:$0xf]
      %v3774 = vld [vmem:[%s2690 + $0x4c] sm:$0xf]
      %v3775 = vld [vmem:[%s2690 + $0x50] sm:$0xf]
      %v3776 = vld [vmem:[%s2690 + $0x54] sm:$0xf]
      %v3777 = vld [vmem:[%s2690 + $0x58] sm:$0xf]
      %v3778 = vld [vmem:[%s2690 + $0x5c] sm:$0xf]
      %v3779 = vld [vmem:[%s2690 + $0x60] sm:$0xf]
      %v3780 = vld [vmem:[%s2690 + $0x64] sm:$0xf]
      %v3781 = vld [vmem:[%s2690 + $0x68] sm:$0xf]
      %v3782 = vld [vmem:[%s2690 + $0x6c] sm:$0xf]
      %v3783 = vld [vmem:[%s2690 + $0x70] sm:$0xf]
      %v3784 = vld [vmem:[%s2690 + $0x74] sm:$0xf]
      %v3785 = vld [vmem:[%s2690 + $0x78] sm:$0xf]
      %v3786 = vld [vmem:[%s2690 + $0x7c] sm:$0xf]
      %v3787 = vld [vmem:[%s298] sm:$0xff]
      %v3788 = vld [vmem:[%s298 + $0x8] sm:$0xff]
      %v3789 = vld [vmem:[%s298 + $0x10] sm:$0xff]
      %v3790 = vld [vmem:[%s298 + $0x18] sm:$0xff]
      %v3791 = vld [vmem:[%s298 + $0x20] sm:$0xff]
      %v3792 = vld [vmem:[%s298 + $0x28] sm:$0xff]
      %v3793 = vld [vmem:[%s298 + $0x30] sm:$0xff]
      %v3794 = vld [vmem:[%s298 + $0x38] sm:$0xff]
      %v3795 = vld [vmem:[%s298 + $0x40] sm:$0xff]
      %v3796 = vld [vmem:[%s298 + $0x48] sm:$0xff]
      %v3797 = vld [vmem:[%s298 + $0x50] sm:$0xff]
      %v3798 = vld [vmem:[%s298 + $0x58] sm:$0xff]
      %v3799 = vld [vmem:[%s298 + $0x60] sm:$0xff]
      %v3800 = vld [vmem:[%s298 + $0x68] sm:$0xff]
      %v3801 = vld [vmem:[%s298 + $0x70] sm:$0xff]
      %v3802 = vld [vmem:[%s298 + $0x78] sm:$0xff]
      %v3803 = vld [vmem:[%s298 + $0x80] sm:$0xff]
      %v3804 = vld [vmem:[%s298 + $0x88] sm:$0xff]
      %v3805 = vld [vmem:[%s298 + $0x90] sm:$0xff]
      %v3806 = vld [vmem:[%s298 + $0x98] sm:$0xff]
      %v3807 = vld [vmem:[%s298 + $0xa0] sm:$0xff]
      %v3808 = vld [vmem:[%s298 + $0xa8] sm:$0xff]
      %v3809 = vld [vmem:[%s298 + $0xb0] sm:$0xff]
      %v3810 = vld [vmem:[%s298 + $0xb8] sm:$0xff]
      %v3811 = vld [vmem:[%s298 + $0xc0] sm:$0xff]
      %v3812 = vld [vmem:[%s298 + $0xc8] sm:$0xff]
      %v3813 = vld [vmem:[%s298 + $0xd0] sm:$0xff]
      %v3814 = vld [vmem:[%s298 + $0xd8] sm:$0xff]
      %v3815 = vld [vmem:[%s298 + $0xe0] sm:$0xff]
      %v3816 = vld [vmem:[%s298 + $0xe8] sm:$0xff]
      %v3817 = vld [vmem:[%s298 + $0xf0] sm:$0xff]
      %v3818 = vld [vmem:[%s298 + $0xf8] sm:$0xff]
      %s3819 = scalar_lea.vmem %s4, 64
      %v3820 = vld [vmem:[%s3819] sm:$0xf]
      %v3821 = vld [vmem:[%s3819 + $0x4] sm:$0xf]
      %v3822 = vld [vmem:[%s3819 + $0x8] sm:$0xf]
      %v3823 = vld [vmem:[%s3819 + $0xc] sm:$0xf]
      %v3824 = vld [vmem:[%s3819 + $0x10] sm:$0xf]
      %v3825 = vld [vmem:[%s3819 + $0x14] sm:$0xf]
      %v3826 = vld [vmem:[%s3819 + $0x18] sm:$0xf]
      %v3827 = vld [vmem:[%s3819 + $0x1c] sm:$0xf]
      %v3828 = vld [vmem:[%s3819 + $0x20] sm:$0xf]
      %v3829 = vld [vmem:[%s3819 + $0x24] sm:$0xf]
      %v3830 = vld [vmem:[%s3819 + $0x28] sm:$0xf]
      %v3831 = vld [vmem:[%s3819 + $0x2c] sm:$0xf]
      %v3832 = vld [vmem:[%s3819 + $0x30] sm:$0xf]
      %v3833 = vld [vmem:[%s3819 + $0x34] sm:$0xf]
      %v3834 = vld [vmem:[%s3819 + $0x38] sm:$0xf]
      %v3835 = vld [vmem:[%s3819 + $0x3c] sm:$0xf]
      %v3868 = vunpack.c.l.b16 %v3755
      %v3869 = vunpack.c.l.b16 %v3756
      %v3870 = vunpack.c.l.b16 %v3757
      %v3871 = vunpack.c.l.b16 %v3758
      %v3872 = vunpack.c.l.b16 %v3759
      %v3873 = vunpack.c.l.b16 %v3760
      %v3874 = vunpack.c.l.b16 %v3761
      %v3875 = vunpack.c.l.b16 %v3762
      %v3876 = vunpack.c.l.b16 %v3763
      %v3877 = vunpack.c.l.b16 %v3764
      %v3878 = vunpack.c.l.b16 %v3765
      %v3879 = vunpack.c.l.b16 %v3766
      %v3880 = vunpack.c.l.b16 %v3767
      %v3881 = vunpack.c.l.b16 %v3768
      %v3882 = vunpack.c.l.b16 %v3769
      %v3883 = vunpack.c.l.b16 %v3770
      %v3884 = vunpack.c.l.b16 %v3771
      %v3885 = vunpack.c.l.b16 %v3772
      %v3886 = vunpack.c.l.b16 %v3773
      %v3887 = vunpack.c.l.b16 %v3774
      %v3888 = vunpack.c.l.b16 %v3775
      %v3889 = vunpack.c.l.b16 %v3776
      %v3890 = vunpack.c.l.b16 %v3777
      %v3891 = vunpack.c.l.b16 %v3778
      %v3892 = vunpack.c.l.b16 %v3779
      %v3893 = vunpack.c.l.b16 %v3780
      %v3894 = vunpack.c.l.b16 %v3781
      %v3895 = vunpack.c.l.b16 %v3782
      %v3896 = vunpack.c.l.b16 %v3783
      %v3897 = vunpack.c.l.b16 %v3784
      %v3898 = vunpack.c.l.b16 %v3785
      %v3899 = vunpack.c.l.b16 %v3786
      %v3900 = vpack.c.b16 %v3869, %v3868
      %v3901 = vpack.c.b16 %v3871, %v3870
      %v3902 = vpack.c.b16 %v3873, %v3872
      %v3903 = vpack.c.b16 %v3875, %v3874
      %v3904 = vpack.c.b16 %v3877, %v3876
      %v3905 = vpack.c.b16 %v3879, %v3878
      %v3906 = vpack.c.b16 %v3881, %v3880
      %v3907 = vpack.c.b16 %v3883, %v3882
      %v3908 = vpack.c.b16 %v3885, %v3884
      %v3909 = vpack.c.b16 %v3887, %v3886
      %v3910 = vpack.c.b16 %v3889, %v3888
      %v3911 = vpack.c.b16 %v3891, %v3890
      %v3912 = vpack.c.b16 %v3893, %v3892
      %v3913 = vpack.c.b16 %v3895, %v3894
      %v3914 = vpack.c.b16 %v3897, %v3896
      %v3915 = vpack.c.b16 %v3899, %v3898
      %v3948 = vunpack.c.l.b16 %v3820
      %v3949 = vunpack.c.l.b16 %v3821
      %v3950 = vunpack.c.l.b16 %v3822
      %v3951 = vunpack.c.l.b16 %v3823
      %v3952 = vunpack.c.l.b16 %v3824
      %v3953 = vunpack.c.l.b16 %v3825
      %v3954 = vunpack.c.l.b16 %v3826
      %v3955 = vunpack.c.l.b16 %v3827
      %v3956 = vunpack.c.l.b16 %v3828
      %v3957 = vunpack.c.l.b16 %v3829
      %v3958 = vunpack.c.l.b16 %v3830
      %v3959 = vunpack.c.l.b16 %v3831
      %v3960 = vunpack.c.l.b16 %v3832
      %v3961 = vunpack.c.l.b16 %v3833
      %v3962 = vunpack.c.l.b16 %v3834
      %v3963 = vunpack.c.l.b16 %v3835
      %v3964 = vpack.c.b16 %v3949, %v3948
      %v3965 = vpack.c.b16 %v3951, %v3950
      %v3966 = vpack.c.b16 %v3953, %v3952
      %v3967 = vpack.c.b16 %v3955, %v3954
      %v3968 = vpack.c.b16 %v3957, %v3956
      %v3969 = vpack.c.b16 %v3959, %v3958
      %v3970 = vpack.c.b16 %v3961, %v3960
      %v3971 = vpack.c.b16 %v3963, %v3962
      %3980 = vmatprep.subr.bf16.mxu0 0
      %3981 = vmatpush1.bf16.msra.mxu0 %v3971
      %3982 = vmatprep.subr.bf16.mxu0 0
      %3983 = vmatpush1.bf16.msra.mxu0 %v3970
      %3984 = vmatprep.subr.bf16.mxu0 0
      %3985 = vmatpush1.bf16.msra.mxu0 %v3969
      %3986 = vmatprep.subr.bf16.mxu0 0
      %3987 = vmatpush1.bf16.msra.mxu0 %v3968
      %3988 = vmatprep.subr.bf16.mxu0 0
      %3989 = vmatpush1.bf16.msra.mxu0 %v3967
      %3990 = vmatprep.subr.bf16.mxu0 0
      %3991 = vmatpush1.bf16.msra.mxu0 %v3966
      %3992 = vmatprep.subr.bf16.mxu0 0
      %3993 = vmatpush1.bf16.msra.mxu0 %v3965
      %3994 = vmatprep.subr.bf16.mxu0 0
      %3995 = vmatpush1.bf16.msra.mxu0 %v3964
      %3996 = vmatprep.subr.bf16.mxu0 0
      %3997 = vmatpush2.bf16.msra.mxu0 0
      %3998 = vmatprep.subr.bf16.mxu0 0
      %3999 = vmatpush2.bf16.msra.mxu0 0
      %4000 = vmatprep.subr.bf16.mxu0 0
      %4001 = vmatpush2.bf16.msra.mxu0 0
      %4002 = vmatprep.subr.bf16.mxu0 0
      %4003 = vmatpush2.bf16.msra.mxu0 0
      %4004 = vmatprep.subr.bf16.mxu0 0
      %4005 = vmatpush2.bf16.msra.mxu0 0
      %4006 = vmatprep.subr.bf16.mxu0 0
      %4007 = vmatpush2.bf16.msra.mxu0 0
      %4008 = vmatprep.subr.bf16.mxu0 0
      %4009 = vmatpush2.bf16.msra.mxu0 0
      %4010 = vmatprep.subr.bf16.mxu0 0
      %4011 = vmatpush2.bf16.msra.mxu0 0
      %4012 = vmatprep.mubr.bf16.mxu0 0
      %4013 = vmatmul.mubr.bf16.gmra.mxu0 %v3900
      %v4014 = vpop.f32.mrf.mxu0
      %v4015 = vadd.f32 0.0, %v4014
      %v4016 = vpop.f32.mrf.mxu0
      %v4017 = vpop.f32.mrf.mxu0
      %v4018 = vadd.f32 0.0, %v4017
      %v4019 = vpop.f32.mrf.mxu0
      %4020 = vmatprep.mubr.bf16.mxu0 0
      %4021 = vmatmul.mubr.bf16.gmra.mxu0 %v3901
      %v4022 = vpop.f32.mrf.mxu0
      %v4023 = vadd.f32 0.0, %v4022
      %v4024 = vpop.f32.mrf.mxu0
      %v4025 = vpop.f32.mrf.mxu0
      %v4026 = vadd.f32 0.0, %v4025
      %v4027 = vpop.f32.mrf.mxu0
      %4028 = vmatprep.mubr.bf16.mxu0 0
      %4029 = vmatmul.mubr.bf16.gmra.mxu0 %v3902
      %v4030 = vpop.f32.mrf.mxu0
      %v4031 = vadd.f32 0.0, %v4030
      %v4032 = vpop.f32.mrf.mxu0
      %v4033 = vpop.f32.mrf.mxu0
      %v4034 = vadd.f32 0.0, %v4033
      %v4035 = vpop.f32.mrf.mxu0
      %4036 = vmatprep.mubr.bf16.mxu0 0
      %4037 = vmatmul.mubr.bf16.gmra.mxu0 %v3903
      %v4038 = vpop.f32.mrf.mxu0
      %v4039 = vadd.f32 0.0, %v4038
      %v4040 = vpop.f32.mrf.mxu0
      %v4041 = vpop.f32.mrf.mxu0
      %v4042 = vadd.f32 0.0, %v4041
      %v4043 = vpop.f32.mrf.mxu0
      %4044 = vmatprep.mubr.bf16.mxu0 0
      %4045 = vmatmul.mubr.bf16.gmra.mxu0 %v3904
      %v4046 = vpop.f32.mrf.mxu0
      %v4047 = vadd.f32 0.0, %v4046
      %v4048 = vpop.f32.mrf.mxu0
      %v4049 = vpop.f32.mrf.mxu0
      %v4050 = vadd.f32 0.0, %v4049
      %v4051 = vpop.f32.mrf.mxu0
      %4052 = vmatprep.mubr.bf16.mxu0 0
      %4053 = vmatmul.mubr.bf16.gmra.mxu0 %v3905
      %v4054 = vpop.f32.mrf.mxu0
      %v4055 = vadd.f32 0.0, %v4054
      %v4056 = vpop.f32.mrf.mxu0
      %v4057 = vpop.f32.mrf.mxu0
      %v4058 = vadd.f32 0.0, %v4057
      %v4059 = vpop.f32.mrf.mxu0
      %4060 = vmatprep.mubr.bf16.mxu0 0
      %4061 = vmatmul.mubr.bf16.gmra.mxu0 %v3906
      %v4062 = vpop.f32.mrf.mxu0
      %v4063 = vadd.f32 0.0, %v4062
      %v4064 = vpop.f32.mrf.mxu0
      %v4065 = vpop.f32.mrf.mxu0
      %v4066 = vadd.f32 0.0, %v4065
      %v4067 = vpop.f32.mrf.mxu0
      %4068 = vmatprep.mubr.bf16.mxu0 0
      %4069 = vmatmul.mubr.bf16.gmra.mxu0 %v3907
      %v4070 = vpop.f32.mrf.mxu0
      %v4071 = vadd.f32 0.0, %v4070
      %v4072 = vpop.f32.mrf.mxu0
      %v4073 = vpop.f32.mrf.mxu0
      %v4074 = vadd.f32 0.0, %v4073
      %v4075 = vpop.f32.mrf.mxu0
      %4076 = vmatprep.mubr.bf16.mxu0 0
      %4077 = vmatmul.mubr.bf16.gmra.mxu0 %v3908
      %v4078 = vpop.f32.mrf.mxu0
      %v4079 = vadd.f32 0.0, %v4078
      %v4080 = vpop.f32.mrf.mxu0
      %v4081 = vpop.f32.mrf.mxu0
      %v4082 = vadd.f32 0.0, %v4081
      %v4083 = vpop.f32.mrf.mxu0
      %4084 = vmatprep.mubr.bf16.mxu0 0
      %4085 = vmatmul.mubr.bf16.gmra.mxu0 %v3909
      %v4086 = vpop.f32.mrf.mxu0
      %v4087 = vadd.f32 0.0, %v4086
      %v4088 = vpop.f32.mrf.mxu0
      %v4089 = vpop.f32.mrf.mxu0
      %v4090 = vadd.f32 0.0, %v4089
      %v4091 = vpop.f32.mrf.mxu0
      %4092 = vmatprep.mubr.bf16.mxu0 0
      %4093 = vmatmul.mubr.bf16.gmra.mxu0 %v3910
      %v4094 = vpop.f32.mrf.mxu0
      %v4095 = vadd.f32 0.0, %v4094
      %v4096 = vpop.f32.mrf.mxu0
      %v4097 = vpop.f32.mrf.mxu0
      %v4098 = vadd.f32 0.0, %v4097
      %v4099 = vpop.f32.mrf.mxu0
      %4100 = vmatprep.mubr.bf16.mxu0 0
      %4101 = vmatmul.mubr.bf16.gmra.mxu0 %v3911
      %v4102 = vpop.f32.mrf.mxu0
      %v4103 = vadd.f32 0.0, %v4102
      %v4104 = vpop.f32.mrf.mxu0
      %v4105 = vpop.f32.mrf.mxu0
      %v4106 = vadd.f32 0.0, %v4105
      %v4107 = vpop.f32.mrf.mxu0
      %4108 = vmatprep.mubr.bf16.mxu0 0
      %4109 = vmatmul.mubr.bf16.gmra.mxu0 %v3912
      %v4110 = vpop.f32.mrf.mxu0
      %v4111 = vadd.f32 0.0, %v4110
      %v4112 = vpop.f32.mrf.mxu0
      %v4113 = vpop.f32.mrf.mxu0
      %v4114 = vadd.f32 0.0, %v4113
      %v4115 = vpop.f32.mrf.mxu0
      %4116 = vmatprep.mubr.bf16.mxu0 0
      %4117 = vmatmul.mubr.bf16.gmra.mxu0 %v3913
      %v4118 = vpop.f32.mrf.mxu0
      %v4119 = vadd.f32 0.0, %v4118
      %v4120 = vpop.f32.mrf.mxu0
      %v4121 = vpop.f32.mrf.mxu0
      %v4122 = vadd.f32 0.0, %v4121
      %v4123 = vpop.f32.mrf.mxu0
      %4124 = vmatprep.mubr.bf16.mxu0 0
      %4125 = vmatmul.mubr.bf16.gmra.mxu0 %v3914
      %v4126 = vpop.f32.mrf.mxu0
      %v4127 = vadd.f32 0.0, %v4126
      %v4128 = vpop.f32.mrf.mxu0
      %v4129 = vpop.f32.mrf.mxu0
      %v4130 = vadd.f32 0.0, %v4129
      %v4131 = vpop.f32.mrf.mxu0
      %4132 = vmatprep.mubr.bf16.mxu0 0
      %4133 = vmatmul.mubr.bf16.gmra.mxu0 %v3915
      %v4134 = vpop.f32.mrf.mxu0
      %v4135 = vadd.f32 0.0, %v4134
      %v4136 = vpop.f32.mrf.mxu0
      %v4137 = vpop.f32.mrf.mxu0
      %v4138 = vadd.f32 0.0, %v4137
      %v4139 = vpop.f32.mrf.mxu0
      %4140 = vdwg.mxu0
      %v4141 = vadd.f32 %v3787, %v4015
      %v4142 = vadd.f32 %v3788, %v4018
      %v4143 = vadd.f32 %v3789, %v4023
      %v4144 = vadd.f32 %v3790, %v4026
      %v4145 = vadd.f32 %v3791, %v4031
      %v4146 = vadd.f32 %v3792, %v4034
      %v4147 = vadd.f32 %v3793, %v4039
      %v4148 = vadd.f32 %v3794, %v4042
      %v4149 = vadd.f32 %v3795, %v4047
      %v4150 = vadd.f32 %v3796, %v4050
      %v4151 = vadd.f32 %v3797, %v4055
      %v4152 = vadd.f32 %v3798, %v4058
      %v4153 = vadd.f32 %v3799, %v4063
      %v4154 = vadd.f32 %v3800, %v4066
      %v4155 = vadd.f32 %v3801, %v4071
      %v4156 = vadd.f32 %v3802, %v4074
      %v4157 = vadd.f32 %v3803, %v4079
      %v4158 = vadd.f32 %v3804, %v4082
      %v4159 = vadd.f32 %v3805, %v4087
      %v4160 = vadd.f32 %v3806, %v4090
      %v4161 = vadd.f32 %v3807, %v4095
      %v4162 = vadd.f32 %v3808, %v4098
      %v4163 = vadd.f32 %v3809, %v4103
      %v4164 = vadd.f32 %v3810, %v4106
      %v4165 = vadd.f32 %v3811, %v4111
      %v4166 = vadd.f32 %v3812, %v4114
      %v4167 = vadd.f32 %v3813, %v4119
      %v4168 = vadd.f32 %v3814, %v4122
      %v4169 = vadd.f32 %v3815, %v4127
      %v4170 = vadd.f32 %v3816, %v4130
      %v4171 = vadd.f32 %v3817, %v4135
      %v4172 = vadd.f32 %v3818, %v4138
      %4173 = vst [vmem:[%s298] sm:$0xff] %v4141
      %4174 = vst [vmem:[%s298 + $0x8] sm:$0xff] %v4142
      %4175 = vst [vmem:[%s298 + $0x10] sm:$0xff] %v4143
      %4176 = vst [vmem:[%s298 + $0x18] sm:$0xff] %v4144
      %4177 = vst [vmem:[%s298 + $0x20] sm:$0xff] %v4145
      %4178 = vst [vmem:[%s298 + $0x28] sm:$0xff] %v4146
      %4179 = vst [vmem:[%s298 + $0x30] sm:$0xff] %v4147
      %4180 = vst [vmem:[%s298 + $0x38] sm:$0xff] %v4148
      %4181 = vst [vmem:[%s298 + $0x40] sm:$0xff] %v4149
      %4182 = vst [vmem:[%s298 + $0x48] sm:$0xff] %v4150
      %4183 = vst [vmem:[%s298 + $0x50] sm:$0xff] %v4151
      %4184 = vst [vmem:[%s298 + $0x58] sm:$0xff] %v4152
      %4185 = vst [vmem:[%s298 + $0x60] sm:$0xff] %v4153
      %4186 = vst [vmem:[%s298 + $0x68] sm:$0xff] %v4154
      %4187 = vst [vmem:[%s298 + $0x70] sm:$0xff] %v4155
      %4188 = vst [vmem:[%s298 + $0x78] sm:$0xff] %v4156
      %4189 = vst [vmem:[%s298 + $0x80] sm:$0xff] %v4157
      %4190 = vst [vmem:[%s298 + $0x88] sm:$0xff] %v4158
      %4191 = vst [vmem:[%s298 + $0x90] sm:$0xff] %v4159
      %4192 = vst [vmem:[%s298 + $0x98] sm:$0xff] %v4160
      %4193 = vst [vmem:[%s298 + $0xa0] sm:$0xff] %v4161
      %4194 = vst [vmem:[%s298 + $0xa8] sm:$0xff] %v4162
      %4195 = vst [vmem:[%s298 + $0xb0] sm:$0xff] %v4163
      %4196 = vst [vmem:[%s298 + $0xb8] sm:$0xff] %v4164
      %4197 = vst [vmem:[%s298 + $0xc0] sm:$0xff] %v4165
      %4198 = vst [vmem:[%s298 + $0xc8] sm:$0xff] %v4166
      %4199 = vst [vmem:[%s298 + $0xd0] sm:$0xff] %v4167
      %4200 = vst [vmem:[%s298 + $0xd8] sm:$0xff] %v4168
      %4201 = vst [vmem:[%s298 + $0xe0] sm:$0xff] %v4169
      %4202 = vst [vmem:[%s298 + $0xe8] sm:$0xff] %v4170
      %4203 = vst [vmem:[%s298 + $0xf0] sm:$0xff] %v4171
      %4204 = vst [vmem:[%s298 + $0xf8] sm:$0xff] %v4172
      %v4205 = vld [vmem:[%s2968] sm:$0xf]
      %v4206 = vld [vmem:[%s2968 + $0x4] sm:$0xf]
      %v4207 = vld [vmem:[%s2968 + $0x8] sm:$0xf]
      %v4208 = vld [vmem:[%s2968 + $0xc] sm:$0xf]
      %v4209 = vld [vmem:[%s2968 + $0x10] sm:$0xf]
      %v4210 = vld [vmem:[%s2968 + $0x14] sm:$0xf]
      %v4211 = vld [vmem:[%s2968 + $0x18] sm:$0xf]
      %v4212 = vld [vmem:[%s2968 + $0x1c] sm:$0xf]
      %v4213 = vld [vmem:[%s2968 + $0x20] sm:$0xf]
      %v4214 = vld [vmem:[%s2968 + $0x24] sm:$0xf]
      %v4215 = vld [vmem:[%s2968 + $0x28] sm:$0xf]
      %v4216 = vld [vmem:[%s2968 + $0x2c] sm:$0xf]
      %v4217 = vld [vmem:[%s2968 + $0x30] sm:$0xf]
      %v4218 = vld [vmem:[%s2968 + $0x34] sm:$0xf]
      %v4219 = vld [vmem:[%s2968 + $0x38] sm:$0xf]
      %v4220 = vld [vmem:[%s2968 + $0x3c] sm:$0xf]
      %v4221 = vld [vmem:[%s2968 + $0x40] sm:$0xf]
      %v4222 = vld [vmem:[%s2968 + $0x44] sm:$0xf]
      %v4223 = vld [vmem:[%s2968 + $0x48] sm:$0xf]
      %v4224 = vld [vmem:[%s2968 + $0x4c] sm:$0xf]
      %v4225 = vld [vmem:[%s2968 + $0x50] sm:$0xf]
      %v4226 = vld [vmem:[%s2968 + $0x54] sm:$0xf]
      %v4227 = vld [vmem:[%s2968 + $0x58] sm:$0xf]
      %v4228 = vld [vmem:[%s2968 + $0x5c] sm:$0xf]
      %v4229 = vld [vmem:[%s2968 + $0x60] sm:$0xf]
      %v4230 = vld [vmem:[%s2968 + $0x64] sm:$0xf]
      %v4231 = vld [vmem:[%s2968 + $0x68] sm:$0xf]
      %v4232 = vld [vmem:[%s2968 + $0x6c] sm:$0xf]
      %v4233 = vld [vmem:[%s2968 + $0x70] sm:$0xf]
      %v4234 = vld [vmem:[%s2968 + $0x74] sm:$0xf]
      %v4235 = vld [vmem:[%s2968 + $0x78] sm:$0xf]
      %v4236 = vld [vmem:[%s2968 + $0x7c] sm:$0xf]
      %v4237 = vld [vmem:[%s298] sm:$0xff]
      %v4238 = vld [vmem:[%s298 + $0x8] sm:$0xff]
      %v4239 = vld [vmem:[%s298 + $0x10] sm:$0xff]
      %v4240 = vld [vmem:[%s298 + $0x18] sm:$0xff]
      %v4241 = vld [vmem:[%s298 + $0x20] sm:$0xff]
      %v4242 = vld [vmem:[%s298 + $0x28] sm:$0xff]
      %v4243 = vld [vmem:[%s298 + $0x30] sm:$0xff]
      %v4244 = vld [vmem:[%s298 + $0x38] sm:$0xff]
      %v4245 = vld [vmem:[%s298 + $0x40] sm:$0xff]
      %v4246 = vld [vmem:[%s298 + $0x48] sm:$0xff]
      %v4247 = vld [vmem:[%s298 + $0x50] sm:$0xff]
      %v4248 = vld [vmem:[%s298 + $0x58] sm:$0xff]
      %v4249 = vld [vmem:[%s298 + $0x60] sm:$0xff]
      %v4250 = vld [vmem:[%s298 + $0x68] sm:$0xff]
      %v4251 = vld [vmem:[%s298 + $0x70] sm:$0xff]
      %v4252 = vld [vmem:[%s298 + $0x78] sm:$0xff]
      %v4253 = vld [vmem:[%s298 + $0x80] sm:$0xff]
      %v4254 = vld [vmem:[%s298 + $0x88] sm:$0xff]
      %v4255 = vld [vmem:[%s298 + $0x90] sm:$0xff]
      %v4256 = vld [vmem:[%s298 + $0x98] sm:$0xff]
      %v4257 = vld [vmem:[%s298 + $0xa0] sm:$0xff]
      %v4258 = vld [vmem:[%s298 + $0xa8] sm:$0xff]
      %v4259 = vld [vmem:[%s298 + $0xb0] sm:$0xff]
      %v4260 = vld [vmem:[%s298 + $0xb8] sm:$0xff]
      %v4261 = vld [vmem:[%s298 + $0xc0] sm:$0xff]
      %v4262 = vld [vmem:[%s298 + $0xc8] sm:$0xff]
      %v4263 = vld [vmem:[%s298 + $0xd0] sm:$0xff]
      %v4264 = vld [vmem:[%s298 + $0xd8] sm:$0xff]
      %v4265 = vld [vmem:[%s298 + $0xe0] sm:$0xff]
      %v4266 = vld [vmem:[%s298 + $0xe8] sm:$0xff]
      %v4267 = vld [vmem:[%s298 + $0xf0] sm:$0xff]
      %v4268 = vld [vmem:[%s298 + $0xf8] sm:$0xff]
      %s4269 = scalar_lea.vmem %s4, 128
      %v4270 = vld [vmem:[%s4269] sm:$0xf]
      %v4271 = vld [vmem:[%s4269 + $0x4] sm:$0xf]
      %v4272 = vld [vmem:[%s4269 + $0x8] sm:$0xf]
      %v4273 = vld [vmem:[%s4269 + $0xc] sm:$0xf]
      %v4274 = vld [vmem:[%s4269 + $0x10] sm:$0xf]
      %v4275 = vld [vmem:[%s4269 + $0x14] sm:$0xf]
      %v4276 = vld [vmem:[%s4269 + $0x18] sm:$0xf]
      %v4277 = vld [vmem:[%s4269 + $0x1c] sm:$0xf]
      %v4278 = vld [vmem:[%s4269 + $0x20] sm:$0xf]
      %v4279 = vld [vmem:[%s4269 + $0x24] sm:$0xf]
      %v4280 = vld [vmem:[%s4269 + $0x28] sm:$0xf]
      %v4281 = vld [vmem:[%s4269 + $0x2c] sm:$0xf]
      %v4282 = vld [vmem:[%s4269 + $0x30] sm:$0xf]
      %v4283 = vld [vmem:[%s4269 + $0x34] sm:$0xf]
      %v4284 = vld [vmem:[%s4269 + $0x38] sm:$0xf]
      %v4285 = vld [vmem:[%s4269 + $0x3c] sm:$0xf]
      %v4318 = vunpack.c.l.b16 %v4205
      %v4319 = vunpack.c.l.b16 %v4206
      %v4320 = vunpack.c.l.b16 %v4207
      %v4321 = vunpack.c.l.b16 %v4208
      %v4322 = vunpack.c.l.b16 %v4209
      %v4323 = vunpack.c.l.b16 %v4210
      %v4324 = vunpack.c.l.b16 %v4211
      %v4325 = vunpack.c.l.b16 %v4212
      %v4326 = vunpack.c.l.b16 %v4213
      %v4327 = vunpack.c.l.b16 %v4214
      %v4328 = vunpack.c.l.b16 %v4215
      %v4329 = vunpack.c.l.b16 %v4216
      %v4330 = vunpack.c.l.b16 %v4217
      %v4331 = vunpack.c.l.b16 %v4218
      %v4332 = vunpack.c.l.b16 %v4219
      %v4333 = vunpack.c.l.b16 %v4220
      %v4334 = vunpack.c.l.b16 %v4221
      %v4335 = vunpack.c.l.b16 %v4222
      %v4336 = vunpack.c.l.b16 %v4223
      %v4337 = vunpack.c.l.b16 %v4224
      %v4338 = vunpack.c.l.b16 %v4225
      %v4339 = vunpack.c.l.b16 %v4226
      %v4340 = vunpack.c.l.b16 %v4227
      %v4341 = vunpack.c.l.b16 %v4228
      %v4342 = vunpack.c.l.b16 %v4229
      %v4343 = vunpack.c.l.b16 %v4230
      %v4344 = vunpack.c.l.b16 %v4231
      %v4345 = vunpack.c.l.b16 %v4232
      %v4346 = vunpack.c.l.b16 %v4233
      %v4347 = vunpack.c.l.b16 %v4234
      %v4348 = vunpack.c.l.b16 %v4235
      %v4349 = vunpack.c.l.b16 %v4236
      %v4350 = vpack.c.b16 %v4319, %v4318
      %v4351 = vpack.c.b16 %v4321, %v4320
      %v4352 = vpack.c.b16 %v4323, %v4322
      %v4353 = vpack.c.b16 %v4325, %v4324
      %v4354 = vpack.c.b16 %v4327, %v4326
      %v4355 = vpack.c.b16 %v4329, %v4328
      %v4356 = vpack.c.b16 %v4331, %v4330
      %v4357 = vpack.c.b16 %v4333, %v4332
      %v4358 = vpack.c.b16 %v4335, %v4334
      %v4359 = vpack.c.b16 %v4337, %v4336
      %v4360 = vpack.c.b16 %v4339, %v4338
      %v4361 = vpack.c.b16 %v4341, %v4340
      %v4362 = vpack.c.b16 %v4343, %v4342
      %v4363 = vpack.c.b16 %v4345, %v4344
      %v4364 = vpack.c.b16 %v4347, %v4346
      %v4365 = vpack.c.b16 %v4349, %v4348
      %v4398 = vunpack.c.l.b16 %v4270
      %v4399 = vunpack.c.l.b16 %v4271
      %v4400 = vunpack.c.l.b16 %v4272
      %v4401 = vunpack.c.l.b16 %v4273
      %v4402 = vunpack.c.l.b16 %v4274
      %v4403 = vunpack.c.l.b16 %v4275
      %v4404 = vunpack.c.l.b16 %v4276
      %v4405 = vunpack.c.l.b16 %v4277
      %v4406 = vunpack.c.l.b16 %v4278
      %v4407 = vunpack.c.l.b16 %v4279
      %v4408 = vunpack.c.l.b16 %v4280
      %v4409 = vunpack.c.l.b16 %v4281
      %v4410 = vunpack.c.l.b16 %v4282
      %v4411 = vunpack.c.l.b16 %v4283
      %v4412 = vunpack.c.l.b16 %v4284
      %v4413 = vunpack.c.l.b16 %v4285
      %v4414 = vpack.c.b16 %v4399, %v4398
      %v4415 = vpack.c.b16 %v4401, %v4400
      %v4416 = vpack.c.b16 %v4403, %v4402
      %v4417 = vpack.c.b16 %v4405, %v4404
      %v4418 = vpack.c.b16 %v4407, %v4406
      %v4419 = vpack.c.b16 %v4409, %v4408
      %v4420 = vpack.c.b16 %v4411, %v4410
      %v4421 = vpack.c.b16 %v4413, %v4412
      %4430 = vmatprep.subr.bf16.mxu0 0
      %4431 = vmatpush1.bf16.msra.mxu0 %v4421
      %4432 = vmatprep.subr.bf16.mxu0 0
      %4433 = vmatpush1.bf16.msra.mxu0 %v4420
      %4434 = vmatprep.subr.bf16.mxu0 0
      %4435 = vmatpush1.bf16.msra.mxu0 %v4419
      %4436 = vmatprep.subr.bf16.mxu0 0
      %4437 = vmatpush1.bf16.msra.mxu0 %v4418
      %4438 = vmatprep.subr.bf16.mxu0 0
      %4439 = vmatpush1.bf16.msra.mxu0 %v4417
      %4440 = vmatprep.subr.bf16.mxu0 0
      %4441 = vmatpush1.bf16.msra.mxu0 %v4416
      %4442 = vmatprep.subr.bf16.mxu0 0
      %4443 = vmatpush1.bf16.msra.mxu0 %v4415
      %4444 = vmatprep.subr.bf16.mxu0 0
      %4445 = vmatpush1.bf16.msra.mxu0 %v4414
      %4446 = vmatprep.subr.bf16.mxu0 0
      %4447 = vmatpush2.bf16.msra.mxu0 0
      %4448 = vmatprep.subr.bf16.mxu0 0
      %4449 = vmatpush2.bf16.msra.mxu0 0
      %4450 = vmatprep.subr.bf16.mxu0 0
      %4451 = vmatpush2.bf16.msra.mxu0 0
      %4452 = vmatprep.subr.bf16.mxu0 0
      %4453 = vmatpush2.bf16.msra.mxu0 0
      %4454 = vmatprep.subr.bf16.mxu0 0
      %4455 = vmatpush2.bf16.msra.mxu0 0
      %4456 = vmatprep.subr.bf16.mxu0 0
      %4457 = vmatpush2.bf16.msra.mxu0 0
      %4458 = vmatprep.subr.bf16.mxu0 0
      %4459 = vmatpush2.bf16.msra.mxu0 0
      %4460 = vmatprep.subr.bf16.mxu0 0
      %4461 = vmatpush2.bf16.msra.mxu0 0
      %4462 = vmatprep.mubr.bf16.mxu0 0
      %4463 = vmatmul.mubr.bf16.gmra.mxu0 %v4350
      %v4464 = vpop.f32.mrf.mxu0
      %v4465 = vadd.f32 0.0, %v4464
      %v4466 = vpop.f32.mrf.mxu0
      %v4467 = vpop.f32.mrf.mxu0
      %v4468 = vadd.f32 0.0, %v4467
      %v4469 = vpop.f32.mrf.mxu0
      %4470 = vmatprep.mubr.bf16.mxu0 0
      %4471 = vmatmul.mubr.bf16.gmra.mxu0 %v4351
      %v4472 = vpop.f32.mrf.mxu0
      %v4473 = vadd.f32 0.0, %v4472
      %v4474 = vpop.f32.mrf.mxu0
      %v4475 = vpop.f32.mrf.mxu0
      %v4476 = vadd.f32 0.0, %v4475
      %v4477 = vpop.f32.mrf.mxu0
      %4478 = vmatprep.mubr.bf16.mxu0 0
      %4479 = vmatmul.mubr.bf16.gmra.mxu0 %v4352
      %v4480 = vpop.f32.mrf.mxu0
      %v4481 = vadd.f32 0.0, %v4480
      %v4482 = vpop.f32.mrf.mxu0
      %v4483 = vpop.f32.mrf.mxu0
      %v4484 = vadd.f32 0.0, %v4483
      %v4485 = vpop.f32.mrf.mxu0
      %4486 = vmatprep.mubr.bf16.mxu0 0
      %4487 = vmatmul.mubr.bf16.gmra.mxu0 %v4353
      %v4488 = vpop.f32.mrf.mxu0
      %v4489 = vadd.f32 0.0, %v4488
      %v4490 = vpop.f32.mrf.mxu0
      %v4491 = vpop.f32.mrf.mxu0
      %v4492 = vadd.f32 0.0, %v4491
      %v4493 = vpop.f32.mrf.mxu0
      %4494 = vmatprep.mubr.bf16.mxu0 0
      %4495 = vmatmul.mubr.bf16.gmra.mxu0 %v4354
      %v4496 = vpop.f32.mrf.mxu0
      %v4497 = vadd.f32 0.0, %v4496
      %v4498 = vpop.f32.mrf.mxu0
      %v4499 = vpop.f32.mrf.mxu0
      %v4500 = vadd.f32 0.0, %v4499
      %v4501 = vpop.f32.mrf.mxu0
      %4502 = vmatprep.mubr.bf16.mxu0 0
      %4503 = vmatmul.mubr.bf16.gmra.mxu0 %v4355
      %v4504 = vpop.f32.mrf.mxu0
      %v4505 = vadd.f32 0.0, %v4504
      %v4506 = vpop.f32.mrf.mxu0
      %v4507 = vpop.f32.mrf.mxu0
      %v4508 = vadd.f32 0.0, %v4507
      %v4509 = vpop.f32.mrf.mxu0
      %4510 = vmatprep.mubr.bf16.mxu0 0
      %4511 = vmatmul.mubr.bf16.gmra.mxu0 %v4356
      %v4512 = vpop.f32.mrf.mxu0
      %v4513 = vadd.f32 0.0, %v4512
      %v4514 = vpop.f32.mrf.mxu0
      %v4515 = vpop.f32.mrf.mxu0
      %v4516 = vadd.f32 0.0, %v4515
      %v4517 = vpop.f32.mrf.mxu0
      %4518 = vmatprep.mubr.bf16.mxu0 0
      %4519 = vmatmul.mubr.bf16.gmra.mxu0 %v4357
      %v4520 = vpop.f32.mrf.mxu0
      %v4521 = vadd.f32 0.0, %v4520
      %v4522 = vpop.f32.mrf.mxu0
      %v4523 = vpop.f32.mrf.mxu0
      %v4524 = vadd.f32 0.0, %v4523
      %v4525 = vpop.f32.mrf.mxu0
      %4526 = vmatprep.mubr.bf16.mxu0 0
      %4527 = vmatmul.mubr.bf16.gmra.mxu0 %v4358
      %v4528 = vpop.f32.mrf.mxu0
      %v4529 = vadd.f32 0.0, %v4528
      %v4530 = vpop.f32.mrf.mxu0
      %v4531 = vpop.f32.mrf.mxu0
      %v4532 = vadd.f32 0.0, %v4531
      %v4533 = vpop.f32.mrf.mxu0
      %4534 = vmatprep.mubr.bf16.mxu0 0
      %4535 = vmatmul.mubr.bf16.gmra.mxu0 %v4359
      %v4536 = vpop.f32.mrf.mxu0
      %v4537 = vadd.f32 0.0, %v4536
      %v4538 = vpop.f32.mrf.mxu0
      %v4539 = vpop.f32.mrf.mxu0
      %v4540 = vadd.f32 0.0, %v4539
      %v4541 = vpop.f32.mrf.mxu0
      %4542 = vmatprep.mubr.bf16.mxu0 0
      %4543 = vmatmul.mubr.bf16.gmra.mxu0 %v4360
      %v4544 = vpop.f32.mrf.mxu0
      %v4545 = vadd.f32 0.0, %v4544
      %v4546 = vpop.f32.mrf.mxu0
      %v4547 = vpop.f32.mrf.mxu0
      %v4548 = vadd.f32 0.0, %v4547
      %v4549 = vpop.f32.mrf.mxu0
      %4550 = vmatprep.mubr.bf16.mxu0 0
      %4551 = vmatmul.mubr.bf16.gmra.mxu0 %v4361
      %v4552 = vpop.f32.mrf.mxu0
      %v4553 = vadd.f32 0.0, %v4552
      %v4554 = vpop.f32.mrf.mxu0
      %v4555 = vpop.f32.mrf.mxu0
      %v4556 = vadd.f32 0.0, %v4555
      %v4557 = vpop.f32.mrf.mxu0
      %4558 = vmatprep.mubr.bf16.mxu0 0
      %4559 = vmatmul.mubr.bf16.gmra.mxu0 %v4362
      %v4560 = vpop.f32.mrf.mxu0
      %v4561 = vadd.f32 0.0, %v4560
      %v4562 = vpop.f32.mrf.mxu0
      %v4563 = vpop.f32.mrf.mxu0
      %v4564 = vadd.f32 0.0, %v4563
      %v4565 = vpop.f32.mrf.mxu0
      %4566 = vmatprep.mubr.bf16.mxu0 0
      %4567 = vmatmul.mubr.bf16.gmra.mxu0 %v4363
      %v4568 = vpop.f32.mrf.mxu0
      %v4569 = vadd.f32 0.0, %v4568
      %v4570 = vpop.f32.mrf.mxu0
      %v4571 = vpop.f32.mrf.mxu0
      %v4572 = vadd.f32 0.0, %v4571
      %v4573 = vpop.f32.mrf.mxu0
      %4574 = vmatprep.mubr.bf16.mxu0 0
      %4575 = vmatmul.mubr.bf16.gmra.mxu0 %v4364
      %v4576 = vpop.f32.mrf.mxu0
      %v4577 = vadd.f32 0.0, %v4576
      %v4578 = vpop.f32.mrf.mxu0
      %v4579 = vpop.f32.mrf.mxu0
      %v4580 = vadd.f32 0.0, %v4579
      %v4581 = vpop.f32.mrf.mxu0
      %4582 = vmatprep.mubr.bf16.mxu0 0
      %4583 = vmatmul.mubr.bf16.gmra.mxu0 %v4365
      %v4584 = vpop.f32.mrf.mxu0
      %v4585 = vadd.f32 0.0, %v4584
      %v4586 = vpop.f32.mrf.mxu0
      %v4587 = vpop.f32.mrf.mxu0
      %v4588 = vadd.f32 0.0, %v4587
      %v4589 = vpop.f32.mrf.mxu0
      %4590 = vdwg.mxu0
      %v4591 = vadd.f32 %v4237, %v4465
      %v4592 = vadd.f32 %v4238, %v4468
      %v4593 = vadd.f32 %v4239, %v4473
      %v4594 = vadd.f32 %v4240, %v4476
      %v4595 = vadd.f32 %v4241, %v4481
      %v4596 = vadd.f32 %v4242, %v4484
      %v4597 = vadd.f32 %v4243, %v4489
      %v4598 = vadd.f32 %v4244, %v4492
      %v4599 = vadd.f32 %v4245, %v4497
      %v4600 = vadd.f32 %v4246, %v4500
      %v4601 = vadd.f32 %v4247, %v4505
      %v4602 = vadd.f32 %v4248, %v4508
      %v4603 = vadd.f32 %v4249, %v4513
      %v4604 = vadd.f32 %v4250, %v4516
      %v4605 = vadd.f32 %v4251, %v4521
      %v4606 = vadd.f32 %v4252, %v4524
      %v4607 = vadd.f32 %v4253, %v4529
      %v4608 = vadd.f32 %v4254, %v4532
      %v4609 = vadd.f32 %v4255, %v4537
      %v4610 = vadd.f32 %v4256, %v4540
      %v4611 = vadd.f32 %v4257, %v4545
      %v4612 = vadd.f32 %v4258, %v4548
      %v4613 = vadd.f32 %v4259, %v4553
      %v4614 = vadd.f32 %v4260, %v4556
      %v4615 = vadd.f32 %v4261, %v4561
      %v4616 = vadd.f32 %v4262, %v4564
      %v4617 = vadd.f32 %v4263, %v4569
      %v4618 = vadd.f32 %v4264, %v4572
      %v4619 = vadd.f32 %v4265, %v4577
      %v4620 = vadd.f32 %v4266, %v4580
      %v4621 = vadd.f32 %v4267, %v4585
      %v4622 = vadd.f32 %v4268, %v4588
      %4623 = vst [vmem:[%s298] sm:$0xff] %v4591
      %4624 = vst [vmem:[%s298 + $0x8] sm:$0xff] %v4592
      %4625 = vst [vmem:[%s298 + $0x10] sm:$0xff] %v4593
      %4626 = vst [vmem:[%s298 + $0x18] sm:$0xff] %v4594
      %4627 = vst [vmem:[%s298 + $0x20] sm:$0xff] %v4595
      %4628 = vst [vmem:[%s298 + $0x28] sm:$0xff] %v4596
      %4629 = vst [vmem:[%s298 + $0x30] sm:$0xff] %v4597
      %4630 = vst [vmem:[%s298 + $0x38] sm:$0xff] %v4598
      %4631 = vst [vmem:[%s298 + $0x40] sm:$0xff] %v4599
      %4632 = vst [vmem:[%s298 + $0x48] sm:$0xff] %v4600
      %4633 = vst [vmem:[%s298 + $0x50] sm:$0xff] %v4601
      %4634 = vst [vmem:[%s298 + $0x58] sm:$0xff] %v4602
      %4635 = vst [vmem:[%s298 + $0x60] sm:$0xff] %v4603
      %4636 = vst [vmem:[%s298 + $0x68] sm:$0xff] %v4604
      %4637 = vst [vmem:[%s298 + $0x70] sm:$0xff] %v4605
      %4638 = vst [vmem:[%s298 + $0x78] sm:$0xff] %v4606
      %4639 = vst [vmem:[%s298 + $0x80] sm:$0xff] %v4607
      %4640 = vst [vmem:[%s298 + $0x88] sm:$0xff] %v4608
      %4641 = vst [vmem:[%s298 + $0x90] sm:$0xff] %v4609
      %4642 = vst [vmem:[%s298 + $0x98] sm:$0xff] %v4610
      %4643 = vst [vmem:[%s298 + $0xa0] sm:$0xff] %v4611
      %4644 = vst [vmem:[%s298 + $0xa8] sm:$0xff] %v4612
      %4645 = vst [vmem:[%s298 + $0xb0] sm:$0xff] %v4613
      %4646 = vst [vmem:[%s298 + $0xb8] sm:$0xff] %v4614
      %4647 = vst [vmem:[%s298 + $0xc0] sm:$0xff] %v4615
      %4648 = vst [vmem:[%s298 + $0xc8] sm:$0xff] %v4616
      %4649 = vst [vmem:[%s298 + $0xd0] sm:$0xff] %v4617
      %4650 = vst [vmem:[%s298 + $0xd8] sm:$0xff] %v4618
      %4651 = vst [vmem:[%s298 + $0xe0] sm:$0xff] %v4619
      %4652 = vst [vmem:[%s298 + $0xe8] sm:$0xff] %v4620
      %4653 = vst [vmem:[%s298 + $0xf0] sm:$0xff] %v4621
      %4654 = vst [vmem:[%s298 + $0xf8] sm:$0xff] %v4622
      %v4655 = vld [vmem:[#allocation2 + $0x8] sm:$0xf]
      %v4656 = vld [vmem:[#allocation2 + $0xc] sm:$0xf]
      %v4657 = vld [vmem:[#allocation2 + $0x10] sm:$0xf]
      %v4658 = vld [vmem:[#allocation2 + $0x14] sm:$0xf]
      %v4659 = vld [vmem:[#allocation2 + $0x18] sm:$0xf]
      %v4660 = vld [vmem:[#allocation2 + $0x1c] sm:$0xf]
      %v4661 = vld [vmem:[#allocation2 + $0x20] sm:$0xf]
      %v4662 = vld [vmem:[#allocation2 + $0x24] sm:$0xf]
      %v4663 = vld [vmem:[#allocation2 + $0x28] sm:$0xf]
      %v4664 = vld [vmem:[#allocation2 + $0x2c] sm:$0xf]
      %v4665 = vld [vmem:[#allocation2 + $0x30] sm:$0xf]
      %v4666 = vld [vmem:[#allocation2 + $0x34] sm:$0xf]
      %v4667 = vld [vmem:[#allocation2 + $0x38] sm:$0xf]
      %v4668 = vld [vmem:[#allocation2 + $0x3c] sm:$0xf]
      %v4669 = vld [vmem:[#allocation2 + $0x40] sm:$0xf]
      %v4670 = vld [vmem:[#allocation2 + $0x44] sm:$0xf]
      %v4671 = vld [vmem:[#allocation2 + $0x48] sm:$0xf]
      %v4672 = vld [vmem:[#allocation2 + $0x4c] sm:$0xf]
      %v4673 = vld [vmem:[#allocation2 + $0x50] sm:$0xf]
      %v4674 = vld [vmem:[#allocation2 + $0x54] sm:$0xf]
      %v4675 = vld [vmem:[#allocation2 + $0x58] sm:$0xf]
      %v4676 = vld [vmem:[#allocation2 + $0x5c] sm:$0xf]
      %v4677 = vld [vmem:[#allocation2 + $0x60] sm:$0xf]
      %v4678 = vld [vmem:[#allocation2 + $0x64] sm:$0xf]
      %v4679 = vld [vmem:[#allocation2 + $0x68] sm:$0xf]
      %v4680 = vld [vmem:[#allocation2 + $0x6c] sm:$0xf]
      %v4681 = vld [vmem:[#allocation2 + $0x70] sm:$0xf]
      %v4682 = vld [vmem:[#allocation2 + $0x74] sm:$0xf]
      %v4683 = vld [vmem:[#allocation2 + $0x78] sm:$0xf]
      %v4684 = vld [vmem:[#allocation2 + $0x7c] sm:$0xf]
      %v4685 = vld [vmem:[#allocation2 + $0x80] sm:$0xf]
      %v4686 = vld [vmem:[#allocation2 + $0x84] sm:$0xf]
      %v4687 = vld [vmem:[%s298] sm:$0xff]
      %v4688 = vld [vmem:[%s298 + $0x8] sm:$0xff]
      %v4689 = vld [vmem:[%s298 + $0x10] sm:$0xff]
      %v4690 = vld [vmem:[%s298 + $0x18] sm:$0xff]
      %v4691 = vld [vmem:[%s298 + $0x20] sm:$0xff]
      %v4692 = vld [vmem:[%s298 + $0x28] sm:$0xff]
      %v4693 = vld [vmem:[%s298 + $0x30] sm:$0xff]
      %v4694 = vld [vmem:[%s298 + $0x38] sm:$0xff]
      %v4695 = vld [vmem:[%s298 + $0x40] sm:$0xff]
      %v4696 = vld [vmem:[%s298 + $0x48] sm:$0xff]
      %v4697 = vld [vmem:[%s298 + $0x50] sm:$0xff]
      %v4698 = vld [vmem:[%s298 + $0x58] sm:$0xff]
      %v4699 = vld [vmem:[%s298 + $0x60] sm:$0xff]
      %v4700 = vld [vmem:[%s298 + $0x68] sm:$0xff]
      %v4701 = vld [vmem:[%s298 + $0x70] sm:$0xff]
      %v4702 = vld [vmem:[%s298 + $0x78] sm:$0xff]
      %v4703 = vld [vmem:[%s298 + $0x80] sm:$0xff]
      %v4704 = vld [vmem:[%s298 + $0x88] sm:$0xff]
      %v4705 = vld [vmem:[%s298 + $0x90] sm:$0xff]
      %v4706 = vld [vmem:[%s298 + $0x98] sm:$0xff]
      %v4707 = vld [vmem:[%s298 + $0xa0] sm:$0xff]
      %v4708 = vld [vmem:[%s298 + $0xa8] sm:$0xff]
      %v4709 = vld [vmem:[%s298 + $0xb0] sm:$0xff]
      %v4710 = vld [vmem:[%s298 + $0xb8] sm:$0xff]
      %v4711 = vld [vmem:[%s298 + $0xc0] sm:$0xff]
      %v4712 = vld [vmem:[%s298 + $0xc8] sm:$0xff]
      %v4713 = vld [vmem:[%s298 + $0xd0] sm:$0xff]
      %v4714 = vld [vmem:[%s298 + $0xd8] sm:$0xff]
      %v4715 = vld [vmem:[%s298 + $0xe0] sm:$0xff]
      %v4716 = vld [vmem:[%s298 + $0xe8] sm:$0xff]
      %v4717 = vld [vmem:[%s298 + $0xf0] sm:$0xff]
      %v4718 = vld [vmem:[%s298 + $0xf8] sm:$0xff]
      %s4719 = scalar_lea.vmem %s4, 192
      %v4720 = vld [vmem:[%s4719] sm:$0xf]
      %v4721 = vld [vmem:[%s4719 + $0x4] sm:$0xf]
      %v4722 = vld [vmem:[%s4719 + $0x8] sm:$0xf]
      %v4723 = vld [vmem:[%s4719 + $0xc] sm:$0xf]
      %v4724 = vld [vmem:[%s4719 + $0x10] sm:$0xf]
      %v4725 = vld [vmem:[%s4719 + $0x14] sm:$0xf]
      %v4726 = vld [vmem:[%s4719 + $0x18] sm:$0xf]
      %v4727 = vld [vmem:[%s4719 + $0x1c] sm:$0xf]
      %v4728 = vld [vmem:[%s4719 + $0x20] sm:$0xf]
      %v4729 = vld [vmem:[%s4719 + $0x24] sm:$0xf]
      %v4730 = vld [vmem:[%s4719 + $0x28] sm:$0xf]
      %v4731 = vld [vmem:[%s4719 + $0x2c] sm:$0xf]
      %v4732 = vld [vmem:[%s4719 + $0x30] sm:$0xf]
      %v4733 = vld [vmem:[%s4719 + $0x34] sm:$0xf]
      %v4734 = vld [vmem:[%s4719 + $0x38] sm:$0xf]
      %v4735 = vld [vmem:[%s4719 + $0x3c] sm:$0xf]
      %v4768 = vunpack.c.l.b16 %v4655
      %v4769 = vunpack.c.l.b16 %v4656
      %v4770 = vunpack.c.l.b16 %v4657
      %v4771 = vunpack.c.l.b16 %v4658
      %v4772 = vunpack.c.l.b16 %v4659
      %v4773 = vunpack.c.l.b16 %v4660
      %v4774 = vunpack.c.l.b16 %v4661
      %v4775 = vunpack.c.l.b16 %v4662
      %v4776 = vunpack.c.l.b16 %v4663
      %v4777 = vunpack.c.l.b16 %v4664
      %v4778 = vunpack.c.l.b16 %v4665
      %v4779 = vunpack.c.l.b16 %v4666
      %v4780 = vunpack.c.l.b16 %v4667
      %v4781 = vunpack.c.l.b16 %v4668
      %v4782 = vunpack.c.l.b16 %v4669
      %v4783 = vunpack.c.l.b16 %v4670
      %v4784 = vunpack.c.l.b16 %v4671
      %v4785 = vunpack.c.l.b16 %v4672
      %v4786 = vunpack.c.l.b16 %v4673
      %v4787 = vunpack.c.l.b16 %v4674
      %v4788 = vunpack.c.l.b16 %v4675
      %v4789 = vunpack.c.l.b16 %v4676
      %v4790 = vunpack.c.l.b16 %v4677
      %v4791 = vunpack.c.l.b16 %v4678
      %v4792 = vunpack.c.l.b16 %v4679
      %v4793 = vunpack.c.l.b16 %v4680
      %v4794 = vunpack.c.l.b16 %v4681
      %v4795 = vunpack.c.l.b16 %v4682
      %v4796 = vunpack.c.l.b16 %v4683
      %v4797 = vunpack.c.l.b16 %v4684
      %v4798 = vunpack.c.l.b16 %v4685
      %v4799 = vunpack.c.l.b16 %v4686
      %v4800 = vpack.c.b16 %v4769, %v4768
      %v4801 = vpack.c.b16 %v4771, %v4770
      %v4802 = vpack.c.b16 %v4773, %v4772
      %v4803 = vpack.c.b16 %v4775, %v4774
      %v4804 = vpack.c.b16 %v4777, %v4776
      %v4805 = vpack.c.b16 %v4779, %v4778
      %v4806 = vpack.c.b16 %v4781, %v4780
      %v4807 = vpack.c.b16 %v4783, %v4782
      %v4808 = vpack.c.b16 %v4785, %v4784
      %v4809 = vpack.c.b16 %v4787, %v4786
      %v4810 = vpack.c.b16 %v4789, %v4788
      %v4811 = vpack.c.b16 %v4791, %v4790
      %v4812 = vpack.c.b16 %v4793, %v4792
      %v4813 = vpack.c.b16 %v4795, %v4794
      %v4814 = vpack.c.b16 %v4797, %v4796
      %v4815 = vpack.c.b16 %v4799, %v4798
      %v4848 = vunpack.c.l.b16 %v4720
      %v4849 = vunpack.c.l.b16 %v4721
      %v4850 = vunpack.c.l.b16 %v4722
      %v4851 = vunpack.c.l.b16 %v4723
      %v4852 = vunpack.c.l.b16 %v4724
      %v4853 = vunpack.c.l.b16 %v4725
      %v4854 = vunpack.c.l.b16 %v4726
      %v4855 = vunpack.c.l.b16 %v4727
      %v4856 = vunpack.c.l.b16 %v4728
      %v4857 = vunpack.c.l.b16 %v4729
      %v4858 = vunpack.c.l.b16 %v4730
      %v4859 = vunpack.c.l.b16 %v4731
      %v4860 = vunpack.c.l.b16 %v4732
      %v4861 = vunpack.c.l.b16 %v4733
      %v4862 = vunpack.c.l.b16 %v4734
      %v4863 = vunpack.c.l.b16 %v4735
      %v4864 = vpack.c.b16 %v4849, %v4848
      %v4865 = vpack.c.b16 %v4851, %v4850
      %v4866 = vpack.c.b16 %v4853, %v4852
      %v4867 = vpack.c.b16 %v4855, %v4854
      %v4868 = vpack.c.b16 %v4857, %v4856
      %v4869 = vpack.c.b16 %v4859, %v4858
      %v4870 = vpack.c.b16 %v4861, %v4860
      %v4871 = vpack.c.b16 %v4863, %v4862
      %4880 = vmatprep.subr.bf16.mxu0 0
      %4881 = vmatpush1.bf16.msra.mxu0 %v4871
      %4882 = vmatprep.subr.bf16.mxu0 0
      %4883 = vmatpush1.bf16.msra.mxu0 %v4870
      %4884 = vmatprep.subr.bf16.mxu0 0
      %4885 = vmatpush1.bf16.msra.mxu0 %v4869
      %4886 = vmatprep.subr.bf16.mxu0 0
      %4887 = vmatpush1.bf16.msra.mxu0 %v4868
      %4888 = vmatprep.subr.bf16.mxu0 0
      %4889 = vmatpush1.bf16.msra.mxu0 %v4867
      %4890 = vmatprep.subr.bf16.mxu0 0
      %4891 = vmatpush1.bf16.msra.mxu0 %v4866
      %4892 = vmatprep.subr.bf16.mxu0 0
      %4893 = vmatpush1.bf16.msra.mxu0 %v4865
      %4894 = vmatprep.subr.bf16.mxu0 0
      %4895 = vmatpush1.bf16.msra.mxu0 %v4864
      %4896 = vmatprep.subr.bf16.mxu0 0
      %4897 = vmatpush2.bf16.msra.mxu0 0
      %4898 = vmatprep.subr.bf16.mxu0 0
      %4899 = vmatpush2.bf16.msra.mxu0 0
      %4900 = vmatprep.subr.bf16.mxu0 0
      %4901 = vmatpush2.bf16.msra.mxu0 0
      %4902 = vmatprep.subr.bf16.mxu0 0
      %4903 = vmatpush2.bf16.msra.mxu0 0
      %4904 = vmatprep.subr.bf16.mxu0 0
      %4905 = vmatpush2.bf16.msra.mxu0 0
      %4906 = vmatprep.subr.bf16.mxu0 0
      %4907 = vmatpush2.bf16.msra.mxu0 0
      %4908 = vmatprep.subr.bf16.mxu0 0
      %4909 = vmatpush2.bf16.msra.mxu0 0
      %4910 = vmatprep.subr.bf16.mxu0 0
      %4911 = vmatpush2.bf16.msra.mxu0 0
      %4912 = vmatprep.mubr.bf16.mxu0 0
      %4913 = vmatmul.mubr.bf16.gmra.mxu0 %v4800
      %v4914 = vpop.f32.mrf.mxu0
      %v4915 = vadd.f32 0.0, %v4914
      %v4916 = vpop.f32.mrf.mxu0
      %v4917 = vpop.f32.mrf.mxu0
      %v4918 = vadd.f32 0.0, %v4917
      %v4919 = vpop.f32.mrf.mxu0
      %4920 = vmatprep.mubr.bf16.mxu0 0
      %4921 = vmatmul.mubr.bf16.gmra.mxu0 %v4801
      %v4922 = vpop.f32.mrf.mxu0
      %v4923 = vadd.f32 0.0, %v4922
      %v4924 = vpop.f32.mrf.mxu0
      %v4925 = vpop.f32.mrf.mxu0
      %v4926 = vadd.f32 0.0, %v4925
      %v4927 = vpop.f32.mrf.mxu0
      %4928 = vmatprep.mubr.bf16.mxu0 0
      %4929 = vmatmul.mubr.bf16.gmra.mxu0 %v4802
      %v4930 = vpop.f32.mrf.mxu0
      %v4931 = vadd.f32 0.0, %v4930
      %v4932 = vpop.f32.mrf.mxu0
      %v4933 = vpop.f32.mrf.mxu0
      %v4934 = vadd.f32 0.0, %v4933
      %v4935 = vpop.f32.mrf.mxu0
      %4936 = vmatprep.mubr.bf16.mxu0 0
      %4937 = vmatmul.mubr.bf16.gmra.mxu0 %v4803
      %v4938 = vpop.f32.mrf.mxu0
      %v4939 = vadd.f32 0.0, %v4938
      %v4940 = vpop.f32.mrf.mxu0
      %v4941 = vpop.f32.mrf.mxu0
      %v4942 = vadd.f32 0.0, %v4941
      %v4943 = vpop.f32.mrf.mxu0
      %4944 = vmatprep.mubr.bf16.mxu0 0
      %4945 = vmatmul.mubr.bf16.gmra.mxu0 %v4804
      %v4946 = vpop.f32.mrf.mxu0
      %v4947 = vadd.f32 0.0, %v4946
      %v4948 = vpop.f32.mrf.mxu0
      %v4949 = vpop.f32.mrf.mxu0
      %v4950 = vadd.f32 0.0, %v4949
      %v4951 = vpop.f32.mrf.mxu0
      %4952 = vmatprep.mubr.bf16.mxu0 0
      %4953 = vmatmul.mubr.bf16.gmra.mxu0 %v4805
      %v4954 = vpop.f32.mrf.mxu0
      %v4955 = vadd.f32 0.0, %v4954
      %v4956 = vpop.f32.mrf.mxu0
      %v4957 = vpop.f32.mrf.mxu0
      %v4958 = vadd.f32 0.0, %v4957
      %v4959 = vpop.f32.mrf.mxu0
      %4960 = vmatprep.mubr.bf16.mxu0 0
      %4961 = vmatmul.mubr.bf16.gmra.mxu0 %v4806
      %v4962 = vpop.f32.mrf.mxu0
      %v4963 = vadd.f32 0.0, %v4962
      %v4964 = vpop.f32.mrf.mxu0
      %v4965 = vpop.f32.mrf.mxu0
      %v4966 = vadd.f32 0.0, %v4965
      %v4967 = vpop.f32.mrf.mxu0
      %4968 = vmatprep.mubr.bf16.mxu0 0
      %4969 = vmatmul.mubr.bf16.gmra.mxu0 %v4807
      %v4970 = vpop.f32.mrf.mxu0
      %v4971 = vadd.f32 0.0, %v4970
      %v4972 = vpop.f32.mrf.mxu0
      %v4973 = vpop.f32.mrf.mxu0
      %v4974 = vadd.f32 0.0, %v4973
      %v4975 = vpop.f32.mrf.mxu0
      %4976 = vmatprep.mubr.bf16.mxu0 0
      %4977 = vmatmul.mubr.bf16.gmra.mxu0 %v4808
      %v4978 = vpop.f32.mrf.mxu0
      %v4979 = vadd.f32 0.0, %v4978
      %v4980 = vpop.f32.mrf.mxu0
      %v4981 = vpop.f32.mrf.mxu0
      %v4982 = vadd.f32 0.0, %v4981
      %v4983 = vpop.f32.mrf.mxu0
      %4984 = vmatprep.mubr.bf16.mxu0 0
      %4985 = vmatmul.mubr.bf16.gmra.mxu0 %v4809
      %v4986 = vpop.f32.mrf.mxu0
      %v4987 = vadd.f32 0.0, %v4986
      %v4988 = vpop.f32.mrf.mxu0
      %v4989 = vpop.f32.mrf.mxu0
      %v4990 = vadd.f32 0.0, %v4989
      %v4991 = vpop.f32.mrf.mxu0
      %4992 = vmatprep.mubr.bf16.mxu0 0
      %4993 = vmatmul.mubr.bf16.gmra.mxu0 %v4810
      %v4994 = vpop.f32.mrf.mxu0
      %v4995 = vadd.f32 0.0, %v4994
      %v4996 = vpop.f32.mrf.mxu0
      %v4997 = vpop.f32.mrf.mxu0
      %v4998 = vadd.f32 0.0, %v4997
      %v4999 = vpop.f32.mrf.mxu0
      %5000 = vmatprep.mubr.bf16.mxu0 0
      %5001 = vmatmul.mubr.bf16.gmra.mxu0 %v4811
      %v5002 = vpop.f32.mrf.mxu0
      %v5003 = vadd.f32 0.0, %v5002
      %v5004 = vpop.f32.mrf.mxu0
      %v5005 = vpop.f32.mrf.mxu0
      %v5006 = vadd.f32 0.0, %v5005
      %v5007 = vpop.f32.mrf.mxu0
      %5008 = vmatprep.mubr.bf16.mxu0 0
      %5009 = vmatmul.mubr.bf16.gmra.mxu0 %v4812
      %v5010 = vpop.f32.mrf.mxu0
      %v5011 = vadd.f32 0.0, %v5010
      %v5012 = vpop.f32.mrf.mxu0
      %v5013 = vpop.f32.mrf.mxu0
      %v5014 = vadd.f32 0.0, %v5013
      %v5015 = vpop.f32.mrf.mxu0
      %5016 = vmatprep.mubr.bf16.mxu0 0
      %5017 = vmatmul.mubr.bf16.gmra.mxu0 %v4813
      %v5018 = vpop.f32.mrf.mxu0
      %v5019 = vadd.f32 0.0, %v5018
      %v5020 = vpop.f32.mrf.mxu0
      %v5021 = vpop.f32.mrf.mxu0
      %v5022 = vadd.f32 0.0, %v5021
      %v5023 = vpop.f32.mrf.mxu0
      %5024 = vmatprep.mubr.bf16.mxu0 0
      %5025 = vmatmul.mubr.bf16.gmra.mxu0 %v4814
      %v5026 = vpop.f32.mrf.mxu0
      %v5027 = vadd.f32 0.0, %v5026
      %v5028 = vpop.f32.mrf.mxu0
      %v5029 = vpop.f32.mrf.mxu0
      %v5030 = vadd.f32 0.0, %v5029
      %v5031 = vpop.f32.mrf.mxu0
      %5032 = vmatprep.mubr.bf16.mxu0 0
      %5033 = vmatmul.mubr.bf16.gmra.mxu0 %v4815
      %v5034 = vpop.f32.mrf.mxu0
      %v5035 = vadd.f32 0.0, %v5034
      %v5036 = vpop.f32.mrf.mxu0
      %v5037 = vpop.f32.mrf.mxu0
      %v5038 = vadd.f32 0.0, %v5037
      %v5039 = vpop.f32.mrf.mxu0
      %5040 = vdwg.mxu0
      %v5041 = vadd.f32 %v4687, %v4915
      %v5042 = vadd.f32 %v4688, %v4918
      %v5043 = vadd.f32 %v4689, %v4923
      %v5044 = vadd.f32 %v4690, %v4926
      %v5045 = vadd.f32 %v4691, %v4931
      %v5046 = vadd.f32 %v4692, %v4934
      %v5047 = vadd.f32 %v4693, %v4939
      %v5048 = vadd.f32 %v4694, %v4942
      %v5049 = vadd.f32 %v4695, %v4947
      %v5050 = vadd.f32 %v4696, %v4950
      %v5051 = vadd.f32 %v4697, %v4955
      %v5052 = vadd.f32 %v4698, %v4958
      %v5053 = vadd.f32 %v4699, %v4963
      %v5054 = vadd.f32 %v4700, %v4966
      %v5055 = vadd.f32 %v4701, %v4971
      %v5056 = vadd.f32 %v4702, %v4974
      %v5057 = vadd.f32 %v4703, %v4979
      %v5058 = vadd.f32 %v4704, %v4982
      %v5059 = vadd.f32 %v4705, %v4987
      %v5060 = vadd.f32 %v4706, %v4990
      %v5061 = vadd.f32 %v4707, %v4995
      %v5062 = vadd.f32 %v4708, %v4998
      %v5063 = vadd.f32 %v4709, %v5003
      %v5064 = vadd.f32 %v4710, %v5006
      %v5065 = vadd.f32 %v4711, %v5011
      %v5066 = vadd.f32 %v4712, %v5014
      %v5067 = vadd.f32 %v4713, %v5019
      %v5068 = vadd.f32 %v4714, %v5022
      %v5069 = vadd.f32 %v4715, %v5027
      %v5070 = vadd.f32 %v4716, %v5030
      %v5071 = vadd.f32 %v4717, %v5035
      %v5072 = vadd.f32 %v4718, %v5038
      %5073 = vst [vmem:[%s298] sm:$0xff] %v5041
      %5074 = vst [vmem:[%s298 + $0x8] sm:$0xff] %v5042
      %5075 = vst [vmem:[%s298 + $0x10] sm:$0xff] %v5043
      %5076 = vst [vmem:[%s298 + $0x18] sm:$0xff] %v5044
      %5077 = vst [vmem:[%s298 + $0x20] sm:$0xff] %v5045
      %5078 = vst [vmem:[%s298 + $0x28] sm:$0xff] %v5046
      %5079 = vst [vmem:[%s298 + $0x30] sm:$0xff] %v5047
      %5080 = vst [vmem:[%s298 + $0x38] sm:$0xff] %v5048
      %5081 = vst [vmem:[%s298 + $0x40] sm:$0xff] %v5049
      %5082 = vst [vmem:[%s298 + $0x48] sm:$0xff] %v5050
      %5083 = vst [vmem:[%s298 + $0x50] sm:$0xff] %v5051
      %5084 = vst [vmem:[%s298 + $0x58] sm:$0xff] %v5052
      %5085 = vst [vmem:[%s298 + $0x60] sm:$0xff] %v5053
      %5086 = vst [vmem:[%s298 + $0x68] sm:$0xff] %v5054
      %5087 = vst [vmem:[%s298 + $0x70] sm:$0xff] %v5055
      %5088 = vst [vmem:[%s298 + $0x78] sm:$0xff] %v5056
      %5089 = vst [vmem:[%s298 + $0x80] sm:$0xff] %v5057
      %5090 = vst [vmem:[%s298 + $0x88] sm:$0xff] %v5058
      %5091 = vst [vmem:[%s298 + $0x90] sm:$0xff] %v5059
      %5092 = vst [vmem:[%s298 + $0x98] sm:$0xff] %v5060
      %5093 = vst [vmem:[%s298 + $0xa0] sm:$0xff] %v5061
      %5094 = vst [vmem:[%s298 + $0xa8] sm:$0xff] %v5062
      %5095 = vst [vmem:[%s298 + $0xb0] sm:$0xff] %v5063
      %5096 = vst [vmem:[%s298 + $0xb8] sm:$0xff] %v5064
      %5097 = vst [vmem:[%s298 + $0xc0] sm:$0xff] %v5065
      %5098 = vst [vmem:[%s298 + $0xc8] sm:$0xff] %v5066
      %5099 = vst [vmem:[%s298 + $0xd0] sm:$0xff] %v5067
      %5100 = vst [vmem:[%s298 + $0xd8] sm:$0xff] %v5068
      %5101 = vst [vmem:[%s298 + $0xe0] sm:$0xff] %v5069
      %5102 = vst [vmem:[%s298 + $0xe8] sm:$0xff] %v5070
      %5103 = vst [vmem:[%s298 + $0xf0] sm:$0xff] %v5071
      %5104 = vst [vmem:[%s298 + $0xf8] sm:$0xff] %v5072
      %v5105 = vld [vmem:[%s2690 + $0x8] sm:$0xf]
      %v5106 = vld [vmem:[%s2690 + $0xc] sm:$0xf]
      %v5107 = vld [vmem:[%s2690 + $0x10] sm:$0xf]
      %v5108 = vld [vmem:[%s2690 + $0x14] sm:$0xf]
      %v5109 = vld [vmem:[%s2690 + $0x18] sm:$0xf]
      %v5110 = vld [vmem:[%s2690 + $0x1c] sm:$0xf]
      %v5111 = vld [vmem:[%s2690 + $0x20] sm:$0xf]
      %v5112 = vld [vmem:[%s2690 + $0x24] sm:$0xf]
      %v5113 = vld [vmem:[%s2690 + $0x28] sm:$0xf]
      %v5114 = vld [vmem:[%s2690 + $0x2c] sm:$0xf]
      %v5115 = vld [vmem:[%s2690 + $0x30] sm:$0xf]
      %v5116 = vld [vmem:[%s2690 + $0x34] sm:$0xf]
      %v5117 = vld [vmem:[%s2690 + $0x38] sm:$0xf]
      %v5118 = vld [vmem:[%s2690 + $0x3c] sm:$0xf]
      %v5119 = vld [vmem:[%s2690 + $0x40] sm:$0xf]
      %v5120 = vld [vmem:[%s2690 + $0x44] sm:$0xf]
      %v5121 = vld [vmem:[%s2690 + $0x48] sm:$0xf]
      %v5122 = vld [vmem:[%s2690 + $0x4c] sm:$0xf]
      %v5123 = vld [vmem:[%s2690 + $0x50] sm:$0xf]
      %v5124 = vld [vmem:[%s2690 + $0x54] sm:$0xf]
      %v5125 = vld [vmem:[%s2690 + $0x58] sm:$0xf]
      %v5126 = vld [vmem:[%s2690 + $0x5c] sm:$0xf]
      %v5127 = vld [vmem:[%s2690 + $0x60] sm:$0xf]
      %v5128 = vld [vmem:[%s2690 + $0x64] sm:$0xf]
      %v5129 = vld [vmem:[%s2690 + $0x68] sm:$0xf]
      %v5130 = vld [vmem:[%s2690 + $0x6c] sm:$0xf]
      %v5131 = vld [vmem:[%s2690 + $0x70] sm:$0xf]
      %v5132 = vld [vmem:[%s2690 + $0x74] sm:$0xf]
      %v5133 = vld [vmem:[%s2690 + $0x78] sm:$0xf]
      %v5134 = vld [vmem:[%s2690 + $0x7c] sm:$0xf]
      %v5135 = vld [vmem:[%s2690 + $0x80] sm:$0xf]
      %v5136 = vld [vmem:[%s2690 + $0x84] sm:$0xf]
      %v5137 = vld [vmem:[%s298] sm:$0xff]
      %v5138 = vld [vmem:[%s298 + $0x8] sm:$0xff]
      %v5139 = vld [vmem:[%s298 + $0x10] sm:$0xff]
      %v5140 = vld [vmem:[%s298 + $0x18] sm:$0xff]
      %v5141 = vld [vmem:[%s298 + $0x20] sm:$0xff]
      %v5142 = vld [vmem:[%s298 + $0x28] sm:$0xff]
      %v5143 = vld [vmem:[%s298 + $0x30] sm:$0xff]
      %v5144 = vld [vmem:[%s298 + $0x38] sm:$0xff]
      %v5145 = vld [vmem:[%s298 + $0x40] sm:$0xff]
      %v5146 = vld [vmem:[%s298 + $0x48] sm:$0xff]
      %v5147 = vld [vmem:[%s298 + $0x50] sm:$0xff]
      %v5148 = vld [vmem:[%s298 + $0x58] sm:$0xff]
      %v5149 = vld [vmem:[%s298 + $0x60] sm:$0xff]
      %v5150 = vld [vmem:[%s298 + $0x68] sm:$0xff]
      %v5151 = vld [vmem:[%s298 + $0x70] sm:$0xff]
      %v5152 = vld [vmem:[%s298 + $0x78] sm:$0xff]
      %v5153 = vld [vmem:[%s298 + $0x80] sm:$0xff]
      %v5154 = vld [vmem:[%s298 + $0x88] sm:$0xff]
      %v5155 = vld [vmem:[%s298 + $0x90] sm:$0xff]
      %v5156 = vld [vmem:[%s298 + $0x98] sm:$0xff]
      %v5157 = vld [vmem:[%s298 + $0xa0] sm:$0xff]
      %v5158 = vld [vmem:[%s298 + $0xa8] sm:$0xff]
      %v5159 = vld [vmem:[%s298 + $0xb0] sm:$0xff]
      %v5160 = vld [vmem:[%s298 + $0xb8] sm:$0xff]
      %v5161 = vld [vmem:[%s298 + $0xc0] sm:$0xff]
      %v5162 = vld [vmem:[%s298 + $0xc8] sm:$0xff]
      %v5163 = vld [vmem:[%s298 + $0xd0] sm:$0xff]
      %v5164 = vld [vmem:[%s298 + $0xd8] sm:$0xff]
      %v5165 = vld [vmem:[%s298 + $0xe0] sm:$0xff]
      %v5166 = vld [vmem:[%s298 + $0xe8] sm:$0xff]
      %v5167 = vld [vmem:[%s298 + $0xf0] sm:$0xff]
      %v5168 = vld [vmem:[%s298 + $0xf8] sm:$0xff]
      %s5169 = scalar_lea.vmem %s4, 256
      %v5170 = vld [vmem:[%s5169] sm:$0xf]
      %v5171 = vld [vmem:[%s5169 + $0x4] sm:$0xf]
      %v5172 = vld [vmem:[%s5169 + $0x8] sm:$0xf]
      %v5173 = vld [vmem:[%s5169 + $0xc] sm:$0xf]
      %v5174 = vld [vmem:[%s5169 + $0x10] sm:$0xf]
      %v5175 = vld [vmem:[%s5169 + $0x14] sm:$0xf]
      %v5176 = vld [vmem:[%s5169 + $0x18] sm:$0xf]
      %v5177 = vld [vmem:[%s5169 + $0x1c] sm:$0xf]
      %v5178 = vld [vmem:[%s5169 + $0x20] sm:$0xf]
      %v5179 = vld [vmem:[%s5169 + $0x24] sm:$0xf]
      %v5180 = vld [vmem:[%s5169 + $0x28] sm:$0xf]
      %v5181 = vld [vmem:[%s5169 + $0x2c] sm:$0xf]
      %v5182 = vld [vmem:[%s5169 + $0x30] sm:$0xf]
      %v5183 = vld [vmem:[%s5169 + $0x34] sm:$0xf]
      %v5184 = vld [vmem:[%s5169 + $0x38] sm:$0xf]
      %v5185 = vld [vmem:[%s5169 + $0x3c] sm:$0xf]
      %v5218 = vunpack.c.l.b16 %v5105
      %v5219 = vunpack.c.l.b16 %v5106
      %v5220 = vunpack.c.l.b16 %v5107
      %v5221 = vunpack.c.l.b16 %v5108
      %v5222 = vunpack.c.l.b16 %v5109
      %v5223 = vunpack.c.l.b16 %v5110
      %v5224 = vunpack.c.l.b16 %v5111
      %v5225 = vunpack.c.l.b16 %v5112
      %v5226 = vunpack.c.l.b16 %v5113
      %v5227 = vunpack.c.l.b16 %v5114
      %v5228 = vunpack.c.l.b16 %v5115
      %v5229 = vunpack.c.l.b16 %v5116
      %v5230 = vunpack.c.l.b16 %v5117
      %v5231 = vunpack.c.l.b16 %v5118
      %v5232 = vunpack.c.l.b16 %v5119
      %v5233 = vunpack.c.l.b16 %v5120
      %v5234 = vunpack.c.l.b16 %v5121
      %v5235 = vunpack.c.l.b16 %v5122
      %v5236 = vunpack.c.l.b16 %v5123
      %v5237 = vunpack.c.l.b16 %v5124
      %v5238 = vunpack.c.l.b16 %v5125
      %v5239 = vunpack.c.l.b16 %v5126
      %v5240 = vunpack.c.l.b16 %v5127
      %v5241 = vunpack.c.l.b16 %v5128
      %v5242 = vunpack.c.l.b16 %v5129
      %v5243 = vunpack.c.l.b16 %v5130
      %v5244 = vunpack.c.l.b16 %v5131
      %v5245 = vunpack.c.l.b16 %v5132
      %v5246 = vunpack.c.l.b16 %v5133
      %v5247 = vunpack.c.l.b16 %v5134
      %v5248 = vunpack.c.l.b16 %v5135
      %v5249 = vunpack.c.l.b16 %v5136
      %v5250 = vpack.c.b16 %v5219, %v5218
      %v5251 = vpack.c.b16 %v5221, %v5220
      %v5252 = vpack.c.b16 %v5223, %v5222
      %v5253 = vpack.c.b16 %v5225, %v5224
      %v5254 = vpack.c.b16 %v5227, %v5226
      %v5255 = vpack.c.b16 %v5229, %v5228
      %v5256 = vpack.c.b16 %v5231, %v5230
      %v5257 = vpack.c.b16 %v5233, %v5232
      %v5258 = vpack.c.b16 %v5235, %v5234
      %v5259 = vpack.c.b16 %v5237, %v5236
      %v5260 = vpack.c.b16 %v5239, %v5238
      %v5261 = vpack.c.b16 %v5241, %v5240
      %v5262 = vpack.c.b16 %v5243, %v5242
      %v5263 = vpack.c.b16 %v5245, %v5244
      %v5264 = vpack.c.b16 %v5247, %v5246
      %v5265 = vpack.c.b16 %v5249, %v5248
      %v5298 = vunpack.c.l.b16 %v5170
      %v5299 = vunpack.c.l.b16 %v5171
      %v5300 = vunpack.c.l.b16 %v5172
      %v5301 = vunpack.c.l.b16 %v5173
      %v5302 = vunpack.c.l.b16 %v5174
      %v5303 = vunpack.c.l.b16 %v5175
      %v5304 = vunpack.c.l.b16 %v5176
      %v5305 = vunpack.c.l.b16 %v5177
      %v5306 = vunpack.c.l.b16 %v5178
      %v5307 = vunpack.c.l.b16 %v5179
      %v5308 = vunpack.c.l.b16 %v5180
      %v5309 = vunpack.c.l.b16 %v5181
      %v5310 = vunpack.c.l.b16 %v5182
      %v5311 = vunpack.c.l.b16 %v5183
      %v5312 = vunpack.c.l.b16 %v5184
      %v5313 = vunpack.c.l.b16 %v5185
      %v5314 = vpack.c.b16 %v5299, %v5298
      %v5315 = vpack.c.b16 %v5301, %v5300
      %v5316 = vpack.c.b16 %v5303, %v5302
      %v5317 = vpack.c.b16 %v5305, %v5304
      %v5318 = vpack.c.b16 %v5307, %v5306
      %v5319 = vpack.c.b16 %v5309, %v5308
      %v5320 = vpack.c.b16 %v5311, %v5310
      %v5321 = vpack.c.b16 %v5313, %v5312
      %5330 = vmatprep.subr.bf16.mxu0 0
      %5331 = vmatpush1.bf16.msra.mxu0 %v5321
      %5332 = vmatprep.subr.bf16.mxu0 0
      %5333 = vmatpush1.bf16.msra.mxu0 %v5320
      %5334 = vmatprep.subr.bf16.mxu0 0
      %5335 = vmatpush1.bf16.msra.mxu0 %v5319
      %5336 = vmatprep.subr.bf16.mxu0 0
      %5337 = vmatpush1.bf16.msra.mxu0 %v5318
      %5338 = vmatprep.subr.bf16.mxu0 0
      %5339 = vmatpush1.bf16.msra.mxu0 %v5317
      %5340 = vmatprep.subr.bf16.mxu0 0
      %5341 = vmatpush1.bf16.msra.mxu0 %v5316
      %5342 = vmatprep.subr.bf16.mxu0 0
      %5343 = vmatpush1.bf16.msra.mxu0 %v5315
      %5344 = vmatprep.subr.bf16.mxu0 0
      %5345 = vmatpush1.bf16.msra.mxu0 %v5314
      %5346 = vmatprep.subr.bf16.mxu0 0
      %5347 = vmatpush2.bf16.msra.mxu0 0
      %5348 = vmatprep.subr.bf16.mxu0 0
      %5349 = vmatpush2.bf16.msra.mxu0 0
      %5350 = vmatprep.subr.bf16.mxu0 0
      %5351 = vmatpush2.bf16.msra.mxu0 0
      %5352 = vmatprep.subr.bf16.mxu0 0
      %5353 = vmatpush2.bf16.msra.mxu0 0
      %5354 = vmatprep.subr.bf16.mxu0 0
      %5355 = vmatpush2.bf16.msra.mxu0 0
      %5356 = vmatprep.subr.bf16.mxu0 0
      %5357 = vmatpush2.bf16.msra.mxu0 0
      %5358 = vmatprep.subr.bf16.mxu0 0
      %5359 = vmatpush2.bf16.msra.mxu0 0
      %5360 = vmatprep.subr.bf16.mxu0 0
      %5361 = vmatpush2.bf16.msra.mxu0 0
      %5362 = vmatprep.mubr.bf16.mxu0 0
      %5363 = vmatmul.mubr.bf16.gmra.mxu0 %v5250
      %v5364 = vpop.f32.mrf.mxu0
      %v5365 = vadd.f32 0.0, %v5364
      %v5366 = vpop.f32.mrf.mxu0
      %v5367 = vpop.f32.mrf.mxu0
      %v5368 = vadd.f32 0.0, %v5367
      %v5369 = vpop.f32.mrf.mxu0
      %5370 = vmatprep.mubr.bf16.mxu0 0
      %5371 = vmatmul.mubr.bf16.gmra.mxu0 %v5251
      %v5372 = vpop.f32.mrf.mxu0
      %v5373 = vadd.f32 0.0, %v5372
      %v5374 = vpop.f32.mrf.mxu0
      %v5375 = vpop.f32.mrf.mxu0
      %v5376 = vadd.f32 0.0, %v5375
      %v5377 = vpop.f32.mrf.mxu0
      %5378 = vmatprep.mubr.bf16.mxu0 0
      %5379 = vmatmul.mubr.bf16.gmra.mxu0 %v5252
      %v5380 = vpop.f32.mrf.mxu0
      %v5381 = vadd.f32 0.0, %v5380
      %v5382 = vpop.f32.mrf.mxu0
      %v5383 = vpop.f32.mrf.mxu0
      %v5384 = vadd.f32 0.0, %v5383
      %v5385 = vpop.f32.mrf.mxu0
      %5386 = vmatprep.mubr.bf16.mxu0 0
      %5387 = vmatmul.mubr.bf16.gmra.mxu0 %v5253
      %v5388 = vpop.f32.mrf.mxu0
      %v5389 = vadd.f32 0.0, %v5388
      %v5390 = vpop.f32.mrf.mxu0
      %v5391 = vpop.f32.mrf.mxu0
      %v5392 = vadd.f32 0.0, %v5391
      %v5393 = vpop.f32.mrf.mxu0
      %5394 = vmatprep.mubr.bf16.mxu0 0
      %5395 = vmatmul.mubr.bf16.gmra.mxu0 %v5254
      %v5396 = vpop.f32.mrf.mxu0
      %v5397 = vadd.f32 0.0, %v5396
      %v5398 = vpop.f32.mrf.mxu0
      %v5399 = vpop.f32.mrf.mxu0
      %v5400 = vadd.f32 0.0, %v5399
      %v5401 = vpop.f32.mrf.mxu0
      %5402 = vmatprep.mubr.bf16.mxu0 0
      %5403 = vmatmul.mubr.bf16.gmra.mxu0 %v5255
      %v5404 = vpop.f32.mrf.mxu0
      %v5405 = vadd.f32 0.0, %v5404
      %v5406 = vpop.f32.mrf.mxu0
      %v5407 = vpop.f32.mrf.mxu0
      %v5408 = vadd.f32 0.0, %v5407
      %v5409 = vpop.f32.mrf.mxu0
      %5410 = vmatprep.mubr.bf16.mxu0 0
      %5411 = vmatmul.mubr.bf16.gmra.mxu0 %v5256
      %v5412 = vpop.f32.mrf.mxu0
      %v5413 = vadd.f32 0.0, %v5412
      %v5414 = vpop.f32.mrf.mxu0
      %v5415 = vpop.f32.mrf.mxu0
      %v5416 = vadd.f32 0.0, %v5415
      %v5417 = vpop.f32.mrf.mxu0
      %5418 = vmatprep.mubr.bf16.mxu0 0
      %5419 = vmatmul.mubr.bf16.gmra.mxu0 %v5257
      %v5420 = vpop.f32.mrf.mxu0
      %v5421 = vadd.f32 0.0, %v5420
      %v5422 = vpop.f32.mrf.mxu0
      %v5423 = vpop.f32.mrf.mxu0
      %v5424 = vadd.f32 0.0, %v5423
      %v5425 = vpop.f32.mrf.mxu0
      %5426 = vmatprep.mubr.bf16.mxu0 0
      %5427 = vmatmul.mubr.bf16.gmra.mxu0 %v5258
      %v5428 = vpop.f32.mrf.mxu0
      %v5429 = vadd.f32 0.0, %v5428
      %v5430 = vpop.f32.mrf.mxu0
      %v5431 = vpop.f32.mrf.mxu0
      %v5432 = vadd.f32 0.0, %v5431
      %v5433 = vpop.f32.mrf.mxu0
      %5434 = vmatprep.mubr.bf16.mxu0 0
      %5435 = vmatmul.mubr.bf16.gmra.mxu0 %v5259
      %v5436 = vpop.f32.mrf.mxu0
      %v5437 = vadd.f32 0.0, %v5436
      %v5438 = vpop.f32.mrf.mxu0
      %v5439 = vpop.f32.mrf.mxu0
      %v5440 = vadd.f32 0.0, %v5439
      %v5441 = vpop.f32.mrf.mxu0
      %5442 = vmatprep.mubr.bf16.mxu0 0
      %5443 = vmatmul.mubr.bf16.gmra.mxu0 %v5260
      %v5444 = vpop.f32.mrf.mxu0
      %v5445 = vadd.f32 0.0, %v5444
      %v5446 = vpop.f32.mrf.mxu0
      %v5447 = vpop.f32.mrf.mxu0
      %v5448 = vadd.f32 0.0, %v5447
      %v5449 = vpop.f32.mrf.mxu0
      %5450 = vmatprep.mubr.bf16.mxu0 0
      %5451 = vmatmul.mubr.bf16.gmra.mxu0 %v5261
      %v5452 = vpop.f32.mrf.mxu0
      %v5453 = vadd.f32 0.0, %v5452
      %v5454 = vpop.f32.mrf.mxu0
      %v5455 = vpop.f32.mrf.mxu0
      %v5456 = vadd.f32 0.0, %v5455
      %v5457 = vpop.f32.mrf.mxu0
      %5458 = vmatprep.mubr.bf16.mxu0 0
      %5459 = vmatmul.mubr.bf16.gmra.mxu0 %v5262
      %v5460 = vpop.f32.mrf.mxu0
      %v5461 = vadd.f32 0.0, %v5460
      %v5462 = vpop.f32.mrf.mxu0
      %v5463 = vpop.f32.mrf.mxu0
      %v5464 = vadd.f32 0.0, %v5463
      %v5465 = vpop.f32.mrf.mxu0
      %5466 = vmatprep.mubr.bf16.mxu0 0
      %5467 = vmatmul.mubr.bf16.gmra.mxu0 %v5263
      %v5468 = vpop.f32.mrf.mxu0
      %v5469 = vadd.f32 0.0, %v5468
      %v5470 = vpop.f32.mrf.mxu0
      %v5471 = vpop.f32.mrf.mxu0
      %v5472 = vadd.f32 0.0, %v5471
      %v5473 = vpop.f32.mrf.mxu0
      %5474 = vmatprep.mubr.bf16.mxu0 0
      %5475 = vmatmul.mubr.bf16.gmra.mxu0 %v5264
      %v5476 = vpop.f32.mrf.mxu0
      %v5477 = vadd.f32 0.0, %v5476
      %v5478 = vpop.f32.mrf.mxu0
      %v5479 = vpop.f32.mrf.mxu0
      %v5480 = vadd.f32 0.0, %v5479
      %v5481 = vpop.f32.mrf.mxu0
      %5482 = vmatprep.mubr.bf16.mxu0 0
      %5483 = vmatmul.mubr.bf16.gmra.mxu0 %v5265
      %v5484 = vpop.f32.mrf.mxu0
      %v5485 = vadd.f32 0.0, %v5484
      %v5486 = vpop.f32.mrf.mxu0
      %v5487 = vpop.f32.mrf.mxu0
      %v5488 = vadd.f32 0.0, %v5487
      %v5489 = vpop.f32.mrf.mxu0
      %5490 = vdwg.mxu0
      %v5491 = vadd.f32 %v5137, %v5365
      %v5492 = vadd.f32 %v5138, %v5368
      %v5493 = vadd.f32 %v5139, %v5373
      %v5494 = vadd.f32 %v5140, %v5376
      %v5495 = vadd.f32 %v5141, %v5381
      %v5496 = vadd.f32 %v5142, %v5384
      %v5497 = vadd.f32 %v5143, %v5389
      %v5498 = vadd.f32 %v5144, %v5392
      %v5499 = vadd.f32 %v5145, %v5397
      %v5500 = vadd.f32 %v5146, %v5400
      %v5501 = vadd.f32 %v5147, %v5405
      %v5502 = vadd.f32 %v5148, %v5408
      %v5503 = vadd.f32 %v5149, %v5413
      %v5504 = vadd.f32 %v5150, %v5416
      %v5505 = vadd.f32 %v5151, %v5421
      %v5506 = vadd.f32 %v5152, %v5424
      %v5507 = vadd.f32 %v5153, %v5429
      %v5508 = vadd.f32 %v5154, %v5432
      %v5509 = vadd.f32 %v5155, %v5437
      %v5510 = vadd.f32 %v5156, %v5440
      %v5511 = vadd.f32 %v5157, %v5445
      %v5512 = vadd.f32 %v5158, %v5448
      %v5513 = vadd.f32 %v5159, %v5453
      %v5514 = vadd.f32 %v5160, %v5456
      %v5515 = vadd.f32 %v5161, %v5461
      %v5516 = vadd.f32 %v5162, %v5464
      %v5517 = vadd.f32 %v5163, %v5469
      %v5518 = vadd.f32 %v5164, %v5472
      %v5519 = vadd.f32 %v5165, %v5477
      %v5520 = vadd.f32 %v5166, %v5480
      %v5521 = vadd.f32 %v5167, %v5485
      %v5522 = vadd.f32 %v5168, %v5488
      %5523 = vst [vmem:[%s298] sm:$0xff] %v5491
      %5524 = vst [vmem:[%s298 + $0x8] sm:$0xff] %v5492
      %5525 = vst [vmem:[%s298 + $0x10] sm:$0xff] %v5493
      %5526 = vst [vmem:[%s298 + $0x18] sm:$0xff] %v5494
      %5527 = vst [vmem:[%s298 + $0x20] sm:$0xff] %v5495
      %5528 = vst [vmem:[%s298 + $0x28] sm:$0xff] %v5496
      %5529 = vst [vmem:[%s298 + $0x30] sm:$0xff] %v5497
      %5530 = vst [vmem:[%s298 + $0x38] sm:$0xff] %v5498
      %5531 = vst [vmem:[%s298 + $0x40] sm:$0xff] %v5499
      %5532 = vst [vmem:[%s298 + $0x48] sm:$0xff] %v5500
      %5533 = vst [vmem:[%s298 + $0x50] sm:$0xff] %v5501
      %5534 = vst [vmem:[%s298 + $0x58] sm:$0xff] %v5502
      %5535 = vst [vmem:[%s298 + $0x60] sm:$0xff] %v5503
      %5536 = vst [vmem:[%s298 + $0x68] sm:$0xff] %v5504
      %5537 = vst [vmem:[%s298 + $0x70] sm:$0xff] %v5505
      %5538 = vst [vmem:[%s298 + $0x78] sm:$0xff] %v5506
      %5539 = vst [vmem:[%s298 + $0x80] sm:$0xff] %v5507
      %5540 = vst [vmem:[%s298 + $0x88] sm:$0xff] %v5508
      %5541 = vst [vmem:[%s298 + $0x90] sm:$0xff] %v5509
      %5542 = vst [vmem:[%s298 + $0x98] sm:$0xff] %v5510
      %5543 = vst [vmem:[%s298 + $0xa0] sm:$0xff] %v5511
      %5544 = vst [vmem:[%s298 + $0xa8] sm:$0xff] %v5512
      %5545 = vst [vmem:[%s298 + $0xb0] sm:$0xff] %v5513
      %5546 = vst [vmem:[%s298 + $0xb8] sm:$0xff] %v5514
      %5547 = vst [vmem:[%s298 + $0xc0] sm:$0xff] %v5515
      %5548 = vst [vmem:[%s298 + $0xc8] sm:$0xff] %v5516
      %5549 = vst [vmem:[%s298 + $0xd0] sm:$0xff] %v5517
      %5550 = vst [vmem:[%s298 + $0xd8] sm:$0xff] %v5518
      %5551 = vst [vmem:[%s298 + $0xe0] sm:$0xff] %v5519
      %5552 = vst [vmem:[%s298 + $0xe8] sm:$0xff] %v5520
      %5553 = vst [vmem:[%s298 + $0xf0] sm:$0xff] %v5521
      %5554 = vst [vmem:[%s298 + $0xf8] sm:$0xff] %v5522
      %v5555 = vld [vmem:[%s2968 + $0x8] sm:$0xf]
      %v5556 = vld [vmem:[%s2968 + $0xc] sm:$0xf]
      %v5557 = vld [vmem:[%s2968 + $0x10] sm:$0xf]
      %v5558 = vld [vmem:[%s2968 + $0x14] sm:$0xf]
      %v5559 = vld [vmem:[%s2968 + $0x18] sm:$0xf]
      %v5560 = vld [vmem:[%s2968 + $0x1c] sm:$0xf]
      %v5561 = vld [vmem:[%s2968 + $0x20] sm:$0xf]
      %v5562 = vld [vmem:[%s2968 + $0x24] sm:$0xf]
      %v5563 = vld [vmem:[%s2968 + $0x28] sm:$0xf]
      %v5564 = vld [vmem:[%s2968 + $0x2c] sm:$0xf]
      %v5565 = vld [vmem:[%s2968 + $0x30] sm:$0xf]
      %v5566 = vld [vmem:[%s2968 + $0x34] sm:$0xf]
      %v5567 = vld [vmem:[%s2968 + $0x38] sm:$0xf]
      %v5568 = vld [vmem:[%s2968 + $0x3c] sm:$0xf]
      %v5569 = vld [vmem:[%s2968 + $0x40] sm:$0xf]
      %v5570 = vld [vmem:[%s2968 + $0x44] sm:$0xf]
      %v5571 = vld [vmem:[%s2968 + $0x48] sm:$0xf]
      %v5572 = vld [vmem:[%s2968 + $0x4c] sm:$0xf]
      %v5573 = vld [vmem:[%s2968 + $0x50] sm:$0xf]
      %v5574 = vld [vmem:[%s2968 + $0x54] sm:$0xf]
      %v5575 = vld [vmem:[%s2968 + $0x58] sm:$0xf]
      %v5576 = vld [vmem:[%s2968 + $0x5c] sm:$0xf]
      %v5577 = vld [vmem:[%s2968 + $0x60] sm:$0xf]
      %v5578 = vld [vmem:[%s2968 + $0x64] sm:$0xf]
      %v5579 = vld [vmem:[%s2968 + $0x68] sm:$0xf]
      %v5580 = vld [vmem:[%s2968 + $0x6c] sm:$0xf]
      %v5581 = vld [vmem:[%s2968 + $0x70] sm:$0xf]
      %v5582 = vld [vmem:[%s2968 + $0x74] sm:$0xf]
      %v5583 = vld [vmem:[%s2968 + $0x78] sm:$0xf]
      %v5584 = vld [vmem:[%s2968 + $0x7c] sm:$0xf]
      %v5585 = vld [vmem:[%s2968 + $0x80] sm:$0xf]
      %v5586 = vld [vmem:[%s2968 + $0x84] sm:$0xf]
      %v5587 = vld [vmem:[%s298] sm:$0xff]
      %v5588 = vld [vmem:[%s298 + $0x8] sm:$0xff]
      %v5589 = vld [vmem:[%s298 + $0x10] sm:$0xff]
      %v5590 = vld [vmem:[%s298 + $0x18] sm:$0xff]
      %v5591 = vld [vmem:[%s298 + $0x20] sm:$0xff]
      %v5592 = vld [vmem:[%s298 + $0x28] sm:$0xff]
      %v5593 = vld [vmem:[%s298 + $0x30] sm:$0xff]
      %v5594 = vld [vmem:[%s298 + $0x38] sm:$0xff]
      %v5595 = vld [vmem:[%s298 + $0x40] sm:$0xff]
      %v5596 = vld [vmem:[%s298 + $0x48] sm:$0xff]
      %v5597 = vld [vmem:[%s298 + $0x50] sm:$0xff]
      %v5598 = vld [vmem:[%s298 + $0x58] sm:$0xff]
      %v5599 = vld [vmem:[%s298 + $0x60] sm:$0xff]
      %v5600 = vld [vmem:[%s298 + $0x68] sm:$0xff]
      %v5601 = vld [vmem:[%s298 + $0x70] sm:$0xff]
      %v5602 = vld [vmem:[%s298 + $0x78] sm:$0xff]
      %v5603 = vld [vmem:[%s298 + $0x80] sm:$0xff]
      %v5604 = vld [vmem:[%s298 + $0x88] sm:$0xff]
      %v5605 = vld [vmem:[%s298 + $0x90] sm:$0xff]
      %v5606 = vld [vmem:[%s298 + $0x98] sm:$0xff]
      %v5607 = vld [vmem:[%s298 + $0xa0] sm:$0xff]
      %v5608 = vld [vmem:[%s298 + $0xa8] sm:$0xff]
      %v5609 = vld [vmem:[%s298 + $0xb0] sm:$0xff]
      %v5610 = vld [vmem:[%s298 + $0xb8] sm:$0xff]
      %v5611 = vld [vmem:[%s298 + $0xc0] sm:$0xff]
      %v5612 = vld [vmem:[%s298 + $0xc8] sm:$0xff]
      %v5613 = vld [vmem:[%s298 + $0xd0] sm:$0xff]
      %v5614 = vld [vmem:[%s298 + $0xd8] sm:$0xff]
      %v5615 = vld [vmem:[%s298 + $0xe0] sm:$0xff]
      %v5616 = vld [vmem:[%s298 + $0xe8] sm:$0xff]
      %v5617 = vld [vmem:[%s298 + $0xf0] sm:$0xff]
      %v5618 = vld [vmem:[%s298 + $0xf8] sm:$0xff]
      %s5619 = scalar_lea.vmem %s4, 320
      %v5620 = vld [vmem:[%s5619] sm:$0xf]
      %v5621 = vld [vmem:[%s5619 + $0x4] sm:$0xf]
      %v5622 = vld [vmem:[%s5619 + $0x8] sm:$0xf]
      %v5623 = vld [vmem:[%s5619 + $0xc] sm:$0xf]
      %v5624 = vld [vmem:[%s5619 + $0x10] sm:$0xf]
      %v5625 = vld [vmem:[%s5619 + $0x14] sm:$0xf]
      %v5626 = vld [vmem:[%s5619 + $0x18] sm:$0xf]
      %v5627 = vld [vmem:[%s5619 + $0x1c] sm:$0xf]
      %v5628 = vld [vmem:[%s5619 + $0x20] sm:$0xf]
      %v5629 = vld [vmem:[%s5619 + $0x24] sm:$0xf]
      %v5630 = vld [vmem:[%s5619 + $0x28] sm:$0xf]
      %v5631 = vld [vmem:[%s5619 + $0x2c] sm:$0xf]
      %v5632 = vld [vmem:[%s5619 + $0x30] sm:$0xf]
      %v5633 = vld [vmem:[%s5619 + $0x34] sm:$0xf]
      %v5634 = vld [vmem:[%s5619 + $0x38] sm:$0xf]
      %v5635 = vld [vmem:[%s5619 + $0x3c] sm:$0xf]
      %v5668 = vunpack.c.l.b16 %v5555
      %v5669 = vunpack.c.l.b16 %v5556
      %v5670 = vunpack.c.l.b16 %v5557
      %v5671 = vunpack.c.l.b16 %v5558
      %v5672 = vunpack.c.l.b16 %v5559
      %v5673 = vunpack.c.l.b16 %v5560
      %v5674 = vunpack.c.l.b16 %v5561
      %v5675 = vunpack.c.l.b16 %v5562
      %v5676 = vunpack.c.l.b16 %v5563
      %v5677 = vunpack.c.l.b16 %v5564
      %v5678 = vunpack.c.l.b16 %v5565
      %v5679 = vunpack.c.l.b16 %v5566
      %v5680 = vunpack.c.l.b16 %v5567
      %v5681 = vunpack.c.l.b16 %v5568
      %v5682 = vunpack.c.l.b16 %v5569
      %v5683 = vunpack.c.l.b16 %v5570
      %v5684 = vunpack.c.l.b16 %v5571
      %v5685 = vunpack.c.l.b16 %v5572
      %v5686 = vunpack.c.l.b16 %v5573
      %v5687 = vunpack.c.l.b16 %v5574
      %v5688 = vunpack.c.l.b16 %v5575
      %v5689 = vunpack.c.l.b16 %v5576
      %v5690 = vunpack.c.l.b16 %v5577
      %v5691 = vunpack.c.l.b16 %v5578
      %v5692 = vunpack.c.l.b16 %v5579
      %v5693 = vunpack.c.l.b16 %v5580
      %v5694 = vunpack.c.l.b16 %v5581
      %v5695 = vunpack.c.l.b16 %v5582
      %v5696 = vunpack.c.l.b16 %v5583
      %v5697 = vunpack.c.l.b16 %v5584
      %v5698 = vunpack.c.l.b16 %v5585
      %v5699 = vunpack.c.l.b16 %v5586
      %v5700 = vpack.c.b16 %v5669, %v5668
      %v5701 = vpack.c.b16 %v5671, %v5670
      %v5702 = vpack.c.b16 %v5673, %v5672
      %v5703 = vpack.c.b16 %v5675, %v5674
      %v5704 = vpack.c.b16 %v5677, %v5676
      %v5705 = vpack.c.b16 %v5679, %v5678
      %v5706 = vpack.c.b16 %v5681, %v5680
      %v5707 = vpack.c.b16 %v5683, %v5682
      %v5708 = vpack.c.b16 %v5685, %v5684
      %v5709 = vpack.c.b16 %v5687, %v5686
      %v5710 = vpack.c.b16 %v5689, %v5688
      %v5711 = vpack.c.b16 %v5691, %v5690
      %v5712 = vpack.c.b16 %v5693, %v5692
      %v5713 = vpack.c.b16 %v5695, %v5694
      %v5714 = vpack.c.b16 %v5697, %v5696
      %v5715 = vpack.c.b16 %v5699, %v5698
      %v5748 = vunpack.c.l.b16 %v5620
      %v5749 = vunpack.c.l.b16 %v5621
      %v5750 = vunpack.c.l.b16 %v5622
      %v5751 = vunpack.c.l.b16 %v5623
      %v5752 = vunpack.c.l.b16 %v5624
      %v5753 = vunpack.c.l.b16 %v5625
      %v5754 = vunpack.c.l.b16 %v5626
      %v5755 = vunpack.c.l.b16 %v5627
      %v5756 = vunpack.c.l.b16 %v5628
      %v5757 = vunpack.c.l.b16 %v5629
      %v5758 = vunpack.c.l.b16 %v5630
      %v5759 = vunpack.c.l.b16 %v5631
      %v5760 = vunpack.c.l.b16 %v5632
      %v5761 = vunpack.c.l.b16 %v5633
      %v5762 = vunpack.c.l.b16 %v5634
      %v5763 = vunpack.c.l.b16 %v5635
      %v5764 = vpack.c.b16 %v5749, %v5748
      %v5765 = vpack.c.b16 %v5751, %v5750
      %v5766 = vpack.c.b16 %v5753, %v5752
      %v5767 = vpack.c.b16 %v5755, %v5754
      %v5768 = vpack.c.b16 %v5757, %v5756
      %v5769 = vpack.c.b16 %v5759, %v5758
      %v5770 = vpack.c.b16 %v5761, %v5760
      %v5771 = vpack.c.b16 %v5763, %v5762
      %5780 = vmatprep.subr.bf16.mxu0 0
      %5781 = vmatpush1.bf16.msra.mxu0 %v5771
      %5782 = vmatprep.subr.bf16.mxu0 0
      %5783 = vmatpush1.bf16.msra.mxu0 %v5770
      %5784 = vmatprep.subr.bf16.mxu0 0
      %5785 = vmatpush1.bf16.msra.mxu0 %v5769
      %5786 = vmatprep.subr.bf16.mxu0 0
      %5787 = vmatpush1.bf16.msra.mxu0 %v5768
      %5788 = vmatprep.subr.bf16.mxu0 0
      %5789 = vmatpush1.bf16.msra.mxu0 %v5767
      %5790 = vmatprep.subr.bf16.mxu0 0
      %5791 = vmatpush1.bf16.msra.mxu0 %v5766
      %5792 = vmatprep.subr.bf16.mxu0 0
      %5793 = vmatpush1.bf16.msra.mxu0 %v5765
      %5794 = vmatprep.subr.bf16.mxu0 0
      %5795 = vmatpush1.bf16.msra.mxu0 %v5764
      %5796 = vmatprep.subr.bf16.mxu0 0
      %5797 = vmatpush2.bf16.msra.mxu0 0
      %5798 = vmatprep.subr.bf16.mxu0 0
      %5799 = vmatpush2.bf16.msra.mxu0 0
      %5800 = vmatprep.subr.bf16.mxu0 0
      %5801 = vmatpush2.bf16.msra.mxu0 0
      %5802 = vmatprep.subr.bf16.mxu0 0
      %5803 = vmatpush2.bf16.msra.mxu0 0
      %5804 = vmatprep.subr.bf16.mxu0 0
      %5805 = vmatpush2.bf16.msra.mxu0 0
      %5806 = vmatprep.subr.bf16.mxu0 0
      %5807 = vmatpush2.bf16.msra.mxu0 0
      %5808 = vmatprep.subr.bf16.mxu0 0
      %5809 = vmatpush2.bf16.msra.mxu0 0
      %5810 = vmatprep.subr.bf16.mxu0 0
      %5811 = vmatpush2.bf16.msra.mxu0 0
      %5812 = vmatprep.mubr.bf16.mxu0 0
      %5813 = vmatmul.mubr.bf16.gmra.mxu0 %v5700
      %v5814 = vpop.f32.mrf.mxu0
      %v5815 = vadd.f32 0.0, %v5814
      %v5816 = vpop.f32.mrf.mxu0
      %v5817 = vpop.f32.mrf.mxu0
      %v5818 = vadd.f32 0.0, %v5817
      %v5819 = vpop.f32.mrf.mxu0
      %5820 = vmatprep.mubr.bf16.mxu0 0
      %5821 = vmatmul.mubr.bf16.gmra.mxu0 %v5701
      %v5822 = vpop.f32.mrf.mxu0
      %v5823 = vadd.f32 0.0, %v5822
      %v5824 = vpop.f32.mrf.mxu0
      %v5825 = vpop.f32.mrf.mxu0
      %v5826 = vadd.f32 0.0, %v5825
      %v5827 = vpop.f32.mrf.mxu0
      %5828 = vmatprep.mubr.bf16.mxu0 0
      %5829 = vmatmul.mubr.bf16.gmra.mxu0 %v5702
      %v5830 = vpop.f32.mrf.mxu0
      %v5831 = vadd.f32 0.0, %v5830
      %v5832 = vpop.f32.mrf.mxu0
      %v5833 = vpop.f32.mrf.mxu0
      %v5834 = vadd.f32 0.0, %v5833
      %v5835 = vpop.f32.mrf.mxu0
      %5836 = vmatprep.mubr.bf16.mxu0 0
      %5837 = vmatmul.mubr.bf16.gmra.mxu0 %v5703
      %v5838 = vpop.f32.mrf.mxu0
      %v5839 = vadd.f32 0.0, %v5838
      %v5840 = vpop.f32.mrf.mxu0
      %v5841 = vpop.f32.mrf.mxu0
      %v5842 = vadd.f32 0.0, %v5841
      %v5843 = vpop.f32.mrf.mxu0
      %5844 = vmatprep.mubr.bf16.mxu0 0
      %5845 = vmatmul.mubr.bf16.gmra.mxu0 %v5704
      %v5846 = vpop.f32.mrf.mxu0
      %v5847 = vadd.f32 0.0, %v5846
      %v5848 = vpop.f32.mrf.mxu0
      %v5849 = vpop.f32.mrf.mxu0
      %v5850 = vadd.f32 0.0, %v5849
      %v5851 = vpop.f32.mrf.mxu0
      %5852 = vmatprep.mubr.bf16.mxu0 0
      %5853 = vmatmul.mubr.bf16.gmra.mxu0 %v5705
      %v5854 = vpop.f32.mrf.mxu0
      %v5855 = vadd.f32 0.0, %v5854
      %v5856 = vpop.f32.mrf.mxu0
      %v5857 = vpop.f32.mrf.mxu0
      %v5858 = vadd.f32 0.0, %v5857
      %v5859 = vpop.f32.mrf.mxu0
      %5860 = vmatprep.mubr.bf16.mxu0 0
      %5861 = vmatmul.mubr.bf16.gmra.mxu0 %v5706
      %v5862 = vpop.f32.mrf.mxu0
      %v5863 = vadd.f32 0.0, %v5862
      %v5864 = vpop.f32.mrf.mxu0
      %v5865 = vpop.f32.mrf.mxu0
      %v5866 = vadd.f32 0.0, %v5865
      %v5867 = vpop.f32.mrf.mxu0
      %5868 = vmatprep.mubr.bf16.mxu0 0
      %5869 = vmatmul.mubr.bf16.gmra.mxu0 %v5707
      %v5870 = vpop.f32.mrf.mxu0
      %v5871 = vadd.f32 0.0, %v5870
      %v5872 = vpop.f32.mrf.mxu0
      %v5873 = vpop.f32.mrf.mxu0
      %v5874 = vadd.f32 0.0, %v5873
      %v5875 = vpop.f32.mrf.mxu0
      %5876 = vmatprep.mubr.bf16.mxu0 0
      %5877 = vmatmul.mubr.bf16.gmra.mxu0 %v5708
      %v5878 = vpop.f32.mrf.mxu0
      %v5879 = vadd.f32 0.0, %v5878
      %v5880 = vpop.f32.mrf.mxu0
      %v5881 = vpop.f32.mrf.mxu0
      %v5882 = vadd.f32 0.0, %v5881
      %v5883 = vpop.f32.mrf.mxu0
      %5884 = vmatprep.mubr.bf16.mxu0 0
      %5885 = vmatmul.mubr.bf16.gmra.mxu0 %v5709
      %v5886 = vpop.f32.mrf.mxu0
      %v5887 = vadd.f32 0.0, %v5886
      %v5888 = vpop.f32.mrf.mxu0
      %v5889 = vpop.f32.mrf.mxu0
      %v5890 = vadd.f32 0.0, %v5889
      %v5891 = vpop.f32.mrf.mxu0
      %5892 = vmatprep.mubr.bf16.mxu0 0
      %5893 = vmatmul.mubr.bf16.gmra.mxu0 %v5710
      %v5894 = vpop.f32.mrf.mxu0
      %v5895 = vadd.f32 0.0, %v5894
      %v5896 = vpop.f32.mrf.mxu0
      %v5897 = vpop.f32.mrf.mxu0
      %v5898 = vadd.f32 0.0, %v5897
      %v5899 = vpop.f32.mrf.mxu0
      %5900 = vmatprep.mubr.bf16.mxu0 0
      %5901 = vmatmul.mubr.bf16.gmra.mxu0 %v5711
      %v5902 = vpop.f32.mrf.mxu0
      %v5903 = vadd.f32 0.0, %v5902
      %v5904 = vpop.f32.mrf.mxu0
      %v5905 = vpop.f32.mrf.mxu0
      %v5906 = vadd.f32 0.0, %v5905
      %v5907 = vpop.f32.mrf.mxu0
      %5908 = vmatprep.mubr.bf16.mxu0 0
      %5909 = vmatmul.mubr.bf16.gmra.mxu0 %v5712
      %v5910 = vpop.f32.mrf.mxu0
      %v5911 = vadd.f32 0.0, %v5910
      %v5912 = vpop.f32.mrf.mxu0
      %v5913 = vpop.f32.mrf.mxu0
      %v5914 = vadd.f32 0.0, %v5913
      %v5915 = vpop.f32.mrf.mxu0
      %5916 = vmatprep.mubr.bf16.mxu0 0
      %5917 = vmatmul.mubr.bf16.gmra.mxu0 %v5713
      %v5918 = vpop.f32.mrf.mxu0
      %v5919 = vadd.f32 0.0, %v5918
      %v5920 = vpop.f32.mrf.mxu0
      %v5921 = vpop.f32.mrf.mxu0
      %v5922 = vadd.f32 0.0, %v5921
      %v5923 = vpop.f32.mrf.mxu0
      %5924 = vmatprep.mubr.bf16.mxu0 0
      %5925 = vmatmul.mubr.bf16.gmra.mxu0 %v5714
      %v5926 = vpop.f32.mrf.mxu0
      %v5927 = vadd.f32 0.0, %v5926
      %v5928 = vpop.f32.mrf.mxu0
      %v5929 = vpop.f32.mrf.mxu0
      %v5930 = vadd.f32 0.0, %v5929
      %v5931 = vpop.f32.mrf.mxu0
      %5932 = vmatprep.mubr.bf16.mxu0 0
      %5933 = vmatmul.mubr.bf16.gmra.mxu0 %v5715
      %v5934 = vpop.f32.mrf.mxu0
      %v5935 = vadd.f32 0.0, %v5934
      %v5936 = vpop.f32.mrf.mxu0
      %v5937 = vpop.f32.mrf.mxu0
      %v5938 = vadd.f32 0.0, %v5937
      %v5939 = vpop.f32.mrf.mxu0
      %5940 = vdwg.mxu0
      %v5941 = vadd.f32 %v5587, %v5815
      %v5942 = vadd.f32 %v5588, %v5818
      %v5943 = vadd.f32 %v5589, %v5823
      %v5944 = vadd.f32 %v5590, %v5826
      %v5945 = vadd.f32 %v5591, %v5831
      %v5946 = vadd.f32 %v5592, %v5834
      %v5947 = vadd.f32 %v5593, %v5839
      %v5948 = vadd.f32 %v5594, %v5842
      %v5949 = vadd.f32 %v5595, %v5847
      %v5950 = vadd.f32 %v5596, %v5850
      %v5951 = vadd.f32 %v5597, %v5855
      %v5952 = vadd.f32 %v5598, %v5858
      %v5953 = vadd.f32 %v5599, %v5863
      %v5954 = vadd.f32 %v5600, %v5866
      %v5955 = vadd.f32 %v5601, %v5871
      %v5956 = vadd.f32 %v5602, %v5874
      %v5957 = vadd.f32 %v5603, %v5879
      %v5958 = vadd.f32 %v5604, %v5882
      %v5959 = vadd.f32 %v5605, %v5887
      %v5960 = vadd.f32 %v5606, %v5890
      %v5961 = vadd.f32 %v5607, %v5895
      %v5962 = vadd.f32 %v5608, %v5898
      %v5963 = vadd.f32 %v5609, %v5903
      %v5964 = vadd.f32 %v5610, %v5906
      %v5965 = vadd.f32 %v5611, %v5911
      %v5966 = vadd.f32 %v5612, %v5914
      %v5967 = vadd.f32 %v5613, %v5919
      %v5968 = vadd.f32 %v5614, %v5922
      %v5969 = vadd.f32 %v5615, %v5927
      %v5970 = vadd.f32 %v5616, %v5930
      %v5971 = vadd.f32 %v5617, %v5935
      %v5972 = vadd.f32 %v5618, %v5938
      %5973 = vst [vmem:[%s298] sm:$0xff] %v5941
      %5974 = vst [vmem:[%s298 + $0x8] sm:$0xff] %v5942
      %5975 = vst [vmem:[%s298 + $0x10] sm:$0xff] %v5943
      %5976 = vst [vmem:[%s298 + $0x18] sm:$0xff] %v5944
      %5977 = vst [vmem:[%s298 + $0x20] sm:$0xff] %v5945
      %5978 = vst [vmem:[%s298 + $0x28] sm:$0xff] %v5946
      %5979 = vst [vmem:[%s298 + $0x30] sm:$0xff] %v5947
      %5980 = vst [vmem:[%s298 + $0x38] sm:$0xff] %v5948
      %5981 = vst [vmem:[%s298 + $0x40] sm:$0xff] %v5949
      %5982 = vst [vmem:[%s298 + $0x48] sm:$0xff] %v5950
      %5983 = vst [vmem:[%s298 + $0x50] sm:$0xff] %v5951
      %5984 = vst [vmem:[%s298 + $0x58] sm:$0xff] %v5952
      %5985 = vst [vmem:[%s298 + $0x60] sm:$0xff] %v5953
      %5986 = vst [vmem:[%s298 + $0x68] sm:$0xff] %v5954
      %5987 = vst [vmem:[%s298 + $0x70] sm:$0xff] %v5955
      %5988 = vst [vmem:[%s298 + $0x78] sm:$0xff] %v5956
      %5989 = vst [vmem:[%s298 + $0x80] sm:$0xff] %v5957
      %5990 = vst [vmem:[%s298 + $0x88] sm:$0xff] %v5958
      %5991 = vst [vmem:[%s298 + $0x90] sm:$0xff] %v5959
      %5992 = vst [vmem:[%s298 + $0x98] sm:$0xff] %v5960
      %5993 = vst [vmem:[%s298 + $0xa0] sm:$0xff] %v5961
      %5994 = vst [vmem:[%s298 + $0xa8] sm:$0xff] %v5962
      %5995 = vst [vmem:[%s298 + $0xb0] sm:$0xff] %v5963
      %5996 = vst [vmem:[%s298 + $0xb8] sm:$0xff] %v5964
      %5997 = vst [vmem:[%s298 + $0xc0] sm:$0xff] %v5965
      %5998 = vst [vmem:[%s298 + $0xc8] sm:$0xff] %v5966
      %5999 = vst [vmem:[%s298 + $0xd0] sm:$0xff] %v5967
      %6000 = vst [vmem:[%s298 + $0xd8] sm:$0xff] %v5968
      %6001 = vst [vmem:[%s298 + $0xe0] sm:$0xff] %v5969
      %6002 = vst [vmem:[%s298 + $0xe8] sm:$0xff] %v5970
      %6003 = vst [vmem:[%s298 + $0xf0] sm:$0xff] %v5971
      %6004 = vst [vmem:[%s298 + $0xf8] sm:$0xff] %v5972
      %v6005 = vld [vmem:[#allocation2 + $0x10] sm:$0xf]
      %v6006 = vld [vmem:[#allocation2 + $0x14] sm:$0xf]
      %v6007 = vld [vmem:[#allocation2 + $0x18] sm:$0xf]
      %v6008 = vld [vmem:[#allocation2 + $0x1c] sm:$0xf]
      %v6009 = vld [vmem:[#allocation2 + $0x20] sm:$0xf]
      %v6010 = vld [vmem:[#allocation2 + $0x24] sm:$0xf]
      %v6011 = vld [vmem:[#allocation2 + $0x28] sm:$0xf]
      %v6012 = vld [vmem:[#allocation2 + $0x2c] sm:$0xf]
      %v6013 = vld [vmem:[#allocation2 + $0x30] sm:$0xf]
      %v6014 = vld [vmem:[#allocation2 + $0x34] sm:$0xf]
      %v6015 = vld [vmem:[#allocation2 + $0x38] sm:$0xf]
      %v6016 = vld [vmem:[#allocation2 + $0x3c] sm:$0xf]
      %v6017 = vld [vmem:[#allocation2 + $0x40] sm:$0xf]
      %v6018 = vld [vmem:[#allocation2 + $0x44] sm:$0xf]
      %v6019 = vld [vmem:[#allocation2 + $0x48] sm:$0xf]
      %v6020 = vld [vmem:[#allocation2 + $0x4c] sm:$0xf]
      %v6021 = vld [vmem:[#allocation2 + $0x50] sm:$0xf]
      %v6022 = vld [vmem:[#allocation2 + $0x54] sm:$0xf]
      %v6023 = vld [vmem:[#allocation2 + $0x58] sm:$0xf]
      %v6024 = vld [vmem:[#allocation2 + $0x5c] sm:$0xf]
      %v6025 = vld [vmem:[#allocation2 + $0x60] sm:$0xf]
      %v6026 = vld [vmem:[#allocation2 + $0x64] sm:$0xf]
      %v6027 = vld [vmem:[#allocation2 + $0x68] sm:$0xf]
      %v6028 = vld [vmem:[#allocation2 + $0x6c] sm:$0xf]
      %v6029 = vld [vmem:[#allocation2 + $0x70] sm:$0xf]
      %v6030 = vld [vmem:[#allocation2 + $0x74] sm:$0xf]
      %v6031 = vld [vmem:[#allocation2 + $0x78] sm:$0xf]
      %v6032 = vld [vmem:[#allocation2 + $0x7c] sm:$0xf]
      %v6033 = vld [vmem:[#allocation2 + $0x80] sm:$0xf]
      %v6034 = vld [vmem:[#allocation2 + $0x84] sm:$0xf]
      %v6035 = vld [vmem:[#allocation2 + $0x88] sm:$0xf]
      %v6036 = vld [vmem:[#allocation2 + $0x8c] sm:$0xf]
      %v6037 = vld [vmem:[%s298] sm:$0xff]
      %v6038 = vld [vmem:[%s298 + $0x8] sm:$0xff]
      %v6039 = vld [vmem:[%s298 + $0x10] sm:$0xff]
      %v6040 = vld [vmem:[%s298 + $0x18] sm:$0xff]
      %v6041 = vld [vmem:[%s298 + $0x20] sm:$0xff]
      %v6042 = vld [vmem:[%s298 + $0x28] sm:$0xff]
      %v6043 = vld [vmem:[%s298 + $0x30] sm:$0xff]
      %v6044 = vld [vmem:[%s298 + $0x38] sm:$0xff]
      %v6045 = vld [vmem:[%s298 + $0x40] sm:$0xff]
      %v6046 = vld [vmem:[%s298 + $0x48] sm:$0xff]
      %v6047 = vld [vmem:[%s298 + $0x50] sm:$0xff]
      %v6048 = vld [vmem:[%s298 + $0x58] sm:$0xff]
      %v6049 = vld [vmem:[%s298 + $0x60] sm:$0xff]
      %v6050 = vld [vmem:[%s298 + $0x68] sm:$0xff]
      %v6051 = vld [vmem:[%s298 + $0x70] sm:$0xff]
      %v6052 = vld [vmem:[%s298 + $0x78] sm:$0xff]
      %v6053 = vld [vmem:[%s298 + $0x80] sm:$0xff]
      %v6054 = vld [vmem:[%s298 + $0x88] sm:$0xff]
      %v6055 = vld [vmem:[%s298 + $0x90] sm:$0xff]
      %v6056 = vld [vmem:[%s298 + $0x98] sm:$0xff]
      %v6057 = vld [vmem:[%s298 + $0xa0] sm:$0xff]
      %v6058 = vld [vmem:[%s298 + $0xa8] sm:$0xff]
      %v6059 = vld [vmem:[%s298 + $0xb0] sm:$0xff]
      %v6060 = vld [vmem:[%s298 + $0xb8] sm:$0xff]
      %v6061 = vld [vmem:[%s298 + $0xc0] sm:$0xff]
      %v6062 = vld [vmem:[%s298 + $0xc8] sm:$0xff]
      %v6063 = vld [vmem:[%s298 + $0xd0] sm:$0xff]
      %v6064 = vld [vmem:[%s298 + $0xd8] sm:$0xff]
      %v6065 = vld [vmem:[%s298 + $0xe0] sm:$0xff]
      %v6066 = vld [vmem:[%s298 + $0xe8] sm:$0xff]
      %v6067 = vld [vmem:[%s298 + $0xf0] sm:$0xff]
      %v6068 = vld [vmem:[%s298 + $0xf8] sm:$0xff]
      %s6069 = scalar_lea.vmem %s4, 384
      %v6070 = vld [vmem:[%s6069] sm:$0xf]
      %v6071 = vld [vmem:[%s6069 + $0x4] sm:$0xf]
      %v6072 = vld [vmem:[%s6069 + $0x8] sm:$0xf]
      %v6073 = vld [vmem:[%s6069 + $0xc] sm:$0xf]
      %v6074 = vld [vmem:[%s6069 + $0x10] sm:$0xf]
      %v6075 = vld [vmem:[%s6069 + $0x14] sm:$0xf]
      %v6076 = vld [vmem:[%s6069 + $0x18] sm:$0xf]
      %v6077 = vld [vmem:[%s6069 + $0x1c] sm:$0xf]
      %v6078 = vld [vmem:[%s6069 + $0x20] sm:$0xf]
      %v6079 = vld [vmem:[%s6069 + $0x24] sm:$0xf]
      %v6080 = vld [vmem:[%s6069 + $0x28] sm:$0xf]
      %v6081 = vld [vmem:[%s6069 + $0x2c] sm:$0xf]
      %v6082 = vld [vmem:[%s6069 + $0x30] sm:$0xf]
      %v6083 = vld [vmem:[%s6069 + $0x34] sm:$0xf]
      %v6084 = vld [vmem:[%s6069 + $0x38] sm:$0xf]
      %v6085 = vld [vmem:[%s6069 + $0x3c] sm:$0xf]
      %v6118 = vunpack.c.l.b16 %v6005
      %v6119 = vunpack.c.l.b16 %v6006
      %v6120 = vunpack.c.l.b16 %v6007
      %v6121 = vunpack.c.l.b16 %v6008
      %v6122 = vunpack.c.l.b16 %v6009
      %v6123 = vunpack.c.l.b16 %v6010
      %v6124 = vunpack.c.l.b16 %v6011
      %v6125 = vunpack.c.l.b16 %v6012
      %v6126 = vunpack.c.l.b16 %v6013
      %v6127 = vunpack.c.l.b16 %v6014
      %v6128 = vunpack.c.l.b16 %v6015
      %v6129 = vunpack.c.l.b16 %v6016
      %v6130 = vunpack.c.l.b16 %v6017
      %v6131 = vunpack.c.l.b16 %v6018
      %v6132 = vunpack.c.l.b16 %v6019
      %v6133 = vunpack.c.l.b16 %v6020
      %v6134 = vunpack.c.l.b16 %v6021
      %v6135 = vunpack.c.l.b16 %v6022
      %v6136 = vunpack.c.l.b16 %v6023
      %v6137 = vunpack.c.l.b16 %v6024
      %v6138 = vunpack.c.l.b16 %v6025
      %v6139 = vunpack.c.l.b16 %v6026
      %v6140 = vunpack.c.l.b16 %v6027
      %v6141 = vunpack.c.l.b16 %v6028
      %v6142 = vunpack.c.l.b16 %v6029
      %v6143 = vunpack.c.l.b16 %v6030
      %v6144 = vunpack.c.l.b16 %v6031
      %v6145 = vunpack.c.l.b16 %v6032
      %v6146 = vunpack.c.l.b16 %v6033
      %v6147 = vunpack.c.l.b16 %v6034
      %v6148 = vunpack.c.l.b16 %v6035
      %v6149 = vunpack.c.l.b16 %v6036
      %v6150 = vpack.c.b16 %v6119, %v6118
      %v6151 = vpack.c.b16 %v6121, %v6120
      %v6152 = vpack.c.b16 %v6123, %v6122
      %v6153 = vpack.c.b16 %v6125, %v6124
      %v6154 = vpack.c.b16 %v6127, %v6126
      %v6155 = vpack.c.b16 %v6129, %v6128
      %v6156 = vpack.c.b16 %v6131, %v6130
      %v6157 = vpack.c.b16 %v6133, %v6132
      %v6158 = vpack.c.b16 %v6135, %v6134
      %v6159 = vpack.c.b16 %v6137, %v6136
      %v6160 = vpack.c.b16 %v6139, %v6138
      %v6161 = vpack.c.b16 %v6141, %v6140
      %v6162 = vpack.c.b16 %v6143, %v6142
      %v6163 = vpack.c.b16 %v6145, %v6144
      %v6164 = vpack.c.b16 %v6147, %v6146
      %v6165 = vpack.c.b16 %v6149, %v6148
      %v6198 = vunpack.c.l.b16 %v6070
      %v6199 = vunpack.c.l.b16 %v6071
      %v6200 = vunpack.c.l.b16 %v6072
      %v6201 = vunpack.c.l.b16 %v6073
      %v6202 = vunpack.c.l.b16 %v6074
      %v6203 = vunpack.c.l.b16 %v6075
      %v6204 = vunpack.c.l.b16 %v6076
      %v6205 = vunpack.c.l.b16 %v6077
      %v6206 = vunpack.c.l.b16 %v6078
      %v6207 = vunpack.c.l.b16 %v6079
      %v6208 = vunpack.c.l.b16 %v6080
      %v6209 = vunpack.c.l.b16 %v6081
      %v6210 = vunpack.c.l.b16 %v6082
      %v6211 = vunpack.c.l.b16 %v6083
      %v6212 = vunpack.c.l.b16 %v6084
      %v6213 = vunpack.c.l.b16 %v6085
      %v6214 = vpack.c.b16 %v6199, %v6198
      %v6215 = vpack.c.b16 %v6201, %v6200
      %v6216 = vpack.c.b16 %v6203, %v6202
      %v6217 = vpack.c.b16 %v6205, %v6204
      %v6218 = vpack.c.b16 %v6207, %v6206
      %v6219 = vpack.c.b16 %v6209, %v6208
      %v6220 = vpack.c.b16 %v6211, %v6210
      %v6221 = vpack.c.b16 %v6213, %v6212
      %6230 = vmatprep.subr.bf16.mxu0 0
      %6231 = vmatpush1.bf16.msra.mxu0 %v6221
      %6232 = vmatprep.subr.bf16.mxu0 0
      %6233 = vmatpush1.bf16.msra.mxu0 %v6220
      %6234 = vmatprep.subr.bf16.mxu0 0
      %6235 = vmatpush1.bf16.msra.mxu0 %v6219
      %6236 = vmatprep.subr.bf16.mxu0 0
      %6237 = vmatpush1.bf16.msra.mxu0 %v6218
      %6238 = vmatprep.subr.bf16.mxu0 0
      %6239 = vmatpush1.bf16.msra.mxu0 %v6217
      %6240 = vmatprep.subr.bf16.mxu0 0
      %6241 = vmatpush1.bf16.msra.mxu0 %v6216
      %6242 = vmatprep.subr.bf16.mxu0 0
      %6243 = vmatpush1.bf16.msra.mxu0 %v6215
      %6244 = vmatprep.subr.bf16.mxu0 0
      %6245 = vmatpush1.bf16.msra.mxu0 %v6214
      %6246 = vmatprep.subr.bf16.mxu0 0
      %6247 = vmatpush2.bf16.msra.mxu0 0
      %6248 = vmatprep.subr.bf16.mxu0 0
      %6249 = vmatpush2.bf16.msra.mxu0 0
      %6250 = vmatprep.subr.bf16.mxu0 0
      %6251 = vmatpush2.bf16.msra.mxu0 0
      %6252 = vmatprep.subr.bf16.mxu0 0
      %6253 = vmatpush2.bf16.msra.mxu0 0
      %6254 = vmatprep.subr.bf16.mxu0 0
      %6255 = vmatpush2.bf16.msra.mxu0 0
      %6256 = vmatprep.subr.bf16.mxu0 0
      %6257 = vmatpush2.bf16.msra.mxu0 0
      %6258 = vmatprep.subr.bf16.mxu0 0
      %6259 = vmatpush2.bf16.msra.mxu0 0
      %6260 = vmatprep.subr.bf16.mxu0 0
      %6261 = vmatpush2.bf16.msra.mxu0 0
      %6262 = vmatprep.mubr.bf16.mxu0 0
      %6263 = vmatmul.mubr.bf16.gmra.mxu0 %v6150
      %v6264 = vpop.f32.mrf.mxu0
      %v6265 = vadd.f32 0.0, %v6264
      %v6266 = vpop.f32.mrf.mxu0
      %v6267 = vpop.f32.mrf.mxu0
      %v6268 = vadd.f32 0.0, %v6267
      %v6269 = vpop.f32.mrf.mxu0
      %6270 = vmatprep.mubr.bf16.mxu0 0
      %6271 = vmatmul.mubr.bf16.gmra.mxu0 %v6151
      %v6272 = vpop.f32.mrf.mxu0
      %v6273 = vadd.f32 0.0, %v6272
      %v6274 = vpop.f32.mrf.mxu0
      %v6275 = vpop.f32.mrf.mxu0
      %v6276 = vadd.f32 0.0, %v6275
      %v6277 = vpop.f32.mrf.mxu0
      %6278 = vmatprep.mubr.bf16.mxu0 0
      %6279 = vmatmul.mubr.bf16.gmra.mxu0 %v6152
      %v6280 = vpop.f32.mrf.mxu0
      %v6281 = vadd.f32 0.0, %v6280
      %v6282 = vpop.f32.mrf.mxu0
      %v6283 = vpop.f32.mrf.mxu0
      %v6284 = vadd.f32 0.0, %v6283
      %v6285 = vpop.f32.mrf.mxu0
      %6286 = vmatprep.mubr.bf16.mxu0 0
      %6287 = vmatmul.mubr.bf16.gmra.mxu0 %v6153
      %v6288 = vpop.f32.mrf.mxu0
      %v6289 = vadd.f32 0.0, %v6288
      %v6290 = vpop.f32.mrf.mxu0
      %v6291 = vpop.f32.mrf.mxu0
      %v6292 = vadd.f32 0.0, %v6291
      %v6293 = vpop.f32.mrf.mxu0
      %6294 = vmatprep.mubr.bf16.mxu0 0
      %6295 = vmatmul.mubr.bf16.gmra.mxu0 %v6154
      %v6296 = vpop.f32.mrf.mxu0
      %v6297 = vadd.f32 0.0, %v6296
      %v6298 = vpop.f32.mrf.mxu0
      %v6299 = vpop.f32.mrf.mxu0
      %v6300 = vadd.f32 0.0, %v6299
      %v6301 = vpop.f32.mrf.mxu0
      %6302 = vmatprep.mubr.bf16.mxu0 0
      %6303 = vmatmul.mubr.bf16.gmra.mxu0 %v6155
      %v6304 = vpop.f32.mrf.mxu0
      %v6305 = vadd.f32 0.0, %v6304
      %v6306 = vpop.f32.mrf.mxu0
      %v6307 = vpop.f32.mrf.mxu0
      %v6308 = vadd.f32 0.0, %v6307
      %v6309 = vpop.f32.mrf.mxu0
      %6310 = vmatprep.mubr.bf16.mxu0 0
      %6311 = vmatmul.mubr.bf16.gmra.mxu0 %v6156
      %v6312 = vpop.f32.mrf.mxu0
      %v6313 = vadd.f32 0.0, %v6312
      %v6314 = vpop.f32.mrf.mxu0
      %v6315 = vpop.f32.mrf.mxu0
      %v6316 = vadd.f32 0.0, %v6315
      %v6317 = vpop.f32.mrf.mxu0
      %6318 = vmatprep.mubr.bf16.mxu0 0
      %6319 = vmatmul.mubr.bf16.gmra.mxu0 %v6157
      %v6320 = vpop.f32.mrf.mxu0
      %v6321 = vadd.f32 0.0, %v6320
      %v6322 = vpop.f32.mrf.mxu0
      %v6323 = vpop.f32.mrf.mxu0
      %v6324 = vadd.f32 0.0, %v6323
      %v6325 = vpop.f32.mrf.mxu0
      %6326 = vmatprep.mubr.bf16.mxu0 0
      %6327 = vmatmul.mubr.bf16.gmra.mxu0 %v6158
      %v6328 = vpop.f32.mrf.mxu0
      %v6329 = vadd.f32 0.0, %v6328
      %v6330 = vpop.f32.mrf.mxu0
      %v6331 = vpop.f32.mrf.mxu0
      %v6332 = vadd.f32 0.0, %v6331
      %v6333 = vpop.f32.mrf.mxu0
      %6334 = vmatprep.mubr.bf16.mxu0 0
      %6335 = vmatmul.mubr.bf16.gmra.mxu0 %v6159
      %v6336 = vpop.f32.mrf.mxu0
      %v6337 = vadd.f32 0.0, %v6336
      %v6338 = vpop.f32.mrf.mxu0
      %v6339 = vpop.f32.mrf.mxu0
      %v6340 = vadd.f32 0.0, %v6339
      %v6341 = vpop.f32.mrf.mxu0
      %6342 = vmatprep.mubr.bf16.mxu0 0
      %6343 = vmatmul.mubr.bf16.gmra.mxu0 %v6160
      %v6344 = vpop.f32.mrf.mxu0
      %v6345 = vadd.f32 0.0, %v6344
      %v6346 = vpop.f32.mrf.mxu0
      %v6347 = vpop.f32.mrf.mxu0
      %v6348 = vadd.f32 0.0, %v6347
      %v6349 = vpop.f32.mrf.mxu0
      %6350 = vmatprep.mubr.bf16.mxu0 0
      %6351 = vmatmul.mubr.bf16.gmra.mxu0 %v6161
      %v6352 = vpop.f32.mrf.mxu0
      %v6353 = vadd.f32 0.0, %v6352
      %v6354 = vpop.f32.mrf.mxu0
      %v6355 = vpop.f32.mrf.mxu0
      %v6356 = vadd.f32 0.0, %v6355
      %v6357 = vpop.f32.mrf.mxu0
      %6358 = vmatprep.mubr.bf16.mxu0 0
      %6359 = vmatmul.mubr.bf16.gmra.mxu0 %v6162
      %v6360 = vpop.f32.mrf.mxu0
      %v6361 = vadd.f32 0.0, %v6360
      %v6362 = vpop.f32.mrf.mxu0
      %v6363 = vpop.f32.mrf.mxu0
      %v6364 = vadd.f32 0.0, %v6363
      %v6365 = vpop.f32.mrf.mxu0
      %6366 = vmatprep.mubr.bf16.mxu0 0
      %6367 = vmatmul.mubr.bf16.gmra.mxu0 %v6163
      %v6368 = vpop.f32.mrf.mxu0
      %v6369 = vadd.f32 0.0, %v6368
      %v6370 = vpop.f32.mrf.mxu0
      %v6371 = vpop.f32.mrf.mxu0
      %v6372 = vadd.f32 0.0, %v6371
      %v6373 = vpop.f32.mrf.mxu0
      %6374 = vmatprep.mubr.bf16.mxu0 0
      %6375 = vmatmul.mubr.bf16.gmra.mxu0 %v6164
      %v6376 = vpop.f32.mrf.mxu0
      %v6377 = vadd.f32 0.0, %v6376
      %v6378 = vpop.f32.mrf.mxu0
      %v6379 = vpop.f32.mrf.mxu0
      %v6380 = vadd.f32 0.0, %v6379
      %v6381 = vpop.f32.mrf.mxu0
      %6382 = vmatprep.mubr.bf16.mxu0 0
      %6383 = vmatmul.mubr.bf16.gmra.mxu0 %v6165
      %v6384 = vpop.f32.mrf.mxu0
      %v6385 = vadd.f32 0.0, %v6384
      %v6386 = vpop.f32.mrf.mxu0
      %v6387 = vpop.f32.mrf.mxu0
      %v6388 = vadd.f32 0.0, %v6387
      %v6389 = vpop.f32.mrf.mxu0
      %6390 = vdwg.mxu0
      %v6391 = vadd.f32 %v6037, %v6265
      %v6392 = vadd.f32 %v6038, %v6268
      %v6393 = vadd.f32 %v6039, %v6273
      %v6394 = vadd.f32 %v6040, %v6276
      %v6395 = vadd.f32 %v6041, %v6281
      %v6396 = vadd.f32 %v6042, %v6284
      %v6397 = vadd.f32 %v6043, %v6289
      %v6398 = vadd.f32 %v6044, %v6292
      %v6399 = vadd.f32 %v6045, %v6297
      %v6400 = vadd.f32 %v6046, %v6300
      %v6401 = vadd.f32 %v6047, %v6305
      %v6402 = vadd.f32 %v6048, %v6308
      %v6403 = vadd.f32 %v6049, %v6313
      %v6404 = vadd.f32 %v6050, %v6316
      %v6405 = vadd.f32 %v6051, %v6321
      %v6406 = vadd.f32 %v6052, %v6324
      %v6407 = vadd.f32 %v6053, %v6329
      %v6408 = vadd.f32 %v6054, %v6332
      %v6409 = vadd.f32 %v6055, %v6337
      %v6410 = vadd.f32 %v6056, %v6340
      %v6411 = vadd.f32 %v6057, %v6345
      %v6412 = vadd.f32 %v6058, %v6348
      %v6413 = vadd.f32 %v6059, %v6353
      %v6414 = vadd.f32 %v6060, %v6356
      %v6415 = vadd.f32 %v6061, %v6361
      %v6416 = vadd.f32 %v6062, %v6364
      %v6417 = vadd.f32 %v6063, %v6369
      %v6418 = vadd.f32 %v6064, %v6372
      %v6419 = vadd.f32 %v6065, %v6377
      %v6420 = vadd.f32 %v6066, %v6380
      %v6421 = vadd.f32 %v6067, %v6385
      %v6422 = vadd.f32 %v6068, %v6388
      %6423 = vst [vmem:[%s298] sm:$0xff] %v6391
      %6424 = vst [vmem:[%s298 + $0x8] sm:$0xff] %v6392
      %6425 = vst [vmem:[%s298 + $0x10] sm:$0xff] %v6393
      %6426 = vst [vmem:[%s298 + $0x18] sm:$0xff] %v6394
      %6427 = vst [vmem:[%s298 + $0x20] sm:$0xff] %v6395
      %6428 = vst [vmem:[%s298 + $0x28] sm:$0xff] %v6396
      %6429 = vst [vmem:[%s298 + $0x30] sm:$0xff] %v6397
      %6430 = vst [vmem:[%s298 + $0x38] sm:$0xff] %v6398
      %6431 = vst [vmem:[%s298 + $0x40] sm:$0xff] %v6399
      %6432 = vst [vmem:[%s298 + $0x48] sm:$0xff] %v6400
      %6433 = vst [vmem:[%s298 + $0x50] sm:$0xff] %v6401
      %6434 = vst [vmem:[%s298 + $0x58] sm:$0xff] %v6402
      %6435 = vst [vmem:[%s298 + $0x60] sm:$0xff] %v6403
      %6436 = vst [vmem:[%s298 + $0x68] sm:$0xff] %v6404
      %6437 = vst [vmem:[%s298 + $0x70] sm:$0xff] %v6405
      %6438 = vst [vmem:[%s298 + $0x78] sm:$0xff] %v6406
      %6439 = vst [vmem:[%s298 + $0x80] sm:$0xff] %v6407
      %6440 = vst [vmem:[%s298 + $0x88] sm:$0xff] %v6408
      %6441 = vst [vmem:[%s298 + $0x90] sm:$0xff] %v6409
      %6442 = vst [vmem:[%s298 + $0x98] sm:$0xff] %v6410
      %6443 = vst [vmem:[%s298 + $0xa0] sm:$0xff] %v6411
      %6444 = vst [vmem:[%s298 + $0xa8] sm:$0xff] %v6412
      %6445 = vst [vmem:[%s298 + $0xb0] sm:$0xff] %v6413
      %6446 = vst [vmem:[%s298 + $0xb8] sm:$0xff] %v6414
      %6447 = vst [vmem:[%s298 + $0xc0] sm:$0xff] %v6415
      %6448 = vst [vmem:[%s298 + $0xc8] sm:$0xff] %v6416
      %6449 = vst [vmem:[%s298 + $0xd0] sm:$0xff] %v6417
      %6450 = vst [vmem:[%s298 + $0xd8] sm:$0xff] %v6418
      %6451 = vst [vmem:[%s298 + $0xe0] sm:$0xff] %v6419
      %6452 = vst [vmem:[%s298 + $0xe8] sm:$0xff] %v6420
      %6453 = vst [vmem:[%s298 + $0xf0] sm:$0xff] %v6421
      %6454 = vst [vmem:[%s298 + $0xf8] sm:$0xff] %v6422
      %v6455 = vld [vmem:[%s2690 + $0x10] sm:$0xf]
      %v6456 = vld [vmem:[%s2690 + $0x14] sm:$0xf]
      %v6457 = vld [vmem:[%s2690 + $0x18] sm:$0xf]
      %v6458 = vld [vmem:[%s2690 + $0x1c] sm:$0xf]
      %v6459 = vld [vmem:[%s2690 + $0x20] sm:$0xf]
      %v6460 = vld [vmem:[%s2690 + $0x24] sm:$0xf]
      %v6461 = vld [vmem:[%s2690 + $0x28] sm:$0xf]
      %v6462 = vld [vmem:[%s2690 + $0x2c] sm:$0xf]
      %v6463 = vld [vmem:[%s2690 + $0x30] sm:$0xf]
      %v6464 = vld [vmem:[%s2690 + $0x34] sm:$0xf]
      %v6465 = vld [vmem:[%s2690 + $0x38] sm:$0xf]
      %v6466 = vld [vmem:[%s2690 + $0x3c] sm:$0xf]
      %v6467 = vld [vmem:[%s2690 + $0x40] sm:$0xf]
      %v6468 = vld [vmem:[%s2690 + $0x44] sm:$0xf]
      %v6469 = vld [vmem:[%s2690 + $0x48] sm:$0xf]
      %v6470 = vld [vmem:[%s2690 + $0x4c] sm:$0xf]
      %v6471 = vld [vmem:[%s2690 + $0x50] sm:$0xf]
      %v6472 = vld [vmem:[%s2690 + $0x54] sm:$0xf]
      %v6473 = vld [vmem:[%s2690 + $0x58] sm:$0xf]
      %v6474 = vld [vmem:[%s2690 + $0x5c] sm:$0xf]
      %v6475 = vld [vmem:[%s2690 + $0x60] sm:$0xf]
      %v6476 = vld [vmem:[%s2690 + $0x64] sm:$0xf]
      %v6477 = vld [vmem:[%s2690 + $0x68] sm:$0xf]
      %v6478 = vld [vmem:[%s2690 + $0x6c] sm:$0xf]
      %v6479 = vld [vmem:[%s2690 + $0x70] sm:$0xf]
      %v6480 = vld [vmem:[%s2690 + $0x74] sm:$0xf]
      %v6481 = vld [vmem:[%s2690 + $0x78] sm:$0xf]
      %v6482 = vld [vmem:[%s2690 + $0x7c] sm:$0xf]
      %v6483 = vld [vmem:[%s2690 + $0x80] sm:$0xf]
      %v6484 = vld [vmem:[%s2690 + $0x84] sm:$0xf]
      %v6485 = vld [vmem:[%s2690 + $0x88] sm:$0xf]
      %v6486 = vld [vmem:[%s2690 + $0x8c] sm:$0xf]
      %v6487 = vld [vmem:[%s298] sm:$0xff]
      %v6488 = vld [vmem:[%s298 + $0x8] sm:$0xff]
      %v6489 = vld [vmem:[%s298 + $0x10] sm:$0xff]
      %v6490 = vld [vmem:[%s298 + $0x18] sm:$0xff]
      %v6491 = vld [vmem:[%s298 + $0x20] sm:$0xff]
      %v6492 = vld [vmem:[%s298 + $0x28] sm:$0xff]
      %v6493 = vld [vmem:[%s298 + $0x30] sm:$0xff]
      %v6494 = vld [vmem:[%s298 + $0x38] sm:$0xff]
      %v6495 = vld [vmem:[%s298 + $0x40] sm:$0xff]
      %v6496 = vld [vmem:[%s298 + $0x48] sm:$0xff]
      %v6497 = vld [vmem:[%s298 + $0x50] sm:$0xff]
      %v6498 = vld [vmem:[%s298 + $0x58] sm:$0xff]
      %v6499 = vld [vmem:[%s298 + $0x60] sm:$0xff]
      %v6500 = vld [vmem:[%s298 + $0x68] sm:$0xff]
      %v6501 = vld [vmem:[%s298 + $0x70] sm:$0xff]
      %v6502 = vld [vmem:[%s298 + $0x78] sm:$0xff]
      %v6503 = vld [vmem:[%s298 + $0x80] sm:$0xff]
      %v6504 = vld [vmem:[%s298 + $0x88] sm:$0xff]
      %v6505 = vld [vmem:[%s298 + $0x90] sm:$0xff]
      %v6506 = vld [vmem:[%s298 + $0x98] sm:$0xff]
      %v6507 = vld [vmem:[%s298 + $0xa0] sm:$0xff]
      %v6508 = vld [vmem:[%s298 + $0xa8] sm:$0xff]
      %v6509 = vld [vmem:[%s298 + $0xb0] sm:$0xff]
      %v6510 = vld [vmem:[%s298 + $0xb8] sm:$0xff]
      %v6511 = vld [vmem:[%s298 + $0xc0] sm:$0xff]
      %v6512 = vld [vmem:[%s298 + $0xc8] sm:$0xff]
      %v6513 = vld [vmem:[%s298 + $0xd0] sm:$0xff]
      %v6514 = vld [vmem:[%s298 + $0xd8] sm:$0xff]
      %v6515 = vld [vmem:[%s298 + $0xe0] sm:$0xff]
      %v6516 = vld [vmem:[%s298 + $0xe8] sm:$0xff]
      %v6517 = vld [vmem:[%s298 + $0xf0] sm:$0xff]
      %v6518 = vld [vmem:[%s298 + $0xf8] sm:$0xff]
      %s6519 = scalar_lea.vmem %s4, 448
      %v6520 = vld [vmem:[%s6519] sm:$0xf]
      %v6521 = vld [vmem:[%s6519 + $0x4] sm:$0xf]
      %v6522 = vld [vmem:[%s6519 + $0x8] sm:$0xf]
      %v6523 = vld [vmem:[%s6519 + $0xc] sm:$0xf]
      %v6524 = vld [vmem:[%s6519 + $0x10] sm:$0xf]
      %v6525 = vld [vmem:[%s6519 + $0x14] sm:$0xf]
      %v6526 = vld [vmem:[%s6519 + $0x18] sm:$0xf]
      %v6527 = vld [vmem:[%s6519 + $0x1c] sm:$0xf]
      %v6528 = vld [vmem:[%s6519 + $0x20] sm:$0xf]
      %v6529 = vld [vmem:[%s6519 + $0x24] sm:$0xf]
      %v6530 = vld [vmem:[%s6519 + $0x28] sm:$0xf]
      %v6531 = vld [vmem:[%s6519 + $0x2c] sm:$0xf]
      %v6532 = vld [vmem:[%s6519 + $0x30] sm:$0xf]
      %v6533 = vld [vmem:[%s6519 + $0x34] sm:$0xf]
      %v6534 = vld [vmem:[%s6519 + $0x38] sm:$0xf]
      %v6535 = vld [vmem:[%s6519 + $0x3c] sm:$0xf]
      %v6568 = vunpack.c.l.b16 %v6455
      %v6569 = vunpack.c.l.b16 %v6456
      %v6570 = vunpack.c.l.b16 %v6457
      %v6571 = vunpack.c.l.b16 %v6458
      %v6572 = vunpack.c.l.b16 %v6459
      %v6573 = vunpack.c.l.b16 %v6460
      %v6574 = vunpack.c.l.b16 %v6461
      %v6575 = vunpack.c.l.b16 %v6462
      %v6576 = vunpack.c.l.b16 %v6463
      %v6577 = vunpack.c.l.b16 %v6464
      %v6578 = vunpack.c.l.b16 %v6465
      %v6579 = vunpack.c.l.b16 %v6466
      %v6580 = vunpack.c.l.b16 %v6467
      %v6581 = vunpack.c.l.b16 %v6468
      %v6582 = vunpack.c.l.b16 %v6469
      %v6583 = vunpack.c.l.b16 %v6470
      %v6584 = vunpack.c.l.b16 %v6471
      %v6585 = vunpack.c.l.b16 %v6472
      %v6586 = vunpack.c.l.b16 %v6473
      %v6587 = vunpack.c.l.b16 %v6474
      %v6588 = vunpack.c.l.b16 %v6475
      %v6589 = vunpack.c.l.b16 %v6476
      %v6590 = vunpack.c.l.b16 %v6477
      %v6591 = vunpack.c.l.b16 %v6478
      %v6592 = vunpack.c.l.b16 %v6479
      %v6593 = vunpack.c.l.b16 %v6480
      %v6594 = vunpack.c.l.b16 %v6481
      %v6595 = vunpack.c.l.b16 %v6482
      %v6596 = vunpack.c.l.b16 %v6483
      %v6597 = vunpack.c.l.b16 %v6484
      %v6598 = vunpack.c.l.b16 %v6485
      %v6599 = vunpack.c.l.b16 %v6486
      %v6600 = vpack.c.b16 %v6569, %v6568
      %v6601 = vpack.c.b16 %v6571, %v6570
      %v6602 = vpack.c.b16 %v6573, %v6572
      %v6603 = vpack.c.b16 %v6575, %v6574
      %v6604 = vpack.c.b16 %v6577, %v6576
      %v6605 = vpack.c.b16 %v6579, %v6578
      %v6606 = vpack.c.b16 %v6581, %v6580
      %v6607 = vpack.c.b16 %v6583, %v6582
      %v6608 = vpack.c.b16 %v6585, %v6584
      %v6609 = vpack.c.b16 %v6587, %v6586
      %v6610 = vpack.c.b16 %v6589, %v6588
      %v6611 = vpack.c.b16 %v6591, %v6590
      %v6612 = vpack.c.b16 %v6593, %v6592
      %v6613 = vpack.c.b16 %v6595, %v6594
      %v6614 = vpack.c.b16 %v6597, %v6596
      %v6615 = vpack.c.b16 %v6599, %v6598
      %v6648 = vunpack.c.l.b16 %v6520
      %v6649 = vunpack.c.l.b16 %v6521
      %v6650 = vunpack.c.l.b16 %v6522
      %v6651 = vunpack.c.l.b16 %v6523
      %v6652 = vunpack.c.l.b16 %v6524
      %v6653 = vunpack.c.l.b16 %v6525
      %v6654 = vunpack.c.l.b16 %v6526
      %v6655 = vunpack.c.l.b16 %v6527
      %v6656 = vunpack.c.l.b16 %v6528
      %v6657 = vunpack.c.l.b16 %v6529
      %v6658 = vunpack.c.l.b16 %v6530
      %v6659 = vunpack.c.l.b16 %v6531
      %v6660 = vunpack.c.l.b16 %v6532
      %v6661 = vunpack.c.l.b16 %v6533
      %v6662 = vunpack.c.l.b16 %v6534
      %v6663 = vunpack.c.l.b16 %v6535
      %v6664 = vpack.c.b16 %v6649, %v6648
      %v6665 = vpack.c.b16 %v6651, %v6650
      %v6666 = vpack.c.b16 %v6653, %v6652
      %v6667 = vpack.c.b16 %v6655, %v6654
      %v6668 = vpack.c.b16 %v6657, %v6656
      %v6669 = vpack.c.b16 %v6659, %v6658
      %v6670 = vpack.c.b16 %v6661, %v6660
      %v6671 = vpack.c.b16 %v6663, %v6662
      %6680 = vmatprep.subr.bf16.mxu0 0
      %6681 = vmatpush1.bf16.msra.mxu0 %v6671
      %6682 = vmatprep.subr.bf16.mxu0 0
      %6683 = vmatpush1.bf16.msra.mxu0 %v6670
      %6684 = vmatprep.subr.bf16.mxu0 0
      %6685 = vmatpush1.bf16.msra.mxu0 %v6669
      %6686 = vmatprep.subr.bf16.mxu0 0
      %6687 = vmatpush1.bf16.msra.mxu0 %v6668
      %6688 = vmatprep.subr.bf16.mxu0 0
      %6689 = vmatpush1.bf16.msra.mxu0 %v6667
      %6690 = vmatprep.subr.bf16.mxu0 0
      %6691 = vmatpush1.bf16.msra.mxu0 %v6666
      %6692 = vmatprep.subr.bf16.mxu0 0
      %6693 = vmatpush1.bf16.msra.mxu0 %v6665
      %6694 = vmatprep.subr.bf16.mxu0 0
      %6695 = vmatpush1.bf16.msra.mxu0 %v6664
      %6696 = vmatprep.subr.bf16.mxu0 0
      %6697 = vmatpush2.bf16.msra.mxu0 0
      %6698 = vmatprep.subr.bf16.mxu0 0
      %6699 = vmatpush2.bf16.msra.mxu0 0
      %6700 = vmatprep.subr.bf16.mxu0 0
      %6701 = vmatpush2.bf16.msra.mxu0 0
      %6702 = vmatprep.subr.bf16.mxu0 0
      %6703 = vmatpush2.bf16.msra.mxu0 0
      %6704 = vmatprep.subr.bf16.mxu0 0
      %6705 = vmatpush2.bf16.msra.mxu0 0
      %6706 = vmatprep.subr.bf16.mxu0 0
      %6707 = vmatpush2.bf16.msra.mxu0 0
      %6708 = vmatprep.subr.bf16.mxu0 0
      %6709 = vmatpush2.bf16.msra.mxu0 0
      %6710 = vmatprep.subr.bf16.mxu0 0
      %6711 = vmatpush2.bf16.msra.mxu0 0
      %6712 = vmatprep.mubr.bf16.mxu0 0
      %6713 = vmatmul.mubr.bf16.gmra.mxu0 %v6600
      %v6714 = vpop.f32.mrf.mxu0
      %v6715 = vadd.f32 0.0, %v6714
      %v6716 = vpop.f32.mrf.mxu0
      %v6717 = vpop.f32.mrf.mxu0
      %v6718 = vadd.f32 0.0, %v6717
      %v6719 = vpop.f32.mrf.mxu0
      %6720 = vmatprep.mubr.bf16.mxu0 0
      %6721 = vmatmul.mubr.bf16.gmra.mxu0 %v6601
      %v6722 = vpop.f32.mrf.mxu0
      %v6723 = vadd.f32 0.0, %v6722
      %v6724 = vpop.f32.mrf.mxu0
      %v6725 = vpop.f32.mrf.mxu0
      %v6726 = vadd.f32 0.0, %v6725
      %v6727 = vpop.f32.mrf.mxu0
      %6728 = vmatprep.mubr.bf16.mxu0 0
      %6729 = vmatmul.mubr.bf16.gmra.mxu0 %v6602
      %v6730 = vpop.f32.mrf.mxu0
      %v6731 = vadd.f32 0.0, %v6730
      %v6732 = vpop.f32.mrf.mxu0
      %v6733 = vpop.f32.mrf.mxu0
      %v6734 = vadd.f32 0.0, %v6733
      %v6735 = vpop.f32.mrf.mxu0
      %6736 = vmatprep.mubr.bf16.mxu0 0
      %6737 = vmatmul.mubr.bf16.gmra.mxu0 %v6603
      %v6738 = vpop.f32.mrf.mxu0
      %v6739 = vadd.f32 0.0, %v6738
      %v6740 = vpop.f32.mrf.mxu0
      %v6741 = vpop.f32.mrf.mxu0
      %v6742 = vadd.f32 0.0, %v6741
      %v6743 = vpop.f32.mrf.mxu0
      %6744 = vmatprep.mubr.bf16.mxu0 0
      %6745 = vmatmul.mubr.bf16.gmra.mxu0 %v6604
      %v6746 = vpop.f32.mrf.mxu0
      %v6747 = vadd.f32 0.0, %v6746
      %v6748 = vpop.f32.mrf.mxu0
      %v6749 = vpop.f32.mrf.mxu0
      %v6750 = vadd.f32 0.0, %v6749
      %v6751 = vpop.f32.mrf.mxu0
      %6752 = vmatprep.mubr.bf16.mxu0 0
      %6753 = vmatmul.mubr.bf16.gmra.mxu0 %v6605
      %v6754 = vpop.f32.mrf.mxu0
      %v6755 = vadd.f32 0.0, %v6754
      %v6756 = vpop.f32.mrf.mxu0
      %v6757 = vpop.f32.mrf.mxu0
      %v6758 = vadd.f32 0.0, %v6757
      %v6759 = vpop.f32.mrf.mxu0
      %6760 = vmatprep.mubr.bf16.mxu0 0
      %6761 = vmatmul.mubr.bf16.gmra.mxu0 %v6606
      %v6762 = vpop.f32.mrf.mxu0
      %v6763 = vadd.f32 0.0, %v6762
      %v6764 = vpop.f32.mrf.mxu0
      %v6765 = vpop.f32.mrf.mxu0
      %v6766 = vadd.f32 0.0, %v6765
      %v6767 = vpop.f32.mrf.mxu0
      %6768 = vmatprep.mubr.bf16.mxu0 0
      %6769 = vmatmul.mubr.bf16.gmra.mxu0 %v6607
      %v6770 = vpop.f32.mrf.mxu0
      %v6771 = vadd.f32 0.0, %v6770
      %v6772 = vpop.f32.mrf.mxu0
      %v6773 = vpop.f32.mrf.mxu0
      %v6774 = vadd.f32 0.0, %v6773
      %v6775 = vpop.f32.mrf.mxu0
      %6776 = vmatprep.mubr.bf16.mxu0 0
      %6777 = vmatmul.mubr.bf16.gmra.mxu0 %v6608
      %v6778 = vpop.f32.mrf.mxu0
      %v6779 = vadd.f32 0.0, %v6778
      %v6780 = vpop.f32.mrf.mxu0
      %v6781 = vpop.f32.mrf.mxu0
      %v6782 = vadd.f32 0.0, %v6781
      %v6783 = vpop.f32.mrf.mxu0
      %6784 = vmatprep.mubr.bf16.mxu0 0
      %6785 = vmatmul.mubr.bf16.gmra.mxu0 %v6609
      %v6786 = vpop.f32.mrf.mxu0
      %v6787 = vadd.f32 0.0, %v6786
      %v6788 = vpop.f32.mrf.mxu0
      %v6789 = vpop.f32.mrf.mxu0
      %v6790 = vadd.f32 0.0, %v6789
      %v6791 = vpop.f32.mrf.mxu0
      %6792 = vmatprep.mubr.bf16.mxu0 0
      %6793 = vmatmul.mubr.bf16.gmra.mxu0 %v6610
      %v6794 = vpop.f32.mrf.mxu0
      %v6795 = vadd.f32 0.0, %v6794
      %v6796 = vpop.f32.mrf.mxu0
      %v6797 = vpop.f32.mrf.mxu0
      %v6798 = vadd.f32 0.0, %v6797
      %v6799 = vpop.f32.mrf.mxu0
      %6800 = vmatprep.mubr.bf16.mxu0 0
      %6801 = vmatmul.mubr.bf16.gmra.mxu0 %v6611
      %v6802 = vpop.f32.mrf.mxu0
      %v6803 = vadd.f32 0.0, %v6802
      %v6804 = vpop.f32.mrf.mxu0
      %v6805 = vpop.f32.mrf.mxu0
      %v6806 = vadd.f32 0.0, %v6805
      %v6807 = vpop.f32.mrf.mxu0
      %6808 = vmatprep.mubr.bf16.mxu0 0
      %6809 = vmatmul.mubr.bf16.gmra.mxu0 %v6612
      %v6810 = vpop.f32.mrf.mxu0
      %v6811 = vadd.f32 0.0, %v6810
      %v6812 = vpop.f32.mrf.mxu0
      %v6813 = vpop.f32.mrf.mxu0
      %v6814 = vadd.f32 0.0, %v6813
      %v6815 = vpop.f32.mrf.mxu0
      %6816 = vmatprep.mubr.bf16.mxu0 0
      %6817 = vmatmul.mubr.bf16.gmra.mxu0 %v6613
      %v6818 = vpop.f32.mrf.mxu0
      %v6819 = vadd.f32 0.0, %v6818
      %v6820 = vpop.f32.mrf.mxu0
      %v6821 = vpop.f32.mrf.mxu0
      %v6822 = vadd.f32 0.0, %v6821
      %v6823 = vpop.f32.mrf.mxu0
      %6824 = vmatprep.mubr.bf16.mxu0 0
      %6825 = vmatmul.mubr.bf16.gmra.mxu0 %v6614
      %v6826 = vpop.f32.mrf.mxu0
      %v6827 = vadd.f32 0.0, %v6826
      %v6828 = vpop.f32.mrf.mxu0
      %v6829 = vpop.f32.mrf.mxu0
      %v6830 = vadd.f32 0.0, %v6829
      %v6831 = vpop.f32.mrf.mxu0
      %6832 = vmatprep.mubr.bf16.mxu0 0
      %6833 = vmatmul.mubr.bf16.gmra.mxu0 %v6615
      %v6834 = vpop.f32.mrf.mxu0
      %v6835 = vadd.f32 0.0, %v6834
      %v6836 = vpop.f32.mrf.mxu0
      %v6837 = vpop.f32.mrf.mxu0
      %v6838 = vadd.f32 0.0, %v6837
      %v6839 = vpop.f32.mrf.mxu0
      %6840 = vdwg.mxu0
      %v6841 = vadd.f32 %v6487, %v6715
      %v6842 = vadd.f32 %v6488, %v6718
      %v6843 = vadd.f32 %v6489, %v6723
      %v6844 = vadd.f32 %v6490, %v6726
      %v6845 = vadd.f32 %v6491, %v6731
      %v6846 = vadd.f32 %v6492, %v6734
      %v6847 = vadd.f32 %v6493, %v6739
      %v6848 = vadd.f32 %v6494, %v6742
      %v6849 = vadd.f32 %v6495, %v6747
      %v6850 = vadd.f32 %v6496, %v6750
      %v6851 = vadd.f32 %v6497, %v6755
      %v6852 = vadd.f32 %v6498, %v6758
      %v6853 = vadd.f32 %v6499, %v6763
      %v6854 = vadd.f32 %v6500, %v6766
      %v6855 = vadd.f32 %v6501, %v6771
      %v6856 = vadd.f32 %v6502, %v6774
      %v6857 = vadd.f32 %v6503, %v6779
      %v6858 = vadd.f32 %v6504, %v6782
      %v6859 = vadd.f32 %v6505, %v6787
      %v6860 = vadd.f32 %v6506, %v6790
      %v6861 = vadd.f32 %v6507, %v6795
      %v6862 = vadd.f32 %v6508, %v6798
      %v6863 = vadd.f32 %v6509, %v6803
      %v6864 = vadd.f32 %v6510, %v6806
      %v6865 = vadd.f32 %v6511, %v6811
      %v6866 = vadd.f32 %v6512, %v6814
      %v6867 = vadd.f32 %v6513, %v6819
      %v6868 = vadd.f32 %v6514, %v6822
      %v6869 = vadd.f32 %v6515, %v6827
      %v6870 = vadd.f32 %v6516, %v6830
      %v6871 = vadd.f32 %v6517, %v6835
      %v6872 = vadd.f32 %v6518, %v6838
      %6873 = vst [vmem:[%s298] sm:$0xff] %v6841
      %6874 = vst [vmem:[%s298 + $0x8] sm:$0xff] %v6842
      %6875 = vst [vmem:[%s298 + $0x10] sm:$0xff] %v6843
      %6876 = vst [vmem:[%s298 + $0x18] sm:$0xff] %v6844
      %6877 = vst [vmem:[%s298 + $0x20] sm:$0xff] %v6845
      %6878 = vst [vmem:[%s298 + $0x28] sm:$0xff] %v6846
      %6879 = vst [vmem:[%s298 + $0x30] sm:$0xff] %v6847
      %6880 = vst [vmem:[%s298 + $0x38] sm:$0xff] %v6848
      %6881 = vst [vmem:[%s298 + $0x40] sm:$0xff] %v6849
      %6882 = vst [vmem:[%s298 + $0x48] sm:$0xff] %v6850
      %6883 = vst [vmem:[%s298 + $0x50] sm:$0xff] %v6851
      %6884 = vst [vmem:[%s298 + $0x58] sm:$0xff] %v6852
      %6885 = vst [vmem:[%s298 + $0x60] sm:$0xff] %v6853
      %6886 = vst [vmem:[%s298 + $0x68] sm:$0xff] %v6854
      %6887 = vst [vmem:[%s298 + $0x70] sm:$0xff] %v6855
      %6888 = vst [vmem:[%s298 + $0x78] sm:$0xff] %v6856
      %6889 = vst [vmem:[%s298 + $0x80] sm:$0xff] %v6857
      %6890 = vst [vmem:[%s298 + $0x88] sm:$0xff] %v6858
      %6891 = vst [vmem:[%s298 + $0x90] sm:$0xff] %v6859
      %6892 = vst [vmem:[%s298 + $0x98] sm:$0xff] %v6860
      %6893 = vst [vmem:[%s298 + $0xa0] sm:$0xff] %v6861
      %6894 = vst [vmem:[%s298 + $0xa8] sm:$0xff] %v6862
      %6895 = vst [vmem:[%s298 + $0xb0] sm:$0xff] %v6863
      %6896 = vst [vmem:[%s298 + $0xb8] sm:$0xff] %v6864
      %6897 = vst [vmem:[%s298 + $0xc0] sm:$0xff] %v6865
      %6898 = vst [vmem:[%s298 + $0xc8] sm:$0xff] %v6866
      %6899 = vst [vmem:[%s298 + $0xd0] sm:$0xff] %v6867
      %6900 = vst [vmem:[%s298 + $0xd8] sm:$0xff] %v6868
      %6901 = vst [vmem:[%s298 + $0xe0] sm:$0xff] %v6869
      %6902 = vst [vmem:[%s298 + $0xe8] sm:$0xff] %v6870
      %6903 = vst [vmem:[%s298 + $0xf0] sm:$0xff] %v6871
      %6904 = vst [vmem:[%s298 + $0xf8] sm:$0xff] %v6872
      %v6905 = vld [vmem:[%s2968 + $0x10] sm:$0xf]
      %v6906 = vld [vmem:[%s2968 + $0x14] sm:$0xf]
      %v6907 = vld [vmem:[%s2968 + $0x18] sm:$0xf]
      %v6908 = vld [vmem:[%s2968 + $0x1c] sm:$0xf]
      %v6909 = vld [vmem:[%s2968 + $0x20] sm:$0xf]
      %v6910 = vld [vmem:[%s2968 + $0x24] sm:$0xf]
      %v6911 = vld [vmem:[%s2968 + $0x28] sm:$0xf]
      %v6912 = vld [vmem:[%s2968 + $0x2c] sm:$0xf]
      %v6913 = vld [vmem:[%s2968 + $0x30] sm:$0xf]
      %v6914 = vld [vmem:[%s2968 + $0x34] sm:$0xf]
      %v6915 = vld [vmem:[%s2968 + $0x38] sm:$0xf]
      %v6916 = vld [vmem:[%s2968 + $0x3c] sm:$0xf]
      %v6917 = vld [vmem:[%s2968 + $0x40] sm:$0xf]
      %v6918 = vld [vmem:[%s2968 + $0x44] sm:$0xf]
      %v6919 = vld [vmem:[%s2968 + $0x48] sm:$0xf]
      %v6920 = vld [vmem:[%s2968 + $0x4c] sm:$0xf]
      %v6921 = vld [vmem:[%s2968 + $0x50] sm:$0xf]
      %v6922 = vld [vmem:[%s2968 + $0x54] sm:$0xf]
      %v6923 = vld [vmem:[%s2968 + $0x58] sm:$0xf]
      %v6924 = vld [vmem:[%s2968 + $0x5c] sm:$0xf]
      %v6925 = vld [vmem:[%s2968 + $0x60] sm:$0xf]
      %v6926 = vld [vmem:[%s2968 + $0x64] sm:$0xf]
      %v6927 = vld [vmem:[%s2968 + $0x68] sm:$0xf]
      %v6928 = vld [vmem:[%s2968 + $0x6c] sm:$0xf]
      %v6929 = vld [vmem:[%s2968 + $0x70] sm:$0xf]
      %v6930 = vld [vmem:[%s2968 + $0x74] sm:$0xf]
      %v6931 = vld [vmem:[%s2968 + $0x78] sm:$0xf]
      %v6932 = vld [vmem:[%s2968 + $0x7c] sm:$0xf]
      %v6933 = vld [vmem:[%s2968 + $0x80] sm:$0xf]
      %v6934 = vld [vmem:[%s2968 + $0x84] sm:$0xf]
      %v6935 = vld [vmem:[%s2968 + $0x88] sm:$0xf]
      %v6936 = vld [vmem:[%s2968 + $0x8c] sm:$0xf]
      %v6937 = vld [vmem:[%s298] sm:$0xff]
      %v6938 = vld [vmem:[%s298 + $0x8] sm:$0xff]
      %v6939 = vld [vmem:[%s298 + $0x10] sm:$0xff]
      %v6940 = vld [vmem:[%s298 + $0x18] sm:$0xff]
      %v6941 = vld [vmem:[%s298 + $0x20] sm:$0xff]
      %v6942 = vld [vmem:[%s298 + $0x28] sm:$0xff]
      %v6943 = vld [vmem:[%s298 + $0x30] sm:$0xff]
      %v6944 = vld [vmem:[%s298 + $0x38] sm:$0xff]
      %v6945 = vld [vmem:[%s298 + $0x40] sm:$0xff]
      %v6946 = vld [vmem:[%s298 + $0x48] sm:$0xff]
      %v6947 = vld [vmem:[%s298 + $0x50] sm:$0xff]
      %v6948 = vld [vmem:[%s298 + $0x58] sm:$0xff]
      %v6949 = vld [vmem:[%s298 + $0x60] sm:$0xff]
      %v6950 = vld [vmem:[%s298 + $0x68] sm:$0xff]
      %v6951 = vld [vmem:[%s298 + $0x70] sm:$0xff]
      %v6952 = vld [vmem:[%s298 + $0x78] sm:$0xff]
      %v6953 = vld [vmem:[%s298 + $0x80] sm:$0xff]
      %v6954 = vld [vmem:[%s298 + $0x88] sm:$0xff]
      %v6955 = vld [vmem:[%s298 + $0x90] sm:$0xff]
      %v6956 = vld [vmem:[%s298 + $0x98] sm:$0xff]
      %v6957 = vld [vmem:[%s298 + $0xa0] sm:$0xff]
      %v6958 = vld [vmem:[%s298 + $0xa8] sm:$0xff]
      %v6959 = vld [vmem:[%s298 + $0xb0] sm:$0xff]
      %v6960 = vld [vmem:[%s298 + $0xb8] sm:$0xff]
      %v6961 = vld [vmem:[%s298 + $0xc0] sm:$0xff]
      %v6962 = vld [vmem:[%s298 + $0xc8] sm:$0xff]
      %v6963 = vld [vmem:[%s298 + $0xd0] sm:$0xff]
      %v6964 = vld [vmem:[%s298 + $0xd8] sm:$0xff]
      %v6965 = vld [vmem:[%s298 + $0xe0] sm:$0xff]
      %v6966 = vld [vmem:[%s298 + $0xe8] sm:$0xff]
      %v6967 = vld [vmem:[%s298 + $0xf0] sm:$0xff]
      %v6968 = vld [vmem:[%s298 + $0xf8] sm:$0xff]
      %s6969 = scalar_lea.vmem %s4, 512
      %v6970 = vld [vmem:[%s6969] sm:$0xf]
      %v6971 = vld [vmem:[%s6969 + $0x4] sm:$0xf]
      %v6972 = vld [vmem:[%s6969 + $0x8] sm:$0xf]
      %v6973 = vld [vmem:[%s6969 + $0xc] sm:$0xf]
      %v6974 = vld [vmem:[%s6969 + $0x10] sm:$0xf]
      %v6975 = vld [vmem:[%s6969 + $0x14] sm:$0xf]
      %v6976 = vld [vmem:[%s6969 + $0x18] sm:$0xf]
      %v6977 = vld [vmem:[%s6969 + $0x1c] sm:$0xf]
      %v6978 = vld [vmem:[%s6969 + $0x20] sm:$0xf]
      %v6979 = vld [vmem:[%s6969 + $0x24] sm:$0xf]
      %v6980 = vld [vmem:[%s6969 + $0x28] sm:$0xf]
      %v6981 = vld [vmem:[%s6969 + $0x2c] sm:$0xf]
      %v6982 = vld [vmem:[%s6969 + $0x30] sm:$0xf]
      %v6983 = vld [vmem:[%s6969 + $0x34] sm:$0xf]
      %v6984 = vld [vmem:[%s6969 + $0x38] sm:$0xf]
      %v6985 = vld [vmem:[%s6969 + $0x3c] sm:$0xf]
      %v7018 = vunpack.c.l.b16 %v6905
      %v7019 = vunpack.c.l.b16 %v6906
      %v7020 = vunpack.c.l.b16 %v6907
      %v7021 = vunpack.c.l.b16 %v6908
      %v7022 = vunpack.c.l.b16 %v6909
      %v7023 = vunpack.c.l.b16 %v6910
      %v7024 = vunpack.c.l.b16 %v6911
      %v7025 = vunpack.c.l.b16 %v6912
      %v7026 = vunpack.c.l.b16 %v6913
      %v7027 = vunpack.c.l.b16 %v6914
      %v7028 = vunpack.c.l.b16 %v6915
      %v7029 = vunpack.c.l.b16 %v6916
      %v7030 = vunpack.c.l.b16 %v6917
      %v7031 = vunpack.c.l.b16 %v6918
      %v7032 = vunpack.c.l.b16 %v6919
      %v7033 = vunpack.c.l.b16 %v6920
      %v7034 = vunpack.c.l.b16 %v6921
      %v7035 = vunpack.c.l.b16 %v6922
      %v7036 = vunpack.c.l.b16 %v6923
      %v7037 = vunpack.c.l.b16 %v6924
      %v7038 = vunpack.c.l.b16 %v6925
      %v7039 = vunpack.c.l.b16 %v6926
      %v7040 = vunpack.c.l.b16 %v6927
      %v7041 = vunpack.c.l.b16 %v6928
      %v7042 = vunpack.c.l.b16 %v6929
      %v7043 = vunpack.c.l.b16 %v6930
      %v7044 = vunpack.c.l.b16 %v6931
      %v7045 = vunpack.c.l.b16 %v6932
      %v7046 = vunpack.c.l.b16 %v6933
      %v7047 = vunpack.c.l.b16 %v6934
      %v7048 = vunpack.c.l.b16 %v6935
      %v7049 = vunpack.c.l.b16 %v6936
      %v7050 = vpack.c.b16 %v7019, %v7018
      %v7051 = vpack.c.b16 %v7021, %v7020
      %v7052 = vpack.c.b16 %v7023, %v7022
      %v7053 = vpack.c.b16 %v7025, %v7024
      %v7054 = vpack.c.b16 %v7027, %v7026
      %v7055 = vpack.c.b16 %v7029, %v7028
      %v7056 = vpack.c.b16 %v7031, %v7030
      %v7057 = vpack.c.b16 %v7033, %v7032
      %v7058 = vpack.c.b16 %v7035, %v7034
      %v7059 = vpack.c.b16 %v7037, %v7036
      %v7060 = vpack.c.b16 %v7039, %v7038
      %v7061 = vpack.c.b16 %v7041, %v7040
      %v7062 = vpack.c.b16 %v7043, %v7042
      %v7063 = vpack.c.b16 %v7045, %v7044
      %v7064 = vpack.c.b16 %v7047, %v7046
      %v7065 = vpack.c.b16 %v7049, %v7048
      %v7098 = vunpack.c.l.b16 %v6970
      %v7099 = vunpack.c.l.b16 %v6971
      %v7100 = vunpack.c.l.b16 %v6972
      %v7101 = vunpack.c.l.b16 %v6973
      %v7102 = vunpack.c.l.b16 %v6974
      %v7103 = vunpack.c.l.b16 %v6975
      %v7104 = vunpack.c.l.b16 %v6976
      %v7105 = vunpack.c.l.b16 %v6977
      %v7106 = vunpack.c.l.b16 %v6978
      %v7107 = vunpack.c.l.b16 %v6979
      %v7108 = vunpack.c.l.b16 %v6980
      %v7109 = vunpack.c.l.b16 %v6981
      %v7110 = vunpack.c.l.b16 %v6982
      %v7111 = vunpack.c.l.b16 %v6983
      %v7112 = vunpack.c.l.b16 %v6984
      %v7113 = vunpack.c.l.b16 %v6985
      %v7114 = vpack.c.b16 %v7099, %v7098
      %v7115 = vpack.c.b16 %v7101, %v7100
      %v7116 = vpack.c.b16 %v7103, %v7102
      %v7117 = vpack.c.b16 %v7105, %v7104
      %v7118 = vpack.c.b16 %v7107, %v7106
      %v7119 = vpack.c.b16 %v7109, %v7108
      %v7120 = vpack.c.b16 %v7111, %v7110
      %v7121 = vpack.c.b16 %v7113, %v7112
      %7130 = vmatprep.subr.bf16.mxu0 0
      %7131 = vmatpush1.bf16.msra.mxu0 %v7121
      %7132 = vmatprep.subr.bf16.mxu0 0
      %7133 = vmatpush1.bf16.msra.mxu0 %v7120
      %7134 = vmatprep.subr.bf16.mxu0 0
      %7135 = vmatpush1.bf16.msra.mxu0 %v7119
      %7136 = vmatprep.subr.bf16.mxu0 0
      %7137 = vmatpush1.bf16.msra.mxu0 %v7118
      %7138 = vmatprep.subr.bf16.mxu0 0
      %7139 = vmatpush1.bf16.msra.mxu0 %v7117
      %7140 = vmatprep.subr.bf16.mxu0 0
      %7141 = vmatpush1.bf16.msra.mxu0 %v7116
      %7142 = vmatprep.subr.bf16.mxu0 0
      %7143 = vmatpush1.bf16.msra.mxu0 %v7115
      %7144 = vmatprep.subr.bf16.mxu0 0
      %7145 = vmatpush1.bf16.msra.mxu0 %v7114
      %7146 = vmatprep.subr.bf16.mxu0 0
      %7147 = vmatpush2.bf16.msra.mxu0 0
      %7148 = vmatprep.subr.bf16.mxu0 0
      %7149 = vmatpush2.bf16.msra.mxu0 0
      %7150 = vmatprep.subr.bf16.mxu0 0
      %7151 = vmatpush2.bf16.msra.mxu0 0
      %7152 = vmatprep.subr.bf16.mxu0 0
      %7153 = vmatpush2.bf16.msra.mxu0 0
      %7154 = vmatprep.subr.bf16.mxu0 0
      %7155 = vmatpush2.bf16.msra.mxu0 0
      %7156 = vmatprep.subr.bf16.mxu0 0
      %7157 = vmatpush2.bf16.msra.mxu0 0
      %7158 = vmatprep.subr.bf16.mxu0 0
      %7159 = vmatpush2.bf16.msra.mxu0 0
      %7160 = vmatprep.subr.bf16.mxu0 0
      %7161 = vmatpush2.bf16.msra.mxu0 0
      %7162 = vmatprep.mubr.bf16.mxu0 0
      %7163 = vmatmul.mubr.bf16.gmra.mxu0 %v7050
      %v7164 = vpop.f32.mrf.mxu0
      %v7165 = vadd.f32 0.0, %v7164
      %v7166 = vpop.f32.mrf.mxu0
      %v7167 = vpop.f32.mrf.mxu0
      %v7168 = vadd.f32 0.0, %v7167
      %v7169 = vpop.f32.mrf.mxu0
      %7170 = vmatprep.mubr.bf16.mxu0 0
      %7171 = vmatmul.mubr.bf16.gmra.mxu0 %v7051
      %v7172 = vpop.f32.mrf.mxu0
      %v7173 = vadd.f32 0.0, %v7172
      %v7174 = vpop.f32.mrf.mxu0
      %v7175 = vpop.f32.mrf.mxu0
      %v7176 = vadd.f32 0.0, %v7175
      %v7177 = vpop.f32.mrf.mxu0
      %7178 = vmatprep.mubr.bf16.mxu0 0
      %7179 = vmatmul.mubr.bf16.gmra.mxu0 %v7052
      %v7180 = vpop.f32.mrf.mxu0
      %v7181 = vadd.f32 0.0, %v7180
      %v7182 = vpop.f32.mrf.mxu0
      %v7183 = vpop.f32.mrf.mxu0
      %v7184 = vadd.f32 0.0, %v7183
      %v7185 = vpop.f32.mrf.mxu0
      %7186 = vmatprep.mubr.bf16.mxu0 0
      %7187 = vmatmul.mubr.bf16.gmra.mxu0 %v7053
      %v7188 = vpop.f32.mrf.mxu0
      %v7189 = vadd.f32 0.0, %v7188
      %v7190 = vpop.f32.mrf.mxu0
      %v7191 = vpop.f32.mrf.mxu0
      %v7192 = vadd.f32 0.0, %v7191
      %v7193 = vpop.f32.mrf.mxu0
      %7194 = vmatprep.mubr.bf16.mxu0 0
      %7195 = vmatmul.mubr.bf16.gmra.mxu0 %v7054
      %v7196 = vpop.f32.mrf.mxu0
      %v7197 = vadd.f32 0.0, %v7196
      %v7198 = vpop.f32.mrf.mxu0
      %v7199 = vpop.f32.mrf.mxu0
      %v7200 = vadd.f32 0.0, %v7199
      %v7201 = vpop.f32.mrf.mxu0
      %7202 = vmatprep.mubr.bf16.mxu0 0
      %7203 = vmatmul.mubr.bf16.gmra.mxu0 %v7055
      %v7204 = vpop.f32.mrf.mxu0
      %v7205 = vadd.f32 0.0, %v7204
      %v7206 = vpop.f32.mrf.mxu0
      %v7207 = vpop.f32.mrf.mxu0
      %v7208 = vadd.f32 0.0, %v7207
      %v7209 = vpop.f32.mrf.mxu0
      %7210 = vmatprep.mubr.bf16.mxu0 0
      %7211 = vmatmul.mubr.bf16.gmra.mxu0 %v7056
      %v7212 = vpop.f32.mrf.mxu0
      %v7213 = vadd.f32 0.0, %v7212
      %v7214 = vpop.f32.mrf.mxu0
      %v7215 = vpop.f32.mrf.mxu0
      %v7216 = vadd.f32 0.0, %v7215
      %v7217 = vpop.f32.mrf.mxu0
      %7218 = vmatprep.mubr.bf16.mxu0 0
      %7219 = vmatmul.mubr.bf16.gmra.mxu0 %v7057
      %v7220 = vpop.f32.mrf.mxu0
      %v7221 = vadd.f32 0.0, %v7220
      %v7222 = vpop.f32.mrf.mxu0
      %v7223 = vpop.f32.mrf.mxu0
      %v7224 = vadd.f32 0.0, %v7223
      %v7225 = vpop.f32.mrf.mxu0
      %7226 = vmatprep.mubr.bf16.mxu0 0
      %7227 = vmatmul.mubr.bf16.gmra.mxu0 %v7058
      %v7228 = vpop.f32.mrf.mxu0
      %v7229 = vadd.f32 0.0, %v7228
      %v7230 = vpop.f32.mrf.mxu0
      %v7231 = vpop.f32.mrf.mxu0
      %v7232 = vadd.f32 0.0, %v7231
      %v7233 = vpop.f32.mrf.mxu0
      %7234 = vmatprep.mubr.bf16.mxu0 0
      %7235 = vmatmul.mubr.bf16.gmra.mxu0 %v7059
      %v7236 = vpop.f32.mrf.mxu0
      %v7237 = vadd.f32 0.0, %v7236
      %v7238 = vpop.f32.mrf.mxu0
      %v7239 = vpop.f32.mrf.mxu0
      %v7240 = vadd.f32 0.0, %v7239
      %v7241 = vpop.f32.mrf.mxu0
      %7242 = vmatprep.mubr.bf16.mxu0 0
      %7243 = vmatmul.mubr.bf16.gmra.mxu0 %v7060
      %v7244 = vpop.f32.mrf.mxu0
      %v7245 = vadd.f32 0.0, %v7244
      %v7246 = vpop.f32.mrf.mxu0
      %v7247 = vpop.f32.mrf.mxu0
      %v7248 = vadd.f32 0.0, %v7247
      %v7249 = vpop.f32.mrf.mxu0
      %7250 = vmatprep.mubr.bf16.mxu0 0
      %7251 = vmatmul.mubr.bf16.gmra.mxu0 %v7061
      %v7252 = vpop.f32.mrf.mxu0
      %v7253 = vadd.f32 0.0, %v7252
      %v7254 = vpop.f32.mrf.mxu0
      %v7255 = vpop.f32.mrf.mxu0
      %v7256 = vadd.f32 0.0, %v7255
      %v7257 = vpop.f32.mrf.mxu0
      %7258 = vmatprep.mubr.bf16.mxu0 0
      %7259 = vmatmul.mubr.bf16.gmra.mxu0 %v7062
      %v7260 = vpop.f32.mrf.mxu0
      %v7261 = vadd.f32 0.0, %v7260
      %v7262 = vpop.f32.mrf.mxu0
      %v7263 = vpop.f32.mrf.mxu0
      %v7264 = vadd.f32 0.0, %v7263
      %v7265 = vpop.f32.mrf.mxu0
      %7266 = vmatprep.mubr.bf16.mxu0 0
      %7267 = vmatmul.mubr.bf16.gmra.mxu0 %v7063
      %v7268 = vpop.f32.mrf.mxu0
      %v7269 = vadd.f32 0.0, %v7268
      %v7270 = vpop.f32.mrf.mxu0
      %v7271 = vpop.f32.mrf.mxu0
      %v7272 = vadd.f32 0.0, %v7271
      %v7273 = vpop.f32.mrf.mxu0
      %7274 = vmatprep.mubr.bf16.mxu0 0
      %7275 = vmatmul.mubr.bf16.gmra.mxu0 %v7064
      %v7276 = vpop.f32.mrf.mxu0
      %v7277 = vadd.f32 0.0, %v7276
      %v7278 = vpop.f32.mrf.mxu0
      %v7279 = vpop.f32.mrf.mxu0
      %v7280 = vadd.f32 0.0, %v7279
      %v7281 = vpop.f32.mrf.mxu0
      %7282 = vmatprep.mubr.bf16.mxu0 0
      %7283 = vmatmul.mubr.bf16.gmra.mxu0 %v7065
      %v7284 = vpop.f32.mrf.mxu0
      %v7285 = vadd.f32 0.0, %v7284
      %v7286 = vpop.f32.mrf.mxu0
      %v7287 = vpop.f32.mrf.mxu0
      %v7288 = vadd.f32 0.0, %v7287
      %v7289 = vpop.f32.mrf.mxu0
      %7290 = vdwg.mxu0
      %v7291 = vadd.f32 %v6937, %v7165
      %v7292 = vadd.f32 %v6938, %v7168
      %v7293 = vadd.f32 %v6939, %v7173
      %v7294 = vadd.f32 %v6940, %v7176
      %v7295 = vadd.f32 %v6941, %v7181
      %v7296 = vadd.f32 %v6942, %v7184
      %v7297 = vadd.f32 %v6943, %v7189
      %v7298 = vadd.f32 %v6944, %v7192
      %v7299 = vadd.f32 %v6945, %v7197
      %v7300 = vadd.f32 %v6946, %v7200
      %v7301 = vadd.f32 %v6947, %v7205
      %v7302 = vadd.f32 %v6948, %v7208
      %v7303 = vadd.f32 %v6949, %v7213
      %v7304 = vadd.f32 %v6950, %v7216
      %v7305 = vadd.f32 %v6951, %v7221
      %v7306 = vadd.f32 %v6952, %v7224
      %v7307 = vadd.f32 %v6953, %v7229
      %v7308 = vadd.f32 %v6954, %v7232
      %v7309 = vadd.f32 %v6955, %v7237
      %v7310 = vadd.f32 %v6956, %v7240
      %v7311 = vadd.f32 %v6957, %v7245
      %v7312 = vadd.f32 %v6958, %v7248
      %v7313 = vadd.f32 %v6959, %v7253
      %v7314 = vadd.f32 %v6960, %v7256
      %v7315 = vadd.f32 %v6961, %v7261
      %v7316 = vadd.f32 %v6962, %v7264
      %v7317 = vadd.f32 %v6963, %v7269
      %v7318 = vadd.f32 %v6964, %v7272
      %v7319 = vadd.f32 %v6965, %v7277
      %v7320 = vadd.f32 %v6966, %v7280
      %v7321 = vadd.f32 %v6967, %v7285
      %v7322 = vadd.f32 %v6968, %v7288
      %7323 = vst [vmem:[%s298] sm:$0xff] %v7291
      %7324 = vst [vmem:[%s298 + $0x8] sm:$0xff] %v7292
      %7325 = vst [vmem:[%s298 + $0x10] sm:$0xff] %v7293
      %7326 = vst [vmem:[%s298 + $0x18] sm:$0xff] %v7294
      %7327 = vst [vmem:[%s298 + $0x20] sm:$0xff] %v7295
      %7328 = vst [vmem:[%s298 + $0x28] sm:$0xff] %v7296
      %7329 = vst [vmem:[%s298 + $0x30] sm:$0xff] %v7297
      %7330 = vst [vmem:[%s298 + $0x38] sm:$0xff] %v7298
      %7331 = vst [vmem:[%s298 + $0x40] sm:$0xff] %v7299
      %7332 = vst [vmem:[%s298 + $0x48] sm:$0xff] %v7300
      %7333 = vst [vmem:[%s298 + $0x50] sm:$0xff] %v7301
      %7334 = vst [vmem:[%s298 + $0x58] sm:$0xff] %v7302
      %7335 = vst [vmem:[%s298 + $0x60] sm:$0xff] %v7303
      %7336 = vst [vmem:[%s298 + $0x68] sm:$0xff] %v7304
      %7337 = vst [vmem:[%s298 + $0x70] sm:$0xff] %v7305
      %7338 = vst [vmem:[%s298 + $0x78] sm:$0xff] %v7306
      %7339 = vst [vmem:[%s298 + $0x80] sm:$0xff] %v7307
      %7340 = vst [vmem:[%s298 + $0x88] sm:$0xff] %v7308
      %7341 = vst [vmem:[%s298 + $0x90] sm:$0xff] %v7309
      %7342 = vst [vmem:[%s298 + $0x98] sm:$0xff] %v7310
      %7343 = vst [vmem:[%s298 + $0xa0] sm:$0xff] %v7311
      %7344 = vst [vmem:[%s298 + $0xa8] sm:$0xff] %v7312
      %7345 = vst [vmem:[%s298 + $0xb0] sm:$0xff] %v7313
      %7346 = vst [vmem:[%s298 + $0xb8] sm:$0xff] %v7314
      %7347 = vst [vmem:[%s298 + $0xc0] sm:$0xff] %v7315
      %7348 = vst [vmem:[%s298 + $0xc8] sm:$0xff] %v7316
      %7349 = vst [vmem:[%s298 + $0xd0] sm:$0xff] %v7317
      %7350 = vst [vmem:[%s298 + $0xd8] sm:$0xff] %v7318
      %7351 = vst [vmem:[%s298 + $0xe0] sm:$0xff] %v7319
      %7352 = vst [vmem:[%s298 + $0xe8] sm:$0xff] %v7320
      %7353 = vst [vmem:[%s298 + $0xf0] sm:$0xff] %v7321
      %7354 = vst [vmem:[%s298 + $0xf8] sm:$0xff] %v7322
      %p7355 = scmp.lt.s32.totalorder %s18, 1
      %s7356 = scalar_select %p7355, %s18, 1
      %s7357 = smul.addr %s7356, 32
      %s7358 = smul.addr %s7357, 8
      %s7359 = scalar_lea.vmem %s7, %s7358
      // Predicated region
      $region49: #{downblock_pallas.1} parent=47 // pred_check
        %p7360 = pneg %p193
      $region50: #{downblock_pallas.1} parent=47 // pred_check_branch
        %7362 = sbr.rel (%p7360) target = $region52
      $region51: #{downblock_pallas.1} parent=47 // pred_region
        _
      $region52: #{downblock_pallas.1} parent=47 // pred_fallthru
        _
    $region48: #{downblock_pallas.1} parent=5 // pred_fallthru
      _
    %p7363 = scmp.le.s32.totalorder 2, %s13
    // Predicated region
    $region53: #{downblock_pallas.1} parent=5 // pred_check
      %p7364 = pneg %p7363
    $region54: #{downblock_pallas.1} parent=5 // pred_check_branch
      %7366 = sbr.rel (%p7364) target = $region56
    $region55: #{downblock_pallas.1} parent=5 // pred_region
      %s7367 = ssub.s32 %s13, 2
      // Predicated region
      $region57: #{downblock_pallas.1} parent=55 // pred_check
        %p7368 = pneg %p199
      $region58: #{downblock_pallas.1} parent=55 // pred_check_branch
        %7370 = sbr.rel (%p7368) target = $region60
      $region59: #{downblock_pallas.1} parent=55 // pred_region
        %p7371 = scmp.lt.s32.totalorder %s19, 1
        %s7372 = scalar_select %p7371, %s19, 1
        %s7373 = smul.addr %s7372, 32
        %s7374 = smul.addr %s7373, 8
        %s7375 = scalar_lea.vmem %s7, %s7374
      $region60: #{downblock_pallas.1} parent=55 // pred_fallthru
        _
    $region56: #{downblock_pallas.1} parent=5 // pred_fallthru
      _
  $region6: #{downblock_pallas.1} parent=0 // loop_footer
    %s17 = sadd.s32 1, %s13
  $region7: #{downblock_pallas.1} parent=0 // loop_footer_branch
    %12 = sbr.rel target = $region3
  $region8: #{downblock_pallas.1} parent=0 // loop_exit
    _

</llo_original>
